<compile_context>
chip_gen: v7x
topology: tpu7x:2x2x1
jax: 0.10.0
libtpu: 0.0.40
codegen_flags: <defaults>
</compile_context>

<pallas_src>
import functools

import jax
import jax.numpy as jnp
from jax.experimental import pallas as pl
from jax.experimental.pallas import tpu as pltpu

# ----------------------------- config -------------------------------------
VOCAB = 100
SEQ = 8            # stands in for the 1001 positions of the original model
HIDDEN = 32
N_LAYERS = 2
N_HEADS = 4
HEAD_DIM = HIDDEN // N_HEADS
INTERMEDIATE = 64
N_CLASSES = 919
N_CLASSES_PAD = 1024          # next multiple of 128 (lane-dense stores, clean MXU tiles)
LN_EPS = 1e-12
THRESH_VALUE = 1e-6
ATTN_SCALE = 1.0 / float(HEAD_DIM) ** 0.5


# ----------------------------- in-kernel helpers ---------------------------
def _bf16(x):
    return x.astype(jnp.bfloat16)


def _ln(x, g, b):
    mean = jnp.mean(x, axis=-1, keepdims=True)
    var = jnp.mean((x - mean) ** 2, axis=-1, keepdims=True)
    return (x - mean) * jax.lax.rsqrt(var + LN_EPS) * g + b


def _gelu(x):
    # TODO(synk): tanh-approximate GELU ("gelu_new"); HF BERT default is exact erf GELU.
    c = 0.7978845608028654  # sqrt(2/pi)
    return 0.5 * x * (1.0 + jnp.tanh(c * (x + 0.044715 * x * x * x)))


# ----------------------------- kernels ------------------------------------
def _encoder_kernel(x_ref, eg_ref, eb_ref,
                    wqkv_ref, bqkv_ref, wo_ref, bo_ref, ln1g_ref, ln1b_ref,
                    wi_ref, bi_ref, wo2_ref, bo2_ref, ln2g_ref, ln2b_ref,
                    o_ref, *, n_seq):
    """Whole BERT encoder for a block of `n_seq` sequences ([n_seq*SEQ, HIDDEN])."""
    h = _ln(x_ref[...], eg_ref[...], eb_ref[...])          # embedding LayerNorm

    def split_heads(t, off):
        # (n_seq*SEQ, ...) -> (n_seq*N_HEADS, SEQ, HEAD_DIM); static slices only.
        parts = []
        for b in range(n_seq):
            for hh in range(N_HEADS):
                parts.append(t[b * SEQ:(b + 1) * SEQ,
                               off + hh * HEAD_DIM: off + (hh + 1) * HEAD_DIM])
        return jnp.stack(parts)

    def merge_heads(t):
        # (n_seq*N_HEADS, SEQ, HEAD_DIM) -> (n_seq*SEQ, HIDDEN)
        rows = []
        for b in range(n_seq):
            rows.append(jnp.concatenate(
                [t[b * N_HEADS + hh] for hh in range(N_HEADS)], axis=-1))
        return jnp.concatenate(rows, axis=0)

    # TODO(synk): for large N_LAYERS use a layer grid axis (or lax.fori_loop) so
    # live ranges / VMEM-resident weights are bounded; unrolled is fine at L=2.
    for l in range(N_LAYERS):                              # weights resident in VMEM
        # --- attention block: fused QKV matmul, heads batched on a leading axis ---
        qkv = (jnp.dot(_bf16(h), wqkv_ref[l], preferred_element_type=jnp.float32)
               + bqkv_ref[l])                              # [n_seq*S, 3H]
        q = split_heads(qkv, 0 * HIDDEN)                   # [n_seq*NH, S, Dh]
        k = split_heads(qkv, 1 * HIDDEN)
        v = split_heads(qkv, 2 * HIDDEN)

        s = jnp.einsum('hqd,hkd->hqk', _bf16(q), _bf16(k),
                       preferred_element_type=jnp.float32) * ATTN_SCALE
        m = jnp.max(s, axis=-1, keepdims=True)
        p = jnp.exp(s - m)
        p = p * pl.reciprocal(jnp.sum(p, axis=-1, keepdims=True), approx=True)
        ctx = jnp.einsum('hqk,hkd->hqd', _bf16(p), _bf16(v),
                         preferred_element_type=jnp.float32)
        ctx = merge_heads(ctx)                             # [n_seq*S, H]

        attn_out = (jnp.dot(_bf16(ctx), wo_ref[l], preferred_element_type=jnp.float32)
                    + bo_ref[l])
        h = _ln(h + attn_out, ln1g_ref[l], ln1b_ref[l])

        # --- feed-forward block ---
        inter = (jnp.dot(_bf16(h), wi_ref[l], preferred_element_type=jnp.float32)
                 + bi_ref[l])
        inter = _gelu(inter)
        ffn = (jnp.dot(_bf16(inter), wo2_ref[l], preferred_element_type=jnp.float32)
               + bo2_ref[l])
        h = _ln(h + ffn, ln2g_ref[l], ln2b_ref[l])

    # Lane-dense output slab (n_seq, SEQ*HIDDEN): row b is the row-major flatten
    # of sequence b, i.e. exactly `output.view(bs, -1)` — no masked 32-lane
    # stores and no wrapper reshape before the classifier.
    slab_rows = []
    for b in range(n_seq):
        seq = h[b * SEQ:(b + 1) * SEQ, :]
        slab_rows.append(jnp.concatenate([seq[s:s + 1, :] for s in range(SEQ)], axis=1))
    o_ref[...] = jnp.concatenate(slab_rows, axis=0)


def _classifier_kernel(x_ref, w1_ref, b1_ref, w2_ref, b2_ref, o_ref):
    # linear -> Threshold(0, 1e-6) -> linear2 -> sigmoid, fully fused, N padded to 1024.
    h = (jnp.dot(_bf16(x_ref[...]), w1_ref[...], preferred_element_type=jnp.float32)
         + b1_ref[...])
    h = jnp.where(h > 0.0, h, THRESH_VALUE)                # nn.Threshold(0, 1e-6)
    h = (jnp.dot(_bf16(h), w2_ref[...], preferred_element_type=jnp.float32)
         + b2_ref[...])
    s = pl.reciprocal(1.0 + jnp.exp(-h))                   # exact sigmoid
    o_ref[...] = jnp.minimum(s, 1.0)


# ----------------------------- wrappers ------------------------------------
def _seqs_per_block(batch, seq):
    """Enough sequences per grid step to reach >=256 rows (or the whole batch)."""
    want = max(1, -(-256 // seq))
    bb = min(batch, want)
    while batch % bb:
        bb -= 1
    return bb


def bert_encoder(packed, emb):
    """emb: [B, S, H] f32 (word+pos+type sums) -> lane-dense slab [B, S*H]."""
    B, S, H = emb.shape
    n_seq = _seqs_per_block(B, S)
    x2 = emb.reshape(B * S, H)
    L = N_LAYERS

    def full3(shape):
        return pl.BlockSpec(shape, lambda b: (0, 0, 0))

    def full2(shape):
        return pl.BlockSpec(shape, lambda b: (0, 0))

    out = pl.pallas_call(
        functools.partial(_encoder_kernel, n_seq=n_seq),
        out_shape=jax.ShapeDtypeStruct((B, S * H), jnp.float32),
        grid=(B // n_seq,),
        in_specs=[
            pl.BlockSpec((n_seq * S, H), lambda b: (b, 0)),               # x (n_seq sequences)
            full2((1, H)), full2((1, H)),                                 # embedding LN
            full3((L, H, 3 * H)), full3((L, 1, 3 * H)),                   # fused QKV
            full3((L, H, H)), full3((L, 1, H)),                           # attn out proj
            full3((L, 1, H)), full3((L, 1, H)),                           # LN1
            full3((L, H, INTERMEDIATE)), full3((L, 1, INTERMEDIATE)),     # FFN in
            full3((L, INTERMEDIATE, H)), full3((L, 1, H)),                # FFN out
            full3((L, 1, H)), full3((L, 1, H)),                           # LN2
        ],
        out_specs=pl.BlockSpec((n_seq, S * H), lambda b: (b, 0)),
        compiler_params=pltpu.CompilerParams(dimension_semantics=("parallel",)),
    )(x2,
      packed["emb_ln_g"], packed["emb_ln_b"],
      packed["wqkv"], packed["bqkv"], packed["wo"], packed["bo"],
      packed["ln1_g"], packed["ln1_b"],
      packed["wi"], packed["bi"], packed["wo2"], packed["bo2"],
      packed["ln2_g"], packed["ln2_b"])
    return out


def classifier_head(x_flat, w1, b1, w2, b2):
    B, K = x_flat.shape
    Np = w1.shape[-1]
    Mp = ((B + 7) // 8) * 8                    # pad rows to a sublane multiple
    x_pad = jnp.zeros((Mp, K), x_flat.dtype).at[:B, :].set(x_flat)
    out = pl.pallas_call(
        _classifier_kernel,
        out_shape=jax.ShapeDtypeStruct((Mp, Np), jnp.float32),
        grid=(1,),
        in_specs=[
            pl.BlockSpec((Mp, K), lambda i: (0, 0)),
            pl.BlockSpec((K, Np), lambda i: (0, 0)),
            pl.BlockSpec((1, Np), lambda i: (0, 0)),
            pl.BlockSpec((Np, Np), lambda i: (0, 0)),
            pl.BlockSpec((1, Np), lambda i: (0, 0)),
        ],
        out_specs=pl.BlockSpec((Mp, Np), lambda i: (0, 0)),
    )(x_pad, w1, b1, w2, b2)
    return out[:B]                             # drop the sublane padding rows


# ----------------------------- parameters ----------------------------------
def init_params(key):
    std = 0.02
    counter = [0]

    def nxt():
        counter[0] += 1
        return jax.random.fold_in(key, counter[0])

    def normal(shape):
        return std * jax.random.normal(nxt(), shape, dtype=jnp.float32)

    def zeros(shape):
        return jnp.zeros(shape, jnp.float32)

    def ones(shape):
        return jnp.ones(shape, jnp.float32)

    params = {
        "word_emb": normal((VOCAB, HIDDEN)),
        "pos_emb": normal((SEQ, HIDDEN)),
        "type_emb": normal((2, HIDDEN)),
        "emb_ln_g": ones((HIDDEN,)),
        "emb_ln_b": zeros((HIDDEN,)),
        "layers": [],
        # NOTE: the BertModel pooler (tanh on first token) is discarded by the
        # PyTorch forward, so it is omitted entirely (no dead compute).
        "cls_w1": normal((HIDDEN * SEQ, N_CLASSES)),
        "cls_b1": zeros((N_CLASSES,)),
        "cls_w2": normal((N_CLASSES, N_CLASSES)),
        "cls_b2": zeros((N_CLASSES,)),
    }
    for _ in range(N_LAYERS):
        params["layers"].append({
            "wq": normal((HIDDEN, HIDDEN)), "bq": zeros((HIDDEN,)),
            "wk": normal((HIDDEN, HIDDEN)), "bk": zeros((HIDDEN,)),
            "wv": normal((HIDDEN, HIDDEN)), "bv": zeros((HIDDEN,)),
            "wo": normal((HIDDEN, HIDDEN)), "bo": zeros((HIDDEN,)),
            "ln1_g": ones((HIDDEN,)), "ln1_b": zeros((HIDDEN,)),
            "wi": normal((HIDDEN, INTERMEDIATE)), "bi": zeros((INTERMEDIATE,)),
            "wo2": normal((INTERMEDIATE, HIDDEN)), "bo2": zeros((HIDDEN,)),
            "ln2_g": ones((HIDDEN,)), "ln2_b": zeros((HIDDEN,)),
        })
    return params


def pack_params(p):
    """Stack per-layer weights, fuse QKV, cast matmul weights to bf16, pad classifier to 1024."""
    def stack(name):
        return jnp.stack([lyr[name] for lyr in p["layers"]])

    wqkv = jnp.concatenate([stack("wq"), stack("wk"), stack("wv")], axis=-1)     # [L, H, 3H]
    bqkv = jnp.concatenate([stack("bq"), stack("bk"), stack("bv")], axis=-1)     # [L, 3H]

    packed = {
        "word_emb": p["word_emb"],
        "pos_emb": p["pos_emb"],
        "type_emb": p["type_emb"],
        "emb_ln_g": p["emb_ln_g"][None, :],
        "emb_ln_b": p["emb_ln_b"][None, :],
        "wqkv": wqkv.astype(jnp.bfloat16),
        "bqkv": bqkv[:, None, :],
        "wo": stack("wo").astype(jnp.bfloat16), "bo": stack("bo")[:, None, :],
        "ln1_g": stack("ln1_g")[:, None, :], "ln1_b": stack("ln1_b")[:, None, :],
        "wi": stack("wi").astype(jnp.bfloat16), "bi": stack("bi")[:, None, :],
        "wo2": stack("wo2").astype(jnp.bfloat16), "bo2": stack("bo2")[:, None, :],
        "ln2_g": stack("ln2_g")[:, None, :], "ln2_b": stack("ln2_b")[:, None, :],
    }

    # Classifier head, padded 919 -> 1024 lanes.  Padded columns of layer 1 get
    # bias 0 -> threshold -> 1e-6, but the corresponding rows of w2 are zero so
    # they contribute nothing; padded outputs are sliced off in the wrapper.
    K = p["cls_w1"].shape[0]
    w1_p = jnp.zeros((K, N_CLASSES_PAD), jnp.float32).at[:, :N_CLASSES].set(p["cls_w1"])
    b1_p = jnp.zeros((1, N_CLASSES_PAD), jnp.float32).at[:, :N_CLASSES].set(p["cls_b1"])
    w2_p = jnp.zeros((N_CLASSES_PAD, N_CLASSES_PAD), jnp.float32).at[:N_CLASSES, :N_CLASSES].set(p["cls_w2"])
    b2_p = jnp.zeros((1, N_CLASSES_PAD), jnp.float32).at[:, :N_CLASSES].set(p["cls_b2"])
    packed.update(
        cls_w1=w1_p.astype(jnp.bfloat16), cls_b1=b1_p,
        cls_w2=w2_p.astype(jnp.bfloat16), cls_b2=b2_p,
    )
    return packed


# ----------------------------- model forward -------------------------------
def transformer_classifier(packed, input_ids):
    B, S = input_ids.shape
    # embedding lookup stays in plain JAX (gather glue); all dense math is Pallas.
    # TODO(synk): no attention_mask is applied (forward passes only input_ids,
    # so BertModel uses the all-ones default); padding-aware masking not needed.
    emb = (jnp.take(packed["word_emb"], input_ids, axis=0)
           + packed["pos_emb"][None, :S, :]
           + packed["type_emb"][0][None, None, :])
    flat = bert_encoder(packed, emb)                       # [B, S*H] == output.view(bs, -1)
    logits = classifier_head(flat, packed["cls_w1"], packed["cls_b1"],
                             packed["cls_w2"], packed["cls_b2"])
    return logits[:, :N_CLASSES]                           # drop the lane padding


# ----------------------------- main ----------------------------------------
if __name__ == "__main__":
    key = jax.random.PRNGKey(0)
    pkey, dkey = jax.random.split(key)
    params = init_params(pkey)
    packed = pack_params(params)
    input_ids = jax.random.randint(dkey, (2, SEQ), 0, VOCAB, dtype=jnp.int32)

    out = jax.jit(transformer_classifier)(packed, input_ids)
    out = jax.block_until_ready(out)

    assert out.shape == (2, N_CLASSES)
    assert bool(jnp.all(jnp.isfinite(out)))
    assert bool(jnp.all((out >= 0.0) & (out <= 1.0)))
    print("KERNEL_OK")
</pallas_src>

<mosaic_0001>
module attributes {stable_mosaic.version = 11 : i64} {
  func.func @_classifier_kernel(%arg0: i32, %arg1: memref<8x256xf32, #tpu.memory_space<vmem>>, %arg2: memref<256x1024xbf16, #tpu.memory_space<vmem>>, %arg3: memref<1x1024xf32, #tpu.memory_space<vmem>>, %arg4: memref<1024x1024xbf16, #tpu.memory_space<vmem>>, %arg5: memref<1x1024xf32, #tpu.memory_space<vmem>>, %arg6: memref<8x1024xf32, #tpu.memory_space<vmem>>) attributes {dimension_semantics = [#tpu.dimension_semantics<arbitrary>], iteration_bounds = array<i64: 1>, scalar_prefetch = 0 : i64, scratch_operands = 0 : i64, tpu.core_type = #tpu.core_type<tc>, window_params = [{pipeline_mode = #tpu.pipeline_mode<synchronous>, transform_indices = @transform_0, window_bounds = array<i64: 8, 256>}, {pipeline_mode = #tpu.pipeline_mode<synchronous>, transform_indices = @transform_1, window_bounds = array<i64: 256, 1024>}, {pipeline_mode = #tpu.pipeline_mode<synchronous>, transform_indices = @transform_2, window_bounds = array<i64: 1, 1024>}, {pipeline_mode = #tpu.pipeline_mode<synchronous>, transform_indices = @transform_3, window_bounds = array<i64: 1024, 1024>}, {pipeline_mode = #tpu.pipeline_mode<synchronous>, transform_indices = @transform_4, window_bounds = array<i64: 1, 1024>}, {pipeline_mode = #tpu.pipeline_mode<synchronous>, transform_indices = @transform_5, window_bounds = array<i64: 8, 1024>}]} {
    %c0 = arith.constant 0 : index
    %c0_0 = arith.constant 0 : index
    %0 = vector.load %arg1[%c0, %c0_0] : memref<8x256xf32, #tpu.memory_space<vmem>>, vector<8x256xf32>
    %1 = arith.truncf %0 : vector<8x256xf32> to vector<8x256xbf16>
    %c0_1 = arith.constant 0 : index
    %c0_2 = arith.constant 0 : index
    %2 = vector.load %arg2[%c0_1, %c0_2] : memref<256x1024xbf16, #tpu.memory_space<vmem>>, vector<256x1024xbf16>
    %cst = arith.constant dense<0.000000e+00> : vector<8x1024xf32>
    %3 = tpu.matmul %1, %2, %cst {dimension_numbers = #tpu.dot_dimension_numbers<[1], [0], [0], [1], [0, 0, 1, 1], [], []>} : vector<8x256xbf16>, vector<256x1024xbf16>, vector<8x1024xf32> -> vector<8x1024xf32>
    %c0_3 = arith.constant 0 : index
    %c0_4 = arith.constant 0 : index
    %4 = vector.load %arg3[%c0_3, %c0_4] : memref<1x1024xf32, #tpu.memory_space<vmem>>, vector<1x1024xf32>
    %5 = vector.broadcast %4 : vector<1x1024xf32> to vector<8x1024xf32>
    %6 = arith.addf %3, %5 : vector<8x1024xf32>
    %cst_5 = arith.constant 0.000000e+00 : f32
    %7 = vector.broadcast %cst_5 : f32 to vector<8x1024xf32>
    %8 = arith.cmpf ogt, %6, %7 : vector<8x1024xf32>
    %cst_6 = arith.constant 9.99999997E-7 : f32
    %9 = vector.broadcast %cst_6 : f32 to vector<8x1024xf32>
    %10 = arith.select %8, %6, %9 : vector<8x1024xi1>, vector<8x1024xf32>
    %11 = arith.truncf %10 : vector<8x1024xf32> to vector<8x1024xbf16>
    %c0_7 = arith.constant 0 : index
    %c0_8 = arith.constant 0 : index
    %12 = vector.load %arg4[%c0_7, %c0_8] : memref<1024x1024xbf16, #tpu.memory_space<vmem>>, vector<1024x1024xbf16>
    %cst_9 = arith.constant dense<0.000000e+00> : vector<8x1024xf32>
    %13 = tpu.matmul %11, %12, %cst_9 {dimension_numbers = #tpu.dot_dimension_numbers<[1], [0], [0], [1], [0, 0, 1, 1], [], []>} : vector<8x1024xbf16>, vector<1024x1024xbf16>, vector<8x1024xf32> -> vector<8x1024xf32>
    %c0_10 = arith.constant 0 : index
    %c0_11 = arith.constant 0 : index
    %14 = vector.load %arg5[%c0_10, %c0_11] : memref<1x1024xf32, #tpu.memory_space<vmem>>, vector<1x1024xf32>
    %15 = vector.broadcast %14 : vector<1x1024xf32> to vector<8x1024xf32>
    %16 = arith.addf %13, %15 : vector<8x1024xf32>
    %cst_12 = arith.constant 0.000000e+00 : f32
    %17 = vector.broadcast %cst_12 : f32 to vector<8x1024xf32>
    %18 = arith.subf %17, %16 : vector<8x1024xf32>
    %19 = math.exp %18 : vector<8x1024xf32>
    %cst_13 = arith.constant 1.000000e+00 : f32
    %20 = vector.broadcast %cst_13 : f32 to vector<8x1024xf32>
    %21 = arith.addf %20, %19 : vector<8x1024xf32>
    %22 = tpu.reciprocal %21 : vector<8x1024xf32> -> vector<8x1024xf32>
    %cst_14 = arith.constant 1.000000e+00 : f32
    %23 = vector.broadcast %cst_14 : f32 to vector<8x1024xf32>
    %24 = arith.minimumf %22, %23 : vector<8x1024xf32>
    %c0_15 = arith.constant 0 : index
    %c0_16 = arith.constant 0 : index
    %25 = vector.load %arg6[%c0_15, %c0_16] : memref<8x1024xf32, #tpu.memory_space<vmem>>, vector<8x1024xf32>
    tpu.vector_store %arg6[%c0_15, %c0_16], %24 {strides = array<i32>} : memref<8x1024xf32, #tpu.memory_space<vmem>>, vector<8x1024xf32>,
    return
  }
  func.func @transform_0(%arg0: i32) -> (i32, i32) {
    %c0_i32 = arith.constant 0 : i32
    %c0_i32_0 = arith.constant 0 : i32
    %c0_i32_1 = arith.constant 0 : i32
    return %c0_i32, %c0_i32_0 : i32, i32
  }
  func.func @transform_1(%arg0: i32) -> (i32, i32) {
    %c0_i32 = arith.constant 0 : i32
    %c0_i32_0 = arith.constant 0 : i32
    %c0_i32_1 = arith.constant 0 : i32
    return %c0_i32, %c0_i32_0 : i32, i32
  }
  func.func @transform_2(%arg0: i32) -> (i32, i32) {
    %c0_i32 = arith.constant 0 : i32
    %c0_i32_0 = arith.constant 0 : i32
    %c0_i32_1 = arith.constant 0 : i32
    return %c0_i32, %c0_i32_0 : i32, i32
  }
  func.func @transform_3(%arg0: i32) -> (i32, i32) {
    %c0_i32 = arith.constant 0 : i32
    %c0_i32_0 = arith.constant 0 : i32
    %c0_i32_1 = arith.constant 0 : i32
    return %c0_i32, %c0_i32_0 : i32, i32
  }
  func.func @transform_4(%arg0: i32) -> (i32, i32) {
    %c0_i32 = arith.constant 0 : i32
    %c0_i32_0 = arith.constant 0 : i32
    %c0_i32_1 = arith.constant 0 : i32
    return %c0_i32, %c0_i32_0 : i32, i32
  }
  func.func @transform_5(%arg0: i32) -> (i32, i32) {
    %c0_i32 = arith.constant 0 : i32
    %c0_i32_0 = arith.constant 0 : i32
    %c0_i32_1 = arith.constant 0 : i32
    return %c0_i32, %c0_i32_0 : i32, i32
  }
}

module attributes {stable_mosaic.version = 11 : i64} {
  func.func @_encoder_kernel(%arg0: i32, %arg1: memref<16x32xf32, #tpu.memory_space<vmem>>, %arg2: memref<1x32xf32, #tpu.memory_space<vmem>>, %arg3: memref<1x32xf32, #tpu.memory_space<vmem>>, %arg4: memref<2x32x96xbf16, #tpu.memory_space<vmem>>, %arg5: memref<2x1x96xf32, #tpu.memory_space<vmem>>, %arg6: memref<2x32x32xbf16, #tpu.memory_space<vmem>>, %arg7: memref<2x1x32xf32, #tpu.memory_space<vmem>>, %arg8: memref<2x1x32xf32, #tpu.memory_space<vmem>>, %arg9: memref<2x1x32xf32, #tpu.memory_space<vmem>>, %arg10: memref<2x32x64xbf16, #tpu.memory_space<vmem>>, %arg11: memref<2x1x64xf32, #tpu.memory_space<vmem>>, %arg12: memref<2x64x32xbf16, #tpu.memory_space<vmem>>, %arg13: memref<2x1x32xf32, #tpu.memory_space<vmem>>, %arg14: memref<2x1x32xf32, #tpu.memory_space<vmem>>, %arg15: memref<2x1x32xf32, #tpu.memory_space<vmem>>, %arg16: memref<2x256xf32, #tpu.memory_space<vmem>>) attributes {dimension_semantics = [#tpu.dimension_semantics<parallel>], iteration_bounds = array<i64: 1>, scalar_prefetch = 0 : i64, scratch_operands = 0 : i64, tpu.core_type = #tpu.core_type<tc>, window_params = [{transform_indices = @transform_0, window_bounds = array<i64: 16, 32>}, {pipeline_mode = #tpu.pipeline_mode<synchronous>, transform_indices = @transform_1, window_bounds = array<i64: 1, 32>}, {pipeline_mode = #tpu.pipeline_mode<synchronous>, transform_indices = @transform_2, window_bounds = array<i64: 1, 32>}, {pipeline_mode = #tpu.pipeline_mode<synchronous>, transform_indices = @transform_3, window_bounds = array<i64: 2, 32, 96>}, {pipeline_mode = #tpu.pipeline_mode<synchronous>, transform_indices = @transform_4, window_bounds = array<i64: 2, 1, 96>}, {pipeline_mode = #tpu.pipeline_mode<synchronous>, transform_indices = @transform_5, window_bounds = array<i64: 2, 32, 32>}, {pipeline_mode = #tpu.pipeline_mode<synchronous>, transform_indices = @transform_6, window_bounds = array<i64: 2, 1, 32>}, {pipeline_mode = #tpu.pipeline_mode<synchronous>, transform_indices = @transform_7, window_bounds = array<i64: 2, 1, 32>}, {pipeline_mode = #tpu.pipeline_mode<synchronous>, transform_indices = @transform_8, window_bounds = array<i64: 2, 1, 32>}, {pipeline_mode = #tpu.pipeline_mode<synchronous>, transform_indices = @transform_9, window_bounds = array<i64: 2, 32, 64>}, {pipeline_mode = #tpu.pipeline_mode<synchronous>, transform_indices = @transform_10, window_bounds = array<i64: 2, 1, 64>}, {pipeline_mode = #tpu.pipeline_mode<synchronous>, transform_indices = @transform_11, window_bounds = array<i64: 2, 64, 32>}, {pipeline_mode = #tpu.pipeline_mode<synchronous>, transform_indices = @transform_12, window_bounds = array<i64: 2, 1, 32>}, {pipeline_mode = #tpu.pipeline_mode<synchronous>, transform_indices = @transform_13, window_bounds = array<i64: 2, 1, 32>}, {pipeline_mode = #tpu.pipeline_mode<synchronous>, transform_indices = @transform_14, window_bounds = array<i64: 2, 1, 32>}, {transform_indices = @transform_15, window_bounds = array<i64: 2, 256>}]} {
    %c0 = arith.constant 0 : index
    %c0_0 = arith.constant 0 : index
    %0 = vector.load %arg1[%c0, %c0_0] : memref<16x32xf32, #tpu.memory_space<vmem>>, vector<16x32xf32>
    %c0_1 = arith.constant 0 : index
    %c0_2 = arith.constant 0 : index
    %1 = vector.load %arg2[%c0_1, %c0_2] : memref<1x32xf32, #tpu.memory_space<vmem>>, vector<1x32xf32>
    %c0_3 = arith.constant 0 : index
    %c0_4 = arith.constant 0 : index
    %2 = vector.load %arg3[%c0_3, %c0_4] : memref<1x32xf32, #tpu.memory_space<vmem>>, vector<1x32xf32>
    %cst = arith.constant dense<0.000000e+00> : vector<16xf32>
    %3 = vector.multi_reduction <add>, %0, %cst [1] : vector<16x32xf32> to vector<16xf32>
    %4 = vector.shape_cast %3 : vector<16xf32> to vector<16x1xf32>
    %cst_5 = arith.constant 3.200000e+01 : f32
    %5 = vector.broadcast %cst_5 : f32 to vector<16x1xf32>
    %6 = arith.divf %4, %5 : vector<16x1xf32>
    %7 = vector.broadcast %6 : vector<16x1xf32> to vector<16x32xf32>
    %8 = arith.subf %0, %7 : vector<16x32xf32>
    %9 = arith.mulf %8, %8 : vector<16x32xf32>
    %cst_6 = arith.constant dense<0.000000e+00> : vector<16xf32>
    %10 = vector.multi_reduction <add>, %9, %cst_6 [1] : vector<16x32xf32> to vector<16xf32>
    %11 = vector.shape_cast %10 : vector<16xf32> to vector<16x1xf32>
    %cst_7 = arith.constant 3.200000e+01 : f32
    %12 = vector.broadcast %cst_7 : f32 to vector<16x1xf32>
    %13 = arith.divf %11, %12 : vector<16x1xf32>
    %14 = vector.broadcast %6 : vector<16x1xf32> to vector<16x32xf32>
    %15 = arith.subf %0, %14 : vector<16x32xf32>
    %cst_8 = arith.constant 9.99999996E-13 : f32
    %16 = vector.broadcast %cst_8 : f32 to vector<16x1xf32>
    %17 = arith.addf %13, %16 : vector<16x1xf32>
    %18 = math.rsqrt %17 : vector<16x1xf32>
    %19 = vector.broadcast %18 : vector<16x1xf32> to vector<16x32xf32>
    %20 = arith.mulf %15, %19 : vector<16x32xf32>
    %21 = vector.broadcast %1 : vector<1x32xf32> to vector<16x32xf32>
    %22 = arith.mulf %20, %21 : vector<16x32xf32>
    %23 = vector.broadcast %2 : vector<1x32xf32> to vector<16x32xf32>
    %24 = arith.addf %22, %23 : vector<16x32xf32>
    %25 = arith.truncf %24 : vector<16x32xf32> to vector<16x32xbf16>
    %c0_9 = arith.constant 0 : index
    %c0_10 = arith.constant 0 : index
    %c0_11 = arith.constant 0 : index
    %26 = vector.load %arg4[%c0_9, %c0_10, %c0_11] : memref<2x32x96xbf16, #tpu.memory_space<vmem>>, vector<1x32x96xbf16>
    %27 = vector.shape_cast %26 : vector<1x32x96xbf16> to vector<32x96xbf16>
    %cst_12 = arith.constant dense<0.000000e+00> : vector<16x96xf32>
    %28 = tpu.matmul %25, %27, %cst_12 {dimension_numbers = #tpu.dot_dimension_numbers<[1], [0], [0], [1], [0, 0, 1, 1], [], []>} : vector<16x32xbf16>, vector<32x96xbf16>, vector<16x96xf32> -> vector<16x96xf32>
    %c0_13 = arith.constant 0 : index
    %c0_14 = arith.constant 0 : index
    %c0_15 = arith.constant 0 : index
    %29 = vector.load %arg5[%c0_13, %c0_14, %c0_15] : memref<2x1x96xf32, #tpu.memory_space<vmem>>, vector<1x1x96xf32>
    %30 = vector.shape_cast %29 : vector<1x1x96xf32> to vector<1x96xf32>
    %31 = vector.broadcast %30 : vector<1x96xf32> to vector<16x96xf32>
    %32 = arith.addf %28, %31 : vector<16x96xf32>
    %33 = vector.extract_strided_slice %32 {offsets = [0, 0], sizes = [8, 8], strides = [1, 1]} : vector<16x96xf32> to vector<8x8xf32>
    %34 = vector.extract_strided_slice %32 {offsets = [0, 8], sizes = [8, 8], strides = [1, 1]} : vector<16x96xf32> to vector<8x8xf32>
    %35 = vector.extract_strided_slice %32 {offsets = [0, 16], sizes = [8, 8], strides = [1, 1]} : vector<16x96xf32> to vector<8x8xf32>
    %36 = vector.extract_strided_slice %32 {offsets = [0, 24], sizes = [8, 8], strides = [1, 1]} : vector<16x96xf32> to vector<8x8xf32>
    %37 = vector.extract_strided_slice %32 {offsets = [8, 0], sizes = [8, 8], strides = [1, 1]} : vector<16x96xf32> to vector<8x8xf32>
    %38 = vector.extract_strided_slice %32 {offsets = [8, 8], sizes = [8, 8], strides = [1, 1]} : vector<16x96xf32> to vector<8x8xf32>
    %39 = vector.extract_strided_slice %32 {offsets = [8, 16], sizes = [8, 8], strides = [1, 1]} : vector<16x96xf32> to vector<8x8xf32>
    %40 = vector.extract_strided_slice %32 {offsets = [8, 24], sizes = [8, 8], strides = [1, 1]} : vector<16x96xf32> to vector<8x8xf32>
    %41 = vector.shape_cast %33 : vector<8x8xf32> to vector<1x8x8xf32>
    %42 = vector.shape_cast %34 : vector<8x8xf32> to vector<1x8x8xf32>
    %43 = vector.shape_cast %35 : vector<8x8xf32> to vector<1x8x8xf32>
    %44 = vector.shape_cast %36 : vector<8x8xf32> to vector<1x8x8xf32>
    %45 = vector.shape_cast %37 : vector<8x8xf32> to vector<1x8x8xf32>
    %46 = vector.shape_cast %38 : vector<8x8xf32> to vector<1x8x8xf32>
    %47 = vector.shape_cast %39 : vector<8x8xf32> to vector<1x8x8xf32>
    %48 = vector.shape_cast %40 : vector<8x8xf32> to vector<1x8x8xf32>
    %49 = tpu.concatenate %41, %42, %43, %44, %45, %46, %47, %48 in 0 : vector<1x8x8xf32>, vector<1x8x8xf32>, vector<1x8x8xf32>, vector<1x8x8xf32>, vector<1x8x8xf32>, vector<1x8x8xf32>, vector<1x8x8xf32>, vector<1x8x8xf32> -> vector<8x8x8xf32>
    %50 = vector.extract_strided_slice %32 {offsets = [0, 32], sizes = [8, 8], strides = [1, 1]} : vector<16x96xf32> to vector<8x8xf32>
    %51 = vector.extract_strided_slice %32 {offsets = [0, 40], sizes = [8, 8], strides = [1, 1]} : vector<16x96xf32> to vector<8x8xf32>
    %52 = vector.extract_strided_slice %32 {offsets = [0, 48], sizes = [8, 8], strides = [1, 1]} : vector<16x96xf32> to vector<8x8xf32>
    %53 = vector.extract_strided_slice %32 {offsets = [0, 56], sizes = [8, 8], strides = [1, 1]} : vector<16x96xf32> to vector<8x8xf32>
    %54 = vector.extract_strided_slice %32 {offsets = [8, 32], sizes = [8, 8], strides = [1, 1]} : vector<16x96xf32> to vector<8x8xf32>
    %55 = vector.extract_strided_slice %32 {offsets = [8, 40], sizes = [8, 8], strides = [1, 1]} : vector<16x96xf32> to vector<8x8xf32>
    %56 = vector.extract_strided_slice %32 {offsets = [8, 48], sizes = [8, 8], strides = [1, 1]} : vector<16x96xf32> to vector<8x8xf32>
    %57 = vector.extract_strided_slice %32 {offsets = [8, 56], sizes = [8, 8], strides = [1, 1]} : vector<16x96xf32> to vector<8x8xf32>
    %58 = vector.shape_cast %50 : vector<8x8xf32> to vector<1x8x8xf32>
    %59 = vector.shape_cast %51 : vector<8x8xf32> to vector<1x8x8xf32>
    %60 = vector.shape_cast %52 : vector<8x8xf32> to vector<1x8x8xf32>
    %61 = vector.shape_cast %53 : vector<8x8xf32> to vector<1x8x8xf32>
    %62 = vector.shape_cast %54 : vector<8x8xf32> to vector<1x8x8xf32>
    %63 = vector.shape_cast %55 : vector<8x8xf32> to vector<1x8x8xf32>
    %64 = vector.shape_cast %56 : vector<8x8xf32> to vector<1x8x8xf32>
    %65 = vector.shape_cast %57 : vector<8x8xf32> to vector<1x8x8xf32>
    %66 = tpu.concatenate %58, %59, %60, %61, %62, %63, %64, %65 in 0 : vector<1x8x8xf32>, vector<1x8x8xf32>, vector<1x8x8xf32>, vector<1x8x8xf32>, vector<1x8x8xf32>, vector<1x8x8xf32>, vector<1x8x8xf32>, vector<1x8x8xf32> -> vector<8x8x8xf32>
    %67 = vector.extract_strided_slice %32 {offsets = [0, 64], sizes = [8, 8], strides = [1, 1]} : vector<16x96xf32> to vector<8x8xf32>
    %68 = vector.extract_strided_slice %32 {offsets = [0, 72], sizes = [8, 8], strides = [1, 1]} : vector<16x96xf32> to vector<8x8xf32>
    %69 = vector.extract_strided_slice %32 {offsets = [0, 80], sizes = [8, 8], strides = [1, 1]} : vector<16x96xf32> to vector<8x8xf32>
    %70 = vector.extract_strided_slice %32 {offsets = [0, 88], sizes = [8, 8], strides = [1, 1]} : vector<16x96xf32> to vector<8x8xf32>
    %71 = vector.extract_strided_slice %32 {offsets = [8, 64], sizes = [8, 8], strides = [1, 1]} : vector<16x96xf32> to vector<8x8xf32>
    %72 = vector.extract_strided_slice %32 {offsets = [8, 72], sizes = [8, 8], strides = [1, 1]} : vector<16x96xf32> to vector<8x8xf32>
    %73 = vector.extract_strided_slice %32 {offsets = [8, 80], sizes = [8, 8], strides = [1, 1]} : vector<16x96xf32> to vector<8x8xf32>
    %74 = vector.extract_strided_slice %32 {offsets = [8, 88], sizes = [8, 8], strides = [1, 1]} : vector<16x96xf32> to vector<8x8xf32>
    %75 = vector.shape_cast %67 : vector<8x8xf32> to vector<1x8x8xf32>
    %76 = vector.shape_cast %68 : vector<8x8xf32> to vector<1x8x8xf32>
    %77 = vector.shape_cast %69 : vector<8x8xf32> to vector<1x8x8xf32>
    %78 = vector.shape_cast %70 : vector<8x8xf32> to vector<1x8x8xf32>
    %79 = vector.shape_cast %71 : vector<8x8xf32> to vector<1x8x8xf32>
    %80 = vector.shape_cast %72 : vector<8x8xf32> to vector<1x8x8xf32>
    %81 = vector.shape_cast %73 : vector<8x8xf32> to vector<1x8x8xf32>
    %82 = vector.shape_cast %74 : vector<8x8xf32> to vector<1x8x8xf32>
    %83 = tpu.concatenate %75, %76, %77, %78, %79, %80, %81, %82 in 0 : vector<1x8x8xf32>, vector<1x8x8xf32>, vector<1x8x8xf32>, vector<1x8x8xf32>, vector<1x8x8xf32>, vector<1x8x8xf32>, vector<1x8x8xf32>, vector<1x8x8xf32> -> vector<8x8x8xf32>
    %84 = arith.truncf %49 : vector<8x8x8xf32> to vector<8x8x8xbf16>
    %85 = arith.truncf %66 : vector<8x8x8xf32> to vector<8x8x8xbf16>
    "tpu.trace_start"() <{level = 10 : i32, message = "hqd,hkd->hqk"}> : () -> ()
    %cst_16 = arith.constant dense<0.000000e+00> : vector<8x8x8xf32>
    %86 = tpu.matmul %84, %85, %cst_16 {dimension_numbers = #tpu.dot_dimension_numbers<[2], [2], [1], [1], [0, 0, 0, 1, 1, 1], [0], [0]>} : vector<8x8x8xbf16>, vector<8x8x8xbf16>, vector<8x8x8xf32> -> vector<8x8x8xf32>
    "tpu.trace_stop"() : () -> ()
    %cst_17 = arith.constant 0.353553385 : f32
    %87 = vector.broadcast %cst_17 : f32 to vector<8x8x8xf32>
    %88 = arith.mulf %86, %87 : vector<8x8x8xf32>
    %cst_18 = arith.constant dense<0xFF800000> : vector<8x8xf32>
    %89 = vector.multi_reduction <maximumf>, %88, %cst_18 [2] : vector<8x8x8xf32> to vector<8x8xf32>
    %90 = vector.shape_cast %89 : vector<8x8xf32> to vector<8x8x1xf32>
    %91 = vector.broadcast %90 : vector<8x8x1xf32> to vector<8x8x8xf32>
    %92 = arith.subf %88, %91 : vector<8x8x8xf32>
    %93 = math.exp %92 : vector<8x8x8xf32>
    %cst_19 = arith.constant dense<0.000000e+00> : vector<8x8xf32>
    %94 = vector.multi_reduction <add>, %93, %cst_19 [2] : vector<8x8x8xf32> to vector<8x8xf32>
    %95 = vector.shape_cast %94 : vector<8x8xf32> to vector<8x8x1xf32>
    %96 = tpu.reciprocal %95 {approx = true} : vector<8x8x1xf32> -> vector<8x8x1xf32>
    %97 = vector.broadcast %96 : vector<8x8x1xf32> to vector<8x8x8xf32>
    %98 = arith.mulf %93, %97 : vector<8x8x8xf32>
    %99 = arith.truncf %98 : vector<8x8x8xf32> to vector<8x8x8xbf16>
    %100 = arith.truncf %83 : vector<8x8x8xf32> to vector<8x8x8xbf16>
    "tpu.trace_start"() <{level = 10 : i32, message = "hqk,hkd->hqd"}> : () -> ()
    %cst_20 = arith.constant dense<0.000000e+00> : vector<8x8x8xf32>
    %101 = tpu.matmul %99, %100, %cst_20 {dimension_numbers = #tpu.dot_dimension_numbers<[2], [1], [1], [2], [0, 0, 0, 1, 1, 2], [0], [0]>} : vector<8x8x8xbf16>, vector<8x8x8xbf16>, vector<8x8x8xf32> -> vector<8x8x8xf32>
    "tpu.trace_stop"() : () -> ()
    %102 = vector.extract_strided_slice %101 {offsets = [0, 0, 0], sizes = [1, 8, 8], strides = [1, 1, 1]} : vector<8x8x8xf32> to vector<1x8x8xf32>
    %103 = vector.shape_cast %102 : vector<1x8x8xf32> to vector<8x8xf32>
    %104 = vector.extract_strided_slice %101 {offsets = [1, 0, 0], sizes = [1, 8, 8], strides = [1, 1, 1]} : vector<8x8x8xf32> to vector<1x8x8xf32>
    %105 = vector.shape_cast %104 : vector<1x8x8xf32> to vector<8x8xf32>
    %106 = vector.extract_strided_slice %101 {offsets = [2, 0, 0], sizes = [1, 8, 8], strides = [1, 1, 1]} : vector<8x8x8xf32> to vector<1x8x8xf32>
    %107 = vector.shape_cast %106 : vector<1x8x8xf32> to vector<8x8xf32>
    %108 = vector.extract_strided_slice %101 {offsets = [3, 0, 0], sizes = [1, 8, 8], strides = [1, 1, 1]} : vector<8x8x8xf32> to vector<1x8x8xf32>
    %109 = vector.shape_cast %108 : vector<1x8x8xf32> to vector<8x8xf32>
    %110 = tpu.concatenate %103, %105, %107, %109 in 1 : vector<8x8xf32>, vector<8x8xf32>, vector<8x8xf32>, vector<8x8xf32> -> vector<8x32xf32>
    %111 = vector.extract_strided_slice %101 {offsets = [4, 0, 0], sizes = [1, 8, 8], strides = [1, 1, 1]} : vector<8x8x8xf32> to vector<1x8x8xf32>
    %112 = vector.shape_cast %111 : vector<1x8x8xf32> to vector<8x8xf32>
    %113 = vector.extract_strided_slice %101 {offsets = [5, 0, 0], sizes = [1, 8, 8], strides = [1, 1, 1]} : vector<8x8x8xf32> to vector<1x8x8xf32>
    %114 = vector.shape_cast %113 : vector<1x8x8xf32> to vector<8x8xf32>
    %115 = vector.extract_strided_slice %101 {offsets = [6, 0, 0], sizes = [1, 8, 8], strides = [1, 1, 1]} : vector<8x8x8xf32> to vector<1x8x8xf32>
    %116 = vector.shape_cast %115 : vector<1x8x8xf32> to vector<8x8xf32>
    %117 = vector.extract_strided_slice %101 {offsets = [7, 0, 0], sizes = [1, 8, 8], strides = [1, 1, 1]} : vector<8x8x8xf32> to vector<1x8x8xf32>
    %118 = vector.shape_cast %117 : vector<1x8x8xf32> to vector<8x8xf32>
    %119 = tpu.concatenate %112, %114, %116, %118 in 1 : vector<8x8xf32>, vector<8x8xf32>, vector<8x8xf32>, vector<8x8xf32> -> vector<8x32xf32>
    %120 = tpu.concatenate %110, %119 in 0 : vector<8x32xf32>, vector<8x32xf32> -> vector<16x32xf32>
    %121 = arith.truncf %120 : vector<16x32xf32> to vector<16x32xbf16>
    %c0_21 = arith.constant 0 : index
    %c0_22 = arith.constant 0 : index
    %c0_23 = arith.constant 0 : index
    %122 = vector.load %arg6[%c0_21, %c0_22, %c0_23] : memref<2x32x32xbf16, #tpu.memory_space<vmem>>, vector<1x32x32xbf16>
    %123 = vector.shape_cast %122 : vector<1x32x32xbf16> to vector<32x32xbf16>
    %cst_24 = arith.constant dense<0.000000e+00> : vector<16x32xf32>
    %124 = tpu.matmul %121, %123, %cst_24 {dimension_numbers = #tpu.dot_dimension_numbers<[1], [0], [0], [1], [0, 0, 1, 1], [], []>} : vector<16x32xbf16>, vector<32x32xbf16>, vector<16x32xf32> -> vector<16x32xf32>
    %c0_25 = arith.constant 0 : index
    %c0_26 = arith.constant 0 : index
    %c0_27 = arith.constant 0 : index
    %125 = vector.load %arg7[%c0_25, %c0_26, %c0_27] : memref<2x1x32xf32, #tpu.memory_space<vmem>>, vector<1x1x32xf32>
    %126 = vector.shape_cast %125 : vector<1x1x32xf32> to vector<1x32xf32>
    %127 = vector.broadcast %126 : vector<1x32xf32> to vector<16x32xf32>
    %128 = arith.addf %124, %127 : vector<16x32xf32>
    %129 = arith.addf %24, %128 : vector<16x32xf32>
    %c0_28 = arith.constant 0 : index
    %c0_29 = arith.constant 0 : index
    %c0_30 = arith.constant 0 : index
    %130 = vector.load %arg8[%c0_28, %c0_29, %c0_30] : memref<2x1x32xf32, #tpu.memory_space<vmem>>, vector<1x1x32xf32>
    %131 = vector.shape_cast %130 : vector<1x1x32xf32> to vector<1x32xf32>
    %c0_31 = arith.constant 0 : index
    %c0_32 = arith.constant 0 : index
    %c0_33 = arith.constant 0 : index
    %132 = vector.load %arg9[%c0_31, %c0_32, %c0_33] : memref<2x1x32xf32, #tpu.memory_space<vmem>>, vector<1x1x32xf32>
    %133 = vector.shape_cast %132 : vector<1x1x32xf32> to vector<1x32xf32>
    %cst_34 = arith.constant dense<0.000000e+00> : vector<16xf32>
    %134 = vector.multi_reduction <add>, %129, %cst_34 [1] : vector<16x32xf32> to vector<16xf32>
    %135 = vector.shape_cast %134 : vector<16xf32> to vector<16x1xf32>
    %cst_35 = arith.constant 3.200000e+01 : f32
    %136 = vector.broadcast %cst_35 : f32 to vector<16x1xf32>
    %137 = arith.divf %135, %136 : vector<16x1xf32>
    %138 = vector.broadcast %137 : vector<16x1xf32> to vector<16x32xf32>
    %139 = arith.subf %129, %138 : vector<16x32xf32>
    %140 = arith.mulf %139, %139 : vector<16x32xf32>
    %cst_36 = arith.constant dense<0.000000e+00> : vector<16xf32>
    %141 = vector.multi_reduction <add>, %140, %cst_36 [1] : vector<16x32xf32> to vector<16xf32>
    %142 = vector.shape_cast %141 : vector<16xf32> to vector<16x1xf32>
    %cst_37 = arith.constant 3.200000e+01 : f32
    %143 = vector.broadcast %cst_37 : f32 to vector<16x1xf32>
    %144 = arith.divf %142, %143 : vector<16x1xf32>
    %145 = vector.broadcast %137 : vector<16x1xf32> to vector<16x32xf32>
    %146 = arith.subf %129, %145 : vector<16x32xf32>
    %cst_38 = arith.constant 9.99999996E-13 : f32
    %147 = vector.broadcast %cst_38 : f32 to vector<16x1xf32>
    %148 = arith.addf %144, %147 : vector<16x1xf32>
    %149 = math.rsqrt %148 : vector<16x1xf32>
    %150 = vector.broadcast %149 : vector<16x1xf32> to vector<16x32xf32>
    %151 = arith.mulf %146, %150 : vector<16x32xf32>
    %152 = vector.broadcast %131 : vector<1x32xf32> to vector<16x32xf32>
    %153 = arith.mulf %151, %152 : vector<16x32xf32>
    %154 = vector.broadcast %133 : vector<1x32xf32> to vector<16x32xf32>
    %155 = arith.addf %153, %154 : vector<16x32xf32>
    %156 = arith.truncf %155 : vector<16x32xf32> to vector<16x32xbf16>
    %c0_39 = arith.constant 0 : index
    %c0_40 = arith.constant 0 : index
    %c0_41 = arith.constant 0 : index
    %157 = vector.load %arg10[%c0_39, %c0_40, %c0_41] : memref<2x32x64xbf16, #tpu.memory_space<vmem>>, vector<1x32x64xbf16>
    %158 = vector.shape_cast %157 : vector<1x32x64xbf16> to vector<32x64xbf16>
    %cst_42 = arith.constant dense<0.000000e+00> : vector<16x64xf32>
    %159 = tpu.matmul %156, %158, %cst_42 {dimension_numbers = #tpu.dot_dimension_numbers<[1], [0], [0], [1], [0, 0, 1, 1], [], []>} : vector<16x32xbf16>, vector<32x64xbf16>, vector<16x64xf32> -> vector<16x64xf32>
    %c0_43 = arith.constant 0 : index
    %c0_44 = arith.constant 0 : index
    %c0_45 = arith.constant 0 : index
    %160 = vector.load %arg11[%c0_43, %c0_44, %c0_45] : memref<2x1x64xf32, #tpu.memory_space<vmem>>, vector<1x1x64xf32>
    %161 = vector.shape_cast %160 : vector<1x1x64xf32> to vector<1x64xf32>
    %162 = vector.broadcast %161 : vector<1x64xf32> to vector<16x64xf32>
    %163 = arith.addf %159, %162 : vector<16x64xf32>
    %cst_46 = arith.constant 5.000000e-01 : f32
    %164 = vector.broadcast %cst_46 : f32 to vector<16x64xf32>
    %165 = arith.mulf %164, %163 : vector<16x64xf32>
    %cst_47 = arith.constant 4.471500e-02 : f32
    %166 = vector.broadcast %cst_47 : f32 to vector<16x64xf32>
    %167 = arith.mulf %166, %163 : vector<16x64xf32>
    %168 = arith.mulf %167, %163 : vector<16x64xf32>
    %169 = arith.mulf %168, %163 : vector<16x64xf32>
    %170 = arith.addf %163, %169 : vector<16x64xf32>
    %cst_48 = arith.constant 0.797884583 : f32
    %171 = vector.broadcast %cst_48 : f32 to vector<16x64xf32>
    %172 = arith.mulf %171, %170 : vector<16x64xf32>
    %173 = math.tanh %172 : vector<16x64xf32>
    %cst_49 = arith.constant 1.000000e+00 : f32
    %174 = vector.broadcast %cst_49 : f32 to vector<16x64xf32>
    %175 = arith.addf %174, %173 : vector<16x64xf32>
    %176 = arith.mulf %165, %175 : vector<16x64xf32>
    %177 = arith.truncf %176 : vector<16x64xf32> to vector<16x64xbf16>
    %c0_50 = arith.constant 0 : index
    %c0_51 = arith.constant 0 : index
    %c0_52 = arith.constant 0 : index
    %178 = vector.load %arg12[%c0_50, %c0_51, %c0_52] : memref<2x64x32xbf16, #tpu.memory_space<vmem>>, vector<1x64x32xbf16>
    %179 = vector.shape_cast %178 : vector<1x64x32xbf16> to vector<64x32xbf16>
    %cst_53 = arith.constant dense<0.000000e+00> : vector<16x32xf32>
    %180 = tpu.matmul %177, %179, %cst_53 {dimension_numbers = #tpu.dot_dimension_numbers<[1], [0], [0], [1], [0, 0, 1, 1], [], []>} : vector<16x64xbf16>, vector<64x32xbf16>, vector<16x32xf32> -> vector<16x32xf32>
    %c0_54 = arith.constant 0 : index
    %c0_55 = arith.constant 0 : index
    %c0_56 = arith.constant 0 : index
    %181 = vector.load %arg13[%c0_54, %c0_55, %c0_56] : memref<2x1x32xf32, #tpu.memory_space<vmem>>, vector<1x1x32xf32>
    %182 = vector.shape_cast %181 : vector<1x1x32xf32> to vector<1x32xf32>
    %183 = vector.broadcast %182 : vector<1x32xf32> to vector<16x32xf32>
    %184 = arith.addf %180, %183 : vector<16x32xf32>
    %185 = arith.addf %155, %184 : vector<16x32xf32>
    %c0_57 = arith.constant 0 : index
    %c0_58 = arith.constant 0 : index
    %c0_59 = arith.constant 0 : index
    %186 = vector.load %arg14[%c0_57, %c0_58, %c0_59] : memref<2x1x32xf32, #tpu.memory_space<vmem>>, vector<1x1x32xf32>
    %187 = vector.shape_cast %186 : vector<1x1x32xf32> to vector<1x32xf32>
    %c0_60 = arith.constant 0 : index
    %c0_61 = arith.constant 0 : index
    %c0_62 = arith.constant 0 : index
    %188 = vector.load %arg15[%c0_60, %c0_61, %c0_62] : memref<2x1x32xf32, #tpu.memory_space<vmem>>, vector<1x1x32xf32>
    %189 = vector.shape_cast %188 : vector<1x1x32xf32> to vector<1x32xf32>
    %cst_63 = arith.constant dense<0.000000e+00> : vector<16xf32>
    %190 = vector.multi_reduction <add>, %185, %cst_63 [1] : vector<16x32xf32> to vector<16xf32>
    %191 = vector.shape_cast %190 : vector<16xf32> to vector<16x1xf32>
    %cst_64 = arith.constant 3.200000e+01 : f32
    %192 = vector.broadcast %cst_64 : f32 to vector<16x1xf32>
    %193 = arith.divf %191, %192 : vector<16x1xf32>
    %194 = vector.broadcast %193 : vector<16x1xf32> to vector<16x32xf32>
    %195 = arith.subf %185, %194 : vector<16x32xf32>
    %196 = arith.mulf %195, %195 : vector<16x32xf32>
    %cst_65 = arith.constant dense<0.000000e+00> : vector<16xf32>
    %197 = vector.multi_reduction <add>, %196, %cst_65 [1] : vector<16x32xf32> to vector<16xf32>
    %198 = vector.shape_cast %197 : vector<16xf32> to vector<16x1xf32>
    %cst_66 = arith.constant 3.200000e+01 : f32
    %199 = vector.broadcast %cst_66 : f32 to vector<16x1xf32>
    %200 = arith.divf %198, %199 : vector<16x1xf32>
    %201 = vector.broadcast %193 : vector<16x1xf32> to vector<16x32xf32>
    %202 = arith.subf %185, %201 : vector<16x32xf32>
    %cst_67 = arith.constant 9.99999996E-13 : f32
    %203 = vector.broadcast %cst_67 : f32 to vector<16x1xf32>
    %204 = arith.addf %200, %203 : vector<16x1xf32>
    %205 = math.rsqrt %204 : vector<16x1xf32>
    %206 = vector.broadcast %205 : vector<16x1xf32> to vector<16x32xf32>
    %207 = arith.mulf %202, %206 : vector<16x32xf32>
    %208 = vector.broadcast %187 : vector<1x32xf32> to vector<16x32xf32>
    %209 = arith.mulf %207, %208 : vector<16x32xf32>
    %210 = vector.broadcast %189 : vector<1x32xf32> to vector<16x32xf32>
    %211 = arith.addf %209, %210 : vector<16x32xf32>
    %212 = arith.truncf %211 : vector<16x32xf32> to vector<16x32xbf16>
    %c1 = arith.constant 1 : index
    %c0_68 = arith.constant 0 : index
    %c0_69 = arith.constant 0 : index
    %213 = vector.load %arg4[%c1, %c0_68, %c0_69] : memref<2x32x96xbf16, #tpu.memory_space<vmem>>, vector<1x32x96xbf16>
    %214 = vector.shape_cast %213 : vector<1x32x96xbf16> to vector<32x96xbf16>
    %cst_70 = arith.constant dense<0.000000e+00> : vector<16x96xf32>
    %215 = tpu.matmul %212, %214, %cst_70 {dimension_numbers = #tpu.dot_dimension_numbers<[1], [0], [0], [1], [0, 0, 1, 1], [], []>} : vector<16x32xbf16>, vector<32x96xbf16>, vector<16x96xf32> -> vector<16x96xf32>
    %c1_71 = arith.constant 1 : index
    %c0_72 = arith.constant 0 : index
    %c0_73 = arith.constant 0 : index
    %216 = vector.load %arg5[%c1_71, %c0_72, %c0_73] : memref<2x1x96xf32, #tpu.memory_space<vmem>>, vector<1x1x96xf32>
    %217 = vector.shape_cast %216 : vector<1x1x96xf32> to vector<1x96xf32>
    %218 = vector.broadcast %217 : vector<1x96xf32> to vector<16x96xf32>
    %219 = arith.addf %215, %218 : vector<16x96xf32>
    %220 = vector.extract_strided_slice %219 {offsets = [0, 0], sizes = [8, 8], strides = [1, 1]} : vector<16x96xf32> to vector<8x8xf32>
    %221 = vector.extract_strided_slice %219 {offsets = [0, 8], sizes = [8, 8], strides = [1, 1]} : vector<16x96xf32> to vector<8x8xf32>
    %222 = vector.extract_strided_slice %219 {offsets = [0, 16], sizes = [8, 8], strides = [1, 1]} : vector<16x96xf32> to vector<8x8xf32>
    %223 = vector.extract_strided_slice %219 {offsets = [0, 24], sizes = [8, 8], strides = [1, 1]} : vector<16x96xf32> to vector<8x8xf32>
    %224 = vector.extract_strided_slice %219 {offsets = [8, 0], sizes = [8, 8], strides = [1, 1]} : vector<16x96xf32> to vector<8x8xf32>
    %225 = vector.extract_strided_slice %219 {offsets = [8, 8], sizes = [8, 8], strides = [1, 1]} : vector<16x96xf32> to vector<8x8xf32>
    %226 = vector.extract_strided_slice %219 {offsets = [8, 16], sizes = [8, 8], strides = [1, 1]} : vector<16x96xf32> to vector<8x8xf32>
    %227 = vector.extract_strided_slice %219 {offsets = [8, 24], sizes = [8, 8], strides = [1, 1]} : vector<16x96xf32> to vector<8x8xf32>
    %228 = vector.shape_cast %220 : vector<8x8xf32> to vector<1x8x8xf32>
    %229 = vector.shape_cast %221 : vector<8x8xf32> to vector<1x8x8xf32>
    %230 = vector.shape_cast %222 : vector<8x8xf32> to vector<1x8x8xf32>
    %231 = vector.shape_cast %223 : vector<8x8xf32> to vector<1x8x8xf32>
    %232 = vector.shape_cast %224 : vector<8x8xf32> to vector<1x8x8xf32>
    %233 = vector.shape_cast %225 : vector<8x8xf32> to vector<1x8x8xf32>
    %234 = vector.shape_cast %226 : vector<8x8xf32> to vector<1x8x8xf32>
    %235 = vector.shape_cast %227 : vector<8x8xf32> to vector<1x8x8xf32>
    %236 = tpu.concatenate %228, %229, %230, %231, %232, %233, %234, %235 in 0 : vector<1x8x8xf32>, vector<1x8x8xf32>, vector<1x8x8xf32>, vector<1x8x8xf32>, vector<1x8x8xf32>, vector<1x8x8xf32>, vector<1x8x8xf32>, vector<1x8x8xf32> -> vector<8x8x8xf32>
    %237 = vector.extract_strided_slice %219 {offsets = [0, 32], sizes = [8, 8], strides = [1, 1]} : vector<16x96xf32> to vector<8x8xf32>
    %238 = vector.extract_strided_slice %219 {offsets = [0, 40], sizes = [8, 8], strides = [1, 1]} : vector<16x96xf32> to vector<8x8xf32>
    %239 = vector.extract_strided_slice %219 {offsets = [0, 48], sizes = [8, 8], strides = [1, 1]} : vector<16x96xf32> to vector<8x8xf32>
    %240 = vector.extract_strided_slice %219 {offsets = [0, 56], sizes = [8, 8], strides = [1, 1]} : vector<16x96xf32> to vector<8x8xf32>
    %241 = vector.extract_strided_slice %219 {offsets = [8, 32], sizes = [8, 8], strides = [1, 1]} : vector<16x96xf32> to vector<8x8xf32>
    %242 = vector.extract_strided_slice %219 {offsets = [8, 40], sizes = [8, 8], strides = [1, 1]} : vector<16x96xf32> to vector<8x8xf32>
    %243 = vector.extract_strided_slice %219 {offsets = [8, 48], sizes = [8, 8], strides = [1, 1]} : vector<16x96xf32> to vector<8x8xf32>
    %244 = vector.extract_strided_slice %219 {offsets = [8, 56], sizes = [8, 8], strides = [1, 1]} : vector<16x96xf32> to vector<8x8xf32>
    %245 = vector.shape_cast %237 : vector<8x8xf32> to vector<1x8x8xf32>
    %246 = vector.shape_cast %238 : vector<8x8xf32> to vector<1x8x8xf32>
    %247 = vector.shape_cast %239 : vector<8x8xf32> to vector<1x8x8xf32>
    %248 = vector.shape_cast %240 : vector<8x8xf32> to vector<1x8x8xf32>
    %249 = vector.shape_cast %241 : vector<8x8xf32> to vector<1x8x8xf32>
    %250 = vector.shape_cast %242 : vector<8x8xf32> to vector<1x8x8xf32>
    %251 = vector.shape_cast %243 : vector<8x8xf32> to vector<1x8x8xf32>
    %252 = vector.shape_cast %244 : vector<8x8xf32> to vector<1x8x8xf32>
    %253 = tpu.concatenate %245, %246, %247, %248, %249, %250, %251, %252 in 0 : vector<1x8x8xf32>, vector<1x8x8xf32>, vector<1x8x8xf32>, vector<1x8x8xf32>, vector<1x8x8xf32>, vector<1x8x8xf32>, vector<1x8x8xf32>, vector<1x8x8xf32> -> vector<8x8x8xf32>
    %254 = vector.extract_strided_slice %219 {offsets = [0, 64], sizes = [8, 8], strides = [1, 1]} : vector<16x96xf32> to vector<8x8xf32>
    %255 = vector.extract_strided_slice %219 {offsets = [0, 72], sizes = [8, 8], strides = [1, 1]} : vector<16x96xf32> to vector<8x8xf32>
    %256 = vector.extract_strided_slice %219 {offsets = [0, 80], sizes = [8, 8], strides = [1, 1]} : vector<16x96xf32> to vector<8x8xf32>
    %257 = vector.extract_strided_slice %219 {offsets = [0, 88], sizes = [8, 8], strides = [1, 1]} : vector<16x96xf32> to vector<8x8xf32>
    %258 = vector.extract_strided_slice %219 {offsets = [8, 64], sizes = [8, 8], strides = [1, 1]} : vector<16x96xf32> to vector<8x8xf32>
    %259 = vector.extract_strided_slice %219 {offsets = [8, 72], sizes = [8, 8], strides = [1, 1]} : vector<16x96xf32> to vector<8x8xf32>
    %260 = vector.extract_strided_slice %219 {offsets = [8, 80], sizes = [8, 8], strides = [1, 1]} : vector<16x96xf32> to vector<8x8xf32>
    %261 = vector.extract_strided_slice %219 {offsets = [8, 88], sizes = [8, 8], strides = [1, 1]} : vector<16x96xf32> to vector<8x8xf32>
    %262 = vector.shape_cast %254 : vector<8x8xf32> to vector<1x8x8xf32>
    %263 = vector.shape_cast %255 : vector<8x8xf32> to vector<1x8x8xf32>
    %264 = vector.shape_cast %256 : vector<8x8xf32> to vector<1x8x8xf32>
    %265 = vector.shape_cast %257 : vector<8x8xf32> to vector<1x8x8xf32>
    %266 = vector.shape_cast %258 : vector<8x8xf32> to vector<1x8x8xf32>
    %267 = vector.shape_cast %259 : vector<8x8xf32> to vector<1x8x8xf32>
    %268 = vector.shape_cast %260 : vector<8x8xf32> to vector<1x8x8xf32>
    %269 = vector.shape_cast %261 : vector<8x8xf32> to vector<1x8x8xf32>
    %270 = tpu.concatenate %262, %263, %264, %265, %266, %267, %268, %269 in 0 : vector<1x8x8xf32>, vector<1x8x8xf32>, vector<1x8x8xf32>, vector<1x8x8xf32>, vector<1x8x8xf32>, vector<1x8x8xf32>, vector<1x8x8xf32>, vector<1x8x8xf32> -> vector<8x8x8xf32>
    %271 = arith.truncf %236 : vector<8x8x8xf32> to vector<8x8x8xbf16>
    %272 = arith.truncf %253 : vector<8x8x8xf32> to vector<8x8x8xbf16>
    "tpu.trace_start"() <{level = 10 : i32, message = "hqd,hkd->hqk"}> : () -> ()
    %cst_74 = arith.constant dense<0.000000e+00> : vector<8x8x8xf32>
    %273 = tpu.matmul %271, %272, %cst_74 {dimension_numbers = #tpu.dot_dimension_numbers<[2], [2], [1], [1], [0, 0, 0, 1, 1, 1], [0], [0]>} : vector<8x8x8xbf16>, vector<8x8x8xbf16>, vector<8x8x8xf32> -> vector<8x8x8xf32>
    "tpu.trace_stop"() : () -> ()
    %cst_75 = arith.constant 0.353553385 : f32
    %274 = vector.broadcast %cst_75 : f32 to vector<8x8x8xf32>
    %275 = arith.mulf %273, %274 : vector<8x8x8xf32>
    %cst_76 = arith.constant dense<0xFF800000> : vector<8x8xf32>
    %276 = vector.multi_reduction <maximumf>, %275, %cst_76 [2] : vector<8x8x8xf32> to vector<8x8xf32>
    %277 = vector.shape_cast %276 : vector<8x8xf32> to vector<8x8x1xf32>
    %278 = vector.broadcast %277 : vector<8x8x1xf32> to vector<8x8x8xf32>
    %279 = arith.subf %275, %278 : vector<8x8x8xf32>
    %280 = math.exp %279 : vector<8x8x8xf32>
    %cst_77 = arith.constant dense<0.000000e+00> : vector<8x8xf32>
    %281 = vector.multi_reduction <add>, %280, %cst_77 [2] : vector<8x8x8xf32> to vector<8x8xf32>
    %282 = vector.shape_cast %281 : vector<8x8xf32> to vector<8x8x1xf32>
    %283 = tpu.reciprocal %282 {approx = true} : vector<8x8x1xf32> -> vector<8x8x1xf32>
    %284 = vector.broadcast %283 : vector<8x8x1xf32> to vector<8x8x8xf32>
    %285 = arith.mulf %280, %284 : vector<8x8x8xf32>
    %286 = arith.truncf %285 : vector<8x8x8xf32> to vector<8x8x8xbf16>
    %287 = arith.truncf %270 : vector<8x8x8xf32> to vector<8x8x8xbf16>
    "tpu.trace_start"() <{level = 10 : i32, message = "hqk,hkd->hqd"}> : () -> ()
    %cst_78 = arith.constant dense<0.000000e+00> : vector<8x8x8xf32>
    %288 = tpu.matmul %286, %287, %cst_78 {dimension_numbers = #tpu.dot_dimension_numbers<[2], [1], [1], [2], [0, 0, 0, 1, 1, 2], [0], [0]>} : vector<8x8x8xbf16>, vector<8x8x8xbf16>, vector<8x8x8xf32> -> vector<8x8x8xf32>
    "tpu.trace_stop"() : () -> ()
    %289 = vector.extract_strided_slice %288 {offsets = [0, 0, 0], sizes = [1, 8, 8], strides = [1, 1, 1]} : vector<8x8x8xf32> to vector<1x8x8xf32>
    %290 = vector.shape_cast %289 : vector<1x8x8xf32> to vector<8x8xf32>
    %291 = vector.extract_strided_slice %288 {offsets = [1, 0, 0], sizes = [1, 8, 8], strides = [1, 1, 1]} : vector<8x8x8xf32> to vector<1x8x8xf32>
    %292 = vector.shape_cast %291 : vector<1x8x8xf32> to vector<8x8xf32>
    %293 = vector.extract_strided_slice %288 {offsets = [2, 0, 0], sizes = [1, 8, 8], strides = [1, 1, 1]} : vector<8x8x8xf32> to vector<1x8x8xf32>
    %294 = vector.shape_cast %293 : vector<1x8x8xf32> to vector<8x8xf32>
    %295 = vector.extract_strided_slice %288 {offsets = [3, 0, 0], sizes = [1, 8, 8], strides = [1, 1, 1]} : vector<8x8x8xf32> to vector<1x8x8xf32>
    %296 = vector.shape_cast %295 : vector<1x8x8xf32> to vector<8x8xf32>
    %297 = tpu.concatenate %290, %292, %294, %296 in 1 : vector<8x8xf32>, vector<8x8xf32>, vector<8x8xf32>, vector<8x8xf32> -> vector<8x32xf32>
    %298 = vector.extract_strided_slice %288 {offsets = [4, 0, 0], sizes = [1, 8, 8], strides = [1, 1, 1]} : vector<8x8x8xf32> to vector<1x8x8xf32>
    %299 = vector.shape_cast %298 : vector<1x8x8xf32> to vector<8x8xf32>
    %300 = vector.extract_strided_slice %288 {offsets = [5, 0, 0], sizes = [1, 8, 8], strides = [1, 1, 1]} : vector<8x8x8xf32> to vector<1x8x8xf32>
    %301 = vector.shape_cast %300 : vector<1x8x8xf32> to vector<8x8xf32>
    %302 = vector.extract_strided_slice %288 {offsets = [6, 0, 0], sizes = [1, 8, 8], strides = [1, 1, 1]} : vector<8x8x8xf32> to vector<1x8x8xf32>
    %303 = vector.shape_cast %302 : vector<1x8x8xf32> to vector<8x8xf32>
    %304 = vector.extract_strided_slice %288 {offsets = [7, 0, 0], sizes = [1, 8, 8], strides = [1, 1, 1]} : vector<8x8x8xf32> to vector<1x8x8xf32>
    %305 = vector.shape_cast %304 : vector<1x8x8xf32> to vector<8x8xf32>
    %306 = tpu.concatenate %299, %301, %303, %305 in 1 : vector<8x8xf32>, vector<8x8xf32>, vector<8x8xf32>, vector<8x8xf32> -> vector<8x32xf32>
    %307 = tpu.concatenate %297, %306 in 0 : vector<8x32xf32>, vector<8x32xf32> -> vector<16x32xf32>
    %308 = arith.truncf %307 : vector<16x32xf32> to vector<16x32xbf16>
    %c1_79 = arith.constant 1 : index
    %c0_80 = arith.constant 0 : index
    %c0_81 = arith.constant 0 : index
    %309 = vector.load %arg6[%c1_79, %c0_80, %c0_81] : memref<2x32x32xbf16, #tpu.memory_space<vmem>>, vector<1x32x32xbf16>
    %310 = vector.shape_cast %309 : vector<1x32x32xbf16> to vector<32x32xbf16>
    %cst_82 = arith.constant dense<0.000000e+00> : vector<16x32xf32>
    %311 = tpu.matmul %308, %310, %cst_82 {dimension_numbers = #tpu.dot_dimension_numbers<[1], [0], [0], [1], [0, 0, 1, 1], [], []>} : vector<16x32xbf16>, vector<32x32xbf16>, vector<16x32xf32> -> vector<16x32xf32>
    %c1_83 = arith.constant 1 : index
    %c0_84 = arith.constant 0 : index
    %c0_85 = arith.constant 0 : index
    %312 = vector.load %arg7[%c1_83, %c0_84, %c0_85] : memref<2x1x32xf32, #tpu.memory_space<vmem>>, vector<1x1x32xf32>
    %313 = vector.shape_cast %312 : vector<1x1x32xf32> to vector<1x32xf32>
    %314 = vector.broadcast %313 : vector<1x32xf32> to vector<16x32xf32>
    %315 = arith.addf %311, %314 : vector<16x32xf32>
    %316 = arith.addf %211, %315 : vector<16x32xf32>
    %c1_86 = arith.constant 1 : index
    %c0_87 = arith.constant 0 : index
    %c0_88 = arith.constant 0 : index
    %317 = vector.load %arg8[%c1_86, %c0_87, %c0_88] : memref<2x1x32xf32, #tpu.memory_space<vmem>>, vector<1x1x32xf32>
    %318 = vector.shape_cast %317 : vector<1x1x32xf32> to vector<1x32xf32>
    %c1_89 = arith.constant 1 : index
    %c0_90 = arith.constant 0 : index
    %c0_91 = arith.constant 0 : index
    %319 = vector.load %arg9[%c1_89, %c0_90, %c0_91] : memref<2x1x32xf32, #tpu.memory_space<vmem>>, vector<1x1x32xf32>
    %320 = vector.shape_cast %319 : vector<1x1x32xf32> to vector<1x32xf32>
    %cst_92 = arith.constant dense<0.000000e+00> : vector<16xf32>
    %321 = vector.multi_reduction <add>, %316, %cst_92 [1] : vector<16x32xf32> to vector<16xf32>
    %322 = vector.shape_cast %321 : vector<16xf32> to vector<16x1xf32>
    %cst_93 = arith.constant 3.200000e+01 : f32
    %323 = vector.broadcast %cst_93 : f32 to vector<16x1xf32>
    %324 = arith.divf %322, %323 : vector<16x1xf32>
    %325 = vector.broadcast %324 : vector<16x1xf32> to vector<16x32xf32>
    %326 = arith.subf %316, %325 : vector<16x32xf32>
    %327 = arith.mulf %326, %326 : vector<16x32xf32>
    %cst_94 = arith.constant dense<0.000000e+00> : vector<16xf32>
    %328 = vector.multi_reduction <add>, %327, %cst_94 [1] : vector<16x32xf32> to vector<16xf32>
    %329 = vector.shape_cast %328 : vector<16xf32> to vector<16x1xf32>
    %cst_95 = arith.constant 3.200000e+01 : f32
    %330 = vector.broadcast %cst_95 : f32 to vector<16x1xf32>
    %331 = arith.divf %329, %330 : vector<16x1xf32>
    %332 = vector.broadcast %324 : vector<16x1xf32> to vector<16x32xf32>
    %333 = arith.subf %316, %332 : vector<16x32xf32>
    %cst_96 = arith.constant 9.99999996E-13 : f32
    %334 = vector.broadcast %cst_96 : f32 to vector<16x1xf32>
    %335 = arith.addf %331, %334 : vector<16x1xf32>
    %336 = math.rsqrt %335 : vector<16x1xf32>
    %337 = vector.broadcast %336 : vector<16x1xf32> to vector<16x32xf32>
    %338 = arith.mulf %333, %337 : vector<16x32xf32>
    %339 = vector.broadcast %318 : vector<1x32xf32> to vector<16x32xf32>
    %340 = arith.mulf %338, %339 : vector<16x32xf32>
    %341 = vector.broadcast %320 : vector<1x32xf32> to vector<16x32xf32>
    %342 = arith.addf %340, %341 : vector<16x32xf32>
    %343 = arith.truncf %342 : vector<16x32xf32> to vector<16x32xbf16>
    %c1_97 = arith.constant 1 : index
    %c0_98 = arith.constant 0 : index
    %c0_99 = arith.constant 0 : index
    %344 = vector.load %arg10[%c1_97, %c0_98, %c0_99] : memref<2x32x64xbf16, #tpu.memory_space<vmem>>, vector<1x32x64xbf16>
    %345 = vector.shape_cast %344 : vector<1x32x64xbf16> to vector<32x64xbf16>
    %cst_100 = arith.constant dense<0.000000e+00> : vector<16x64xf32>
    %346 = tpu.matmul %343, %345, %cst_100 {dimension_numbers = #tpu.dot_dimension_numbers<[1], [0], [0], [1], [0, 0, 1, 1], [], []>} : vector<16x32xbf16>, vector<32x64xbf16>, vector<16x64xf32> -> vector<16x64xf32>
    %c1_101 = arith.constant 1 : index
    %c0_102 = arith.constant 0 : index
    %c0_103 = arith.constant 0 : index
    %347 = vector.load %arg11[%c1_101, %c0_102, %c0_103] : memref<2x1x64xf32, #tpu.memory_space<vmem>>, vector<1x1x64xf32>
    %348 = vector.shape_cast %347 : vector<1x1x64xf32> to vector<1x64xf32>
    %349 = vector.broadcast %348 : vector<1x64xf32> to vector<16x64xf32>
    %350 = arith.addf %346, %349 : vector<16x64xf32>
    %cst_104 = arith.constant 5.000000e-01 : f32
    %351 = vector.broadcast %cst_104 : f32 to vector<16x64xf32>
    %352 = arith.mulf %351, %350 : vector<16x64xf32>
    %cst_105 = arith.constant 4.471500e-02 : f32
    %353 = vector.broadcast %cst_105 : f32 to vector<16x64xf32>
    %354 = arith.mulf %353, %350 : vector<16x64xf32>
    %355 = arith.mulf %354, %350 : vector<16x64xf32>
    %356 = arith.mulf %355, %350 : vector<16x64xf32>
    %357 = arith.addf %350, %356 : vector<16x64xf32>
    %cst_106 = arith.constant 0.797884583 : f32
    %358 = vector.broadcast %cst_106 : f32 to vector<16x64xf32>
    %359 = arith.mulf %358, %357 : vector<16x64xf32>
    %360 = math.tanh %359 : vector<16x64xf32>
    %cst_107 = arith.constant 1.000000e+00 : f32
    %361 = vector.broadcast %cst_107 : f32 to vector<16x64xf32>
    %362 = arith.addf %361, %360 : vector<16x64xf32>
    %363 = arith.mulf %352, %362 : vector<16x64xf32>
    %364 = arith.truncf %363 : vector<16x64xf32> to vector<16x64xbf16>
    %c1_108 = arith.constant 1 : index
    %c0_109 = arith.constant 0 : index
    %c0_110 = arith.constant 0 : index
    %365 = vector.load %arg12[%c1_108, %c0_109, %c0_110] : memref<2x64x32xbf16, #tpu.memory_space<vmem>>, vector<1x64x32xbf16>
    %366 = vector.shape_cast %365 : vector<1x64x32xbf16> to vector<64x32xbf16>
    %cst_111 = arith.constant dense<0.000000e+00> : vector<16x32xf32>
    %367 = tpu.matmul %364, %366, %cst_111 {dimension_numbers = #tpu.dot_dimension_numbers<[1], [0], [0], [1], [0, 0, 1, 1], [], []>} : vector<16x64xbf16>, vector<64x32xbf16>, vector<16x32xf32> -> vector<16x32xf32>
    %c1_112 = arith.constant 1 : index
    %c0_113 = arith.constant 0 : index
    %c0_114 = arith.constant 0 : index
    %368 = vector.load %arg13[%c1_112, %c0_113, %c0_114] : memref<2x1x32xf32, #tpu.memory_space<vmem>>, vector<1x1x32xf32>
    %369 = vector.shape_cast %368 : vector<1x1x32xf32> to vector<1x32xf32>
    %370 = vector.broadcast %369 : vector<1x32xf32> to vector<16x32xf32>
    %371 = arith.addf %367, %370 : vector<16x32xf32>
    %372 = arith.addf %342, %371 : vector<16x32xf32>
    %c1_115 = arith.constant 1 : index
    %c0_116 = arith.constant 0 : index
    %c0_117 = arith.constant 0 : index
    %373 = vector.load %arg14[%c1_115, %c0_116, %c0_117] : memref<2x1x32xf32, #tpu.memory_space<vmem>>, vector<1x1x32xf32>
    %374 = vector.shape_cast %373 : vector<1x1x32xf32> to vector<1x32xf32>
    %c1_118 = arith.constant 1 : index
    %c0_119 = arith.constant 0 : index
    %c0_120 = arith.constant 0 : index
    %375 = vector.load %arg15[%c1_118, %c0_119, %c0_120] : memref<2x1x32xf32, #tpu.memory_space<vmem>>, vector<1x1x32xf32>
    %376 = vector.shape_cast %375 : vector<1x1x32xf32> to vector<1x32xf32>
    %cst_121 = arith.constant dense<0.000000e+00> : vector<16xf32>
    %377 = vector.multi_reduction <add>, %372, %cst_121 [1] : vector<16x32xf32> to vector<16xf32>
    %378 = vector.shape_cast %377 : vector<16xf32> to vector<16x1xf32>
    %cst_122 = arith.constant 3.200000e+01 : f32
    %379 = vector.broadcast %cst_122 : f32 to vector<16x1xf32>
    %380 = arith.divf %378, %379 : vector<16x1xf32>
    %381 = vector.broadcast %380 : vector<16x1xf32> to vector<16x32xf32>
    %382 = arith.subf %372, %381 : vector<16x32xf32>
    %383 = arith.mulf %382, %382 : vector<16x32xf32>
    %cst_123 = arith.constant dense<0.000000e+00> : vector<16xf32>
    %384 = vector.multi_reduction <add>, %383, %cst_123 [1] : vector<16x32xf32> to vector<16xf32>
    %385 = vector.shape_cast %384 : vector<16xf32> to vector<16x1xf32>
    %cst_124 = arith.constant 3.200000e+01 : f32
    %386 = vector.broadcast %cst_124 : f32 to vector<16x1xf32>
    %387 = arith.divf %385, %386 : vector<16x1xf32>
    %388 = vector.broadcast %380 : vector<16x1xf32> to vector<16x32xf32>
    %389 = arith.subf %372, %388 : vector<16x32xf32>
    %cst_125 = arith.constant 9.99999996E-13 : f32
    %390 = vector.broadcast %cst_125 : f32 to vector<16x1xf32>
    %391 = arith.addf %387, %390 : vector<16x1xf32>
    %392 = math.rsqrt %391 : vector<16x1xf32>
    %393 = vector.broadcast %392 : vector<16x1xf32> to vector<16x32xf32>
    %394 = arith.mulf %389, %393 : vector<16x32xf32>
    %395 = vector.broadcast %374 : vector<1x32xf32> to vector<16x32xf32>
    %396 = arith.mulf %394, %395 : vector<16x32xf32>
    %397 = vector.broadcast %376 : vector<1x32xf32> to vector<16x32xf32>
    %398 = arith.addf %396, %397 : vector<16x32xf32>
    %399 = vector.extract_strided_slice %398 {offsets = [0, 0], sizes = [8, 32], strides = [1, 1]} : vector<16x32xf32> to vector<8x32xf32>
    %400 = vector.extract_strided_slice %399 {offsets = [0, 0], sizes = [1, 32], strides = [1, 1]} : vector<8x32xf32> to vector<1x32xf32>
    %401 = vector.extract_strided_slice %399 {offsets = [1, 0], sizes = [1, 32], strides = [1, 1]} : vector<8x32xf32> to vector<1x32xf32>
    %402 = vector.extract_strided_slice %399 {offsets = [2, 0], sizes = [1, 32], strides = [1, 1]} : vector<8x32xf32> to vector<1x32xf32>
    %403 = vector.extract_strided_slice %399 {offsets = [3, 0], sizes = [1, 32], strides = [1, 1]} : vector<8x32xf32> to vector<1x32xf32>
    %404 = vector.extract_strided_slice %399 {offsets = [4, 0], sizes = [1, 32], strides = [1, 1]} : vector<8x32xf32> to vector<1x32xf32>
    %405 = vector.extract_strided_slice %399 {offsets = [5, 0], sizes = [1, 32], strides = [1, 1]} : vector<8x32xf32> to vector<1x32xf32>
    %406 = vector.extract_strided_slice %399 {offsets = [6, 0], sizes = [1, 32], strides = [1, 1]} : vector<8x32xf32> to vector<1x32xf32>
    %407 = vector.extract_strided_slice %399 {offsets = [7, 0], sizes = [1, 32], strides = [1, 1]} : vector<8x32xf32> to vector<1x32xf32>
    %408 = tpu.concatenate %400, %401, %402, %403, %404, %405, %406, %407 in 1 : vector<1x32xf32>, vector<1x32xf32>, vector<1x32xf32>, vector<1x32xf32>, vector<1x32xf32>, vector<1x32xf32>, vector<1x32xf32>, vector<1x32xf32> -> vector<1x256xf32>
    %409 = vector.extract_strided_slice %398 {offsets = [8, 0], sizes = [8, 32], strides = [1, 1]} : vector<16x32xf32> to vector<8x32xf32>
    %410 = vector.extract_strided_slice %409 {offsets = [0, 0], sizes = [1, 32], strides = [1, 1]} : vector<8x32xf32> to vector<1x32xf32>
    %411 = vector.extract_strided_slice %409 {offsets = [1, 0], sizes = [1, 32], strides = [1, 1]} : vector<8x32xf32> to vector<1x32xf32>
    %412 = vector.extract_strided_slice %409 {offsets = [2, 0], sizes = [1, 32], strides = [1, 1]} : vector<8x32xf32> to vector<1x32xf32>
    %413 = vector.extract_strided_slice %409 {offsets = [3, 0], sizes = [1, 32], strides = [1, 1]} : vector<8x32xf32> to vector<1x32xf32>
    %414 = vector.extract_strided_slice %409 {offsets = [4, 0], sizes = [1, 32], strides = [1, 1]} : vector<8x32xf32> to vector<1x32xf32>
    %415 = vector.extract_strided_slice %409 {offsets = [5, 0], sizes = [1, 32], strides = [1, 1]} : vector<8x32xf32> to vector<1x32xf32>
    %416 = vector.extract_strided_slice %409 {offsets = [6, 0], sizes = [1, 32], strides = [1, 1]} : vector<8x32xf32> to vector<1x32xf32>
    %417 = vector.extract_strided_slice %409 {offsets = [7, 0], sizes = [1, 32], strides = [1, 1]} : vector<8x32xf32> to vector<1x32xf32>
    %418 = tpu.concatenate %410, %411, %412, %413, %414, %415, %416, %417 in 1 : vector<1x32xf32>, vector<1x32xf32>, vector<1x32xf32>, vector<1x32xf32>, vector<1x32xf32>, vector<1x32xf32>, vector<1x32xf32>, vector<1x32xf32> -> vector<1x256xf32>
    %419 = tpu.concatenate %408, %418 in 0 : vector<1x256xf32>, vector<1x256xf32> -> vector<2x256xf32>
    %c0_126 = arith.constant 0 : index
    %c0_127 = arith.constant 0 : index
    %420 = vector.load %arg16[%c0_126, %c0_127] : memref<2x256xf32, #tpu.memory_space<vmem>>, vector<2x256xf32>
    tpu.vector_store %arg16[%c0_126, %c0_127], %419 {strides = array<i32>} : memref<2x256xf32, #tpu.memory_space<vmem>>, vector<2x256xf32>,
    return
  }
  func.func @transform_0(%arg0: i32) -> (i32, i32) {
    %c0_i32 = arith.constant 0 : i32
    %c0_i32_0 = arith.constant 0 : i32
    return %arg0, %c0_i32 : i32, i32
  }
  func.func @transform_1(%arg0: i32) -> (i32, i32) {
    %c0_i32 = arith.constant 0 : i32
    %c0_i32_0 = arith.constant 0 : i32
    %c0_i32_1 = arith.constant 0 : i32
    return %c0_i32, %c0_i32_0 : i32, i32
  }
  func.func @transform_2(%arg0: i32) -> (i32, i32) {
    %c0_i32 = arith.constant 0 : i32
    %c0_i32_0 = arith.constant 0 : i32
    %c0_i32_1 = arith.constant 0 : i32
    return %c0_i32, %c0_i32_0 : i32, i32
  }
  func.func @transform_3(%arg0: i32) -> (i32, i32, i32) {
    %c0_i32 = arith.constant 0 : i32
    %c0_i32_0 = arith.constant 0 : i32
    %c0_i32_1 = arith.constant 0 : i32
    %c0_i32_2 = arith.constant 0 : i32
    return %c0_i32, %c0_i32_0, %c0_i32_1 : i32, i32, i32
  }
  func.func @transform_4(%arg0: i32) -> (i32, i32, i32) {
    %c0_i32 = arith.constant 0 : i32
    %c0_i32_0 = arith.constant 0 : i32
    %c0_i32_1 = arith.constant 0 : i32
    %c0_i32_2 = arith.constant 0 : i32
    return %c0_i32, %c0_i32_0, %c0_i32_1 : i32, i32, i32
  }
  func.func @transform_5(%arg0: i32) -> (i32, i32, i32) {
    %c0_i32 = arith.constant 0 : i32
    %c0_i32_0 = arith.constant 0 : i32
    %c0_i32_1 = arith.constant 0 : i32
    %c0_i32_2 = arith.constant 0 : i32
    return %c0_i32, %c0_i32_0, %c0_i32_1 : i32, i32, i32
  }
  func.func @transform_6(%arg0: i32) -> (i32, i32, i32) {
    %c0_i32 = arith.constant 0 : i32
    %c0_i32_0 = arith.constant 0 : i32
    %c0_i32_1 = arith.constant 0 : i32
    %c0_i32_2 = arith.constant 0 : i32
    return %c0_i32, %c0_i32_0, %c0_i32_1 : i32, i32, i32
  }
  func.func @transform_7(%arg0: i32) -> (i32, i32, i32) {
    %c0_i32 = arith.constant 0 : i32
    %c0_i32_0 = arith.constant 0 : i32
    %c0_i32_1 = arith.constant 0 : i32
    %c0_i32_2 = arith.constant 0 : i32
    return %c0_i32, %c0_i32_0, %c0_i32_1 : i32, i32, i32
  }
  func.func @transform_8(%arg0: i32) -> (i32, i32, i32) {
    %c0_i32 = arith.constant 0 : i32
    %c0_i32_0 = arith.constant 0 : i32
    %c0_i32_1 = arith.constant 0 : i32
    %c0_i32_2 = arith.constant 0 : i32
    return %c0_i32, %c0_i32_0, %c0_i32_1 : i32, i32, i32
  }
  func.func @transform_9(%arg0: i32) -> (i32, i32, i32) {
    %c0_i32 = arith.constant 0 : i32
    %c0_i32_0 = arith.constant 0 : i32
    %c0_i32_1 = arith.constant 0 : i32
    %c0_i32_2 = arith.constant 0 : i32
    return %c0_i32, %c0_i32_0, %c0_i32_1 : i32, i32, i32
  }
  func.func @transform_10(%arg0: i32) -> (i32, i32, i32) {
    %c0_i32 = arith.constant 0 : i32
    %c0_i32_0 = arith.constant 0 : i32
    %c0_i32_1 = arith.constant 0 : i32
    %c0_i32_2 = arith.constant 0 : i32
    return %c0_i32, %c0_i32_0, %c0_i32_1 : i32, i32, i32
  }
  func.func @transform_11(%arg0: i32) -> (i32, i32, i32) {
    %c0_i32 = arith.constant 0 : i32
    %c0_i32_0 = arith.constant 0 : i32
    %c0_i32_1 = arith.constant 0 : i32
    %c0_i32_2 = arith.constant 0 : i32
    return %c0_i32, %c0_i32_0, %c0_i32_1 : i32, i32, i32
  }
  func.func @transform_12(%arg0: i32) -> (i32, i32, i32) {
    %c0_i32 = arith.constant 0 : i32
    %c0_i32_0 = arith.constant 0 : i32
    %c0_i32_1 = arith.constant 0 : i32
    %c0_i32_2 = arith.constant 0 : i32
    return %c0_i32, %c0_i32_0, %c0_i32_1 : i32, i32, i32
  }
  func.func @transform_13(%arg0: i32) -> (i32, i32, i32) {
    %c0_i32 = arith.constant 0 : i32
    %c0_i32_0 = arith.constant 0 : i32
    %c0_i32_1 = arith.constant 0 : i32
    %c0_i32_2 = arith.constant 0 : i32
    return %c0_i32, %c0_i32_0, %c0_i32_1 : i32, i32, i32
  }
  func.func @transform_14(%arg0: i32) -> (i32, i32, i32) {
    %c0_i32 = arith.constant 0 : i32
    %c0_i32_0 = arith.constant 0 : i32
    %c0_i32_1 = arith.constant 0 : i32
    %c0_i32_2 = arith.constant 0 : i32
    return %c0_i32, %c0_i32_0, %c0_i32_1 : i32, i32, i32
  }
  func.func @transform_15(%arg0: i32) -> (i32, i32) {
    %c0_i32 = arith.constant 0 : i32
    %c0_i32_0 = arith.constant 0 : i32
    return %arg0, %c0_i32 : i32, i32
  }
}

</mosaic_0001>

<llo_original>
// kernel: transformer_classifier.2
$region0: #{transformer_classifier.2}
  #allocation0 [shape = 'u32[]', space=smem, size = 0x4, offset = 0x4, fixed_abs, tag = 'smem constant byte address 0x4 - core index']
  #allocation1 [shape = 'u32[144,128]{1,0:T(1,128)}', space=vmem, size = 0x12000, scoped, tag = 'internal scratch']
  %s0 = inlined_call_operand.vmem [shape: f32[16,32], index: 0, kind: input, shape index: {}]
  %s1 = inlined_call_operand.hbm [shape: f32[1,32], index: 1, kind: input, shape index: {}]
  %s2 = inlined_call_operand.hbm [shape: f32[1,32], index: 2, kind: input, shape index: {}]
  %s3 = inlined_call_operand.hbm [shape: bf16[2,32,96], index: 3, kind: input, shape index: {}]
  %s4 = inlined_call_operand.hbm [shape: f32[2,1,96], index: 4, kind: input, shape index: {}]
  %s5 = inlined_call_operand.hbm [shape: bf16[2,32,32], index: 5, kind: input, shape index: {}]
  %s6 = inlined_call_operand.hbm [shape: f32[2,1,32], index: 6, kind: input, shape index: {}]
  %s7 = inlined_call_operand.hbm [shape: f32[2,1,32], index: 7, kind: input, shape index: {}]
  %s8 = inlined_call_operand.hbm [shape: f32[2,1,32], index: 8, kind: input, shape index: {}]
  %s9 = inlined_call_operand.hbm [shape: bf16[2,32,64], index: 9, kind: input, shape index: {}]
  %s10 = inlined_call_operand.hbm [shape: f32[2,1,64], index: 10, kind: input, shape index: {}]
  %s11 = inlined_call_operand.vmem [shape: bf16[2,64,32], index: 11, kind: input, shape index: {}]
  %s12 = inlined_call_operand.hbm [shape: f32[2,1,32], index: 12, kind: input, shape index: {}]
  %s13 = inlined_call_operand.hbm [shape: f32[2,1,32], index: 13, kind: input, shape index: {}]
  %s14 = inlined_call_operand.hbm [shape: f32[2,1,32], index: 14, kind: input, shape index: {}]
  %s15 = inlined_call_operand.vmem [shape: f32[2,256], index: 15, kind: output, shape index: {}]
  %s16 = sld [smem:[#allocation0]]
  $region122: #{transformer_classifier.2} parent=0
    _
  %s18 = ssub.s32 1, %s16
  %s19 = scalar_select 0, %s18, %s16
  $region1: #{transformer_classifier.2} parent=0
    #allocation2 [shape = 'u8[512]{0}', space=vmem, size = 0x400, scoped, tag = 'input window, operand 1, single buffered']
    #allocation3 [shape = 's32[1]{0}', space=sflag, size = 0x4, scoped, tag = 'scoped memory for transformer_classifier.2']
    #allocation4 [shape = 'u8[512]{0}', space=vmem, size = 0x400, scoped, tag = 'input window, operand 2, single buffered']
    #allocation5 [shape = 's32[1]{0}', space=sflag, size = 0x4, scoped, tag = 'scoped memory for transformer_classifier.2']
    #allocation6 [shape = 'u8[16384]{0}', space=vmem, size = 0x4000, scoped, tag = 'input window, operand 3, single buffered']
    #allocation7 [shape = 'u8[1024]{0}', space=vmem, size = 0x400, scoped, tag = 'input window, operand 4, single buffered']
    #allocation8 [shape = 's32[1]{0}', space=sflag, size = 0x4, scoped, tag = 'scoped memory for transformer_classifier.2']
    #allocation9 [shape = 'u8[16384]{0}', space=vmem, size = 0x4000, scoped, tag = 'input window, operand 5, single buffered']
    #allocation10 [shape = 'u8[1024]{0}', space=vmem, size = 0x400, scoped, tag = 'input window, operand 6, single buffered']
    #allocation11 [shape = 's32[1]{0}', space=sflag, size = 0x4, scoped, tag = 'scoped memory for transformer_classifier.2']
    #allocation12 [shape = 'u8[1024]{0}', space=vmem, size = 0x400, scoped, tag = 'input window, operand 7, single buffered']
    #allocation13 [shape = 'u8[1024]{0}', space=vmem, size = 0x400, scoped, tag = 'input window, operand 8, single buffered']
    #allocation14 [shape = 's32[1]{0}', space=sflag, size = 0x4, scoped, tag = 'scoped memory for transformer_classifier.2']
    #allocation15 [shape = 'u8[16384]{0}', space=vmem, size = 0x4000, scoped, tag = 'input window, operand 9, single buffered']
    #allocation16 [shape = 'u8[1024]{0}', space=vmem, size = 0x400, scoped, tag = 'input window, operand 10, single buffered']
    #allocation17 [shape = 's32[1]{0}', space=sflag, size = 0x4, scoped, tag = 'scoped memory for transformer_classifier.2']
    #allocation18 [shape = 'u8[1024]{0}', space=vmem, size = 0x400, scoped, tag = 'input window, operand 12, single buffered']
    #allocation19 [shape = 'u8[1024]{0}', space=vmem, size = 0x400, scoped, tag = 'input window, operand 13, single buffered']
    #allocation20 [shape = 's32[1]{0}', space=sflag, size = 0x4, scoped, tag = 'scoped memory for transformer_classifier.2']
    #allocation21 [shape = 'u8[1024]{0}', space=vmem, size = 0x400, scoped, tag = 'input window, operand 14, single buffered']
    %20 = vsyncpa [#allocation3], 0
    %21 = vsyncpa [#allocation5], 0
    %22 = vsyncpa [#allocation8], 0
    %23 = vsyncpa [#allocation11], 0
    %24 = vsyncpa [#allocation14], 0
    %25 = vsyncpa [#allocation17], 0
    %26 = vsyncpa [#allocation20], 0
    // Predicated region
    $region2: #{transformer_classifier.2} parent=1 // pred_check
      _
    $region3: #{transformer_classifier.2} parent=1 // pred_check_branch
      %28 = sbr.rel (0) target = $region5
    $region4: #{transformer_classifier.2} parent=1 // pred_region
      _
    $region5: #{transformer_classifier.2} parent=1 // pred_fallthru
      _
    // Predicated region
    $region6: #{transformer_classifier.2} parent=1 // pred_check
      _
    $region7: #{transformer_classifier.2} parent=1 // pred_check_branch
      %30 = sbr.rel (0) target = $region9
    $region8: #{transformer_classifier.2} parent=1 // pred_region
      %s32 = ssub.s32 16, 16
      %33 = vsyncadd [#allocation3], %s32
      %s35 = sshll.u32 [#allocation2], 4
      %s36 = int_to_ptr.vmem [resolvable:$true] %s35
      %38 = dma.hbm_to_vmem [thread:$0]  %s1, 16, %s36, [#allocation3]
    $region9: #{transformer_classifier.2} parent=1 // pred_fallthru
      _
    // Predicated region
    $region10: #{transformer_classifier.2} parent=1 // pred_check
      _
    $region11: #{transformer_classifier.2} parent=1 // pred_check_branch
      %40 = sbr.rel (0) target = $region13
    $region12: #{transformer_classifier.2} parent=1 // pred_region
      %s42 = ssub.s32 16, 16
      %43 = vsyncadd [#allocation5], %s42
      %s45 = sshll.u32 [#allocation4], 4
      %s46 = int_to_ptr.vmem [resolvable:$true] %s45
      %48 = dma.hbm_to_vmem [thread:$0]  %s2, 16, %s46, [#allocation5]
    $region13: #{transformer_classifier.2} parent=1 // pred_fallthru
      _
    // Predicated region
    $region14: #{transformer_classifier.2} parent=1 // pred_check
      _
    $region15: #{transformer_classifier.2} parent=1 // pred_check_branch
      %50 = sbr.rel (0) target = $region17
    $region16: #{transformer_classifier.2} parent=1 // pred_region
      %s52 = ssub.s32 512, 512
      %53 = vsyncadd [#allocation5], %s52
      %s54 = sshll.u32 [#allocation6], 4
      %s55 = int_to_ptr.vmem [resolvable:$true] %s54
      %60 = dma.hbm_to_vmem [thread:$0]  %s3, 512, %s55, [#allocation5], 64, 64, 4
    $region17: #{transformer_classifier.2} parent=1 // pred_fallthru
      _
    // Predicated region
    $region18: #{transformer_classifier.2} parent=1 // pred_check
      _
    $region19: #{transformer_classifier.2} parent=1 // pred_check_branch
      %62 = sbr.rel (0) target = $region21
    $region20: #{transformer_classifier.2} parent=1 // pred_region
      %s64 = ssub.s32 32, 32
      %65 = vsyncadd [#allocation8], %s64
      %s66 = sshll.u32 [#allocation7], 4
      %s67 = int_to_ptr.vmem [resolvable:$true] %s66
      %72 = dma.hbm_to_vmem [thread:$0]  %s4, 32, %s67, [#allocation8], 16, 16, 1
    $region21: #{transformer_classifier.2} parent=1 // pred_fallthru
      _
    // Predicated region
    $region22: #{transformer_classifier.2} parent=1 // pred_check
      _
    $region23: #{transformer_classifier.2} parent=1 // pred_check_branch
      %74 = sbr.rel (0) target = $region25
    $region24: #{transformer_classifier.2} parent=1 // pred_region
      %s76 = ssub.s32 512, 512
      %77 = vsyncadd [#allocation8], %s76
      %s78 = sshll.u32 [#allocation9], 4
      %s79 = int_to_ptr.vmem [resolvable:$true] %s78
      %84 = dma.hbm_to_vmem [thread:$0]  %s5, 512, %s79, [#allocation8], 64, 64, 4
    $region25: #{transformer_classifier.2} parent=1 // pred_fallthru
      _
    // Predicated region
    $region26: #{transformer_classifier.2} parent=1 // pred_check
      _
    $region27: #{transformer_classifier.2} parent=1 // pred_check_branch
      %86 = sbr.rel (0) target = $region29
    $region28: #{transformer_classifier.2} parent=1 // pred_region
      %s88 = ssub.s32 32, 32
      %89 = vsyncadd [#allocation11], %s88
      %s90 = sshll.u32 [#allocation10], 4
      %s91 = int_to_ptr.vmem [resolvable:$true] %s90
      %96 = dma.hbm_to_vmem [thread:$0]  %s6, 32, %s91, [#allocation11], 16, 16, 1
    $region29: #{transformer_classifier.2} parent=1 // pred_fallthru
      _
    // Predicated region
    $region30: #{transformer_classifier.2} parent=1 // pred_check
      _
    $region31: #{transformer_classifier.2} parent=1 // pred_check_branch
      %98 = sbr.rel (0) target = $region33
    $region32: #{transformer_classifier.2} parent=1 // pred_region
      %s100 = ssub.s32 32, 32
      %101 = vsyncadd [#allocation11], %s100
      %s102 = sshll.u32 [#allocation12], 4
      %s103 = int_to_ptr.vmem [resolvable:$true] %s102
      %108 = dma.hbm_to_vmem [thread:$0]  %s7, 32, %s103, [#allocation11], 16, 16, 1
    $region33: #{transformer_classifier.2} parent=1 // pred_fallthru
      _
    // Predicated region
    $region34: #{transformer_classifier.2} parent=1 // pred_check
      _
    $region35: #{transformer_classifier.2} parent=1 // pred_check_branch
      %110 = sbr.rel (0) target = $region37
    $region36: #{transformer_classifier.2} parent=1 // pred_region
      %s112 = ssub.s32 32, 32
      %113 = vsyncadd [#allocation14], %s112
      %s114 = sshll.u32 [#allocation13], 4
      %s115 = int_to_ptr.vmem [resolvable:$true] %s114
      %120 = dma.hbm_to_vmem [thread:$0]  %s8, 32, %s115, [#allocation14], 16, 16, 1
    $region37: #{transformer_classifier.2} parent=1 // pred_fallthru
      _
    // Predicated region
    $region38: #{transformer_classifier.2} parent=1 // pred_check
      _
    $region39: #{transformer_classifier.2} parent=1 // pred_check_branch
      %122 = sbr.rel (0) target = $region41
    $region40: #{transformer_classifier.2} parent=1 // pred_region
      %s124 = ssub.s32 512, 512
      %125 = vsyncadd [#allocation14], %s124
      %s126 = sshll.u32 [#allocation15], 4
      %s127 = int_to_ptr.vmem [resolvable:$true] %s126
      %132 = dma.hbm_to_vmem [thread:$0]  %s9, 512, %s127, [#allocation14], 64, 64, 4
    $region41: #{transformer_classifier.2} parent=1 // pred_fallthru
      _
    // Predicated region
    $region42: #{transformer_classifier.2} parent=1 // pred_check
      _
    $region43: #{transformer_classifier.2} parent=1 // pred_check_branch
      %134 = sbr.rel (0) target = $region45
    $region44: #{transformer_classifier.2} parent=1 // pred_region
      %s136 = ssub.s32 32, 32
      %137 = vsyncadd [#allocation17], %s136
      %s138 = sshll.u32 [#allocation16], 4
      %s139 = int_to_ptr.vmem [resolvable:$true] %s138
      %144 = dma.hbm_to_vmem [thread:$0]  %s10, 32, %s139, [#allocation17], 16, 16, 1
    $region45: #{transformer_classifier.2} parent=1 // pred_fallthru
      _
    // Predicated region
    $region46: #{transformer_classifier.2} parent=1 // pred_check
      _
    $region47: #{transformer_classifier.2} parent=1 // pred_check_branch
      %146 = sbr.rel (0) target = $region49
    $region48: #{transformer_classifier.2} parent=1 // pred_region
      _
    $region49: #{transformer_classifier.2} parent=1 // pred_fallthru
      _
    // Predicated region
    $region50: #{transformer_classifier.2} parent=1 // pred_check
      _
    $region51: #{transformer_classifier.2} parent=1 // pred_check_branch
      %148 = sbr.rel (0) target = $region53
    $region52: #{transformer_classifier.2} parent=1 // pred_region
      %s150 = ssub.s32 32, 32
      %151 = vsyncadd [#allocation17], %s150
      %s152 = sshll.u32 [#allocation18], 4
      %s153 = int_to_ptr.vmem [resolvable:$true] %s152
      %158 = dma.hbm_to_vmem [thread:$0]  %s12, 32, %s153, [#allocation17], 16, 16, 1
    $region53: #{transformer_classifier.2} parent=1 // pred_fallthru
      _
    // Predicated region
    $region54: #{transformer_classifier.2} parent=1 // pred_check
      _
    $region55: #{transformer_classifier.2} parent=1 // pred_check_branch
      %160 = sbr.rel (0) target = $region57
    $region56: #{transformer_classifier.2} parent=1 // pred_region
      %s162 = ssub.s32 32, 32
      %163 = vsyncadd [#allocation20], %s162
      %s164 = sshll.u32 [#allocation19], 4
      %s165 = int_to_ptr.vmem [resolvable:$true] %s164
      %170 = dma.hbm_to_vmem [thread:$0]  %s13, 32, %s165, [#allocation20], 16, 16, 1
    $region57: #{transformer_classifier.2} parent=1 // pred_fallthru
      _
    // Predicated region
    $region58: #{transformer_classifier.2} parent=1 // pred_check
      _
    $region59: #{transformer_classifier.2} parent=1 // pred_check_branch
      %172 = sbr.rel (0) target = $region61
    $region60: #{transformer_classifier.2} parent=1 // pred_region
      %s174 = ssub.s32 32, 32
      %175 = vsyncadd [#allocation20], %s174
      %s176 = sshll.u32 [#allocation21], 4
      %s177 = int_to_ptr.vmem [resolvable:$true] %s176
      %182 = dma.hbm_to_vmem [thread:$0]  %s14, 32, %s177, [#allocation20], 16, 16, 1
    $region61: #{transformer_classifier.2} parent=1 // pred_fallthru
      _
    // Predicated region
    $region62: #{transformer_classifier.2} parent=1 // pred_check
      _
    $region63: #{transformer_classifier.2} parent=1 // pred_check_branch
      %184 = sbr.rel (0) target = $region65
    $region64: #{transformer_classifier.2} parent=1 // pred_region
      %185 = dma.done [#allocation3], 16
    $region65: #{transformer_classifier.2} parent=1 // pred_fallthru
      _
    // Predicated region
    $region66: #{transformer_classifier.2} parent=1 // pred_check
      _
    $region67: #{transformer_classifier.2} parent=1 // pred_check_branch
      %187 = sbr.rel (0) target = $region69
    $region68: #{transformer_classifier.2} parent=1 // pred_region
      %188 = dma.done [#allocation5], 16
    $region69: #{transformer_classifier.2} parent=1 // pred_fallthru
      _
    // Predicated region
    $region70: #{transformer_classifier.2} parent=1 // pred_check
      _
    $region71: #{transformer_classifier.2} parent=1 // pred_check_branch
      %190 = sbr.rel (0) target = $region73
    $region72: #{transformer_classifier.2} parent=1 // pred_region
      %191 = dma.done [#allocation5], 512
    $region73: #{transformer_classifier.2} parent=1 // pred_fallthru
      _
    // Predicated region
    $region74: #{transformer_classifier.2} parent=1 // pred_check
      _
    $region75: #{transformer_classifier.2} parent=1 // pred_check_branch
      %193 = sbr.rel (0) target = $region77
    $region76: #{transformer_classifier.2} parent=1 // pred_region
      %194 = dma.done [#allocation8], 32
    $region77: #{transformer_classifier.2} parent=1 // pred_fallthru
      _
    // Predicated region
    $region78: #{transformer_classifier.2} parent=1 // pred_check
      _
    $region79: #{transformer_classifier.2} parent=1 // pred_check_branch
      %196 = sbr.rel (0) target = $region81
    $region80: #{transformer_classifier.2} parent=1 // pred_region
      %197 = dma.done [#allocation8], 512
    $region81: #{transformer_classifier.2} parent=1 // pred_fallthru
      _
    // Predicated region
    $region82: #{transformer_classifier.2} parent=1 // pred_check
      _
    $region83: #{transformer_classifier.2} parent=1 // pred_check_branch
      %199 = sbr.rel (0) target = $region85
    $region84: #{transformer_classifier.2} parent=1 // pred_region
      %200 = dma.done [#allocation11], 32
    $region85: #{transformer_classifier.2} parent=1 // pred_fallthru
      _
    // Predicated region
    $region86: #{transformer_classifier.2} parent=1 // pred_check
      _
    $region87: #{transformer_classifier.2} parent=1 // pred_check_branch
      %202 = sbr.rel (0) target = $region89
    $region88: #{transformer_classifier.2} parent=1 // pred_region
      %203 = dma.done [#allocation11], 32
    $region89: #{transformer_classifier.2} parent=1 // pred_fallthru
      _
    // Predicated region
    $region90: #{transformer_classifier.2} parent=1 // pred_check
      _
    $region91: #{transformer_classifier.2} parent=1 // pred_check_branch
      %205 = sbr.rel (0) target = $region93
    $region92: #{transformer_classifier.2} parent=1 // pred_region
      %206 = dma.done [#allocation14], 32
    $region93: #{transformer_classifier.2} parent=1 // pred_fallthru
      _
    // Predicated region
    $region94: #{transformer_classifier.2} parent=1 // pred_check
      _
    $region95: #{transformer_classifier.2} parent=1 // pred_check_branch
      %208 = sbr.rel (0) target = $region97
    $region96: #{transformer_classifier.2} parent=1 // pred_region
      %209 = dma.done [#allocation14], 512
    $region97: #{transformer_classifier.2} parent=1 // pred_fallthru
      _
    // Predicated region
    $region98: #{transformer_classifier.2} parent=1 // pred_check
      _
    $region99: #{transformer_classifier.2} parent=1 // pred_check_branch
      %211 = sbr.rel (0) target = $region101
    $region100: #{transformer_classifier.2} parent=1 // pred_region
      %212 = dma.done [#allocation17], 32
    $region101: #{transformer_classifier.2} parent=1 // pred_fallthru
      _
    // Predicated region
    $region102: #{transformer_classifier.2} parent=1 // pred_check
      _
    $region103: #{transformer_classifier.2} parent=1 // pred_check_branch
      %214 = sbr.rel (0) target = $region105
    $region104: #{transformer_classifier.2} parent=1 // pred_region
      %215 = dma.done [#allocation17], 32
    $region105: #{transformer_classifier.2} parent=1 // pred_fallthru
      _
    // Predicated region
    $region106: #{transformer_classifier.2} parent=1 // pred_check
      _
    $region107: #{transformer_classifier.2} parent=1 // pred_check_branch
      %217 = sbr.rel (0) target = $region109
    $region108: #{transformer_classifier.2} parent=1 // pred_region
      %218 = dma.done [#allocation20], 32
    $region109: #{transformer_classifier.2} parent=1 // pred_fallthru
      _
    // Predicated region
    $region110: #{transformer_classifier.2} parent=1 // pred_check
      _
    $region111: #{transformer_classifier.2} parent=1 // pred_check_branch
      %220 = sbr.rel (0) target = $region113
    $region112: #{transformer_classifier.2} parent=1 // pred_region
      %221 = dma.done [#allocation20], 32
    $region113: #{transformer_classifier.2} parent=1 // pred_fallthru
      _
    %v223 = vld [vmem:[%s0] sm:$0xff]
    %v224 = vld [vmem:[%s0 + $0x8] sm:$0xff]
    %v225 = vld [vmem:[#allocation2] sm:$0x1]
    %v226 = vld [vmem:[#allocation4] sm:$0x1]
    %vm227 = vcmask 261120
    %v228 = vsel %vm227, %v223, 0.0
    %229 = vadd.xlane.f32.xlu0 %v228
    %v230 = vpop.xlane.xlu0 %229
    %v231 = vsel %vm227, %v224, 0.0
    %232 = vadd.xlane.f32.xlu0 %v231
    %v233 = vpop.xlane.xlu0 %232
    %v234 = vrcp.pop 32.0
    %v235 = vmul.f32 %v230, %v234
    %v236 = vmul.f32 %v233, %v234
    %v237 = vsub.f32 %v223, %v235
    %v238 = vsub.f32 %v224, %v236
    %v239 = vmul.f32 %v237, %v237
    %v240 = vmul.f32 %v238, %v238
    %v241 = vsel %vm227, %v239, 0.0
    %242 = vadd.xlane.f32.xlu0 %v241
    %v243 = vpop.xlane.xlu0 %242
    %v244 = vsel %vm227, %v240, 0.0
    %245 = vadd.xlane.f32.xlu0 %v244
    %v246 = vpop.xlane.xlu0 %245
    %v247 = vmul.f32 %v243, %v234
    %v248 = vmul.f32 %v246, %v234
    %v249 = vadd.f32 %v247, 1e-12
    %v250 = vadd.f32 %v248, 1e-12
    %v251 = vrsqrt.pop %v249
    %v252 = vrsqrt.pop %v250
    %v253 = vmul.f32 %v237, %v251
    %v254 = vmul.f32 %v238, %v252
    %v256 = vlaneseq
    %v257 = vshrl.u32 %v256, 7
    %v258 = vsub.s32 0, %v257
    %v259 = vrot.slane %v225, %v258
    %v261 = vmul.f32 %v253, %v259
    %v262 = vmul.f32 %v254, %v259
    %v264 = vlaneseq
    %v265 = vshrl.u32 %v264, 7
    %v266 = vsub.s32 0, %v265
    %v267 = vrot.slane %v226, %v266
    %v269 = vadd.f32 %v261, %v267
    %v270 = vadd.f32 %v262, %v267
    %v271 = vpack.c.bf16 %v270, %v269
    %v272 = vld [vmem:[#allocation6] sm:$0xf]
    %v273 = vld [vmem:[#allocation6 + $0x4] sm:$0xf]
    %v274 = vld [vmem:[#allocation6 + $0x8] sm:$0xf]
    %v275 = vld [vmem:[#allocation6 + $0xc] sm:$0xf]
    %v276 = vld [vmem:[#allocation7] sm:$0x1]
    %v278 = vlaneseq
    %v279 = vshrl.u32 %v278, 7
    %v280 = vsub.s32 0, %v279
    %v281 = vrot.slane %v276, %v280
    %v287 = vunpack.c.l.b16 %v272
    %v288 = vunpack.c.l.b16 %v273
    %v289 = vunpack.c.l.b16 %v274
    %v290 = vunpack.c.l.b16 %v275
    %v291 = vpack.c.b16 %v288, %v287
    %v292 = vpack.c.b16 %v290, %v289
    %v296 = vsel %vm227, %v271, 0
    %298 = vmatprep.subr.bf16.mxu0 0
    %299 = vmatpush1.bf16.msra.mxu0 %v291
    %300 = vmatprep.subr.bf16.mxu0 0
    %301 = vmatpush1.bf16.msra.mxu0 %v292
    %302 = vmatprep.subr.bf16.mxu0 0
    %303 = vmatpush1.bf16.msra.mxu0 0
    %304 = vmatprep.subr.bf16.mxu0 0
    %305 = vmatpush1.bf16.msra.mxu0 0
    %306 = vmatprep.subr.bf16.mxu0 0
    %307 = vmatpush1.bf16.msra.mxu0 0
    %308 = vmatprep.subr.bf16.mxu0 0
    %309 = vmatpush1.bf16.msra.mxu0 0
    %310 = vmatprep.subr.bf16.mxu0 0
    %311 = vmatpush1.bf16.msra.mxu0 0
    %312 = vmatprep.subr.bf16.mxu0 0
    %313 = vmatpush1.bf16.msra.mxu0 0
    %314 = vmatprep.subr.bf16.mxu0 0
    %315 = vmatpush1.bf16.msra.mxu0 0
    %316 = vmatprep.subr.bf16.mxu0 0
    %317 = vmatpush1.bf16.msra.mxu0 0
    %318 = vmatprep.subr.bf16.mxu0 0
    %319 = vmatpush1.bf16.msra.mxu0 0
    %320 = vmatprep.subr.bf16.mxu0 0
    %321 = vmatpush1.bf16.msra.mxu0 0
    %322 = vmatprep.subr.bf16.mxu0 0
    %323 = vmatpush1.bf16.msra.mxu0 0
    %324 = vmatprep.subr.bf16.mxu0 0
    %325 = vmatpush1.bf16.msra.mxu0 0
    %326 = vmatprep.subr.bf16.mxu0 0
    %327 = vmatpush1.bf16.msra.mxu0 0
    %328 = vmatprep.subr.bf16.mxu0 0
    %329 = vmatpush1.bf16.msra.mxu0 0
    %330 = vmatprep.mubr.bf16.mxu0 0
    %331 = vmatmul.mubr.bf16.gmra.mrb[0].mxu0 %v296
    %v332 = vpop.f32.mrb[0].mxu0
    %v333 = vadd.f32 %v281, %v332
    %v334 = vpop.f32.mrb[0].mxu0
    %v335 = vpop.f32.mrb[0].mxu0
    %v336 = vadd.f32 %v281, %v335
    %v337 = vpop.f32.mrb[0].mxu0
    %338 = vdwg.mxu0
    %340 = vrot.lane.b32.xlu0 %v333, 120
    %v341 = vpop.permute.xlu0 %340
    %343 = vrot.lane.b32.xlu0 %v333, 112
    %v344 = vpop.permute.xlu0 %343
    %346 = vrot.lane.b32.xlu0 %v333, 104
    %v347 = vpop.permute.xlu0 %346
    %350 = vrot.lane.b32.xlu0 %v336, 120
    %v351 = vpop.permute.xlu0 %350
    %353 = vrot.lane.b32.xlu0 %v336, 112
    %v354 = vpop.permute.xlu0 %353
    %356 = vrot.lane.b32.xlu0 %v336, 104
    %v357 = vpop.permute.xlu0 %356
    %v359 = vpack.c.bf16 %v333, %v333
    %v360 = vpack.c.bf16 %v341, %v341
    %v361 = vpack.c.bf16 %v344, %v344
    %v362 = vpack.c.bf16 %v347, %v347
    %v363 = vpack.c.bf16 %v336, %v336
    %v364 = vpack.c.bf16 %v351, %v351
    %v365 = vpack.c.bf16 %v354, %v354
    %v366 = vpack.c.bf16 %v357, %v357
    %368 = vrot.lane.b32.xlu0 %v359, 96
    %v369 = vpop.permute.xlu0 %368
    %vm370 = vcmask 64512
    %v372 = vsel %vm370, %v359, 0
    %v375 = vsel %vm370, %v369, 0
    %377 = vmatprep.subr.bf16.mxu0 0
    %378 = vmatpush1.bf16.xpose.msra.mxu0 %v375
    %379 = vmatprep.subr.bf16.mxu0 0
    %380 = vmatpush1.bf16.xpose.msra.mxu0 0
    %381 = vmatprep.subr.bf16.mxu0 0
    %382 = vmatpush1.bf16.xpose.msra.mxu0 0
    %383 = vmatprep.subr.bf16.mxu0 0
    %384 = vmatpush1.bf16.xpose.msra.mxu0 0
    %385 = vmatprep.subr.bf16.mxu0 0
    %386 = vmatpush1.bf16.xpose.msra.mxu0 0
    %387 = vmatprep.subr.bf16.mxu0 0
    %388 = vmatpush1.bf16.xpose.msra.mxu0 0
    %389 = vmatprep.subr.bf16.mxu0 0
    %390 = vmatpush1.bf16.xpose.msra.mxu0 0
    %391 = vmatprep.subr.bf16.mxu0 0
    %392 = vmatpush1.bf16.xpose.msra.mxu0 0
    %393 = vmatprep.subr.bf16.mxu0 0
    %394 = vmatpush1.bf16.xpose.msra.mxu0 0
    %395 = vmatprep.subr.bf16.mxu0 0
    %396 = vmatpush1.bf16.xpose.msra.mxu0 0
    %397 = vmatprep.subr.bf16.mxu0 0
    %398 = vmatpush1.bf16.xpose.msra.mxu0 0
    %399 = vmatprep.subr.bf16.mxu0 0
    %400 = vmatpush1.bf16.xpose.msra.mxu0 0
    %401 = vmatprep.subr.bf16.mxu0 0
    %402 = vmatpush1.bf16.xpose.msra.mxu0 0
    %403 = vmatprep.subr.bf16.mxu0 0
    %404 = vmatpush1.bf16.xpose.msra.mxu0 0
    %405 = vmatprep.subr.bf16.mxu0 0
    %406 = vmatpush1.bf16.xpose.msra.mxu0 0
    %407 = vmatprep.subr.bf16.mxu0 0
    %408 = vmatpush1.bf16.xpose.msra.mxu0 0
    %409 = vmatprep.mubr.bf16.mxu0 0
    %410 = vmatmul.mubr.bf16.gmra.mrb[0].mxu0 %v372
    %v411 = vpop.f32.mrb[0].mxu0
    %v412 = vadd.f32 0.0, %v411
    %v413 = vpop.f32.mrb[0].mxu0
    %v414 = vpop.f32.mrb[0].mxu0
    %v415 = vpop.f32.mrb[0].mxu0
    %416 = vdwg.mxu0
    %418 = vrot.lane.b32.xlu0 %v360, 96
    %v419 = vpop.permute.xlu0 %418
    %v421 = vsel %vm370, %v360, 0
    %v424 = vsel %vm370, %v419, 0
    %426 = vmatprep.subr.bf16.mxu0 0
    %427 = vmatpush1.bf16.xpose.msra.mxu0 %v424
    %428 = vmatprep.subr.bf16.mxu0 0
    %429 = vmatpush1.bf16.xpose.msra.mxu0 0
    %430 = vmatprep.subr.bf16.mxu0 0
    %431 = vmatpush1.bf16.xpose.msra.mxu0 0
    %432 = vmatprep.subr.bf16.mxu0 0
    %433 = vmatpush1.bf16.xpose.msra.mxu0 0
    %434 = vmatprep.subr.bf16.mxu0 0
    %435 = vmatpush1.bf16.xpose.msra.mxu0 0
    %436 = vmatprep.subr.bf16.mxu0 0
    %437 = vmatpush1.bf16.xpose.msra.mxu0 0
    %438 = vmatprep.subr.bf16.mxu0 0
    %439 = vmatpush1.bf16.xpose.msra.mxu0 0
    %440 = vmatprep.subr.bf16.mxu0 0
    %441 = vmatpush1.bf16.xpose.msra.mxu0 0
    %442 = vmatprep.subr.bf16.mxu0 0
    %443 = vmatpush1.bf16.xpose.msra.mxu0 0
    %444 = vmatprep.subr.bf16.mxu0 0
    %445 = vmatpush1.bf16.xpose.msra.mxu0 0
    %446 = vmatprep.subr.bf16.mxu0 0
    %447 = vmatpush1.bf16.xpose.msra.mxu0 0
    %448 = vmatprep.subr.bf16.mxu0 0
    %449 = vmatpush1.bf16.xpose.msra.mxu0 0
    %450 = vmatprep.subr.bf16.mxu0 0
    %451 = vmatpush1.bf16.xpose.msra.mxu0 0
    %452 = vmatprep.subr.bf16.mxu0 0
    %453 = vmatpush1.bf16.xpose.msra.mxu0 0
    %454 = vmatprep.subr.bf16.mxu0 0
    %455 = vmatpush1.bf16.xpose.msra.mxu0 0
    %456 = vmatprep.subr.bf16.mxu0 0
    %457 = vmatpush1.bf16.xpose.msra.mxu0 0
    %458 = vmatprep.mubr.bf16.mxu0 0
    %459 = vmatmul.mubr.bf16.gmra.mrb[0].mxu0 %v421
    %v460 = vpop.f32.mrb[0].mxu0
    %v461 = vadd.f32 0.0, %v460
    %v462 = vpop.f32.mrb[0].mxu0
    %v463 = vpop.f32.mrb[0].mxu0
    %v464 = vpop.f32.mrb[0].mxu0
    %465 = vdwg.mxu0
    %467 = vrot.lane.b32.xlu0 %v361, 96
    %v468 = vpop.permute.xlu0 %467
    %v470 = vsel %vm370, %v361, 0
    %v473 = vsel %vm370, %v468, 0
    %475 = vmatprep.subr.bf16.mxu0 0
    %476 = vmatpush1.bf16.xpose.msra.mxu0 %v473
    %477 = vmatprep.subr.bf16.mxu0 0
    %478 = vmatpush1.bf16.xpose.msra.mxu0 0
    %479 = vmatprep.subr.bf16.mxu0 0
    %480 = vmatpush1.bf16.xpose.msra.mxu0 0
    %481 = vmatprep.subr.bf16.mxu0 0
    %482 = vmatpush1.bf16.xpose.msra.mxu0 0
    %483 = vmatprep.subr.bf16.mxu0 0
    %484 = vmatpush1.bf16.xpose.msra.mxu0 0
    %485 = vmatprep.subr.bf16.mxu0 0
    %486 = vmatpush1.bf16.xpose.msra.mxu0 0
    %487 = vmatprep.subr.bf16.mxu0 0
    %488 = vmatpush1.bf16.xpose.msra.mxu0 0
    %489 = vmatprep.subr.bf16.mxu0 0
    %490 = vmatpush1.bf16.xpose.msra.mxu0 0
    %491 = vmatprep.subr.bf16.mxu0 0
    %492 = vmatpush1.bf16.xpose.msra.mxu0 0
    %493 = vmatprep.subr.bf16.mxu0 0
    %494 = vmatpush1.bf16.xpose.msra.mxu0 0
    %495 = vmatprep.subr.bf16.mxu0 0
    %496 = vmatpush1.bf16.xpose.msra.mxu0 0
    %497 = vmatprep.subr.bf16.mxu0 0
    %498 = vmatpush1.bf16.xpose.msra.mxu0 0
    %499 = vmatprep.subr.bf16.mxu0 0
    %500 = vmatpush1.bf16.xpose.msra.mxu0 0
    %501 = vmatprep.subr.bf16.mxu0 0
    %502 = vmatpush1.bf16.xpose.msra.mxu0 0
    %503 = vmatprep.subr.bf16.mxu0 0
    %504 = vmatpush1.bf16.xpose.msra.mxu0 0
    %505 = vmatprep.subr.bf16.mxu0 0
    %506 = vmatpush1.bf16.xpose.msra.mxu0 0
    %507 = vmatprep.mubr.bf16.mxu0 0
    %508 = vmatmul.mubr.bf16.gmra.mrb[0].mxu0 %v470
    %v509 = vpop.f32.mrb[0].mxu0
    %v510 = vadd.f32 0.0, %v509
    %v511 = vpop.f32.mrb[0].mxu0
    %v512 = vpop.f32.mrb[0].mxu0
    %v513 = vpop.f32.mrb[0].mxu0
    %514 = vdwg.mxu0
    %516 = vrot.lane.b32.xlu0 %v362, 96
    %v517 = vpop.permute.xlu0 %516
    %v519 = vsel %vm370, %v362, 0
    %v522 = vsel %vm370, %v517, 0
    %524 = vmatprep.subr.bf16.mxu0 0
    %525 = vmatpush1.bf16.xpose.msra.mxu0 %v522
    %526 = vmatprep.subr.bf16.mxu0 0
    %527 = vmatpush1.bf16.xpose.msra.mxu0 0
    %528 = vmatprep.subr.bf16.mxu0 0
    %529 = vmatpush1.bf16.xpose.msra.mxu0 0
    %530 = vmatprep.subr.bf16.mxu0 0
    %531 = vmatpush1.bf16.xpose.msra.mxu0 0
    %532 = vmatprep.subr.bf16.mxu0 0
    %533 = vmatpush1.bf16.xpose.msra.mxu0 0
    %534 = vmatprep.subr.bf16.mxu0 0
    %535 = vmatpush1.bf16.xpose.msra.mxu0 0
    %536 = vmatprep.subr.bf16.mxu0 0
    %537 = vmatpush1.bf16.xpose.msra.mxu0 0
    %538 = vmatprep.subr.bf16.mxu0 0
    %539 = vmatpush1.bf16.xpose.msra.mxu0 0
    %540 = vmatprep.subr.bf16.mxu0 0
    %541 = vmatpush1.bf16.xpose.msra.mxu0 0
    %542 = vmatprep.subr.bf16.mxu0 0
    %543 = vmatpush1.bf16.xpose.msra.mxu0 0
    %544 = vmatprep.subr.bf16.mxu0 0
    %545 = vmatpush1.bf16.xpose.msra.mxu0 0
    %546 = vmatprep.subr.bf16.mxu0 0
    %547 = vmatpush1.bf16.xpose.msra.mxu0 0
    %548 = vmatprep.subr.bf16.mxu0 0
    %549 = vmatpush1.bf16.xpose.msra.mxu0 0
    %550 = vmatprep.subr.bf16.mxu0 0
    %551 = vmatpush1.bf16.xpose.msra.mxu0 0
    %552 = vmatprep.subr.bf16.mxu0 0
    %553 = vmatpush1.bf16.xpose.msra.mxu0 0
    %554 = vmatprep.subr.bf16.mxu0 0
    %555 = vmatpush1.bf16.xpose.msra.mxu0 0
    %556 = vmatprep.mubr.bf16.mxu0 0
    %557 = vmatmul.mubr.bf16.gmra.mrb[0].mxu0 %v519
    %v558 = vpop.f32.mrb[0].mxu0
    %v559 = vadd.f32 0.0, %v558
    %v560 = vpop.f32.mrb[0].mxu0
    %v561 = vpop.f32.mrb[0].mxu0
    %v562 = vpop.f32.mrb[0].mxu0
    %563 = vdwg.mxu0
    %565 = vrot.lane.b32.xlu0 %v363, 96
    %v566 = vpop.permute.xlu0 %565
    %v568 = vsel %vm370, %v363, 0
    %v571 = vsel %vm370, %v566, 0
    %573 = vmatprep.subr.bf16.mxu0 0
    %574 = vmatpush1.bf16.xpose.msra.mxu0 %v571
    %575 = vmatprep.subr.bf16.mxu0 0
    %576 = vmatpush1.bf16.xpose.msra.mxu0 0
    %577 = vmatprep.subr.bf16.mxu0 0
    %578 = vmatpush1.bf16.xpose.msra.mxu0 0
    %579 = vmatprep.subr.bf16.mxu0 0
    %580 = vmatpush1.bf16.xpose.msra.mxu0 0
    %581 = vmatprep.subr.bf16.mxu0 0
    %582 = vmatpush1.bf16.xpose.msra.mxu0 0
    %583 = vmatprep.subr.bf16.mxu0 0
    %584 = vmatpush1.bf16.xpose.msra.mxu0 0
    %585 = vmatprep.subr.bf16.mxu0 0
    %586 = vmatpush1.bf16.xpose.msra.mxu0 0
    %587 = vmatprep.subr.bf16.mxu0 0
    %588 = vmatpush1.bf16.xpose.msra.mxu0 0
    %589 = vmatprep.subr.bf16.mxu0 0
    %590 = vmatpush1.bf16.xpose.msra.mxu0 0
    %591 = vmatprep.subr.bf16.mxu0 0
    %592 = vmatpush1.bf16.xpose.msra.mxu0 0
    %593 = vmatprep.subr.bf16.mxu0 0
    %594 = vmatpush1.bf16.xpose.msra.mxu0 0
    %595 = vmatprep.subr.bf16.mxu0 0
    %596 = vmatpush1.bf16.xpose.msra.mxu0 0
    %597 = vmatprep.subr.bf16.mxu0 0
    %598 = vmatpush1.bf16.xpose.msra.mxu0 0
    %599 = vmatprep.subr.bf16.mxu0 0
    %600 = vmatpush1.bf16.xpose.msra.mxu0 0
    %601 = vmatprep.subr.bf16.mxu0 0
    %602 = vmatpush1.bf16.xpose.msra.mxu0 0
    %603 = vmatprep.subr.bf16.mxu0 0
    %604 = vmatpush1.bf16.xpose.msra.mxu0 0
    %605 = vmatprep.mubr.bf16.mxu0 0
    %606 = vmatmul.mubr.bf16.gmra.mrb[0].mxu0 %v568
    %v607 = vpop.f32.mrb[0].mxu0
    %v608 = vadd.f32 0.0, %v607
    %v609 = vpop.f32.mrb[0].mxu0
    %v610 = vpop.f32.mrb[0].mxu0
    %v611 = vpop.f32.mrb[0].mxu0
    %612 = vdwg.mxu0
    %614 = vrot.lane.b32.xlu0 %v364, 96
    %v615 = vpop.permute.xlu0 %614
    %v617 = vsel %vm370, %v364, 0
    %v620 = vsel %vm370, %v615, 0
    %622 = vmatprep.subr.bf16.mxu0 0
    %623 = vmatpush1.bf16.xpose.msra.mxu0 %v620
    %624 = vmatprep.subr.bf16.mxu0 0
    %625 = vmatpush1.bf16.xpose.msra.mxu0 0
    %626 = vmatprep.subr.bf16.mxu0 0
    %627 = vmatpush1.bf16.xpose.msra.mxu0 0
    %628 = vmatprep.subr.bf16.mxu0 0
    %629 = vmatpush1.bf16.xpose.msra.mxu0 0
    %630 = vmatprep.subr.bf16.mxu0 0
    %631 = vmatpush1.bf16.xpose.msra.mxu0 0
    %632 = vmatprep.subr.bf16.mxu0 0
    %633 = vmatpush1.bf16.xpose.msra.mxu0 0
    %634 = vmatprep.subr.bf16.mxu0 0
    %635 = vmatpush1.bf16.xpose.msra.mxu0 0
    %636 = vmatprep.subr.bf16.mxu0 0
    %637 = vmatpush1.bf16.xpose.msra.mxu0 0
    %638 = vmatprep.subr.bf16.mxu0 0
    %639 = vmatpush1.bf16.xpose.msra.mxu0 0
    %640 = vmatprep.subr.bf16.mxu0 0
    %641 = vmatpush1.bf16.xpose.msra.mxu0 0
    %642 = vmatprep.subr.bf16.mxu0 0
    %643 = vmatpush1.bf16.xpose.msra.mxu0 0
    %644 = vmatprep.subr.bf16.mxu0 0
    %645 = vmatpush1.bf16.xpose.msra.mxu0 0
    %646 = vmatprep.subr.bf16.mxu0 0
    %647 = vmatpush1.bf16.xpose.msra.mxu0 0
    %648 = vmatprep.subr.bf16.mxu0 0
    %649 = vmatpush1.bf16.xpose.msra.mxu0 0
    %650 = vmatprep.subr.bf16.mxu0 0
    %651 = vmatpush1.bf16.xpose.msra.mxu0 0
    %652 = vmatprep.subr.bf16.mxu0 0
    %653 = vmatpush1.bf16.xpose.msra.mxu0 0
    %654 = vmatprep.mubr.bf16.mxu0 0
    %655 = vmatmul.mubr.bf16.gmra.mrb[0].mxu0 %v617
    %v656 = vpop.f32.mrb[0].mxu0
    %v657 = vadd.f32 0.0, %v656
    %v658 = vpop.f32.mrb[0].mxu0
    %v659 = vpop.f32.mrb[0].mxu0
    %v660 = vpop.f32.mrb[0].mxu0
    %661 = vdwg.mxu0
    %663 = vrot.lane.b32.xlu0 %v365, 96
    %v664 = vpop.permute.xlu0 %663
    %v666 = vsel %vm370, %v365, 0
    %v669 = vsel %vm370, %v664, 0
    %671 = vmatprep.subr.bf16.mxu0 0
    %672 = vmatpush1.bf16.xpose.msra.mxu0 %v669
    %673 = vmatprep.subr.bf16.mxu0 0
    %674 = vmatpush1.bf16.xpose.msra.mxu0 0
    %675 = vmatprep.subr.bf16.mxu0 0
    %676 = vmatpush1.bf16.xpose.msra.mxu0 0
    %677 = vmatprep.subr.bf16.mxu0 0
    %678 = vmatpush1.bf16.xpose.msra.mxu0 0
    %679 = vmatprep.subr.bf16.mxu0 0
    %680 = vmatpush1.bf16.xpose.msra.mxu0 0
    %681 = vmatprep.subr.bf16.mxu0 0
    %682 = vmatpush1.bf16.xpose.msra.mxu0 0
    %683 = vmatprep.subr.bf16.mxu0 0
    %684 = vmatpush1.bf16.xpose.msra.mxu0 0
    %685 = vmatprep.subr.bf16.mxu0 0
    %686 = vmatpush1.bf16.xpose.msra.mxu0 0
    %687 = vmatprep.subr.bf16.mxu0 0
    %688 = vmatpush1.bf16.xpose.msra.mxu0 0
    %689 = vmatprep.subr.bf16.mxu0 0
    %690 = vmatpush1.bf16.xpose.msra.mxu0 0
    %691 = vmatprep.subr.bf16.mxu0 0
    %692 = vmatpush1.bf16.xpose.msra.mxu0 0
    %693 = vmatprep.subr.bf16.mxu0 0
    %694 = vmatpush1.bf16.xpose.msra.mxu0 0
    %695 = vmatprep.subr.bf16.mxu0 0
    %696 = vmatpush1.bf16.xpose.msra.mxu0 0
    %697 = vmatprep.subr.bf16.mxu0 0
    %698 = vmatpush1.bf16.xpose.msra.mxu0 0
    %699 = vmatprep.subr.bf16.mxu0 0
    %700 = vmatpush1.bf16.xpose.msra.mxu0 0
    %701 = vmatprep.subr.bf16.mxu0 0
    %702 = vmatpush1.bf16.xpose.msra.mxu0 0
    %703 = vmatprep.mubr.bf16.mxu0 0
    %704 = vmatmul.mubr.bf16.gmra.mrb[0].mxu0 %v666
    %v705 = vpop.f32.mrb[0].mxu0
    %v706 = vadd.f32 0.0, %v705
    %v707 = vpop.f32.mrb[0].mxu0
    %v708 = vpop.f32.mrb[0].mxu0
    %v709 = vpop.f32.mrb[0].mxu0
    %710 = vdwg.mxu0
    %712 = vrot.lane.b32.xlu0 %v366, 96
    %v713 = vpop.permute.xlu0 %712
    %v715 = vsel %vm370, %v366, 0
    %v718 = vsel %vm370, %v713, 0
    %720 = vmatprep.subr.bf16.mxu0 0
    %721 = vmatpush1.bf16.xpose.msra.mxu0 %v718
    %722 = vmatprep.subr.bf16.mxu0 0
    %723 = vmatpush1.bf16.xpose.msra.mxu0 0
    %724 = vmatprep.subr.bf16.mxu0 0
    %725 = vmatpush1.bf16.xpose.msra.mxu0 0
    %726 = vmatprep.subr.bf16.mxu0 0
    %727 = vmatpush1.bf16.xpose.msra.mxu0 0
    %728 = vmatprep.subr.bf16.mxu0 0
    %729 = vmatpush1.bf16.xpose.msra.mxu0 0
    %730 = vmatprep.subr.bf16.mxu0 0
    %731 = vmatpush1.bf16.xpose.msra.mxu0 0
    %732 = vmatprep.subr.bf16.mxu0 0
    %733 = vmatpush1.bf16.xpose.msra.mxu0 0
    %734 = vmatprep.subr.bf16.mxu0 0
    %735 = vmatpush1.bf16.xpose.msra.mxu0 0
    %736 = vmatprep.subr.bf16.mxu0 0
    %737 = vmatpush1.bf16.xpose.msra.mxu0 0
    %738 = vmatprep.subr.bf16.mxu0 0
    %739 = vmatpush1.bf16.xpose.msra.mxu0 0
    %740 = vmatprep.subr.bf16.mxu0 0
    %741 = vmatpush1.bf16.xpose.msra.mxu0 0
    %742 = vmatprep.subr.bf16.mxu0 0
    %743 = vmatpush1.bf16.xpose.msra.mxu0 0
    %744 = vmatprep.subr.bf16.mxu0 0
    %745 = vmatpush1.bf16.xpose.msra.mxu0 0
    %746 = vmatprep.subr.bf16.mxu0 0
    %747 = vmatpush1.bf16.xpose.msra.mxu0 0
    %748 = vmatprep.subr.bf16.mxu0 0
    %749 = vmatpush1.bf16.xpose.msra.mxu0 0
    %750 = vmatprep.subr.bf16.mxu0 0
    %751 = vmatpush1.bf16.xpose.msra.mxu0 0
    %752 = vmatprep.mubr.bf16.mxu0 0
    %753 = vmatmul.mubr.bf16.gmra.mrb[0].mxu0 %v715
    %v754 = vpop.f32.mrb[0].mxu0
    %v755 = vadd.f32 0.0, %v754
    %v756 = vpop.f32.mrb[0].mxu0
    %v757 = vpop.f32.mrb[0].mxu0
    %v758 = vpop.f32.mrb[0].mxu0
    %759 = vdwg.mxu0
    %v760 = vmul.f32 %v412, 0.35355338
    %v761 = vmul.f32 %v461, 0.35355338
    %v762 = vmul.f32 %v510, 0.35355338
    %v763 = vmul.f32 %v559, 0.35355338
    %v764 = vmul.f32 %v608, 0.35355338
    %v765 = vmul.f32 %v657, 0.35355338
    %v766 = vmul.f32 %v706, 0.35355338
    %v767 = vmul.f32 %v755, 0.35355338
    %v768 = vsel %vm370, %v760, -inf
    %769 = vmax.xlane.f32.xlu0 %v768
    %v770 = vpop.xlane.xlu0 %769
    %v771 = vsel %vm370, %v761, -inf
    %772 = vmax.xlane.f32.xlu0 %v771
    %v773 = vpop.xlane.xlu0 %772
    %v774 = vsel %vm370, %v762, -inf
    %775 = vmax.xlane.f32.xlu0 %v774
    %v776 = vpop.xlane.xlu0 %775
    %v777 = vsel %vm370, %v763, -inf
    %778 = vmax.xlane.f32.xlu0 %v777
    %v779 = vpop.xlane.xlu0 %778
    %v780 = vsel %vm370, %v764, -inf
    %781 = vmax.xlane.f32.xlu0 %v780
    %v782 = vpop.xlane.xlu0 %781
    %v783 = vsel %vm370, %v765, -inf
    %784 = vmax.xlane.f32.xlu0 %v783
    %v785 = vpop.xlane.xlu0 %784
    %v786 = vsel %vm370, %v766, -inf
    %787 = vmax.xlane.f32.xlu0 %v786
    %v788 = vpop.xlane.xlu0 %787
    %v789 = vsel %vm370, %v767, -inf
    %790 = vmax.xlane.f32.xlu0 %v789
    %v791 = vpop.xlane.xlu0 %790
    %v792 = vsub.f32 %v760, %v770
    %v793 = vsub.f32 %v761, %v773
    %v794 = vsub.f32 %v762, %v776
    %v795 = vsub.f32 %v763, %v779
    %v796 = vsub.f32 %v764, %v782
    %v797 = vsub.f32 %v765, %v785
    %v798 = vsub.f32 %v766, %v788
    %v799 = vsub.f32 %v767, %v791
    %v800 = vmul.f32 %v792, 1.442695
    %v801 = vpow.pop %v800
    %v802 = vmul.f32 %v793, 1.442695
    %v803 = vpow.pop %v802
    %v804 = vmul.f32 %v794, 1.442695
    %v805 = vpow.pop %v804
    %v806 = vmul.f32 %v795, 1.442695
    %v807 = vpow.pop %v806
    %v808 = vmul.f32 %v796, 1.442695
    %v809 = vpow.pop %v808
    %v810 = vmul.f32 %v797, 1.442695
    %v811 = vpow.pop %v810
    %v812 = vmul.f32 %v798, 1.442695
    %v813 = vpow.pop %v812
    %v814 = vmul.f32 %v799, 1.442695
    %v815 = vpow.pop %v814
    %v816 = vsel %vm370, %v801, 0.0
    %817 = vadd.xlane.f32.xlu0 %v816
    %v818 = vpop.xlane.xlu0 %817
    %v819 = vsel %vm370, %v803, 0.0
    %820 = vadd.xlane.f32.xlu0 %v819
    %v821 = vpop.xlane.xlu0 %820
    %v822 = vsel %vm370, %v805, 0.0
    %823 = vadd.xlane.f32.xlu0 %v822
    %v824 = vpop.xlane.xlu0 %823
    %v825 = vsel %vm370, %v807, 0.0
    %826 = vadd.xlane.f32.xlu0 %v825
    %v827 = vpop.xlane.xlu0 %826
    %v828 = vsel %vm370, %v809, 0.0
    %829 = vadd.xlane.f32.xlu0 %v828
    %v830 = vpop.xlane.xlu0 %829
    %v831 = vsel %vm370, %v811, 0.0
    %832 = vadd.xlane.f32.xlu0 %v831
    %v833 = vpop.xlane.xlu0 %832
    %v834 = vsel %vm370, %v813, 0.0
    %835 = vadd.xlane.f32.xlu0 %v834
    %v836 = vpop.xlane.xlu0 %835
    %v837 = vsel %vm370, %v815, 0.0
    %838 = vadd.xlane.f32.xlu0 %v837
    %v839 = vpop.xlane.xlu0 %838
    %v840 = vrcp.pop %v818
    %v841 = vrcp.pop %v821
    %v842 = vrcp.pop %v824
    %v843 = vrcp.pop %v827
    %v844 = vrcp.pop %v830
    %v845 = vrcp.pop %v833
    %v846 = vrcp.pop %v836
    %v847 = vrcp.pop %v839
    %v848 = vmul.f32 %v801, %v840
    %v849 = vmul.f32 %v803, %v841
    %v850 = vmul.f32 %v805, %v842
    %v851 = vmul.f32 %v807, %v843
    %v852 = vmul.f32 %v809, %v844
    %v853 = vmul.f32 %v811, %v845
    %v854 = vmul.f32 %v813, %v846
    %v855 = vmul.f32 %v815, %v847
    %v856 = vpack.c.bf16 %v848, %v848
    %v857 = vpack.c.bf16 %v849, %v849
    %v858 = vpack.c.bf16 %v850, %v850
    %v859 = vpack.c.bf16 %v851, %v851
    %v860 = vpack.c.bf16 %v852, %v852
    %v861 = vpack.c.bf16 %v853, %v853
    %v862 = vpack.c.bf16 %v854, %v854
    %v863 = vpack.c.bf16 %v855, %v855
    %864 = vrot.lane.b32.xlu0 %v359, 64
    %v865 = vpop.permute.xlu0 %864
    %v867 = vsel %vm370, %v856, 0
    %vm869 = vcmask 1043456
    %v871 = vsel %vm869, %v865, 0
    %873 = vmatprep.subr.bf16.mxu0 0
    %874 = vmatpush1.bf16.msra.mxu0 %v871
    %875 = vmatprep.subr.bf16.mxu0 0
    %876 = vmatpush1.bf16.msra.mxu0 0
    %877 = vmatprep.subr.bf16.mxu0 0
    %878 = vmatpush1.bf16.msra.mxu0 0
    %879 = vmatprep.subr.bf16.mxu0 0
    %880 = vmatpush1.bf16.msra.mxu0 0
    %881 = vmatprep.subr.bf16.mxu0 0
    %882 = vmatpush1.bf16.msra.mxu0 0
    %883 = vmatprep.subr.bf16.mxu0 0
    %884 = vmatpush1.bf16.msra.mxu0 0
    %885 = vmatprep.subr.bf16.mxu0 0
    %886 = vmatpush1.bf16.msra.mxu0 0
    %887 = vmatprep.subr.bf16.mxu0 0
    %888 = vmatpush1.bf16.msra.mxu0 0
    %889 = vmatprep.subr.bf16.mxu0 0
    %890 = vmatpush1.bf16.msra.mxu0 0
    %891 = vmatprep.subr.bf16.mxu0 0
    %892 = vmatpush1.bf16.msra.mxu0 0
    %893 = vmatprep.subr.bf16.mxu0 0
    %894 = vmatpush1.bf16.msra.mxu0 0
    %895 = vmatprep.subr.bf16.mxu0 0
    %896 = vmatpush1.bf16.msra.mxu0 0
    %897 = vmatprep.subr.bf16.mxu0 0
    %898 = vmatpush1.bf16.msra.mxu0 0
    %899 = vmatprep.subr.bf16.mxu0 0
    %900 = vmatpush1.bf16.msra.mxu0 0
    %901 = vmatprep.subr.bf16.mxu0 0
    %902 = vmatpush1.bf16.msra.mxu0 0
    %903 = vmatprep.subr.bf16.mxu0 0
    %904 = vmatpush1.bf16.msra.mxu0 0
    %905 = vmatprep.mubr.bf16.mxu0 0
    %906 = vmatmul.mubr.bf16.gmra.mrb[0].mxu0 %v867
    %v907 = vpop.f32.mrb[0].mxu0
    %v908 = vadd.f32 0.0, %v907
    %v909 = vpop.f32.mrb[0].mxu0
    %v910 = vpop.f32.mrb[0].mxu0
    %v911 = vpop.f32.mrb[0].mxu0
    %912 = vdwg.mxu0
    %913 = vrot.lane.b32.xlu0 %v360, 64
    %v914 = vpop.permute.xlu0 %913
    %v916 = vsel %vm370, %v857, 0
    %v919 = vsel %vm869, %v914, 0
    %921 = vmatprep.subr.bf16.mxu0 0
    %922 = vmatpush1.bf16.msra.mxu0 %v919
    %923 = vmatprep.subr.bf16.mxu0 0
    %924 = vmatpush1.bf16.msra.mxu0 0
    %925 = vmatprep.subr.bf16.mxu0 0
    %926 = vmatpush1.bf16.msra.mxu0 0
    %927 = vmatprep.subr.bf16.mxu0 0
    %928 = vmatpush1.bf16.msra.mxu0 0
    %929 = vmatprep.subr.bf16.mxu0 0
    %930 = vmatpush1.bf16.msra.mxu0 0
    %931 = vmatprep.subr.bf16.mxu0 0
    %932 = vmatpush1.bf16.msra.mxu0 0
    %933 = vmatprep.subr.bf16.mxu0 0
    %934 = vmatpush1.bf16.msra.mxu0 0
    %935 = vmatprep.subr.bf16.mxu0 0
    %936 = vmatpush1.bf16.msra.mxu0 0
    %937 = vmatprep.subr.bf16.mxu0 0
    %938 = vmatpush1.bf16.msra.mxu0 0
    %939 = vmatprep.subr.bf16.mxu0 0
    %940 = vmatpush1.bf16.msra.mxu0 0
    %941 = vmatprep.subr.bf16.mxu0 0
    %942 = vmatpush1.bf16.msra.mxu0 0
    %943 = vmatprep.subr.bf16.mxu0 0
    %944 = vmatpush1.bf16.msra.mxu0 0
    %945 = vmatprep.subr.bf16.mxu0 0
    %946 = vmatpush1.bf16.msra.mxu0 0
    %947 = vmatprep.subr.bf16.mxu0 0
    %948 = vmatpush1.bf16.msra.mxu0 0
    %949 = vmatprep.subr.bf16.mxu0 0
    %950 = vmatpush1.bf16.msra.mxu0 0
    %951 = vmatprep.subr.bf16.mxu0 0
    %952 = vmatpush1.bf16.msra.mxu0 0
    %953 = vmatprep.mubr.bf16.mxu0 0
    %954 = vmatmul.mubr.bf16.gmra.mrb[0].mxu0 %v916
    %v955 = vpop.f32.mrb[0].mxu0
    %v956 = vadd.f32 0.0, %v955
    %v957 = vpop.f32.mrb[0].mxu0
    %v958 = vpop.f32.mrb[0].mxu0
    %v959 = vpop.f32.mrb[0].mxu0
    %960 = vdwg.mxu0
    %961 = vrot.lane.b32.xlu0 %v361, 64
    %v962 = vpop.permute.xlu0 %961
    %v964 = vsel %vm370, %v858, 0
    %v967 = vsel %vm869, %v962, 0
    %969 = vmatprep.subr.bf16.mxu0 0
    %970 = vmatpush1.bf16.msra.mxu0 %v967
    %971 = vmatprep.subr.bf16.mxu0 0
    %972 = vmatpush1.bf16.msra.mxu0 0
    %973 = vmatprep.subr.bf16.mxu0 0
    %974 = vmatpush1.bf16.msra.mxu0 0
    %975 = vmatprep.subr.bf16.mxu0 0
    %976 = vmatpush1.bf16.msra.mxu0 0
    %977 = vmatprep.subr.bf16.mxu0 0
    %978 = vmatpush1.bf16.msra.mxu0 0
    %979 = vmatprep.subr.bf16.mxu0 0
    %980 = vmatpush1.bf16.msra.mxu0 0
    %981 = vmatprep.subr.bf16.mxu0 0
    %982 = vmatpush1.bf16.msra.mxu0 0
    %983 = vmatprep.subr.bf16.mxu0 0
    %984 = vmatpush1.bf16.msra.mxu0 0
    %985 = vmatprep.subr.bf16.mxu0 0
    %986 = vmatpush1.bf16.msra.mxu0 0
    %987 = vmatprep.subr.bf16.mxu0 0
    %988 = vmatpush1.bf16.msra.mxu0 0
    %989 = vmatprep.subr.bf16.mxu0 0
    %990 = vmatpush1.bf16.msra.mxu0 0
    %991 = vmatprep.subr.bf16.mxu0 0
    %992 = vmatpush1.bf16.msra.mxu0 0
    %993 = vmatprep.subr.bf16.mxu0 0
    %994 = vmatpush1.bf16.msra.mxu0 0
    %995 = vmatprep.subr.bf16.mxu0 0
    %996 = vmatpush1.bf16.msra.mxu0 0
    %997 = vmatprep.subr.bf16.mxu0 0
    %998 = vmatpush1.bf16.msra.mxu0 0
    %999 = vmatprep.subr.bf16.mxu0 0
    %1000 = vmatpush1.bf16.msra.mxu0 0
    %1001 = vmatprep.mubr.bf16.mxu0 0
    %1002 = vmatmul.mubr.bf16.gmra.mrb[0].mxu0 %v964
    %v1003 = vpop.f32.mrb[0].mxu0
    %v1004 = vadd.f32 0.0, %v1003
    %v1005 = vpop.f32.mrb[0].mxu0
    %v1006 = vpop.f32.mrb[0].mxu0
    %v1007 = vpop.f32.mrb[0].mxu0
    %1008 = vdwg.mxu0
    %1009 = vrot.lane.b32.xlu0 %v362, 64
    %v1010 = vpop.permute.xlu0 %1009
    %v1012 = vsel %vm370, %v859, 0
    %v1015 = vsel %vm869, %v1010, 0
    %1017 = vmatprep.subr.bf16.mxu0 0
    %1018 = vmatpush1.bf16.msra.mxu0 %v1015
    %1019 = vmatprep.subr.bf16.mxu0 0
    %1020 = vmatpush1.bf16.msra.mxu0 0
    %1021 = vmatprep.subr.bf16.mxu0 0
    %1022 = vmatpush1.bf16.msra.mxu0 0
    %1023 = vmatprep.subr.bf16.mxu0 0
    %1024 = vmatpush1.bf16.msra.mxu0 0
    %1025 = vmatprep.subr.bf16.mxu0 0
    %1026 = vmatpush1.bf16.msra.mxu0 0
    %1027 = vmatprep.subr.bf16.mxu0 0
    %1028 = vmatpush1.bf16.msra.mxu0 0
    %1029 = vmatprep.subr.bf16.mxu0 0
    %1030 = vmatpush1.bf16.msra.mxu0 0
    %1031 = vmatprep.subr.bf16.mxu0 0
    %1032 = vmatpush1.bf16.msra.mxu0 0
    %1033 = vmatprep.subr.bf16.mxu0 0
    %1034 = vmatpush1.bf16.msra.mxu0 0
    %1035 = vmatprep.subr.bf16.mxu0 0
    %1036 = vmatpush1.bf16.msra.mxu0 0
    %1037 = vmatprep.subr.bf16.mxu0 0
    %1038 = vmatpush1.bf16.msra.mxu0 0
    %1039 = vmatprep.subr.bf16.mxu0 0
    %1040 = vmatpush1.bf16.msra.mxu0 0
    %1041 = vmatprep.subr.bf16.mxu0 0
    %1042 = vmatpush1.bf16.msra.mxu0 0
    %1043 = vmatprep.subr.bf16.mxu0 0
    %1044 = vmatpush1.bf16.msra.mxu0 0
    %1045 = vmatprep.subr.bf16.mxu0 0
    %1046 = vmatpush1.bf16.msra.mxu0 0
    %1047 = vmatprep.subr.bf16.mxu0 0
    %1048 = vmatpush1.bf16.msra.mxu0 0
    %1049 = vmatprep.mubr.bf16.mxu0 0
    %1050 = vmatmul.mubr.bf16.gmra.mrb[0].mxu0 %v1012
    %v1051 = vpop.f32.mrb[0].mxu0
    %v1052 = vadd.f32 0.0, %v1051
    %v1053 = vpop.f32.mrb[0].mxu0
    %v1054 = vpop.f32.mrb[0].mxu0
    %v1055 = vpop.f32.mrb[0].mxu0
    %1056 = vdwg.mxu0
    %1057 = vrot.lane.b32.xlu0 %v363, 64
    %v1058 = vpop.permute.xlu0 %1057
    %v1060 = vsel %vm370, %v860, 0
    %v1063 = vsel %vm869, %v1058, 0
    %1065 = vmatprep.subr.bf16.mxu0 0
    %1066 = vmatpush1.bf16.msra.mxu0 %v1063
    %1067 = vmatprep.subr.bf16.mxu0 0
    %1068 = vmatpush1.bf16.msra.mxu0 0
    %1069 = vmatprep.subr.bf16.mxu0 0
    %1070 = vmatpush1.bf16.msra.mxu0 0
    %1071 = vmatprep.subr.bf16.mxu0 0
    %1072 = vmatpush1.bf16.msra.mxu0 0
    %1073 = vmatprep.subr.bf16.mxu0 0
    %1074 = vmatpush1.bf16.msra.mxu0 0
    %1075 = vmatprep.subr.bf16.mxu0 0
    %1076 = vmatpush1.bf16.msra.mxu0 0
    %1077 = vmatprep.subr.bf16.mxu0 0
    %1078 = vmatpush1.bf16.msra.mxu0 0
    %1079 = vmatprep.subr.bf16.mxu0 0
    %1080 = vmatpush1.bf16.msra.mxu0 0
    %1081 = vmatprep.subr.bf16.mxu0 0
    %1082 = vmatpush1.bf16.msra.mxu0 0
    %1083 = vmatprep.subr.bf16.mxu0 0
    %1084 = vmatpush1.bf16.msra.mxu0 0
    %1085 = vmatprep.subr.bf16.mxu0 0
    %1086 = vmatpush1.bf16.msra.mxu0 0
    %1087 = vmatprep.subr.bf16.mxu0 0
    %1088 = vmatpush1.bf16.msra.mxu0 0
    %1089 = vmatprep.subr.bf16.mxu0 0
    %1090 = vmatpush1.bf16.msra.mxu0 0
    %1091 = vmatprep.subr.bf16.mxu0 0
    %1092 = vmatpush1.bf16.msra.mxu0 0
    %1093 = vmatprep.subr.bf16.mxu0 0
    %1094 = vmatpush1.bf16.msra.mxu0 0
    %1095 = vmatprep.subr.bf16.mxu0 0
    %1096 = vmatpush1.bf16.msra.mxu0 0
    %1097 = vmatprep.mubr.bf16.mxu0 0
    %1098 = vmatmul.mubr.bf16.gmra.mrb[0].mxu0 %v1060
    %v1099 = vpop.f32.mrb[0].mxu0
    %v1100 = vadd.f32 0.0, %v1099
    %v1101 = vpop.f32.mrb[0].mxu0
    %v1102 = vpop.f32.mrb[0].mxu0
    %v1103 = vpop.f32.mrb[0].mxu0
    %1104 = vdwg.mxu0
    %1105 = vrot.lane.b32.xlu0 %v364, 64
    %v1106 = vpop.permute.xlu0 %1105
    %v1108 = vsel %vm370, %v861, 0
    %v1111 = vsel %vm869, %v1106, 0
    %1113 = vmatprep.subr.bf16.mxu0 0
    %1114 = vmatpush1.bf16.msra.mxu0 %v1111
    %1115 = vmatprep.subr.bf16.mxu0 0
    %1116 = vmatpush1.bf16.msra.mxu0 0
    %1117 = vmatprep.subr.bf16.mxu0 0
    %1118 = vmatpush1.bf16.msra.mxu0 0
    %1119 = vmatprep.subr.bf16.mxu0 0
    %1120 = vmatpush1.bf16.msra.mxu0 0
    %1121 = vmatprep.subr.bf16.mxu0 0
    %1122 = vmatpush1.bf16.msra.mxu0 0
    %1123 = vmatprep.subr.bf16.mxu0 0
    %1124 = vmatpush1.bf16.msra.mxu0 0
    %1125 = vmatprep.subr.bf16.mxu0 0
    %1126 = vmatpush1.bf16.msra.mxu0 0
    %1127 = vmatprep.subr.bf16.mxu0 0
    %1128 = vmatpush1.bf16.msra.mxu0 0
    %1129 = vmatprep.subr.bf16.mxu0 0
    %1130 = vmatpush1.bf16.msra.mxu0 0
    %1131 = vmatprep.subr.bf16.mxu0 0
    %1132 = vmatpush1.bf16.msra.mxu0 0
    %1133 = vmatprep.subr.bf16.mxu0 0
    %1134 = vmatpush1.bf16.msra.mxu0 0
    %1135 = vmatprep.subr.bf16.mxu0 0
    %1136 = vmatpush1.bf16.msra.mxu0 0
    %1137 = vmatprep.subr.bf16.mxu0 0
    %1138 = vmatpush1.bf16.msra.mxu0 0
    %1139 = vmatprep.subr.bf16.mxu0 0
    %1140 = vmatpush1.bf16.msra.mxu0 0
    %1141 = vmatprep.subr.bf16.mxu0 0
    %1142 = vmatpush1.bf16.msra.mxu0 0
    %1143 = vmatprep.subr.bf16.mxu0 0
    %1144 = vmatpush1.bf16.msra.mxu0 0
    %1145 = vmatprep.mubr.bf16.mxu0 0
    %1146 = vmatmul.mubr.bf16.gmra.mrb[0].mxu0 %v1108
    %v1147 = vpop.f32.mrb[0].mxu0
    %v1148 = vadd.f32 0.0, %v1147
    %v1149 = vpop.f32.mrb[0].mxu0
    %v1150 = vpop.f32.mrb[0].mxu0
    %v1151 = vpop.f32.mrb[0].mxu0
    %1152 = vdwg.mxu0
    %1153 = vrot.lane.b32.xlu0 %v365, 64
    %v1154 = vpop.permute.xlu0 %1153
    %v1156 = vsel %vm370, %v862, 0
    %v1159 = vsel %vm869, %v1154, 0
    %1161 = vmatprep.subr.bf16.mxu0 0
    %1162 = vmatpush1.bf16.msra.mxu0 %v1159
    %1163 = vmatprep.subr.bf16.mxu0 0
    %1164 = vmatpush1.bf16.msra.mxu0 0
    %1165 = vmatprep.subr.bf16.mxu0 0
    %1166 = vmatpush1.bf16.msra.mxu0 0
    %1167 = vmatprep.subr.bf16.mxu0 0
    %1168 = vmatpush1.bf16.msra.mxu0 0
    %1169 = vmatprep.subr.bf16.mxu0 0
    %1170 = vmatpush1.bf16.msra.mxu0 0
    %1171 = vmatprep.subr.bf16.mxu0 0
    %1172 = vmatpush1.bf16.msra.mxu0 0
    %1173 = vmatprep.subr.bf16.mxu0 0
    %1174 = vmatpush1.bf16.msra.mxu0 0
    %1175 = vmatprep.subr.bf16.mxu0 0
    %1176 = vmatpush1.bf16.msra.mxu0 0
    %1177 = vmatprep.subr.bf16.mxu0 0
    %1178 = vmatpush1.bf16.msra.mxu0 0
    %1179 = vmatprep.subr.bf16.mxu0 0
    %1180 = vmatpush1.bf16.msra.mxu0 0
    %1181 = vmatprep.subr.bf16.mxu0 0
    %1182 = vmatpush1.bf16.msra.mxu0 0
    %1183 = vmatprep.subr.bf16.mxu0 0
    %1184 = vmatpush1.bf16.msra.mxu0 0
    %1185 = vmatprep.subr.bf16.mxu0 0
    %1186 = vmatpush1.bf16.msra.mxu0 0
    %1187 = vmatprep.subr.bf16.mxu0 0
    %1188 = vmatpush1.bf16.msra.mxu0 0
    %1189 = vmatprep.subr.bf16.mxu0 0
    %1190 = vmatpush1.bf16.msra.mxu0 0
    %1191 = vmatprep.subr.bf16.mxu0 0
    %1192 = vmatpush1.bf16.msra.mxu0 0
    %1193 = vmatprep.mubr.bf16.mxu0 0
    %1194 = vmatmul.mubr.bf16.gmra.mrb[0].mxu0 %v1156
    %v1195 = vpop.f32.mrb[0].mxu0
    %v1196 = vadd.f32 0.0, %v1195
    %v1197 = vpop.f32.mrb[0].mxu0
    %v1198 = vpop.f32.mrb[0].mxu0
    %v1199 = vpop.f32.mrb[0].mxu0
    %1200 = vdwg.mxu0
    %1201 = vrot.lane.b32.xlu0 %v366, 64
    %v1202 = vpop.permute.xlu0 %1201
    %v1204 = vsel %vm370, %v863, 0
    %v1207 = vsel %vm869, %v1202, 0
    %1209 = vmatprep.subr.bf16.mxu0 0
    %1210 = vmatpush1.bf16.msra.mxu0 %v1207
    %1211 = vmatprep.subr.bf16.mxu0 0
    %1212 = vmatpush1.bf16.msra.mxu0 0
    %1213 = vmatprep.subr.bf16.mxu0 0
    %1214 = vmatpush1.bf16.msra.mxu0 0
    %1215 = vmatprep.subr.bf16.mxu0 0
    %1216 = vmatpush1.bf16.msra.mxu0 0
    %1217 = vmatprep.subr.bf16.mxu0 0
    %1218 = vmatpush1.bf16.msra.mxu0 0
    %1219 = vmatprep.subr.bf16.mxu0 0
    %1220 = vmatpush1.bf16.msra.mxu0 0
    %1221 = vmatprep.subr.bf16.mxu0 0
    %1222 = vmatpush1.bf16.msra.mxu0 0
    %1223 = vmatprep.subr.bf16.mxu0 0
    %1224 = vmatpush1.bf16.msra.mxu0 0
    %1225 = vmatprep.subr.bf16.mxu0 0
    %1226 = vmatpush1.bf16.msra.mxu0 0
    %1227 = vmatprep.subr.bf16.mxu0 0
    %1228 = vmatpush1.bf16.msra.mxu0 0
    %1229 = vmatprep.subr.bf16.mxu0 0
    %1230 = vmatpush1.bf16.msra.mxu0 0
    %1231 = vmatprep.subr.bf16.mxu0 0
    %1232 = vmatpush1.bf16.msra.mxu0 0
    %1233 = vmatprep.subr.bf16.mxu0 0
    %1234 = vmatpush1.bf16.msra.mxu0 0
    %1235 = vmatprep.subr.bf16.mxu0 0
    %1236 = vmatpush1.bf16.msra.mxu0 0
    %1237 = vmatprep.subr.bf16.mxu0 0
    %1238 = vmatpush1.bf16.msra.mxu0 0
    %1239 = vmatprep.subr.bf16.mxu0 0
    %1240 = vmatpush1.bf16.msra.mxu0 0
    %1241 = vmatprep.mubr.bf16.mxu0 0
    %1242 = vmatmul.mubr.bf16.gmra.mrb[0].mxu0 %v1204
    %v1243 = vpop.f32.mrb[0].mxu0
    %v1244 = vadd.f32 0.0, %v1243
    %v1245 = vpop.f32.mrb[0].mxu0
    %v1246 = vpop.f32.mrb[0].mxu0
    %v1247 = vpop.f32.mrb[0].mxu0
    %1248 = vdwg.mxu0
    %1250 = vrot.lane.b32.xlu0 %v956, 8
    %v1251 = vpop.permute.xlu0 %1250
    %1254 = vrot.lane.b32.xlu0 %v1004, 16
    %v1255 = vpop.permute.xlu0 %1254
    %1258 = vrot.lane.b32.xlu0 %v1052, 24
    %v1259 = vpop.permute.xlu0 %1258
    %v1261 = vsel %vm370, %v908, %v1251
    %vm1262 = vcmask 130048
    %v1263 = vsel %vm1262, %v1261, %v1255
    %vm1264 = vcmask 195584
    %v1265 = vsel %vm1264, %v1263, %v1259
    %1267 = vrot.lane.b32.xlu0 %v1148, 8
    %v1268 = vpop.permute.xlu0 %1267
    %1271 = vrot.lane.b32.xlu0 %v1196, 16
    %v1272 = vpop.permute.xlu0 %1271
    %1275 = vrot.lane.b32.xlu0 %v1244, 24
    %v1276 = vpop.permute.xlu0 %1275
    %v1278 = vsel %vm370, %v1100, %v1268
    %v1279 = vsel %vm1262, %v1278, %v1272
    %v1280 = vsel %vm1264, %v1279, %v1276
    %v1281 = vpack.c.bf16 %v1280, %v1265
    %v1282 = vld [vmem:[#allocation9] sm:$0xf]
    %v1283 = vld [vmem:[#allocation9 + $0x4] sm:$0xf]
    %v1284 = vld [vmem:[#allocation9 + $0x8] sm:$0xf]
    %v1285 = vld [vmem:[#allocation9 + $0xc] sm:$0xf]
    %v1286 = vld [vmem:[#allocation10] sm:$0x1]
    %v1288 = vlaneseq
    %v1289 = vshrl.u32 %v1288, 7
    %v1290 = vsub.s32 0, %v1289
    %v1291 = vrot.slane %v1286, %v1290
    %v1297 = vunpack.c.l.b16 %v1282
    %v1298 = vunpack.c.l.b16 %v1283
    %v1299 = vunpack.c.l.b16 %v1284
    %v1300 = vunpack.c.l.b16 %v1285
    %v1301 = vpack.c.b16 %v1298, %v1297
    %v1302 = vpack.c.b16 %v1300, %v1299
    %v1306 = vsel %vm227, %v1281, 0
    %1308 = vmatprep.subr.bf16.mxu0 0
    %1309 = vmatpush1.bf16.msra.mxu0 %v1301
    %1310 = vmatprep.subr.bf16.mxu0 0
    %1311 = vmatpush1.bf16.msra.mxu0 %v1302
    %1312 = vmatprep.subr.bf16.mxu0 0
    %1313 = vmatpush1.bf16.msra.mxu0 0
    %1314 = vmatprep.subr.bf16.mxu0 0
    %1315 = vmatpush1.bf16.msra.mxu0 0
    %1316 = vmatprep.subr.bf16.mxu0 0
    %1317 = vmatpush1.bf16.msra.mxu0 0
    %1318 = vmatprep.subr.bf16.mxu0 0
    %1319 = vmatpush1.bf16.msra.mxu0 0
    %1320 = vmatprep.subr.bf16.mxu0 0
    %1321 = vmatpush1.bf16.msra.mxu0 0
    %1322 = vmatprep.subr.bf16.mxu0 0
    %1323 = vmatpush1.bf16.msra.mxu0 0
    %1324 = vmatprep.subr.bf16.mxu0 0
    %1325 = vmatpush1.bf16.msra.mxu0 0
    %1326 = vmatprep.subr.bf16.mxu0 0
    %1327 = vmatpush1.bf16.msra.mxu0 0
    %1328 = vmatprep.subr.bf16.mxu0 0
    %1329 = vmatpush1.bf16.msra.mxu0 0
    %1330 = vmatprep.subr.bf16.mxu0 0
    %1331 = vmatpush1.bf16.msra.mxu0 0
    %1332 = vmatprep.subr.bf16.mxu0 0
    %1333 = vmatpush1.bf16.msra.mxu0 0
    %1334 = vmatprep.subr.bf16.mxu0 0
    %1335 = vmatpush1.bf16.msra.mxu0 0
    %1336 = vmatprep.subr.bf16.mxu0 0
    %1337 = vmatpush1.bf16.msra.mxu0 0
    %1338 = vmatprep.subr.bf16.mxu0 0
    %1339 = vmatpush1.bf16.msra.mxu0 0
    %1340 = vmatprep.mubr.bf16.mxu0 0
    %1341 = vmatmul.mubr.bf16.gmra.mrb[0].mxu0 %v1306
    %v1342 = vpop.f32.mrb[0].mxu0
    %v1343 = vadd.f32 %v1291, %v1342
    %v1344 = vpop.f32.mrb[0].mxu0
    %v1345 = vpop.f32.mrb[0].mxu0
    %v1346 = vadd.f32 %v1291, %v1345
    %v1347 = vpop.f32.mrb[0].mxu0
    %1348 = vdwg.mxu0
    %v1349 = vadd.f32 %v269, %v1343
    %v1350 = vadd.f32 %v270, %v1346
    %v1351 = vld [vmem:[#allocation12] sm:$0x1]
    %v1352 = vld [vmem:[#allocation13] sm:$0x1]
    %v1353 = vsel %vm227, %v1349, 0.0
    %1354 = vadd.xlane.f32.xlu0 %v1353
    %v1355 = vpop.xlane.xlu0 %1354
    %v1356 = vsel %vm227, %v1350, 0.0
    %1357 = vadd.xlane.f32.xlu0 %v1356
    %v1358 = vpop.xlane.xlu0 %1357
    %v1359 = vmul.f32 %v1355, %v234
    %v1360 = vmul.f32 %v1358, %v234
    %v1361 = vsub.f32 %v1349, %v1359
    %v1362 = vsub.f32 %v1350, %v1360
    %v1363 = vmul.f32 %v1361, %v1361
    %v1364 = vmul.f32 %v1362, %v1362
    %v1365 = vsel %vm227, %v1363, 0.0
    %1366 = vadd.xlane.f32.xlu0 %v1365
    %v1367 = vpop.xlane.xlu0 %1366
    %v1368 = vsel %vm227, %v1364, 0.0
    %1369 = vadd.xlane.f32.xlu0 %v1368
    %v1370 = vpop.xlane.xlu0 %1369
    %v1371 = vmul.f32 %v1367, %v234
    %v1372 = vmul.f32 %v1370, %v234
    %v1373 = vadd.f32 %v1371, 1e-12
    %v1374 = vadd.f32 %v1372, 1e-12
    %v1375 = vrsqrt.pop %v1373
    %v1376 = vrsqrt.pop %v1374
    %v1377 = vmul.f32 %v1361, %v1375
    %v1378 = vmul.f32 %v1362, %v1376
    %v1380 = vlaneseq
    %v1381 = vshrl.u32 %v1380, 7
    %v1382 = vsub.s32 0, %v1381
    %v1383 = vrot.slane %v1351, %v1382
    %v1385 = vmul.f32 %v1377, %v1383
    %v1386 = vmul.f32 %v1378, %v1383
    %v1388 = vlaneseq
    %v1389 = vshrl.u32 %v1388, 7
    %v1390 = vsub.s32 0, %v1389
    %v1391 = vrot.slane %v1352, %v1390
    %v1393 = vadd.f32 %v1385, %v1391
    %v1394 = vadd.f32 %v1386, %v1391
    %v1395 = vpack.c.bf16 %v1394, %v1393
    %v1396 = vld [vmem:[#allocation15] sm:$0xf]
    %v1397 = vld [vmem:[#allocation15 + $0x4] sm:$0xf]
    %v1398 = vld [vmem:[#allocation15 + $0x8] sm:$0xf]
    %v1399 = vld [vmem:[#allocation15 + $0xc] sm:$0xf]
    %v1400 = vld [vmem:[#allocation16] sm:$0x1]
    %v1402 = vlaneseq
    %v1403 = vshrl.u32 %v1402, 7
    %v1404 = vsub.s32 0, %v1403
    %v1405 = vrot.slane %v1400, %v1404
    %v1411 = vunpack.c.l.b16 %v1396
    %v1412 = vunpack.c.l.b16 %v1397
    %v1413 = vunpack.c.l.b16 %v1398
    %v1414 = vunpack.c.l.b16 %v1399
    %v1415 = vpack.c.b16 %v1412, %v1411
    %v1416 = vpack.c.b16 %v1414, %v1413
    %v1420 = vsel %vm227, %v1395, 0
    %1422 = vmatprep.subr.bf16.mxu0 0
    %1423 = vmatpush1.bf16.msra.mxu0 %v1415
    %1424 = vmatprep.subr.bf16.mxu0 0
    %1425 = vmatpush1.bf16.msra.mxu0 %v1416
    %1426 = vmatprep.subr.bf16.mxu0 0
    %1427 = vmatpush1.bf16.msra.mxu0 0
    %1428 = vmatprep.subr.bf16.mxu0 0
    %1429 = vmatpush1.bf16.msra.mxu0 0
    %1430 = vmatprep.subr.bf16.mxu0 0
    %1431 = vmatpush1.bf16.msra.mxu0 0
    %1432 = vmatprep.subr.bf16.mxu0 0
    %1433 = vmatpush1.bf16.msra.mxu0 0
    %1434 = vmatprep.subr.bf16.mxu0 0
    %1435 = vmatpush1.bf16.msra.mxu0 0
    %1436 = vmatprep.subr.bf16.mxu0 0
    %1437 = vmatpush1.bf16.msra.mxu0 0
    %1438 = vmatprep.subr.bf16.mxu0 0
    %1439 = vmatpush1.bf16.msra.mxu0 0
    %1440 = vmatprep.subr.bf16.mxu0 0
    %1441 = vmatpush1.bf16.msra.mxu0 0
    %1442 = vmatprep.subr.bf16.mxu0 0
    %1443 = vmatpush1.bf16.msra.mxu0 0
    %1444 = vmatprep.subr.bf16.mxu0 0
    %1445 = vmatpush1.bf16.msra.mxu0 0
    %1446 = vmatprep.subr.bf16.mxu0 0
    %1447 = vmatpush1.bf16.msra.mxu0 0
    %1448 = vmatprep.subr.bf16.mxu0 0
    %1449 = vmatpush1.bf16.msra.mxu0 0
    %1450 = vmatprep.subr.bf16.mxu0 0
    %1451 = vmatpush1.bf16.msra.mxu0 0
    %1452 = vmatprep.subr.bf16.mxu0 0
    %1453 = vmatpush1.bf16.msra.mxu0 0
    %1454 = vmatprep.mubr.bf16.mxu0 0
    %1455 = vmatmul.mubr.bf16.gmra.mrb[0].mxu0 %v1420
    %v1456 = vpop.f32.mrb[0].mxu0
    %v1457 = vadd.f32 %v1405, %v1456
    %v1458 = vpop.f32.mrb[0].mxu0
    %v1459 = vpop.f32.mrb[0].mxu0
    %v1460 = vadd.f32 %v1405, %v1459
    %v1461 = vpop.f32.mrb[0].mxu0
    %1462 = vdwg.mxu0
    %v1463 = vmul.f32 %v1457, 0.5
    %v1464 = vmul.f32 %v1460, 0.5
    %v1465 = vmul.f32 %v1457, 0.044715
    %v1466 = vmul.f32 %v1460, 0.044715
    %v1467 = vmul.f32 %v1465, %v1457
    %v1468 = vmul.f32 %v1466, %v1460
    %v1469 = vmul.f32 %v1467, %v1457
    %v1470 = vmul.f32 %v1468, %v1460
    %v1471 = vadd.f32 %v1457, %v1469
    %v1472 = vadd.f32 %v1460, %v1470
    %v1473 = vmul.f32 %v1471, 0.7978846
    %v1474 = vmul.f32 %v1472, 0.7978846
    %v1475 = vtanh.pop %v1473
    %v1476 = vtanh.pop %v1474
    %v1477 = vadd.f32 %v1475, 1.0
    %v1478 = vadd.f32 %v1476, 1.0
    %v1479 = vmul.f32 %v1463, %v1477
    %v1480 = vmul.f32 %v1464, %v1478
    %v1481 = vpack.c.bf16 %v1480, %v1479
    %v1482 = vld [vmem:[%s11] sm:$0xf]
    %v1483 = vld [vmem:[%s11 + $0x4] sm:$0xf]
    %v1484 = vld [vmem:[%s11 + $0x8] sm:$0xf]
    %v1485 = vld [vmem:[%s11 + $0xc] sm:$0xf]
    %v1486 = vld [vmem:[%s11 + $0x10] sm:$0xf]
    %v1487 = vld [vmem:[%s11 + $0x14] sm:$0xf]
    %v1488 = vld [vmem:[%s11 + $0x18] sm:$0xf]
    %v1489 = vld [vmem:[%s11 + $0x1c] sm:$0xf]
    %v1490 = vld [vmem:[#allocation18] sm:$0x1]
    %v1492 = vlaneseq
    %v1493 = vshrl.u32 %v1492, 7
    %v1494 = vsub.s32 0, %v1493
    %v1495 = vrot.slane %v1490, %v1494
    %v1505 = vunpack.c.l.b16 %v1482
    %v1506 = vunpack.c.l.b16 %v1483
    %v1507 = vunpack.c.l.b16 %v1484
    %v1508 = vunpack.c.l.b16 %v1485
    %v1509 = vunpack.c.l.b16 %v1486
    %v1510 = vunpack.c.l.b16 %v1487
    %v1511 = vunpack.c.l.b16 %v1488
    %v1512 = vunpack.c.l.b16 %v1489
    %v1513 = vpack.c.b16 %v1506, %v1505
    %v1514 = vpack.c.b16 %v1508, %v1507
    %v1515 = vpack.c.b16 %v1510, %v1509
    %v1516 = vpack.c.b16 %v1512, %v1511
    %vm1521 = vcmask 523264
    %v1523 = vsel %vm1521, %v1481, 0
    %1525 = vmatprep.subr.bf16.mxu0 0
    %1526 = vmatpush1.bf16.msra.mxu0 %v1513
    %1527 = vmatprep.subr.bf16.mxu0 0
    %1528 = vmatpush1.bf16.msra.mxu0 %v1514
    %1529 = vmatprep.subr.bf16.mxu0 0
    %1530 = vmatpush1.bf16.msra.mxu0 %v1515
    %1531 = vmatprep.subr.bf16.mxu0 0
    %1532 = vmatpush1.bf16.msra.mxu0 %v1516
    %1533 = vmatprep.subr.bf16.mxu0 0
    %1534 = vmatpush1.bf16.msra.mxu0 0
    %1535 = vmatprep.subr.bf16.mxu0 0
    %1536 = vmatpush1.bf16.msra.mxu0 0
    %1537 = vmatprep.subr.bf16.mxu0 0
    %1538 = vmatpush1.bf16.msra.mxu0 0
    %1539 = vmatprep.subr.bf16.mxu0 0
    %1540 = vmatpush1.bf16.msra.mxu0 0
    %1541 = vmatprep.subr.bf16.mxu0 0
    %1542 = vmatpush1.bf16.msra.mxu0 0
    %1543 = vmatprep.subr.bf16.mxu0 0
    %1544 = vmatpush1.bf16.msra.mxu0 0
    %1545 = vmatprep.subr.bf16.mxu0 0
    %1546 = vmatpush1.bf16.msra.mxu0 0
    %1547 = vmatprep.subr.bf16.mxu0 0
    %1548 = vmatpush1.bf16.msra.mxu0 0
    %1549 = vmatprep.subr.bf16.mxu0 0
    %1550 = vmatpush1.bf16.msra.mxu0 0
    %1551 = vmatprep.subr.bf16.mxu0 0
    %1552 = vmatpush1.bf16.msra.mxu0 0
    %1553 = vmatprep.subr.bf16.mxu0 0
    %1554 = vmatpush1.bf16.msra.mxu0 0
    %1555 = vmatprep.subr.bf16.mxu0 0
    %1556 = vmatpush1.bf16.msra.mxu0 0
    %1557 = vmatprep.mubr.bf16.mxu0 0
    %1558 = vmatmul.mubr.bf16.gmra.mrb[0].mxu0 %v1523
    %v1559 = vpop.f32.mrb[0].mxu0
    %v1560 = vadd.f32 %v1495, %v1559
    %v1561 = vpop.f32.mrb[0].mxu0
    %v1562 = vpop.f32.mrb[0].mxu0
    %v1563 = vadd.f32 %v1495, %v1562
    %v1564 = vpop.f32.mrb[0].mxu0
    %1565 = vdwg.mxu0
    %v1566 = vadd.f32 %v1393, %v1560
    %v1567 = vadd.f32 %v1394, %v1563
    %v1568 = vld [vmem:[#allocation19] sm:$0x1]
    %v1569 = vld [vmem:[#allocation21] sm:$0x1]
    %v1570 = vsel %vm227, %v1566, 0.0
    %1571 = vadd.xlane.f32.xlu0 %v1570
    %v1572 = vpop.xlane.xlu0 %1571
    %v1573 = vsel %vm227, %v1567, 0.0
    %1574 = vadd.xlane.f32.xlu0 %v1573
    %v1575 = vpop.xlane.xlu0 %1574
    %v1576 = vmul.f32 %v1572, %v234
    %v1577 = vmul.f32 %v1575, %v234
    %v1578 = vsub.f32 %v1566, %v1576
    %v1579 = vsub.f32 %v1567, %v1577
    %v1580 = vmul.f32 %v1578, %v1578
    %v1581 = vmul.f32 %v1579, %v1579
    %v1582 = vsel %vm227, %v1580, 0.0
    %1583 = vadd.xlane.f32.xlu0 %v1582
    %v1584 = vpop.xlane.xlu0 %1583
    %v1585 = vsel %vm227, %v1581, 0.0
    %1586 = vadd.xlane.f32.xlu0 %v1585
    %v1587 = vpop.xlane.xlu0 %1586
    %v1588 = vmul.f32 %v1584, %v234
    %v1589 = vmul.f32 %v1587, %v234
    %v1590 = vadd.f32 %v1588, 1e-12
    %v1591 = vadd.f32 %v1589, 1e-12
    %v1592 = vrsqrt.pop %v1590
    %v1593 = vrsqrt.pop %v1591
    %v1594 = vmul.f32 %v1578, %v1592
    %v1595 = vmul.f32 %v1579, %v1593
    %v1597 = vlaneseq
    %v1598 = vshrl.u32 %v1597, 7
    %v1599 = vsub.s32 0, %v1598
    %v1600 = vrot.slane %v1568, %v1599
    %v1602 = vmul.f32 %v1594, %v1600
    %v1603 = vmul.f32 %v1595, %v1600
    %v1605 = vlaneseq
    %v1606 = vshrl.u32 %v1605, 7
    %v1607 = vsub.s32 0, %v1606
    %v1608 = vrot.slane %v1569, %v1607
    %v1610 = vadd.f32 %v1602, %v1608
    %v1611 = vadd.f32 %v1603, %v1608
    %v1612 = vpack.c.bf16 %v1611, %v1610
    %s1613 = scalar_lea.vmem [#allocation6], 16
    %v1614 = vld [vmem:[%s1613] sm:$0xf]
    %v1615 = vld [vmem:[%s1613 + $0x4] sm:$0xf]
    %v1616 = vld [vmem:[%s1613 + $0x8] sm:$0xf]
    %v1617 = vld [vmem:[%s1613 + $0xc] sm:$0xf]
    %s1618 = scalar_lea.vmem [#allocation7], 1
    %v1619 = vld [vmem:[%s1618] sm:$0x1]
    %v1621 = vlaneseq
    %v1622 = vshrl.u32 %v1621, 7
    %v1623 = vsub.s32 0, %v1622
    %v1624 = vrot.slane %v1619, %v1623
    %v1630 = vunpack.c.l.b16 %v1614
    %v1631 = vunpack.c.l.b16 %v1615
    %v1632 = vunpack.c.l.b16 %v1616
    %v1633 = vunpack.c.l.b16 %v1617
    %v1634 = vpack.c.b16 %v1631, %v1630
    %v1635 = vpack.c.b16 %v1633, %v1632
    %v1639 = vsel %vm227, %v1612, 0
    %1641 = vmatprep.subr.bf16.mxu0 0
    %1642 = vmatpush1.bf16.msra.mxu0 %v1634
    %1643 = vmatprep.subr.bf16.mxu0 0
    %1644 = vmatpush1.bf16.msra.mxu0 %v1635
    %1645 = vmatprep.subr.bf16.mxu0 0
    %1646 = vmatpush1.bf16.msra.mxu0 0
    %1647 = vmatprep.subr.bf16.mxu0 0
    %1648 = vmatpush1.bf16.msra.mxu0 0
    %1649 = vmatprep.subr.bf16.mxu0 0
    %1650 = vmatpush1.bf16.msra.mxu0 0
    %1651 = vmatprep.subr.bf16.mxu0 0
    %1652 = vmatpush1.bf16.msra.mxu0 0
    %1653 = vmatprep.subr.bf16.mxu0 0
    %1654 = vmatpush1.bf16.msra.mxu0 0
    %1655 = vmatprep.subr.bf16.mxu0 0
    %1656 = vmatpush1.bf16.msra.mxu0 0
    %1657 = vmatprep.subr.bf16.mxu0 0
    %1658 = vmatpush1.bf16.msra.mxu0 0
    %1659 = vmatprep.subr.bf16.mxu0 0
    %1660 = vmatpush1.bf16.msra.mxu0 0
    %1661 = vmatprep.subr.bf16.mxu0 0
    %1662 = vmatpush1.bf16.msra.mxu0 0
    %1663 = vmatprep.subr.bf16.mxu0 0
    %1664 = vmatpush1.bf16.msra.mxu0 0
    %1665 = vmatprep.subr.bf16.mxu0 0
    %1666 = vmatpush1.bf16.msra.mxu0 0
    %1667 = vmatprep.subr.bf16.mxu0 0
    %1668 = vmatpush1.bf16.msra.mxu0 0
    %1669 = vmatprep.subr.bf16.mxu0 0
    %1670 = vmatpush1.bf16.msra.mxu0 0
    %1671 = vmatprep.subr.bf16.mxu0 0
    %1672 = vmatpush1.bf16.msra.mxu0 0
    %1673 = vmatprep.mubr.bf16.mxu0 0
    %1674 = vmatmul.mubr.bf16.gmra.mrb[0].mxu0 %v1639
    %v1675 = vpop.f32.mrb[0].mxu0
    %v1676 = vadd.f32 %v1624, %v1675
    %v1677 = vpop.f32.mrb[0].mxu0
    %v1678 = vpop.f32.mrb[0].mxu0
    %v1679 = vadd.f32 %v1624, %v1678
    %v1680 = vpop.f32.mrb[0].mxu0
    %1681 = vdwg.mxu0
    %1683 = vrot.lane.b32.xlu0 %v1676, 120
    %v1684 = vpop.permute.xlu0 %1683
    %1686 = vrot.lane.b32.xlu0 %v1676, 112
    %v1687 = vpop.permute.xlu0 %1686
    %1689 = vrot.lane.b32.xlu0 %v1676, 104
    %v1690 = vpop.permute.xlu0 %1689
    %1693 = vrot.lane.b32.xlu0 %v1679, 120
    %v1694 = vpop.permute.xlu0 %1693
    %1696 = vrot.lane.b32.xlu0 %v1679, 112
    %v1697 = vpop.permute.xlu0 %1696
    %1699 = vrot.lane.b32.xlu0 %v1679, 104
    %v1700 = vpop.permute.xlu0 %1699
    %v1702 = vpack.c.bf16 %v1676, %v1676
    %v1703 = vpack.c.bf16 %v1684, %v1684
    %v1704 = vpack.c.bf16 %v1687, %v1687
    %v1705 = vpack.c.bf16 %v1690, %v1690
    %v1706 = vpack.c.bf16 %v1679, %v1679
    %v1707 = vpack.c.bf16 %v1694, %v1694
    %v1708 = vpack.c.bf16 %v1697, %v1697
    %v1709 = vpack.c.bf16 %v1700, %v1700
    %1711 = vrot.lane.b32.xlu0 %v1702, 96
    %v1712 = vpop.permute.xlu0 %1711
    %v1714 = vsel %vm370, %v1702, 0
    %v1717 = vsel %vm370, %v1712, 0
    %1719 = vmatprep.subr.bf16.mxu0 0
    %1720 = vmatpush1.bf16.xpose.msra.mxu0 %v1717
    %1721 = vmatprep.subr.bf16.mxu0 0
    %1722 = vmatpush1.bf16.xpose.msra.mxu0 0
    %1723 = vmatprep.subr.bf16.mxu0 0
    %1724 = vmatpush1.bf16.xpose.msra.mxu0 0
    %1725 = vmatprep.subr.bf16.mxu0 0
    %1726 = vmatpush1.bf16.xpose.msra.mxu0 0
    %1727 = vmatprep.subr.bf16.mxu0 0
    %1728 = vmatpush1.bf16.xpose.msra.mxu0 0
    %1729 = vmatprep.subr.bf16.mxu0 0
    %1730 = vmatpush1.bf16.xpose.msra.mxu0 0
    %1731 = vmatprep.subr.bf16.mxu0 0
    %1732 = vmatpush1.bf16.xpose.msra.mxu0 0
    %1733 = vmatprep.subr.bf16.mxu0 0
    %1734 = vmatpush1.bf16.xpose.msra.mxu0 0
    %1735 = vmatprep.subr.bf16.mxu0 0
    %1736 = vmatpush1.bf16.xpose.msra.mxu0 0
    %1737 = vmatprep.subr.bf16.mxu0 0
    %1738 = vmatpush1.bf16.xpose.msra.mxu0 0
    %1739 = vmatprep.subr.bf16.mxu0 0
    %1740 = vmatpush1.bf16.xpose.msra.mxu0 0
    %1741 = vmatprep.subr.bf16.mxu0 0
    %1742 = vmatpush1.bf16.xpose.msra.mxu0 0
    %1743 = vmatprep.subr.bf16.mxu0 0
    %1744 = vmatpush1.bf16.xpose.msra.mxu0 0
    %1745 = vmatprep.subr.bf16.mxu0 0
    %1746 = vmatpush1.bf16.xpose.msra.mxu0 0
    %1747 = vmatprep.subr.bf16.mxu0 0
    %1748 = vmatpush1.bf16.xpose.msra.mxu0 0
    %1749 = vmatprep.subr.bf16.mxu0 0
    %1750 = vmatpush1.bf16.xpose.msra.mxu0 0
    %1751 = vmatprep.mubr.bf16.mxu0 0
    %1752 = vmatmul.mubr.bf16.gmra.mrb[0].mxu0 %v1714
    %v1753 = vpop.f32.mrb[0].mxu0
    %v1754 = vadd.f32 0.0, %v1753
    %v1755 = vpop.f32.mrb[0].mxu0
    %v1756 = vpop.f32.mrb[0].mxu0
    %v1757 = vpop.f32.mrb[0].mxu0
    %1758 = vdwg.mxu0
    %1760 = vrot.lane.b32.xlu0 %v1703, 96
    %v1761 = vpop.permute.xlu0 %1760
    %v1763 = vsel %vm370, %v1703, 0
    %v1766 = vsel %vm370, %v1761, 0
    %1768 = vmatprep.subr.bf16.mxu0 0
    %1769 = vmatpush1.bf16.xpose.msra.mxu0 %v1766
    %1770 = vmatprep.subr.bf16.mxu0 0
    %1771 = vmatpush1.bf16.xpose.msra.mxu0 0
    %1772 = vmatprep.subr.bf16.mxu0 0
    %1773 = vmatpush1.bf16.xpose.msra.mxu0 0
    %1774 = vmatprep.subr.bf16.mxu0 0
    %1775 = vmatpush1.bf16.xpose.msra.mxu0 0
    %1776 = vmatprep.subr.bf16.mxu0 0
    %1777 = vmatpush1.bf16.xpose.msra.mxu0 0
    %1778 = vmatprep.subr.bf16.mxu0 0
    %1779 = vmatpush1.bf16.xpose.msra.mxu0 0
    %1780 = vmatprep.subr.bf16.mxu0 0
    %1781 = vmatpush1.bf16.xpose.msra.mxu0 0
    %1782 = vmatprep.subr.bf16.mxu0 0
    %1783 = vmatpush1.bf16.xpose.msra.mxu0 0
    %1784 = vmatprep.subr.bf16.mxu0 0
    %1785 = vmatpush1.bf16.xpose.msra.mxu0 0
    %1786 = vmatprep.subr.bf16.mxu0 0
    %1787 = vmatpush1.bf16.xpose.msra.mxu0 0
    %1788 = vmatprep.subr.bf16.mxu0 0
    %1789 = vmatpush1.bf16.xpose.msra.mxu0 0
    %1790 = vmatprep.subr.bf16.mxu0 0
    %1791 = vmatpush1.bf16.xpose.msra.mxu0 0
    %1792 = vmatprep.subr.bf16.mxu0 0
    %1793 = vmatpush1.bf16.xpose.msra.mxu0 0
    %1794 = vmatprep.subr.bf16.mxu0 0
    %1795 = vmatpush1.bf16.xpose.msra.mxu0 0
    %1796 = vmatprep.subr.bf16.mxu0 0
    %1797 = vmatpush1.bf16.xpose.msra.mxu0 0
    %1798 = vmatprep.subr.bf16.mxu0 0
    %1799 = vmatpush1.bf16.xpose.msra.mxu0 0
    %1800 = vmatprep.mubr.bf16.mxu0 0
    %1801 = vmatmul.mubr.bf16.gmra.mrb[0].mxu0 %v1763
    %v1802 = vpop.f32.mrb[0].mxu0
    %v1803 = vadd.f32 0.0, %v1802
    %v1804 = vpop.f32.mrb[0].mxu0
    %v1805 = vpop.f32.mrb[0].mxu0
    %v1806 = vpop.f32.mrb[0].mxu0
    %1807 = vdwg.mxu0
    %1809 = vrot.lane.b32.xlu0 %v1704, 96
    %v1810 = vpop.permute.xlu0 %1809
    %v1812 = vsel %vm370, %v1704, 0
    %v1815 = vsel %vm370, %v1810, 0
    %1817 = vmatprep.subr.bf16.mxu0 0
    %1818 = vmatpush1.bf16.xpose.msra.mxu0 %v1815
    %1819 = vmatprep.subr.bf16.mxu0 0
    %1820 = vmatpush1.bf16.xpose.msra.mxu0 0
    %1821 = vmatprep.subr.bf16.mxu0 0
    %1822 = vmatpush1.bf16.xpose.msra.mxu0 0
    %1823 = vmatprep.subr.bf16.mxu0 0
    %1824 = vmatpush1.bf16.xpose.msra.mxu0 0
    %1825 = vmatprep.subr.bf16.mxu0 0
    %1826 = vmatpush1.bf16.xpose.msra.mxu0 0
    %1827 = vmatprep.subr.bf16.mxu0 0
    %1828 = vmatpush1.bf16.xpose.msra.mxu0 0
    %1829 = vmatprep.subr.bf16.mxu0 0
    %1830 = vmatpush1.bf16.xpose.msra.mxu0 0
    %1831 = vmatprep.subr.bf16.mxu0 0
    %1832 = vmatpush1.bf16.xpose.msra.mxu0 0
    %1833 = vmatprep.subr.bf16.mxu0 0
    %1834 = vmatpush1.bf16.xpose.msra.mxu0 0
    %1835 = vmatprep.subr.bf16.mxu0 0
    %1836 = vmatpush1.bf16.xpose.msra.mxu0 0
    %1837 = vmatprep.subr.bf16.mxu0 0
    %1838 = vmatpush1.bf16.xpose.msra.mxu0 0
    %1839 = vmatprep.subr.bf16.mxu0 0
    %1840 = vmatpush1.bf16.xpose.msra.mxu0 0
    %1841 = vmatprep.subr.bf16.mxu0 0
    %1842 = vmatpush1.bf16.xpose.msra.mxu0 0
    %1843 = vmatprep.subr.bf16.mxu0 0
    %1844 = vmatpush1.bf16.xpose.msra.mxu0 0
    %1845 = vmatprep.subr.bf16.mxu0 0
    %1846 = vmatpush1.bf16.xpose.msra.mxu0 0
    %1847 = vmatprep.subr.bf16.mxu0 0
    %1848 = vmatpush1.bf16.xpose.msra.mxu0 0
    %1849 = vmatprep.mubr.bf16.mxu0 0
    %1850 = vmatmul.mubr.bf16.gmra.mrb[0].mxu0 %v1812
    %v1851 = vpop.f32.mrb[0].mxu0
    %v1852 = vadd.f32 0.0, %v1851
    %v1853 = vpop.f32.mrb[0].mxu0
    %v1854 = vpop.f32.mrb[0].mxu0
    %v1855 = vpop.f32.mrb[0].mxu0
    %1856 = vdwg.mxu0
    %1858 = vrot.lane.b32.xlu0 %v1705, 96
    %v1859 = vpop.permute.xlu0 %1858
    %v1861 = vsel %vm370, %v1705, 0
    %v1864 = vsel %vm370, %v1859, 0
    %1866 = vmatprep.subr.bf16.mxu0 0
    %1867 = vmatpush1.bf16.xpose.msra.mxu0 %v1864
    %1868 = vmatprep.subr.bf16.mxu0 0
    %1869 = vmatpush1.bf16.xpose.msra.mxu0 0
    %1870 = vmatprep.subr.bf16.mxu0 0
    %1871 = vmatpush1.bf16.xpose.msra.mxu0 0
    %1872 = vmatprep.subr.bf16.mxu0 0
    %1873 = vmatpush1.bf16.xpose.msra.mxu0 0
    %1874 = vmatprep.subr.bf16.mxu0 0
    %1875 = vmatpush1.bf16.xpose.msra.mxu0 0
    %1876 = vmatprep.subr.bf16.mxu0 0
    %1877 = vmatpush1.bf16.xpose.msra.mxu0 0
    %1878 = vmatprep.subr.bf16.mxu0 0
    %1879 = vmatpush1.bf16.xpose.msra.mxu0 0
    %1880 = vmatprep.subr.bf16.mxu0 0
    %1881 = vmatpush1.bf16.xpose.msra.mxu0 0
    %1882 = vmatprep.subr.bf16.mxu0 0
    %1883 = vmatpush1.bf16.xpose.msra.mxu0 0
    %1884 = vmatprep.subr.bf16.mxu0 0
    %1885 = vmatpush1.bf16.xpose.msra.mxu0 0
    %1886 = vmatprep.subr.bf16.mxu0 0
    %1887 = vmatpush1.bf16.xpose.msra.mxu0 0
    %1888 = vmatprep.subr.bf16.mxu0 0
    %1889 = vmatpush1.bf16.xpose.msra.mxu0 0
    %1890 = vmatprep.subr.bf16.mxu0 0
    %1891 = vmatpush1.bf16.xpose.msra.mxu0 0
    %1892 = vmatprep.subr.bf16.mxu0 0
    %1893 = vmatpush1.bf16.xpose.msra.mxu0 0
    %1894 = vmatprep.subr.bf16.mxu0 0
    %1895 = vmatpush1.bf16.xpose.msra.mxu0 0
    %1896 = vmatprep.subr.bf16.mxu0 0
    %1897 = vmatpush1.bf16.xpose.msra.mxu0 0
    %1898 = vmatprep.mubr.bf16.mxu0 0
    %1899 = vmatmul.mubr.bf16.gmra.mrb[0].mxu0 %v1861
    %v1900 = vpop.f32.mrb[0].mxu0
    %v1901 = vadd.f32 0.0, %v1900
    %v1902 = vpop.f32.mrb[0].mxu0
    %v1903 = vpop.f32.mrb[0].mxu0
    %v1904 = vpop.f32.mrb[0].mxu0
    %1905 = vdwg.mxu0
    %1907 = vrot.lane.b32.xlu0 %v1706, 96
    %v1908 = vpop.permute.xlu0 %1907
    %v1910 = vsel %vm370, %v1706, 0
    %v1913 = vsel %vm370, %v1908, 0
    %1915 = vmatprep.subr.bf16.mxu0 0
    %1916 = vmatpush1.bf16.xpose.msra.mxu0 %v1913
    %1917 = vmatprep.subr.bf16.mxu0 0
    %1918 = vmatpush1.bf16.xpose.msra.mxu0 0
    %1919 = vmatprep.subr.bf16.mxu0 0
    %1920 = vmatpush1.bf16.xpose.msra.mxu0 0
    %1921 = vmatprep.subr.bf16.mxu0 0
    %1922 = vmatpush1.bf16.xpose.msra.mxu0 0
    %1923 = vmatprep.subr.bf16.mxu0 0
    %1924 = vmatpush1.bf16.xpose.msra.mxu0 0
    %1925 = vmatprep.subr.bf16.mxu0 0
    %1926 = vmatpush1.bf16.xpose.msra.mxu0 0
    %1927 = vmatprep.subr.bf16.mxu0 0
    %1928 = vmatpush1.bf16.xpose.msra.mxu0 0
    %1929 = vmatprep.subr.bf16.mxu0 0
    %1930 = vmatpush1.bf16.xpose.msra.mxu0 0
    %1931 = vmatprep.subr.bf16.mxu0 0
    %1932 = vmatpush1.bf16.xpose.msra.mxu0 0
    %1933 = vmatprep.subr.bf16.mxu0 0
    %1934 = vmatpush1.bf16.xpose.msra.mxu0 0
    %1935 = vmatprep.subr.bf16.mxu0 0
    %1936 = vmatpush1.bf16.xpose.msra.mxu0 0
    %1937 = vmatprep.subr.bf16.mxu0 0
    %1938 = vmatpush1.bf16.xpose.msra.mxu0 0
    %1939 = vmatprep.subr.bf16.mxu0 0
    %1940 = vmatpush1.bf16.xpose.msra.mxu0 0
    %1941 = vmatprep.subr.bf16.mxu0 0
    %1942 = vmatpush1.bf16.xpose.msra.mxu0 0
    %1943 = vmatprep.subr.bf16.mxu0 0
    %1944 = vmatpush1.bf16.xpose.msra.mxu0 0
    %1945 = vmatprep.subr.bf16.mxu0 0
    %1946 = vmatpush1.bf16.xpose.msra.mxu0 0
    %1947 = vmatprep.mubr.bf16.mxu0 0
    %1948 = vmatmul.mubr.bf16.gmra.mrb[0].mxu0 %v1910
    %v1949 = vpop.f32.mrb[0].mxu0
    %v1950 = vadd.f32 0.0, %v1949
    %v1951 = vpop.f32.mrb[0].mxu0
    %v1952 = vpop.f32.mrb[0].mxu0
    %v1953 = vpop.f32.mrb[0].mxu0
    %1954 = vdwg.mxu0
    %1956 = vrot.lane.b32.xlu0 %v1707, 96
    %v1957 = vpop.permute.xlu0 %1956
    %v1959 = vsel %vm370, %v1707, 0
    %v1962 = vsel %vm370, %v1957, 0
    %1964 = vmatprep.subr.bf16.mxu0 0
    %1965 = vmatpush1.bf16.xpose.msra.mxu0 %v1962
    %1966 = vmatprep.subr.bf16.mxu0 0
    %1967 = vmatpush1.bf16.xpose.msra.mxu0 0
    %1968 = vmatprep.subr.bf16.mxu0 0
    %1969 = vmatpush1.bf16.xpose.msra.mxu0 0
    %1970 = vmatprep.subr.bf16.mxu0 0
    %1971 = vmatpush1.bf16.xpose.msra.mxu0 0
    %1972 = vmatprep.subr.bf16.mxu0 0
    %1973 = vmatpush1.bf16.xpose.msra.mxu0 0
    %1974 = vmatprep.subr.bf16.mxu0 0
    %1975 = vmatpush1.bf16.xpose.msra.mxu0 0
    %1976 = vmatprep.subr.bf16.mxu0 0
    %1977 = vmatpush1.bf16.xpose.msra.mxu0 0
    %1978 = vmatprep.subr.bf16.mxu0 0
    %1979 = vmatpush1.bf16.xpose.msra.mxu0 0
    %1980 = vmatprep.subr.bf16.mxu0 0
    %1981 = vmatpush1.bf16.xpose.msra.mxu0 0
    %1982 = vmatprep.subr.bf16.mxu0 0
    %1983 = vmatpush1.bf16.xpose.msra.mxu0 0
    %1984 = vmatprep.subr.bf16.mxu0 0
    %1985 = vmatpush1.bf16.xpose.msra.mxu0 0
    %1986 = vmatprep.subr.bf16.mxu0 0
    %1987 = vmatpush1.bf16.xpose.msra.mxu0 0
    %1988 = vmatprep.subr.bf16.mxu0 0
    %1989 = vmatpush1.bf16.xpose.msra.mxu0 0
    %1990 = vmatprep.subr.bf16.mxu0 0
    %1991 = vmatpush1.bf16.xpose.msra.mxu0 0
    %1992 = vmatprep.subr.bf16.mxu0 0
    %1993 = vmatpush1.bf16.xpose.msra.mxu0 0
    %1994 = vmatprep.subr.bf16.mxu0 0
    %1995 = vmatpush1.bf16.xpose.msra.mxu0 0
    %1996 = vmatprep.mubr.bf16.mxu0 0
    %1997 = vmatmul.mubr.bf16.gmra.mrb[0].mxu0 %v1959
    %v1998 = vpop.f32.mrb[0].mxu0
    %v1999 = vadd.f32 0.0, %v1998
    %v2000 = vpop.f32.mrb[0].mxu0
    %v2001 = vpop.f32.mrb[0].mxu0
    %v2002 = vpop.f32.mrb[0].mxu0
    %2003 = vdwg.mxu0
    %2005 = vrot.lane.b32.xlu0 %v1708, 96
    %v2006 = vpop.permute.xlu0 %2005
    %v2008 = vsel %vm370, %v1708, 0
    %v2011 = vsel %vm370, %v2006, 0
    %2013 = vmatprep.subr.bf16.mxu0 0
    %2014 = vmatpush1.bf16.xpose.msra.mxu0 %v2011
    %2015 = vmatprep.subr.bf16.mxu0 0
    %2016 = vmatpush1.bf16.xpose.msra.mxu0 0
    %2017 = vmatprep.subr.bf16.mxu0 0
    %2018 = vmatpush1.bf16.xpose.msra.mxu0 0
    %2019 = vmatprep.subr.bf16.mxu0 0
    %2020 = vmatpush1.bf16.xpose.msra.mxu0 0
    %2021 = vmatprep.subr.bf16.mxu0 0
    %2022 = vmatpush1.bf16.xpose.msra.mxu0 0
    %2023 = vmatprep.subr.bf16.mxu0 0
    %2024 = vmatpush1.bf16.xpose.msra.mxu0 0
    %2025 = vmatprep.subr.bf16.mxu0 0
    %2026 = vmatpush1.bf16.xpose.msra.mxu0 0
    %2027 = vmatprep.subr.bf16.mxu0 0
    %2028 = vmatpush1.bf16.xpose.msra.mxu0 0
    %2029 = vmatprep.subr.bf16.mxu0 0
    %2030 = vmatpush1.bf16.xpose.msra.mxu0 0
    %2031 = vmatprep.subr.bf16.mxu0 0
    %2032 = vmatpush1.bf16.xpose.msra.mxu0 0
    %2033 = vmatprep.subr.bf16.mxu0 0
    %2034 = vmatpush1.bf16.xpose.msra.mxu0 0
    %2035 = vmatprep.subr.bf16.mxu0 0
    %2036 = vmatpush1.bf16.xpose.msra.mxu0 0
    %2037 = vmatprep.subr.bf16.mxu0 0
    %2038 = vmatpush1.bf16.xpose.msra.mxu0 0
    %2039 = vmatprep.subr.bf16.mxu0 0
    %2040 = vmatpush1.bf16.xpose.msra.mxu0 0
    %2041 = vmatprep.subr.bf16.mxu0 0
    %2042 = vmatpush1.bf16.xpose.msra.mxu0 0
    %2043 = vmatprep.subr.bf16.mxu0 0
    %2044 = vmatpush1.bf16.xpose.msra.mxu0 0
    %2045 = vmatprep.mubr.bf16.mxu0 0
    %2046 = vmatmul.mubr.bf16.gmra.mrb[0].mxu0 %v2008
    %v2047 = vpop.f32.mrb[0].mxu0
    %v2048 = vadd.f32 0.0, %v2047
    %v2049 = vpop.f32.mrb[0].mxu0
    %v2050 = vpop.f32.mrb[0].mxu0
    %v2051 = vpop.f32.mrb[0].mxu0
    %2052 = vdwg.mxu0
    %2054 = vrot.lane.b32.xlu0 %v1709, 96
    %v2055 = vpop.permute.xlu0 %2054
    %v2057 = vsel %vm370, %v1709, 0
    %v2060 = vsel %vm370, %v2055, 0
    %2062 = vmatprep.subr.bf16.mxu0 0
    %2063 = vmatpush1.bf16.xpose.msra.mxu0 %v2060
    %2064 = vmatprep.subr.bf16.mxu0 0
    %2065 = vmatpush1.bf16.xpose.msra.mxu0 0
    %2066 = vmatprep.subr.bf16.mxu0 0
    %2067 = vmatpush1.bf16.xpose.msra.mxu0 0
    %2068 = vmatprep.subr.bf16.mxu0 0
    %2069 = vmatpush1.bf16.xpose.msra.mxu0 0
    %2070 = vmatprep.subr.bf16.mxu0 0
    %2071 = vmatpush1.bf16.xpose.msra.mxu0 0
    %2072 = vmatprep.subr.bf16.mxu0 0
    %2073 = vmatpush1.bf16.xpose.msra.mxu0 0
    %2074 = vmatprep.subr.bf16.mxu0 0
    %2075 = vmatpush1.bf16.xpose.msra.mxu0 0
    %2076 = vmatprep.subr.bf16.mxu0 0
    %2077 = vmatpush1.bf16.xpose.msra.mxu0 0
    %2078 = vmatprep.subr.bf16.mxu0 0
    %2079 = vmatpush1.bf16.xpose.msra.mxu0 0
    %2080 = vmatprep.subr.bf16.mxu0 0
    %2081 = vmatpush1.bf16.xpose.msra.mxu0 0
    %2082 = vmatprep.subr.bf16.mxu0 0
    %2083 = vmatpush1.bf16.xpose.msra.mxu0 0
    %2084 = vmatprep.subr.bf16.mxu0 0
    %2085 = vmatpush1.bf16.xpose.msra.mxu0 0
    %2086 = vmatprep.subr.bf16.mxu0 0
    %2087 = vmatpush1.bf16.xpose.msra.mxu0 0
    %2088 = vmatprep.subr.bf16.mxu0 0
    %2089 = vmatpush1.bf16.xpose.msra.mxu0 0
    %2090 = vmatprep.subr.bf16.mxu0 0
    %2091 = vmatpush1.bf16.xpose.msra.mxu0 0
    %2092 = vmatprep.subr.bf16.mxu0 0
    %2093 = vmatpush1.bf16.xpose.msra.mxu0 0
    %2094 = vmatprep.mubr.bf16.mxu0 0
    %2095 = vmatmul.mubr.bf16.gmra.mrb[0].mxu0 %v2057
    %v2096 = vpop.f32.mrb[0].mxu0
    %v2097 = vadd.f32 0.0, %v2096
    %v2098 = vpop.f32.mrb[0].mxu0
    %v2099 = vpop.f32.mrb[0].mxu0
    %v2100 = vpop.f32.mrb[0].mxu0
    %2101 = vdwg.mxu0
    %v2102 = vmul.f32 %v1754, 0.35355338
    %v2103 = vmul.f32 %v1803, 0.35355338
    %v2104 = vmul.f32 %v1852, 0.35355338
    %v2105 = vmul.f32 %v1901, 0.35355338
    %v2106 = vmul.f32 %v1950, 0.35355338
    %v2107 = vmul.f32 %v1999, 0.35355338
    %v2108 = vmul.f32 %v2048, 0.35355338
    %v2109 = vmul.f32 %v2097, 0.35355338
    %v2110 = vsel %vm370, %v2102, -inf
    %2111 = vmax.xlane.f32.xlu0 %v2110
    %v2112 = vpop.xlane.xlu0 %2111
    %v2113 = vsel %vm370, %v2103, -inf
    %2114 = vmax.xlane.f32.xlu0 %v2113
    %v2115 = vpop.xlane.xlu0 %2114
    %v2116 = vsel %vm370, %v2104, -inf
    %2117 = vmax.xlane.f32.xlu0 %v2116
    %v2118 = vpop.xlane.xlu0 %2117
    %v2119 = vsel %vm370, %v2105, -inf
    %2120 = vmax.xlane.f32.xlu0 %v2119
    %v2121 = vpop.xlane.xlu0 %2120
    %v2122 = vsel %vm370, %v2106, -inf
    %2123 = vmax.xlane.f32.xlu0 %v2122
    %v2124 = vpop.xlane.xlu0 %2123
    %v2125 = vsel %vm370, %v2107, -inf
    %2126 = vmax.xlane.f32.xlu0 %v2125
    %v2127 = vpop.xlane.xlu0 %2126
    %v2128 = vsel %vm370, %v2108, -inf
    %2129 = vmax.xlane.f32.xlu0 %v2128
    %v2130 = vpop.xlane.xlu0 %2129
    %v2131 = vsel %vm370, %v2109, -inf
    %2132 = vmax.xlane.f32.xlu0 %v2131
    %v2133 = vpop.xlane.xlu0 %2132
    %v2134 = vsub.f32 %v2102, %v2112
    %v2135 = vsub.f32 %v2103, %v2115
    %v2136 = vsub.f32 %v2104, %v2118
    %v2137 = vsub.f32 %v2105, %v2121
    %v2138 = vsub.f32 %v2106, %v2124
    %v2139 = vsub.f32 %v2107, %v2127
    %v2140 = vsub.f32 %v2108, %v2130
    %v2141 = vsub.f32 %v2109, %v2133
    %v2142 = vmul.f32 %v2134, 1.442695
    %v2143 = vpow.pop %v2142
    %v2144 = vmul.f32 %v2135, 1.442695
    %v2145 = vpow.pop %v2144
    %v2146 = vmul.f32 %v2136, 1.442695
    %v2147 = vpow.pop %v2146
    %v2148 = vmul.f32 %v2137, 1.442695
    %v2149 = vpow.pop %v2148
    %v2150 = vmul.f32 %v2138, 1.442695
    %v2151 = vpow.pop %v2150
    %v2152 = vmul.f32 %v2139, 1.442695
    %v2153 = vpow.pop %v2152
    %v2154 = vmul.f32 %v2140, 1.442695
    %v2155 = vpow.pop %v2154
    %v2156 = vmul.f32 %v2141, 1.442695
    %v2157 = vpow.pop %v2156
    %v2158 = vsel %vm370, %v2143, 0.0
    %2159 = vadd.xlane.f32.xlu0 %v2158
    %v2160 = vpop.xlane.xlu0 %2159
    %v2161 = vsel %vm370, %v2145, 0.0
    %2162 = vadd.xlane.f32.xlu0 %v2161
    %v2163 = vpop.xlane.xlu0 %2162
    %v2164 = vsel %vm370, %v2147, 0.0
    %2165 = vadd.xlane.f32.xlu0 %v2164
    %v2166 = vpop.xlane.xlu0 %2165
    %v2167 = vsel %vm370, %v2149, 0.0
    %2168 = vadd.xlane.f32.xlu0 %v2167
    %v2169 = vpop.xlane.xlu0 %2168
    %v2170 = vsel %vm370, %v2151, 0.0
    %2171 = vadd.xlane.f32.xlu0 %v2170
    %v2172 = vpop.xlane.xlu0 %2171
    %v2173 = vsel %vm370, %v2153, 0.0
    %2174 = vadd.xlane.f32.xlu0 %v2173
    %v2175 = vpop.xlane.xlu0 %2174
    %v2176 = vsel %vm370, %v2155, 0.0
    %2177 = vadd.xlane.f32.xlu0 %v2176
    %v2178 = vpop.xlane.xlu0 %2177
    %v2179 = vsel %vm370, %v2157, 0.0
    %2180 = vadd.xlane.f32.xlu0 %v2179
    %v2181 = vpop.xlane.xlu0 %2180
    %v2182 = vrcp.pop %v2160
    %v2183 = vrcp.pop %v2163
    %v2184 = vrcp.pop %v2166
    %v2185 = vrcp.pop %v2169
    %v2186 = vrcp.pop %v2172
    %v2187 = vrcp.pop %v2175
    %v2188 = vrcp.pop %v2178
    %v2189 = vrcp.pop %v2181
    %v2190 = vmul.f32 %v2143, %v2182
    %v2191 = vmul.f32 %v2145, %v2183
    %v2192 = vmul.f32 %v2147, %v2184
    %v2193 = vmul.f32 %v2149, %v2185
    %v2194 = vmul.f32 %v2151, %v2186
    %v2195 = vmul.f32 %v2153, %v2187
    %v2196 = vmul.f32 %v2155, %v2188
    %v2197 = vmul.f32 %v2157, %v2189
    %v2198 = vpack.c.bf16 %v2190, %v2190
    %v2199 = vpack.c.bf16 %v2191, %v2191
    %v2200 = vpack.c.bf16 %v2192, %v2192
    %v2201 = vpack.c.bf16 %v2193, %v2193
    %v2202 = vpack.c.bf16 %v2194, %v2194
    %v2203 = vpack.c.bf16 %v2195, %v2195
    %v2204 = vpack.c.bf16 %v2196, %v2196
    %v2205 = vpack.c.bf16 %v2197, %v2197
    %2206 = vrot.lane.b32.xlu0 %v1702, 64
    %v2207 = vpop.permute.xlu0 %2206
    %v2209 = vsel %vm370, %v2198, 0
    %v2212 = vsel %vm869, %v2207, 0
    %2214 = vmatprep.subr.bf16.mxu0 0
    %2215 = vmatpush1.bf16.msra.mxu0 %v2212
    %2216 = vmatprep.subr.bf16.mxu0 0
    %2217 = vmatpush1.bf16.msra.mxu0 0
    %2218 = vmatprep.subr.bf16.mxu0 0
    %2219 = vmatpush1.bf16.msra.mxu0 0
    %2220 = vmatprep.subr.bf16.mxu0 0
    %2221 = vmatpush1.bf16.msra.mxu0 0
    %2222 = vmatprep.subr.bf16.mxu0 0
    %2223 = vmatpush1.bf16.msra.mxu0 0
    %2224 = vmatprep.subr.bf16.mxu0 0
    %2225 = vmatpush1.bf16.msra.mxu0 0
    %2226 = vmatprep.subr.bf16.mxu0 0
    %2227 = vmatpush1.bf16.msra.mxu0 0
    %2228 = vmatprep.subr.bf16.mxu0 0
    %2229 = vmatpush1.bf16.msra.mxu0 0
    %2230 = vmatprep.subr.bf16.mxu0 0
    %2231 = vmatpush1.bf16.msra.mxu0 0
    %2232 = vmatprep.subr.bf16.mxu0 0
    %2233 = vmatpush1.bf16.msra.mxu0 0
    %2234 = vmatprep.subr.bf16.mxu0 0
    %2235 = vmatpush1.bf16.msra.mxu0 0
    %2236 = vmatprep.subr.bf16.mxu0 0
    %2237 = vmatpush1.bf16.msra.mxu0 0
    %2238 = vmatprep.subr.bf16.mxu0 0
    %2239 = vmatpush1.bf16.msra.mxu0 0
    %2240 = vmatprep.subr.bf16.mxu0 0
    %2241 = vmatpush1.bf16.msra.mxu0 0
    %2242 = vmatprep.subr.bf16.mxu0 0
    %2243 = vmatpush1.bf16.msra.mxu0 0
    %2244 = vmatprep.subr.bf16.mxu0 0
    %2245 = vmatpush1.bf16.msra.mxu0 0
    %2246 = vmatprep.mubr.bf16.mxu0 0
    %2247 = vmatmul.mubr.bf16.gmra.mrb[0].mxu0 %v2209
    %v2248 = vpop.f32.mrb[0].mxu0
    %v2249 = vadd.f32 0.0, %v2248
    %v2250 = vpop.f32.mrb[0].mxu0
    %v2251 = vpop.f32.mrb[0].mxu0
    %v2252 = vpop.f32.mrb[0].mxu0
    %2253 = vdwg.mxu0
    %2254 = vrot.lane.b32.xlu0 %v1703, 64
    %v2255 = vpop.permute.xlu0 %2254
    %v2257 = vsel %vm370, %v2199, 0
    %v2260 = vsel %vm869, %v2255, 0
    %2262 = vmatprep.subr.bf16.mxu0 0
    %2263 = vmatpush1.bf16.msra.mxu0 %v2260
    %2264 = vmatprep.subr.bf16.mxu0 0
    %2265 = vmatpush1.bf16.msra.mxu0 0
    %2266 = vmatprep.subr.bf16.mxu0 0
    %2267 = vmatpush1.bf16.msra.mxu0 0
    %2268 = vmatprep.subr.bf16.mxu0 0
    %2269 = vmatpush1.bf16.msra.mxu0 0
    %2270 = vmatprep.subr.bf16.mxu0 0
    %2271 = vmatpush1.bf16.msra.mxu0 0
    %2272 = vmatprep.subr.bf16.mxu0 0
    %2273 = vmatpush1.bf16.msra.mxu0 0
    %2274 = vmatprep.subr.bf16.mxu0 0
    %2275 = vmatpush1.bf16.msra.mxu0 0
    %2276 = vmatprep.subr.bf16.mxu0 0
    %2277 = vmatpush1.bf16.msra.mxu0 0
    %2278 = vmatprep.subr.bf16.mxu0 0
    %2279 = vmatpush1.bf16.msra.mxu0 0
    %2280 = vmatprep.subr.bf16.mxu0 0
    %2281 = vmatpush1.bf16.msra.mxu0 0
    %2282 = vmatprep.subr.bf16.mxu0 0
    %2283 = vmatpush1.bf16.msra.mxu0 0
    %2284 = vmatprep.subr.bf16.mxu0 0
    %2285 = vmatpush1.bf16.msra.mxu0 0
    %2286 = vmatprep.subr.bf16.mxu0 0
    %2287 = vmatpush1.bf16.msra.mxu0 0
    %2288 = vmatprep.subr.bf16.mxu0 0
    %2289 = vmatpush1.bf16.msra.mxu0 0
    %2290 = vmatprep.subr.bf16.mxu0 0
    %2291 = vmatpush1.bf16.msra.mxu0 0
    %2292 = vmatprep.subr.bf16.mxu0 0
    %2293 = vmatpush1.bf16.msra.mxu0 0
    %2294 = vmatprep.mubr.bf16.mxu0 0
    %2295 = vmatmul.mubr.bf16.gmra.mrb[0].mxu0 %v2257
    %v2296 = vpop.f32.mrb[0].mxu0
    %v2297 = vadd.f32 0.0, %v2296
    %v2298 = vpop.f32.mrb[0].mxu0
    %v2299 = vpop.f32.mrb[0].mxu0
    %v2300 = vpop.f32.mrb[0].mxu0
    %2301 = vdwg.mxu0
    %2302 = vrot.lane.b32.xlu0 %v1704, 64
    %v2303 = vpop.permute.xlu0 %2302
    %v2305 = vsel %vm370, %v2200, 0
    %v2308 = vsel %vm869, %v2303, 0
    %2310 = vmatprep.subr.bf16.mxu0 0
    %2311 = vmatpush1.bf16.msra.mxu0 %v2308
    %2312 = vmatprep.subr.bf16.mxu0 0
    %2313 = vmatpush1.bf16.msra.mxu0 0
    %2314 = vmatprep.subr.bf16.mxu0 0
    %2315 = vmatpush1.bf16.msra.mxu0 0
    %2316 = vmatprep.subr.bf16.mxu0 0
    %2317 = vmatpush1.bf16.msra.mxu0 0
    %2318 = vmatprep.subr.bf16.mxu0 0
    %2319 = vmatpush1.bf16.msra.mxu0 0
    %2320 = vmatprep.subr.bf16.mxu0 0
    %2321 = vmatpush1.bf16.msra.mxu0 0
    %2322 = vmatprep.subr.bf16.mxu0 0
    %2323 = vmatpush1.bf16.msra.mxu0 0
    %2324 = vmatprep.subr.bf16.mxu0 0
    %2325 = vmatpush1.bf16.msra.mxu0 0
    %2326 = vmatprep.subr.bf16.mxu0 0
    %2327 = vmatpush1.bf16.msra.mxu0 0
    %2328 = vmatprep.subr.bf16.mxu0 0
    %2329 = vmatpush1.bf16.msra.mxu0 0
    %2330 = vmatprep.subr.bf16.mxu0 0
    %2331 = vmatpush1.bf16.msra.mxu0 0
    %2332 = vmatprep.subr.bf16.mxu0 0
    %2333 = vmatpush1.bf16.msra.mxu0 0
    %2334 = vmatprep.subr.bf16.mxu0 0
    %2335 = vmatpush1.bf16.msra.mxu0 0
    %2336 = vmatprep.subr.bf16.mxu0 0
    %2337 = vmatpush1.bf16.msra.mxu0 0
    %2338 = vmatprep.subr.bf16.mxu0 0
    %2339 = vmatpush1.bf16.msra.mxu0 0
    %2340 = vmatprep.subr.bf16.mxu0 0
    %2341 = vmatpush1.bf16.msra.mxu0 0
    %2342 = vmatprep.mubr.bf16.mxu0 0
    %2343 = vmatmul.mubr.bf16.gmra.mrb[0].mxu0 %v2305
    %v2344 = vpop.f32.mrb[0].mxu0
    %v2345 = vadd.f32 0.0, %v2344
    %v2346 = vpop.f32.mrb[0].mxu0
    %v2347 = vpop.f32.mrb[0].mxu0
    %v2348 = vpop.f32.mrb[0].mxu0
    %2349 = vdwg.mxu0
    %2350 = vrot.lane.b32.xlu0 %v1705, 64
    %v2351 = vpop.permute.xlu0 %2350
    %v2353 = vsel %vm370, %v2201, 0
    %v2356 = vsel %vm869, %v2351, 0
    %2358 = vmatprep.subr.bf16.mxu0 0
    %2359 = vmatpush1.bf16.msra.mxu0 %v2356
    %2360 = vmatprep.subr.bf16.mxu0 0
    %2361 = vmatpush1.bf16.msra.mxu0 0
    %2362 = vmatprep.subr.bf16.mxu0 0
    %2363 = vmatpush1.bf16.msra.mxu0 0
    %2364 = vmatprep.subr.bf16.mxu0 0
    %2365 = vmatpush1.bf16.msra.mxu0 0
    %2366 = vmatprep.subr.bf16.mxu0 0
    %2367 = vmatpush1.bf16.msra.mxu0 0
    %2368 = vmatprep.subr.bf16.mxu0 0
    %2369 = vmatpush1.bf16.msra.mxu0 0
    %2370 = vmatprep.subr.bf16.mxu0 0
    %2371 = vmatpush1.bf16.msra.mxu0 0
    %2372 = vmatprep.subr.bf16.mxu0 0
    %2373 = vmatpush1.bf16.msra.mxu0 0
    %2374 = vmatprep.subr.bf16.mxu0 0
    %2375 = vmatpush1.bf16.msra.mxu0 0
    %2376 = vmatprep.subr.bf16.mxu0 0
    %2377 = vmatpush1.bf16.msra.mxu0 0
    %2378 = vmatprep.subr.bf16.mxu0 0
    %2379 = vmatpush1.bf16.msra.mxu0 0
    %2380 = vmatprep.subr.bf16.mxu0 0
    %2381 = vmatpush1.bf16.msra.mxu0 0
    %2382 = vmatprep.subr.bf16.mxu0 0
    %2383 = vmatpush1.bf16.msra.mxu0 0
    %2384 = vmatprep.subr.bf16.mxu0 0
    %2385 = vmatpush1.bf16.msra.mxu0 0
    %2386 = vmatprep.subr.bf16.mxu0 0
    %2387 = vmatpush1.bf16.msra.mxu0 0
    %2388 = vmatprep.subr.bf16.mxu0 0
    %2389 = vmatpush1.bf16.msra.mxu0 0
    %2390 = vmatprep.mubr.bf16.mxu0 0
    %2391 = vmatmul.mubr.bf16.gmra.mrb[0].mxu0 %v2353
    %v2392 = vpop.f32.mrb[0].mxu0
    %v2393 = vadd.f32 0.0, %v2392
    %v2394 = vpop.f32.mrb[0].mxu0
    %v2395 = vpop.f32.mrb[0].mxu0
    %v2396 = vpop.f32.mrb[0].mxu0
    %2397 = vdwg.mxu0
    %2398 = vrot.lane.b32.xlu0 %v1706, 64
    %v2399 = vpop.permute.xlu0 %2398
    %v2401 = vsel %vm370, %v2202, 0
    %v2404 = vsel %vm869, %v2399, 0
    %2406 = vmatprep.subr.bf16.mxu0 0
    %2407 = vmatpush1.bf16.msra.mxu0 %v2404
    %2408 = vmatprep.subr.bf16.mxu0 0
    %2409 = vmatpush1.bf16.msra.mxu0 0
    %2410 = vmatprep.subr.bf16.mxu0 0
    %2411 = vmatpush1.bf16.msra.mxu0 0
    %2412 = vmatprep.subr.bf16.mxu0 0
    %2413 = vmatpush1.bf16.msra.mxu0 0
    %2414 = vmatprep.subr.bf16.mxu0 0
    %2415 = vmatpush1.bf16.msra.mxu0 0
    %2416 = vmatprep.subr.bf16.mxu0 0
    %2417 = vmatpush1.bf16.msra.mxu0 0
    %2418 = vmatprep.subr.bf16.mxu0 0
    %2419 = vmatpush1.bf16.msra.mxu0 0
    %2420 = vmatprep.subr.bf16.mxu0 0
    %2421 = vmatpush1.bf16.msra.mxu0 0
    %2422 = vmatprep.subr.bf16.mxu0 0
    %2423 = vmatpush1.bf16.msra.mxu0 0
    %2424 = vmatprep.subr.bf16.mxu0 0
    %2425 = vmatpush1.bf16.msra.mxu0 0
    %2426 = vmatprep.subr.bf16.mxu0 0
    %2427 = vmatpush1.bf16.msra.mxu0 0
    %2428 = vmatprep.subr.bf16.mxu0 0
    %2429 = vmatpush1.bf16.msra.mxu0 0
    %2430 = vmatprep.subr.bf16.mxu0 0
    %2431 = vmatpush1.bf16.msra.mxu0 0
    %2432 = vmatprep.subr.bf16.mxu0 0
    %2433 = vmatpush1.bf16.msra.mxu0 0
    %2434 = vmatprep.subr.bf16.mxu0 0
    %2435 = vmatpush1.bf16.msra.mxu0 0
    %2436 = vmatprep.subr.bf16.mxu0 0
    %2437 = vmatpush1.bf16.msra.mxu0 0
    %2438 = vmatprep.mubr.bf16.mxu0 0
    %2439 = vmatmul.mubr.bf16.gmra.mrb[0].mxu0 %v2401
    %v2440 = vpop.f32.mrb[0].mxu0
    %v2441 = vadd.f32 0.0, %v2440
    %v2442 = vpop.f32.mrb[0].mxu0
    %v2443 = vpop.f32.mrb[0].mxu0
    %v2444 = vpop.f32.mrb[0].mxu0
    %2445 = vdwg.mxu0
    %2446 = vrot.lane.b32.xlu0 %v1707, 64
    %v2447 = vpop.permute.xlu0 %2446
    %v2449 = vsel %vm370, %v2203, 0
    %v2452 = vsel %vm869, %v2447, 0
    %2454 = vmatprep.subr.bf16.mxu0 0
    %2455 = vmatpush1.bf16.msra.mxu0 %v2452
    %2456 = vmatprep.subr.bf16.mxu0 0
    %2457 = vmatpush1.bf16.msra.mxu0 0
    %2458 = vmatprep.subr.bf16.mxu0 0
    %2459 = vmatpush1.bf16.msra.mxu0 0
    %2460 = vmatprep.subr.bf16.mxu0 0
    %2461 = vmatpush1.bf16.msra.mxu0 0
    %2462 = vmatprep.subr.bf16.mxu0 0
    %2463 = vmatpush1.bf16.msra.mxu0 0
    %2464 = vmatprep.subr.bf16.mxu0 0
    %2465 = vmatpush1.bf16.msra.mxu0 0
    %2466 = vmatprep.subr.bf16.mxu0 0
    %2467 = vmatpush1.bf16.msra.mxu0 0
    %2468 = vmatprep.subr.bf16.mxu0 0
    %2469 = vmatpush1.bf16.msra.mxu0 0
    %2470 = vmatprep.subr.bf16.mxu0 0
    %2471 = vmatpush1.bf16.msra.mxu0 0
    %2472 = vmatprep.subr.bf16.mxu0 0
    %2473 = vmatpush1.bf16.msra.mxu0 0
    %2474 = vmatprep.subr.bf16.mxu0 0
    %2475 = vmatpush1.bf16.msra.mxu0 0
    %2476 = vmatprep.subr.bf16.mxu0 0
    %2477 = vmatpush1.bf16.msra.mxu0 0
    %2478 = vmatprep.subr.bf16.mxu0 0
    %2479 = vmatpush1.bf16.msra.mxu0 0
    %2480 = vmatprep.subr.bf16.mxu0 0
    %2481 = vmatpush1.bf16.msra.mxu0 0
    %2482 = vmatprep.subr.bf16.mxu0 0
    %2483 = vmatpush1.bf16.msra.mxu0 0
    %2484 = vmatprep.subr.bf16.mxu0 0
    %2485 = vmatpush1.bf16.msra.mxu0 0
    %2486 = vmatprep.mubr.bf16.mxu0 0
    %2487 = vmatmul.mubr.bf16.gmra.mrb[0].mxu0 %v2449
    %v2488 = vpop.f32.mrb[0].mxu0
    %v2489 = vadd.f32 0.0, %v2488
    %v2490 = vpop.f32.mrb[0].mxu0
    %v2491 = vpop.f32.mrb[0].mxu0
    %v2492 = vpop.f32.mrb[0].mxu0
    %2493 = vdwg.mxu0
    %2494 = vrot.lane.b32.xlu0 %v1708, 64
    %v2495 = vpop.permute.xlu0 %2494
    %v2497 = vsel %vm370, %v2204, 0
    %v2500 = vsel %vm869, %v2495, 0
    %2502 = vmatprep.subr.bf16.mxu0 0
    %2503 = vmatpush1.bf16.msra.mxu0 %v2500
    %2504 = vmatprep.subr.bf16.mxu0 0
    %2505 = vmatpush1.bf16.msra.mxu0 0
    %2506 = vmatprep.subr.bf16.mxu0 0
    %2507 = vmatpush1.bf16.msra.mxu0 0
    %2508 = vmatprep.subr.bf16.mxu0 0
    %2509 = vmatpush1.bf16.msra.mxu0 0
    %2510 = vmatprep.subr.bf16.mxu0 0
    %2511 = vmatpush1.bf16.msra.mxu0 0
    %2512 = vmatprep.subr.bf16.mxu0 0
    %2513 = vmatpush1.bf16.msra.mxu0 0
    %2514 = vmatprep.subr.bf16.mxu0 0
    %2515 = vmatpush1.bf16.msra.mxu0 0
    %2516 = vmatprep.subr.bf16.mxu0 0
    %2517 = vmatpush1.bf16.msra.mxu0 0
    %2518 = vmatprep.subr.bf16.mxu0 0
    %2519 = vmatpush1.bf16.msra.mxu0 0
    %2520 = vmatprep.subr.bf16.mxu0 0
    %2521 = vmatpush1.bf16.msra.mxu0 0
    %2522 = vmatprep.subr.bf16.mxu0 0
    %2523 = vmatpush1.bf16.msra.mxu0 0
    %2524 = vmatprep.subr.bf16.mxu0 0
    %2525 = vmatpush1.bf16.msra.mxu0 0
    %2526 = vmatprep.subr.bf16.mxu0 0
    %2527 = vmatpush1.bf16.msra.mxu0 0
    %2528 = vmatprep.subr.bf16.mxu0 0
    %2529 = vmatpush1.bf16.msra.mxu0 0
    %2530 = vmatprep.subr.bf16.mxu0 0
    %2531 = vmatpush1.bf16.msra.mxu0 0
    %2532 = vmatprep.subr.bf16.mxu0 0
    %2533 = vmatpush1.bf16.msra.mxu0 0
    %2534 = vmatprep.mubr.bf16.mxu0 0
    %2535 = vmatmul.mubr.bf16.gmra.mrb[0].mxu0 %v2497
    %v2536 = vpop.f32.mrb[0].mxu0
    %v2537 = vadd.f32 0.0, %v2536
    %v2538 = vpop.f32.mrb[0].mxu0
    %v2539 = vpop.f32.mrb[0].mxu0
    %v2540 = vpop.f32.mrb[0].mxu0
    %2541 = vdwg.mxu0
    %2542 = vrot.lane.b32.xlu0 %v1709, 64
    %v2543 = vpop.permute.xlu0 %2542
    %v2545 = vsel %vm370, %v2205, 0
    %v2548 = vsel %vm869, %v2543, 0
    %2550 = vmatprep.subr.bf16.mxu0 0
    %2551 = vmatpush1.bf16.msra.mxu0 %v2548
    %2552 = vmatprep.subr.bf16.mxu0 0
    %2553 = vmatpush1.bf16.msra.mxu0 0
    %2554 = vmatprep.subr.bf16.mxu0 0
    %2555 = vmatpush1.bf16.msra.mxu0 0
    %2556 = vmatprep.subr.bf16.mxu0 0
    %2557 = vmatpush1.bf16.msra.mxu0 0
    %2558 = vmatprep.subr.bf16.mxu0 0
    %2559 = vmatpush1.bf16.msra.mxu0 0
    %2560 = vmatprep.subr.bf16.mxu0 0
    %2561 = vmatpush1.bf16.msra.mxu0 0
    %2562 = vmatprep.subr.bf16.mxu0 0
    %2563 = vmatpush1.bf16.msra.mxu0 0
    %2564 = vmatprep.subr.bf16.mxu0 0
    %2565 = vmatpush1.bf16.msra.mxu0 0
    %2566 = vmatprep.subr.bf16.mxu0 0
    %2567 = vmatpush1.bf16.msra.mxu0 0
    %2568 = vmatprep.subr.bf16.mxu0 0
    %2569 = vmatpush1.bf16.msra.mxu0 0
    %2570 = vmatprep.subr.bf16.mxu0 0
    %2571 = vmatpush1.bf16.msra.mxu0 0
    %2572 = vmatprep.subr.bf16.mxu0 0
    %2573 = vmatpush1.bf16.msra.mxu0 0
    %2574 = vmatprep.subr.bf16.mxu0 0
    %2575 = vmatpush1.bf16.msra.mxu0 0
    %2576 = vmatprep.subr.bf16.mxu0 0
    %2577 = vmatpush1.bf16.msra.mxu0 0
    %2578 = vmatprep.subr.bf16.mxu0 0
    %2579 = vmatpush1.bf16.msra.mxu0 0
    %2580 = vmatprep.subr.bf16.mxu0 0
    %2581 = vmatpush1.bf16.msra.mxu0 0
    %2582 = vmatprep.mubr.bf16.mxu0 0
    %2583 = vmatmul.mubr.bf16.gmra.mrb[0].mxu0 %v2545
    %v2584 = vpop.f32.mrb[0].mxu0
    %v2585 = vadd.f32 0.0, %v2584
    %v2586 = vpop.f32.mrb[0].mxu0
    %v2587 = vpop.f32.mrb[0].mxu0
    %v2588 = vpop.f32.mrb[0].mxu0
    %2589 = vdwg.mxu0
    %2591 = vrot.lane.b32.xlu0 %v2297, 8
    %v2592 = vpop.permute.xlu0 %2591
    %2595 = vrot.lane.b32.xlu0 %v2345, 16
    %v2596 = vpop.permute.xlu0 %2595
    %2599 = vrot.lane.b32.xlu0 %v2393, 24
    %v2600 = vpop.permute.xlu0 %2599
    %v2602 = vsel %vm370, %v2249, %v2592
    %v2603 = vsel %vm1262, %v2602, %v2596
    %v2604 = vsel %vm1264, %v2603, %v2600
    %2606 = vrot.lane.b32.xlu0 %v2489, 8
    %v2607 = vpop.permute.xlu0 %2606
    %2610 = vrot.lane.b32.xlu0 %v2537, 16
    %v2611 = vpop.permute.xlu0 %2610
    %2614 = vrot.lane.b32.xlu0 %v2585, 24
    %v2615 = vpop.permute.xlu0 %2614
    %v2617 = vsel %vm370, %v2441, %v2607
    %v2618 = vsel %vm1262, %v2617, %v2611
    %v2619 = vsel %vm1264, %v2618, %v2615
    %v2620 = vpack.c.bf16 %v2619, %v2604
    %s2621 = scalar_lea.vmem [#allocation9], 16
    %v2622 = vld [vmem:[%s2621] sm:$0xf]
    %v2623 = vld [vmem:[%s2621 + $0x4] sm:$0xf]
    %v2624 = vld [vmem:[%s2621 + $0x8] sm:$0xf]
    %v2625 = vld [vmem:[%s2621 + $0xc] sm:$0xf]
    %s2626 = scalar_lea.vmem [#allocation10], 1
    %v2627 = vld [vmem:[%s2626] sm:$0x1]
    %v2629 = vlaneseq
    %v2630 = vshrl.u32 %v2629, 7
    %v2631 = vsub.s32 0, %v2630
    %v2632 = vrot.slane %v2627, %v2631
    %v2638 = vunpack.c.l.b16 %v2622
    %v2639 = vunpack.c.l.b16 %v2623
    %v2640 = vunpack.c.l.b16 %v2624
    %v2641 = vunpack.c.l.b16 %v2625
    %v2642 = vpack.c.b16 %v2639, %v2638
    %v2643 = vpack.c.b16 %v2641, %v2640
    %v2647 = vsel %vm227, %v2620, 0
    %2649 = vmatprep.subr.bf16.mxu0 0
    %2650 = vmatpush1.bf16.msra.mxu0 %v2642
    %2651 = vmatprep.subr.bf16.mxu0 0
    %2652 = vmatpush1.bf16.msra.mxu0 %v2643
    %2653 = vmatprep.subr.bf16.mxu0 0
    %2654 = vmatpush1.bf16.msra.mxu0 0
    %2655 = vmatprep.subr.bf16.mxu0 0
    %2656 = vmatpush1.bf16.msra.mxu0 0
    %2657 = vmatprep.subr.bf16.mxu0 0
    %2658 = vmatpush1.bf16.msra.mxu0 0
    %2659 = vmatprep.subr.bf16.mxu0 0
    %2660 = vmatpush1.bf16.msra.mxu0 0
    %2661 = vmatprep.subr.bf16.mxu0 0
    %2662 = vmatpush1.bf16.msra.mxu0 0
    %2663 = vmatprep.subr.bf16.mxu0 0
    %2664 = vmatpush1.bf16.msra.mxu0 0
    %2665 = vmatprep.subr.bf16.mxu0 0
    %2666 = vmatpush1.bf16.msra.mxu0 0
    %2667 = vmatprep.subr.bf16.mxu0 0
    %2668 = vmatpush1.bf16.msra.mxu0 0
    %2669 = vmatprep.subr.bf16.mxu0 0
    %2670 = vmatpush1.bf16.msra.mxu0 0
    %2671 = vmatprep.subr.bf16.mxu0 0
    %2672 = vmatpush1.bf16.msra.mxu0 0
    %2673 = vmatprep.subr.bf16.mxu0 0
    %2674 = vmatpush1.bf16.msra.mxu0 0
    %2675 = vmatprep.subr.bf16.mxu0 0
    %2676 = vmatpush1.bf16.msra.mxu0 0
    %2677 = vmatprep.subr.bf16.mxu0 0
    %2678 = vmatpush1.bf16.msra.mxu0 0
    %2679 = vmatprep.subr.bf16.mxu0 0
    %2680 = vmatpush1.bf16.msra.mxu0 0
    %2681 = vmatprep.mubr.bf16.mxu0 0
    %2682 = vmatmul.mubr.bf16.gmra.mrb[0].mxu0 %v2647
    %v2683 = vpop.f32.mrb[0].mxu0
    %v2684 = vadd.f32 %v2632, %v2683
    %v2685 = vpop.f32.mrb[0].mxu0
    %v2686 = vpop.f32.mrb[0].mxu0
    %v2687 = vadd.f32 %v2632, %v2686
    %v2688 = vpop.f32.mrb[0].mxu0
    %2689 = vdwg.mxu0
    %v2690 = vadd.f32 %v1610, %v2684
    %v2691 = vadd.f32 %v1611, %v2687
    %s2692 = scalar_lea.vmem [#allocation12], 1
    %v2693 = vld [vmem:[%s2692] sm:$0x1]
    %s2694 = scalar_lea.vmem [#allocation13], 1
    %v2695 = vld [vmem:[%s2694] sm:$0x1]
    %v2696 = vsel %vm227, %v2690, 0.0
    %2697 = vadd.xlane.f32.xlu0 %v2696
    %v2698 = vpop.xlane.xlu0 %2697
    %v2699 = vsel %vm227, %v2691, 0.0
    %2700 = vadd.xlane.f32.xlu0 %v2699
    %v2701 = vpop.xlane.xlu0 %2700
    %v2702 = vmul.f32 %v2698, %v234
    %v2703 = vmul.f32 %v2701, %v234
    %v2704 = vsub.f32 %v2690, %v2702
    %v2705 = vsub.f32 %v2691, %v2703
    %v2706 = vmul.f32 %v2704, %v2704
    %v2707 = vmul.f32 %v2705, %v2705
    %v2708 = vsel %vm227, %v2706, 0.0
    %2709 = vadd.xlane.f32.xlu0 %v2708
    %v2710 = vpop.xlane.xlu0 %2709
    %v2711 = vsel %vm227, %v2707, 0.0
    %2712 = vadd.xlane.f32.xlu0 %v2711
    %v2713 = vpop.xlane.xlu0 %2712
    %v2714 = vmul.f32 %v2710, %v234
    %v2715 = vmul.f32 %v2713, %v234
    %v2716 = vadd.f32 %v2714, 1e-12
    %v2717 = vadd.f32 %v2715, 1e-12
    %v2718 = vrsqrt.pop %v2716
    %v2719 = vrsqrt.pop %v2717
    %v2720 = vmul.f32 %v2704, %v2718
    %v2721 = vmul.f32 %v2705, %v2719
    %v2723 = vlaneseq
    %v2724 = vshrl.u32 %v2723, 7
    %v2725 = vsub.s32 0, %v2724
    %v2726 = vrot.slane %v2693, %v2725
    %v2728 = vmul.f32 %v2720, %v2726
    %v2729 = vmul.f32 %v2721, %v2726
    %v2731 = vlaneseq
    %v2732 = vshrl.u32 %v2731, 7
    %v2733 = vsub.s32 0, %v2732
    %v2734 = vrot.slane %v2695, %v2733
    %v2736 = vadd.f32 %v2728, %v2734
    %v2737 = vadd.f32 %v2729, %v2734
    %v2738 = vpack.c.bf16 %v2737, %v2736
    %s2739 = scalar_lea.vmem [#allocation15], 16
    %v2740 = vld [vmem:[%s2739] sm:$0xf]
    %v2741 = vld [vmem:[%s2739 + $0x4] sm:$0xf]
    %v2742 = vld [vmem:[%s2739 + $0x8] sm:$0xf]
    %v2743 = vld [vmem:[%s2739 + $0xc] sm:$0xf]
    %s2744 = scalar_lea.vmem [#allocation16], 1
    %v2745 = vld [vmem:[%s2744] sm:$0x1]
    %v2747 = vlaneseq
    %v2748 = vshrl.u32 %v2747, 7
    %v2749 = vsub.s32 0, %v2748
    %v2750 = vrot.slane %v2745, %v2749
    %v2756 = vunpack.c.l.b16 %v2740
    %v2757 = vunpack.c.l.b16 %v2741
    %v2758 = vunpack.c.l.b16 %v2742
    %v2759 = vunpack.c.l.b16 %v2743
    %v2760 = vpack.c.b16 %v2757, %v2756
    %v2761 = vpack.c.b16 %v2759, %v2758
    %v2765 = vsel %vm227, %v2738, 0
    %2767 = vmatprep.subr.bf16.mxu0 0
    %2768 = vmatpush1.bf16.msra.mxu0 %v2760
    %2769 = vmatprep.subr.bf16.mxu0 0
    %2770 = vmatpush1.bf16.msra.mxu0 %v2761
    %2771 = vmatprep.subr.bf16.mxu0 0
    %2772 = vmatpush1.bf16.msra.mxu0 0
    %2773 = vmatprep.subr.bf16.mxu0 0
    %2774 = vmatpush1.bf16.msra.mxu0 0
    %2775 = vmatprep.subr.bf16.mxu0 0
    %2776 = vmatpush1.bf16.msra.mxu0 0
    %2777 = vmatprep.subr.bf16.mxu0 0
    %2778 = vmatpush1.bf16.msra.mxu0 0
    %2779 = vmatprep.subr.bf16.mxu0 0
    %2780 = vmatpush1.bf16.msra.mxu0 0
    %2781 = vmatprep.subr.bf16.mxu0 0
    %2782 = vmatpush1.bf16.msra.mxu0 0
    %2783 = vmatprep.subr.bf16.mxu0 0
    %2784 = vmatpush1.bf16.msra.mxu0 0
    %2785 = vmatprep.subr.bf16.mxu0 0
    %2786 = vmatpush1.bf16.msra.mxu0 0
    %2787 = vmatprep.subr.bf16.mxu0 0
    %2788 = vmatpush1.bf16.msra.mxu0 0
    %2789 = vmatprep.subr.bf16.mxu0 0
    %2790 = vmatpush1.bf16.msra.mxu0 0
    %2791 = vmatprep.subr.bf16.mxu0 0
    %2792 = vmatpush1.bf16.msra.mxu0 0
    %2793 = vmatprep.subr.bf16.mxu0 0
    %2794 = vmatpush1.bf16.msra.mxu0 0
    %2795 = vmatprep.subr.bf16.mxu0 0
    %2796 = vmatpush1.bf16.msra.mxu0 0
    %2797 = vmatprep.subr.bf16.mxu0 0
    %2798 = vmatpush1.bf16.msra.mxu0 0
    %2799 = vmatprep.mubr.bf16.mxu0 0
    %2800 = vmatmul.mubr.bf16.gmra.mrb[0].mxu0 %v2765
    %v2801 = vpop.f32.mrb[0].mxu0
    %v2802 = vadd.f32 %v2750, %v2801
    %v2803 = vpop.f32.mrb[0].mxu0
    %v2804 = vpop.f32.mrb[0].mxu0
    %v2805 = vadd.f32 %v2750, %v2804
    %v2806 = vpop.f32.mrb[0].mxu0
    %2807 = vdwg.mxu0
    %v2808 = vmul.f32 %v2802, 0.5
    %v2809 = vmul.f32 %v2805, 0.5
    %v2810 = vmul.f32 %v2802, 0.044715
    %v2811 = vmul.f32 %v2805, 0.044715
    %v2812 = vmul.f32 %v2810, %v2802
    %v2813 = vmul.f32 %v2811, %v2805
    %v2814 = vmul.f32 %v2812, %v2802
    %v2815 = vmul.f32 %v2813, %v2805
    %v2816 = vadd.f32 %v2802, %v2814
    %v2817 = vadd.f32 %v2805, %v2815
    %v2818 = vmul.f32 %v2816, 0.7978846
    %v2819 = vmul.f32 %v2817, 0.7978846
    %v2820 = vtanh.pop %v2818
    %v2821 = vtanh.pop %v2819
    %v2822 = vadd.f32 %v2820, 1.0
    %v2823 = vadd.f32 %v2821, 1.0
    %v2824 = vmul.f32 %v2808, %v2822
    %v2825 = vmul.f32 %v2809, %v2823
    %v2826 = vpack.c.bf16 %v2825, %v2824
    %s2827 = scalar_lea.vmem %s11, 32
    %v2828 = vld [vmem:[%s2827] sm:$0xf]
    %v2829 = vld [vmem:[%s2827 + $0x4] sm:$0xf]
    %v2830 = vld [vmem:[%s2827 + $0x8] sm:$0xf]
    %v2831 = vld [vmem:[%s2827 + $0xc] sm:$0xf]
    %v2832 = vld [vmem:[%s2827 + $0x10] sm:$0xf]
    %v2833 = vld [vmem:[%s2827 + $0x14] sm:$0xf]
    %v2834 = vld [vmem:[%s2827 + $0x18] sm:$0xf]
    %v2835 = vld [vmem:[%s2827 + $0x1c] sm:$0xf]
    %s2836 = scalar_lea.vmem [#allocation18], 1
    %v2837 = vld [vmem:[%s2836] sm:$0x1]
    %v2839 = vlaneseq
    %v2840 = vshrl.u32 %v2839, 7
    %v2841 = vsub.s32 0, %v2840
    %v2842 = vrot.slane %v2837, %v2841
    %v2852 = vunpack.c.l.b16 %v2828
    %v2853 = vunpack.c.l.b16 %v2829
    %v2854 = vunpack.c.l.b16 %v2830
    %v2855 = vunpack.c.l.b16 %v2831
    %v2856 = vunpack.c.l.b16 %v2832
    %v2857 = vunpack.c.l.b16 %v2833
    %v2858 = vunpack.c.l.b16 %v2834
    %v2859 = vunpack.c.l.b16 %v2835
    %v2860 = vpack.c.b16 %v2853, %v2852
    %v2861 = vpack.c.b16 %v2855, %v2854
    %v2862 = vpack.c.b16 %v2857, %v2856
    %v2863 = vpack.c.b16 %v2859, %v2858
    %v2869 = vsel %vm1521, %v2826, 0
    %2871 = vmatprep.subr.bf16.mxu0 0
    %2872 = vmatpush1.bf16.msra.mxu0 %v2860
    %2873 = vmatprep.subr.bf16.mxu0 0
    %2874 = vmatpush1.bf16.msra.mxu0 %v2861
    %2875 = vmatprep.subr.bf16.mxu0 0
    %2876 = vmatpush1.bf16.msra.mxu0 %v2862
    %2877 = vmatprep.subr.bf16.mxu0 0
    %2878 = vmatpush1.bf16.msra.mxu0 %v2863
    %2879 = vmatprep.subr.bf16.mxu0 0
    %2880 = vmatpush1.bf16.msra.mxu0 0
    %2881 = vmatprep.subr.bf16.mxu0 0
    %2882 = vmatpush1.bf16.msra.mxu0 0
    %2883 = vmatprep.subr.bf16.mxu0 0
    %2884 = vmatpush1.bf16.msra.mxu0 0
    %2885 = vmatprep.subr.bf16.mxu0 0
    %2886 = vmatpush1.bf16.msra.mxu0 0
    %2887 = vmatprep.subr.bf16.mxu0 0
    %2888 = vmatpush1.bf16.msra.mxu0 0
    %2889 = vmatprep.subr.bf16.mxu0 0
    %2890 = vmatpush1.bf16.msra.mxu0 0
    %2891 = vmatprep.subr.bf16.mxu0 0
    %2892 = vmatpush1.bf16.msra.mxu0 0
    %2893 = vmatprep.subr.bf16.mxu0 0
    %2894 = vmatpush1.bf16.msra.mxu0 0
    %2895 = vmatprep.subr.bf16.mxu0 0
    %2896 = vmatpush1.bf16.msra.mxu0 0
    %2897 = vmatprep.subr.bf16.mxu0 0
    %2898 = vmatpush1.bf16.msra.mxu0 0
    %2899 = vmatprep.subr.bf16.mxu0 0
    %2900 = vmatpush1.bf16.msra.mxu0 0
    %2901 = vmatprep.subr.bf16.mxu0 0
    %2902 = vmatpush1.bf16.msra.mxu0 0
    %2903 = vmatprep.mubr.bf16.mxu0 0
    %2904 = vmatmul.mubr.bf16.gmra.mrb[0].mxu0 %v2869
    %v2905 = vpop.f32.mrb[0].mxu0
    %v2906 = vadd.f32 %v2842, %v2905
    %v2907 = vpop.f32.mrb[0].mxu0
    %v2908 = vpop.f32.mrb[0].mxu0
    %v2909 = vadd.f32 %v2842, %v2908
    %v2910 = vpop.f32.mrb[0].mxu0
    %2911 = vdwg.mxu0
    %v2912 = vadd.f32 %v2736, %v2906
    %v2913 = vadd.f32 %v2737, %v2909
    %s2914 = scalar_lea.vmem [#allocation19], 1
    %v2915 = vld [vmem:[%s2914] sm:$0x1]
    %s2916 = scalar_lea.vmem [#allocation21], 1
    %v2917 = vld [vmem:[%s2916] sm:$0x1]
    %v2918 = vsel %vm227, %v2912, 0.0
    %2919 = vadd.xlane.f32.xlu0 %v2918
    %v2920 = vpop.xlane.xlu0 %2919
    %v2921 = vsel %vm227, %v2913, 0.0
    %2922 = vadd.xlane.f32.xlu0 %v2921
    %v2923 = vpop.xlane.xlu0 %2922
    %v2924 = vmul.f32 %v2920, %v234
    %v2925 = vmul.f32 %v2923, %v234
    %v2926 = vsub.f32 %v2912, %v2924
    %v2927 = vsub.f32 %v2913, %v2925
    %v2928 = vmul.f32 %v2926, %v2926
    %v2929 = vmul.f32 %v2927, %v2927
    %v2930 = vsel %vm227, %v2928, 0.0
    %2931 = vadd.xlane.f32.xlu0 %v2930
    %v2932 = vpop.xlane.xlu0 %2931
    %v2933 = vsel %vm227, %v2929, 0.0
    %2934 = vadd.xlane.f32.xlu0 %v2933
    %v2935 = vpop.xlane.xlu0 %2934
    %v2936 = vmul.f32 %v2932, %v234
    %v2937 = vmul.f32 %v2935, %v234
    %v2938 = vadd.f32 %v2936, 1e-12
    %v2939 = vadd.f32 %v2937, 1e-12
    %v2940 = vrsqrt.pop %v2938
    %v2941 = vrsqrt.pop %v2939
    %v2942 = vmul.f32 %v2926, %v2940
    %v2943 = vmul.f32 %v2927, %v2941
    %v2945 = vlaneseq
    %v2946 = vshrl.u32 %v2945, 7
    %v2947 = vsub.s32 0, %v2946
    %v2948 = vrot.slane %v2915, %v2947
    %v2950 = vmul.f32 %v2942, %v2948
    %v2951 = vmul.f32 %v2943, %v2948
    %v2953 = vlaneseq
    %v2954 = vshrl.u32 %v2953, 7
    %v2955 = vsub.s32 0, %v2954
    %v2956 = vrot.slane %v2917, %v2955
    %v2958 = vadd.f32 %v2950, %v2956
    %v2959 = vadd.f32 %v2951, %v2956
    %v2961 = vrot.slane %v2958, 1
    %2962 = vrot.lane.b32.xlu0 %v2961, 32
    %v2963 = vpop.permute.xlu0 %2962
    %v2965 = vrot.slane %v2958, 2
    %2966 = vrot.lane.b32.xlu0 %v2965, 64
    %v2967 = vpop.permute.xlu0 %2966
    %v2969 = vrot.slane %v2958, 3
    %2970 = vrot.lane.b32.xlu0 %v2969, 96
    %v2971 = vpop.permute.xlu0 %2970
    %v2973 = vrot.slane %v2958, 4
    %v2975 = vrot.slane %v2958, 5
    %2976 = vrot.lane.b32.xlu0 %v2975, 32
    %v2977 = vpop.permute.xlu0 %2976
    %v2979 = vrot.slane %v2958, 6
    %2980 = vrot.lane.b32.xlu0 %v2979, 64
    %v2981 = vpop.permute.xlu0 %2980
    %v2983 = vrot.slane %v2958, 7
    %2984 = vrot.lane.b32.xlu0 %v2983, 96
    %v2985 = vpop.permute.xlu0 %2984
    %v2987 = vsel %vm227, %v2958, %v2963
    %v2988 = vsel %vm1521, %v2987, %v2967
    %vm2989 = vcmask 785408
    %v2990 = vsel %vm2989, %v2988, %v2971
    %v2991 = vsel %vm227, %v2973, %v2977
    %v2992 = vsel %vm1521, %v2991, %v2981
    %v2993 = vsel %vm2989, %v2992, %v2985
    %v2995 = vrot.slane %v2959, 1
    %2996 = vrot.lane.b32.xlu0 %v2995, 32
    %v2997 = vpop.permute.xlu0 %2996
    %v2999 = vrot.slane %v2959, 2
    %3000 = vrot.lane.b32.xlu0 %v2999, 64
    %v3001 = vpop.permute.xlu0 %3000
    %v3003 = vrot.slane %v2959, 3
    %3004 = vrot.lane.b32.xlu0 %v3003, 96
    %v3005 = vpop.permute.xlu0 %3004
    %v3007 = vrot.slane %v2959, 4
    %v3009 = vrot.slane %v2959, 5
    %3010 = vrot.lane.b32.xlu0 %v3009, 32
    %v3011 = vpop.permute.xlu0 %3010
    %v3013 = vrot.slane %v2959, 6
    %3014 = vrot.lane.b32.xlu0 %v3013, 64
    %v3015 = vpop.permute.xlu0 %3014
    %v3017 = vrot.slane %v2959, 7
    %3018 = vrot.lane.b32.xlu0 %v3017, 96
    %v3019 = vpop.permute.xlu0 %3018
    %v3021 = vsel %vm227, %v2959, %v2997
    %v3022 = vsel %vm1521, %v3021, %v3001
    %v3023 = vsel %vm2989, %v3022, %v3005
    %v3024 = vsel %vm227, %v3007, %v3011
    %v3025 = vsel %vm1521, %v3024, %v3015
    %v3026 = vsel %vm2989, %v3025, %v3019
    %v3029 = vrot.slane %v3023, 7
    %v3030 = vrot.slane %v3026, 7
    %vm3033 = vcmask 1040384
    %v3034 = vsel %vm3033, %v2990, %v3029
    %v3035 = vsel %vm3033, %v2993, %v3030
    %v3038 = vcombine.low %v3034, %v3035
    %v3040 = vunpack.c.l.s4 1983009808
    %v3041 = vunpack.c.0.s8 %v3040
    %v3042 = vlaneseq
    %v3043 = vshrl.u32 %v3042, 7
    %v3044 = vsub.s32 %v3041, %v3043
    %v3045 = vrot.slane %v3038, %v3044
    %3047 = vst [vmem:[%s15] sm:$0xf] %v3045
    // Predicated region
    $region114: #{transformer_classifier.2} parent=1 // pred_check
      _
    $region115: #{transformer_classifier.2} parent=1 // pred_check_branch
      %3049 = sbr.rel (0) target = $region117
    $region116: #{transformer_classifier.2} parent=1 // pred_region
      _
    $region117: #{transformer_classifier.2} parent=1 // pred_fallthru
      _
    // Predicated region
    $region118: #{transformer_classifier.2} parent=1 // pred_check
      _
    $region119: #{transformer_classifier.2} parent=1 // pred_check_branch
      %3051 = sbr.rel (0) target = $region121
    $region120: #{transformer_classifier.2} parent=1 // pred_region
      _
    $region121: #{transformer_classifier.2} parent=1 // pred_fallthru
      _
    %3052 = vsyncpa [#allocation3], 1
    %3053 = vsyncpa [#allocation5], 1
    %3054 = vsyncpa [#allocation8], 1
    %3055 = vsyncpa [#allocation11], 1
    %3056 = vsyncpa [#allocation14], 1
    %3057 = vsyncpa [#allocation17], 1
    %3058 = vsyncpa [#allocation20], 1

// kernel: transformer_classifier.3
$region0: #{transformer_classifier.3}
  #allocation0 [shape = 'u32[]', space=smem, size = 0x4, offset = 0x4, fixed_abs, tag = 'smem constant byte address 0x4 - core index']
  #allocation1 [shape = 'u32[144,128]{1,0:T(1,128)}', space=vmem, size = 0x12000, scoped, tag = 'internal scratch']
  %s0 = inlined_call_operand.vmem [shape: f32[8,256], index: 0, kind: input, shape index: {}]
  %s1 = inlined_call_operand.hbm [shape: bf16[256,1024], index: 1, kind: input, shape index: {}]
  %s2 = inlined_call_operand.hbm [shape: f32[1,1024], index: 2, kind: input, shape index: {}]
  %s3 = inlined_call_operand.hbm [shape: bf16[1024,1024], index: 3, kind: input, shape index: {}]
  %s4 = inlined_call_operand.hbm [shape: f32[1,1024], index: 4, kind: input, shape index: {}]
  %s5 = inlined_call_operand.vmem [shape: f32[8,1024], index: 5, kind: output, shape index: {}]
  %s6 = sld [smem:[#allocation0]]
  $region46: #{transformer_classifier.3} parent=0
    _
  %s8 = ssub.s32 1, %s6
  %s9 = scalar_select 0, %s8, %s6
  $region1: #{transformer_classifier.3} parent=0
    #allocation2 [shape = 'u8[524288]{0}', space=vmem, size = 0x80000, scoped, tag = 'input window, operand 1, single buffered']
    #allocation3 [shape = 's32[1]{0}', space=sflag, size = 0x4, scoped, tag = 'scoped memory for transformer_classifier.3']
    #allocation4 [shape = 'u8[4096]{0}', space=vmem, size = 0x1000, scoped, tag = 'input window, operand 2, single buffered']
    #allocation5 [shape = 's32[1]{0}', space=sflag, size = 0x4, scoped, tag = 'scoped memory for transformer_classifier.3']
    #allocation6 [shape = 'u8[2097152]{0}', space=vmem, size = 0x200000, scoped, tag = 'input window, operand 3, single buffered']
    #allocation7 [shape = 'u8[4096]{0}', space=vmem, size = 0x1000, scoped, tag = 'input window, operand 4, single buffered']
    #allocation8 [shape = 's32[1]{0}', space=sflag, size = 0x4, scoped, tag = 'scoped memory for transformer_classifier.3']
    %10 = vsyncpa [#allocation3], 0
    %11 = vsyncpa [#allocation5], 0
    %12 = vsyncpa [#allocation8], 0
    // Predicated region
    $region2: #{transformer_classifier.3} parent=1 // pred_check
      _
    $region3: #{transformer_classifier.3} parent=1 // pred_check_branch
      %14 = sbr.rel (0) target = $region5
    $region4: #{transformer_classifier.3} parent=1 // pred_region
      _
    $region5: #{transformer_classifier.3} parent=1 // pred_fallthru
      _
    // Predicated region
    $region6: #{transformer_classifier.3} parent=1 // pred_check
      _
    $region7: #{transformer_classifier.3} parent=1 // pred_check_branch
      %16 = sbr.rel (0) target = $region9
    $region8: #{transformer_classifier.3} parent=1 // pred_region
      %s18 = ssub.s32 16384, 16384
      %19 = vsyncadd [#allocation3], %s18
      %s20 = sshll.u32 [#allocation2], 4
      %s21 = int_to_ptr.vmem [resolvable:$true] %s20
      %26 = dma.hbm_to_vmem [thread:$0]  %s1, 16384, %s21, [#allocation3], 512, 512, 32
    $region9: #{transformer_classifier.3} parent=1 // pred_fallthru
      _
    // Predicated region
    $region10: #{transformer_classifier.3} parent=1 // pred_check
      _
    $region11: #{transformer_classifier.3} parent=1 // pred_check_branch
      %28 = sbr.rel (0) target = $region13
    $region12: #{transformer_classifier.3} parent=1 // pred_region
      %s30 = ssub.s32 128, 128
      %31 = vsyncadd [#allocation5], %s30
      %s33 = sshll.u32 [#allocation4], 4
      %s34 = int_to_ptr.vmem [resolvable:$true] %s33
      %36 = dma.hbm_to_vmem [thread:$0]  %s2, 128, %s34, [#allocation5]
    $region13: #{transformer_classifier.3} parent=1 // pred_fallthru
      _
    // Predicated region
    $region14: #{transformer_classifier.3} parent=1 // pred_check
      _
    $region15: #{transformer_classifier.3} parent=1 // pred_check_branch
      %38 = sbr.rel (0) target = $region17
    $region16: #{transformer_classifier.3} parent=1 // pred_region
      %s40 = ssub.s32 65536, 65536
      %41 = vsyncadd [#allocation5], %s40
      %s42 = sshll.u32 [#allocation6], 4
      %s43 = int_to_ptr.vmem [resolvable:$true] %s42
      %48 = dma.hbm_to_vmem [thread:$0]  %s3, 65536, %s43, [#allocation5], 512, 512, 32
    $region17: #{transformer_classifier.3} parent=1 // pred_fallthru
      _
    // Predicated region
    $region18: #{transformer_classifier.3} parent=1 // pred_check
      _
    $region19: #{transformer_classifier.3} parent=1 // pred_check_branch
      %50 = sbr.rel (0) target = $region21
    $region20: #{transformer_classifier.3} parent=1 // pred_region
      %s52 = ssub.s32 128, 128
      %53 = vsyncadd [#allocation8], %s52
      %s55 = sshll.u32 [#allocation7], 4
      %s56 = int_to_ptr.vmem [resolvable:$true] %s55
      %58 = dma.hbm_to_vmem [thread:$0]  %s4, 128, %s56, [#allocation8]
    $region21: #{transformer_classifier.3} parent=1 // pred_fallthru
      _
    // Predicated region
    $region22: #{transformer_classifier.3} parent=1 // pred_check
      _
    $region23: #{transformer_classifier.3} parent=1 // pred_check_branch
      %60 = sbr.rel (0) target = $region25
    $region24: #{transformer_classifier.3} parent=1 // pred_region
      %61 = dma.done [#allocation3], 16384
    $region25: #{transformer_classifier.3} parent=1 // pred_fallthru
      _
    // Predicated region
    $region26: #{transformer_classifier.3} parent=1 // pred_check
      _
    $region27: #{transformer_classifier.3} parent=1 // pred_check_branch
      %63 = sbr.rel (0) target = $region29
    $region28: #{transformer_classifier.3} parent=1 // pred_region
      %64 = dma.done [#allocation5], 128
    $region29: #{transformer_classifier.3} parent=1 // pred_fallthru
      _
    // Predicated region
    $region30: #{transformer_classifier.3} parent=1 // pred_check
      _
    $region31: #{transformer_classifier.3} parent=1 // pred_check_branch
      %66 = sbr.rel (0) target = $region33
    $region32: #{transformer_classifier.3} parent=1 // pred_region
      %67 = dma.done [#allocation5], 65536
    $region33: #{transformer_classifier.3} parent=1 // pred_fallthru
      _
    // Predicated region
    $region34: #{transformer_classifier.3} parent=1 // pred_check
      _
    $region35: #{transformer_classifier.3} parent=1 // pred_check_branch
      %69 = sbr.rel (0) target = $region37
    $region36: #{transformer_classifier.3} parent=1 // pred_region
      %70 = dma.done [#allocation8], 128
    $region37: #{transformer_classifier.3} parent=1 // pred_fallthru
      _
    %v71 = vld [vmem:[%s0] sm:$0xff]
    %v72 = vld [vmem:[%s0 + $0x8] sm:$0xff]
    %v73 = vpack.c.bf16 %v71, %v71
    %v74 = vpack.c.bf16 %v72, %v72
    %v75 = vld [vmem:[#allocation2] sm:$0xff]
    %v76 = vld [vmem:[#allocation2 + $0x8] sm:$0xff]
    %v77 = vld [vmem:[#allocation2 + $0x10] sm:$0xff]
    %v78 = vld [vmem:[#allocation2 + $0x18] sm:$0xff]
    %v79 = vld [vmem:[#allocation2 + $0x20] sm:$0xff]
    %v80 = vld [vmem:[#allocation2 + $0x28] sm:$0xff]
    %v81 = vld [vmem:[#allocation2 + $0x30] sm:$0xff]
    %v82 = vld [vmem:[#allocation2 + $0x38] sm:$0xff]
    %v83 = vld [vmem:[#allocation2 + $0x40] sm:$0xff]
    %v84 = vld [vmem:[#allocation2 + $0x48] sm:$0xff]
    %v85 = vld [vmem:[#allocation2 + $0x50] sm:$0xff]
    %v86 = vld [vmem:[#allocation2 + $0x58] sm:$0xff]
    %v87 = vld [vmem:[#allocation2 + $0x60] sm:$0xff]
    %v88 = vld [vmem:[#allocation2 + $0x68] sm:$0xff]
    %v89 = vld [vmem:[#allocation2 + $0x70] sm:$0xff]
    %v90 = vld [vmem:[#allocation2 + $0x78] sm:$0xff]
    %v91 = vld [vmem:[#allocation2 + $0x80] sm:$0xff]
    %v92 = vld [vmem:[#allocation2 + $0x88] sm:$0xff]
    %v93 = vld [vmem:[#allocation2 + $0x90] sm:$0xff]
    %v94 = vld [vmem:[#allocation2 + $0x98] sm:$0xff]
    %v95 = vld [vmem:[#allocation2 + $0xa0] sm:$0xff]
    %v96 = vld [vmem:[#allocation2 + $0xa8] sm:$0xff]
    %v97 = vld [vmem:[#allocation2 + $0xb0] sm:$0xff]
    %v98 = vld [vmem:[#allocation2 + $0xb8] sm:$0xff]
    %v99 = vld [vmem:[#allocation2 + $0xc0] sm:$0xff]
    %v100 = vld [vmem:[#allocation2 + $0xc8] sm:$0xff]
    %v101 = vld [vmem:[#allocation2 + $0xd0] sm:$0xff]
    %v102 = vld [vmem:[#allocation2 + $0xd8] sm:$0xff]
    %v103 = vld [vmem:[#allocation2 + $0xe0] sm:$0xff]
    %v104 = vld [vmem:[#allocation2 + $0xe8] sm:$0xff]
    %v105 = vld [vmem:[#allocation2 + $0xf0] sm:$0xff]
    %v106 = vld [vmem:[#allocation2 + $0xf8] sm:$0xff]
    %v107 = vld [vmem:[#allocation2 + $0x100] sm:$0xff]
    %v108 = vld [vmem:[#allocation2 + $0x108] sm:$0xff]
    %v109 = vld [vmem:[#allocation2 + $0x110] sm:$0xff]
    %v110 = vld [vmem:[#allocation2 + $0x118] sm:$0xff]
    %v111 = vld [vmem:[#allocation2 + $0x120] sm:$0xff]
    %v112 = vld [vmem:[#allocation2 + $0x128] sm:$0xff]
    %v113 = vld [vmem:[#allocation2 + $0x130] sm:$0xff]
    %v114 = vld [vmem:[#allocation2 + $0x138] sm:$0xff]
    %v115 = vld [vmem:[#allocation2 + $0x140] sm:$0xff]
    %v116 = vld [vmem:[#allocation2 + $0x148] sm:$0xff]
    %v117 = vld [vmem:[#allocation2 + $0x150] sm:$0xff]
    %v118 = vld [vmem:[#allocation2 + $0x158] sm:$0xff]
    %v119 = vld [vmem:[#allocation2 + $0x160] sm:$0xff]
    %v120 = vld [vmem:[#allocation2 + $0x168] sm:$0xff]
    %v121 = vld [vmem:[#allocation2 + $0x170] sm:$0xff]
    %v122 = vld [vmem:[#allocation2 + $0x178] sm:$0xff]
    %v123 = vld [vmem:[#allocation2 + $0x180] sm:$0xff]
    %v124 = vld [vmem:[#allocation2 + $0x188] sm:$0xff]
    %v125 = vld [vmem:[#allocation2 + $0x190] sm:$0xff]
    %v126 = vld [vmem:[#allocation2 + $0x198] sm:$0xff]
    %v127 = vld [vmem:[#allocation2 + $0x1a0] sm:$0xff]
    %v128 = vld [vmem:[#allocation2 + $0x1a8] sm:$0xff]
    %v129 = vld [vmem:[#allocation2 + $0x1b0] sm:$0xff]
    %v130 = vld [vmem:[#allocation2 + $0x1b8] sm:$0xff]
    %v131 = vld [vmem:[#allocation2 + $0x1c0] sm:$0xff]
    %v132 = vld [vmem:[#allocation2 + $0x1c8] sm:$0xff]
    %v133 = vld [vmem:[#allocation2 + $0x1d0] sm:$0xff]
    %v134 = vld [vmem:[#allocation2 + $0x1d8] sm:$0xff]
    %v135 = vld [vmem:[#allocation2 + $0x1e0] sm:$0xff]
    %v136 = vld [vmem:[#allocation2 + $0x1e8] sm:$0xff]
    %v137 = vld [vmem:[#allocation2 + $0x1f0] sm:$0xff]
    %v138 = vld [vmem:[#allocation2 + $0x1f8] sm:$0xff]
    %v139 = vld [vmem:[#allocation2 + $0x200] sm:$0xff]
    %v140 = vld [vmem:[#allocation2 + $0x208] sm:$0xff]
    %v141 = vld [vmem:[#allocation2 + $0x210] sm:$0xff]
    %v142 = vld [vmem:[#allocation2 + $0x218] sm:$0xff]
    %v143 = vld [vmem:[#allocation2 + $0x220] sm:$0xff]
    %v144 = vld [vmem:[#allocation2 + $0x228] sm:$0xff]
    %v145 = vld [vmem:[#allocation2 + $0x230] sm:$0xff]
    %v146 = vld [vmem:[#allocation2 + $0x238] sm:$0xff]
    %v147 = vld [vmem:[#allocation2 + $0x240] sm:$0xff]
    %v148 = vld [vmem:[#allocation2 + $0x248] sm:$0xff]
    %v149 = vld [vmem:[#allocation2 + $0x250] sm:$0xff]
    %v150 = vld [vmem:[#allocation2 + $0x258] sm:$0xff]
    %v151 = vld [vmem:[#allocation2 + $0x260] sm:$0xff]
    %v152 = vld [vmem:[#allocation2 + $0x268] sm:$0xff]
    %v153 = vld [vmem:[#allocation2 + $0x270] sm:$0xff]
    %v154 = vld [vmem:[#allocation2 + $0x278] sm:$0xff]
    %v155 = vld [vmem:[#allocation2 + $0x280] sm:$0xff]
    %v156 = vld [vmem:[#allocation2 + $0x288] sm:$0xff]
    %v157 = vld [vmem:[#allocation2 + $0x290] sm:$0xff]
    %v158 = vld [vmem:[#allocation2 + $0x298] sm:$0xff]
    %v159 = vld [vmem:[#allocation2 + $0x2a0] sm:$0xff]
    %v160 = vld [vmem:[#allocation2 + $0x2a8] sm:$0xff]
    %v161 = vld [vmem:[#allocation2 + $0x2b0] sm:$0xff]
    %v162 = vld [vmem:[#allocation2 + $0x2b8] sm:$0xff]
    %v163 = vld [vmem:[#allocation2 + $0x2c0] sm:$0xff]
    %v164 = vld [vmem:[#allocation2 + $0x2c8] sm:$0xff]
    %v165 = vld [vmem:[#allocation2 + $0x2d0] sm:$0xff]
    %v166 = vld [vmem:[#allocation2 + $0x2d8] sm:$0xff]
    %v167 = vld [vmem:[#allocation2 + $0x2e0] sm:$0xff]
    %v168 = vld [vmem:[#allocation2 + $0x2e8] sm:$0xff]
    %v169 = vld [vmem:[#allocation2 + $0x2f0] sm:$0xff]
    %v170 = vld [vmem:[#allocation2 + $0x2f8] sm:$0xff]
    %v171 = vld [vmem:[#allocation2 + $0x300] sm:$0xff]
    %v172 = vld [vmem:[#allocation2 + $0x308] sm:$0xff]
    %v173 = vld [vmem:[#allocation2 + $0x310] sm:$0xff]
    %v174 = vld [vmem:[#allocation2 + $0x318] sm:$0xff]
    %v175 = vld [vmem:[#allocation2 + $0x320] sm:$0xff]
    %v176 = vld [vmem:[#allocation2 + $0x328] sm:$0xff]
    %v177 = vld [vmem:[#allocation2 + $0x330] sm:$0xff]
    %v178 = vld [vmem:[#allocation2 + $0x338] sm:$0xff]
    %v179 = vld [vmem:[#allocation2 + $0x340] sm:$0xff]
    %v180 = vld [vmem:[#allocation2 + $0x348] sm:$0xff]
    %v181 = vld [vmem:[#allocation2 + $0x350] sm:$0xff]
    %v182 = vld [vmem:[#allocation2 + $0x358] sm:$0xff]
    %v183 = vld [vmem:[#allocation2 + $0x360] sm:$0xff]
    %v184 = vld [vmem:[#allocation2 + $0x368] sm:$0xff]
    %v185 = vld [vmem:[#allocation2 + $0x370] sm:$0xff]
    %v186 = vld [vmem:[#allocation2 + $0x378] sm:$0xff]
    %v187 = vld [vmem:[#allocation2 + $0x380] sm:$0xff]
    %v188 = vld [vmem:[#allocation2 + $0x388] sm:$0xff]
    %v189 = vld [vmem:[#allocation2 + $0x390] sm:$0xff]
    %v190 = vld [vmem:[#allocation2 + $0x398] sm:$0xff]
    %v191 = vld [vmem:[#allocation2 + $0x3a0] sm:$0xff]
    %v192 = vld [vmem:[#allocation2 + $0x3a8] sm:$0xff]
    %v193 = vld [vmem:[#allocation2 + $0x3b0] sm:$0xff]
    %v194 = vld [vmem:[#allocation2 + $0x3b8] sm:$0xff]
    %v195 = vld [vmem:[#allocation2 + $0x3c0] sm:$0xff]
    %v196 = vld [vmem:[#allocation2 + $0x3c8] sm:$0xff]
    %v197 = vld [vmem:[#allocation2 + $0x3d0] sm:$0xff]
    %v198 = vld [vmem:[#allocation2 + $0x3d8] sm:$0xff]
    %v199 = vld [vmem:[#allocation2 + $0x3e0] sm:$0xff]
    %v200 = vld [vmem:[#allocation2 + $0x3e8] sm:$0xff]
    %v201 = vld [vmem:[#allocation2 + $0x3f0] sm:$0xff]
    %v202 = vld [vmem:[#allocation2 + $0x3f8] sm:$0xff]
    %v203 = vld [vmem:[#allocation4] sm:$0xff]
    %v205 = vlaneseq
    %v206 = vshrl.u32 %v205, 7
    %v207 = vsub.s32 0, %v206
    %v208 = vrot.slane %v203, %v207
    %v209 = vlaneseq
    %v210 = vshrl.u32 %v209, 7
    %v211 = vsub.s32 1, %v210
    %v212 = vrot.slane %v203, %v211
    %v213 = vlaneseq
    %v214 = vshrl.u32 %v213, 7
    %v215 = vsub.s32 2, %v214
    %v216 = vrot.slane %v203, %v215
    %v217 = vlaneseq
    %v218 = vshrl.u32 %v217, 7
    %v219 = vsub.s32 3, %v218
    %v220 = vrot.slane %v203, %v219
    %v221 = vlaneseq
    %v222 = vshrl.u32 %v221, 7
    %v223 = vsub.s32 4, %v222
    %v224 = vrot.slane %v203, %v223
    %v225 = vlaneseq
    %v226 = vshrl.u32 %v225, 7
    %v227 = vsub.s32 5, %v226
    %v228 = vrot.slane %v203, %v227
    %v229 = vlaneseq
    %v230 = vshrl.u32 %v229, 7
    %v231 = vsub.s32 6, %v230
    %v232 = vrot.slane %v203, %v231
    %v233 = vlaneseq
    %v234 = vshrl.u32 %v233, 7
    %v235 = vsub.s32 7, %v234
    %v236 = vrot.slane %v203, %v235
    %v373 = vunpack.c.l.b16 %v75
    %v374 = vunpack.c.h.b16 %v75
    %v375 = vunpack.c.l.b16 %v76
    %v376 = vunpack.c.h.b16 %v76
    %v377 = vunpack.c.l.b16 %v77
    %v378 = vunpack.c.h.b16 %v77
    %v379 = vunpack.c.l.b16 %v78
    %v380 = vunpack.c.h.b16 %v78
    %v381 = vunpack.c.l.b16 %v79
    %v382 = vunpack.c.h.b16 %v79
    %v383 = vunpack.c.l.b16 %v80
    %v384 = vunpack.c.h.b16 %v80
    %v385 = vunpack.c.l.b16 %v81
    %v386 = vunpack.c.h.b16 %v81
    %v387 = vunpack.c.l.b16 %v82
    %v388 = vunpack.c.h.b16 %v82
    %v389 = vunpack.c.l.b16 %v83
    %v390 = vunpack.c.h.b16 %v83
    %v391 = vunpack.c.l.b16 %v84
    %v392 = vunpack.c.h.b16 %v84
    %v393 = vunpack.c.l.b16 %v85
    %v394 = vunpack.c.h.b16 %v85
    %v395 = vunpack.c.l.b16 %v86
    %v396 = vunpack.c.h.b16 %v86
    %v397 = vunpack.c.l.b16 %v87
    %v398 = vunpack.c.h.b16 %v87
    %v399 = vunpack.c.l.b16 %v88
    %v400 = vunpack.c.h.b16 %v88
    %v401 = vunpack.c.l.b16 %v89
    %v402 = vunpack.c.h.b16 %v89
    %v403 = vunpack.c.l.b16 %v90
    %v404 = vunpack.c.h.b16 %v90
    %v405 = vunpack.c.l.b16 %v91
    %v406 = vunpack.c.h.b16 %v91
    %v407 = vunpack.c.l.b16 %v92
    %v408 = vunpack.c.h.b16 %v92
    %v409 = vunpack.c.l.b16 %v93
    %v410 = vunpack.c.h.b16 %v93
    %v411 = vunpack.c.l.b16 %v94
    %v412 = vunpack.c.h.b16 %v94
    %v413 = vunpack.c.l.b16 %v95
    %v414 = vunpack.c.h.b16 %v95
    %v415 = vunpack.c.l.b16 %v96
    %v416 = vunpack.c.h.b16 %v96
    %v417 = vunpack.c.l.b16 %v97
    %v418 = vunpack.c.h.b16 %v97
    %v419 = vunpack.c.l.b16 %v98
    %v420 = vunpack.c.h.b16 %v98
    %v421 = vunpack.c.l.b16 %v99
    %v422 = vunpack.c.h.b16 %v99
    %v423 = vunpack.c.l.b16 %v100
    %v424 = vunpack.c.h.b16 %v100
    %v425 = vunpack.c.l.b16 %v101
    %v426 = vunpack.c.h.b16 %v101
    %v427 = vunpack.c.l.b16 %v102
    %v428 = vunpack.c.h.b16 %v102
    %v429 = vunpack.c.l.b16 %v103
    %v430 = vunpack.c.h.b16 %v103
    %v431 = vunpack.c.l.b16 %v104
    %v432 = vunpack.c.h.b16 %v104
    %v433 = vunpack.c.l.b16 %v105
    %v434 = vunpack.c.h.b16 %v105
    %v435 = vunpack.c.l.b16 %v106
    %v436 = vunpack.c.h.b16 %v106
    %v437 = vunpack.c.l.b16 %v107
    %v438 = vunpack.c.h.b16 %v107
    %v439 = vunpack.c.l.b16 %v108
    %v440 = vunpack.c.h.b16 %v108
    %v441 = vunpack.c.l.b16 %v109
    %v442 = vunpack.c.h.b16 %v109
    %v443 = vunpack.c.l.b16 %v110
    %v444 = vunpack.c.h.b16 %v110
    %v445 = vunpack.c.l.b16 %v111
    %v446 = vunpack.c.h.b16 %v111
    %v447 = vunpack.c.l.b16 %v112
    %v448 = vunpack.c.h.b16 %v112
    %v449 = vunpack.c.l.b16 %v113
    %v450 = vunpack.c.h.b16 %v113
    %v451 = vunpack.c.l.b16 %v114
    %v452 = vunpack.c.h.b16 %v114
    %v453 = vunpack.c.l.b16 %v115
    %v454 = vunpack.c.h.b16 %v115
    %v455 = vunpack.c.l.b16 %v116
    %v456 = vunpack.c.h.b16 %v116
    %v457 = vunpack.c.l.b16 %v117
    %v458 = vunpack.c.h.b16 %v117
    %v459 = vunpack.c.l.b16 %v118
    %v460 = vunpack.c.h.b16 %v118
    %v461 = vunpack.c.l.b16 %v119
    %v462 = vunpack.c.h.b16 %v119
    %v463 = vunpack.c.l.b16 %v120
    %v464 = vunpack.c.h.b16 %v120
    %v465 = vunpack.c.l.b16 %v121
    %v466 = vunpack.c.h.b16 %v121
    %v467 = vunpack.c.l.b16 %v122
    %v468 = vunpack.c.h.b16 %v122
    %v469 = vunpack.c.l.b16 %v123
    %v470 = vunpack.c.h.b16 %v123
    %v471 = vunpack.c.l.b16 %v124
    %v472 = vunpack.c.h.b16 %v124
    %v473 = vunpack.c.l.b16 %v125
    %v474 = vunpack.c.h.b16 %v125
    %v475 = vunpack.c.l.b16 %v126
    %v476 = vunpack.c.h.b16 %v126
    %v477 = vunpack.c.l.b16 %v127
    %v478 = vunpack.c.h.b16 %v127
    %v479 = vunpack.c.l.b16 %v128
    %v480 = vunpack.c.h.b16 %v128
    %v481 = vunpack.c.l.b16 %v129
    %v482 = vunpack.c.h.b16 %v129
    %v483 = vunpack.c.l.b16 %v130
    %v484 = vunpack.c.h.b16 %v130
    %v485 = vunpack.c.l.b16 %v131
    %v486 = vunpack.c.h.b16 %v131
    %v487 = vunpack.c.l.b16 %v132
    %v488 = vunpack.c.h.b16 %v132
    %v489 = vunpack.c.l.b16 %v133
    %v490 = vunpack.c.h.b16 %v133
    %v491 = vunpack.c.l.b16 %v134
    %v492 = vunpack.c.h.b16 %v134
    %v493 = vunpack.c.l.b16 %v135
    %v494 = vunpack.c.h.b16 %v135
    %v495 = vunpack.c.l.b16 %v136
    %v496 = vunpack.c.h.b16 %v136
    %v497 = vunpack.c.l.b16 %v137
    %v498 = vunpack.c.h.b16 %v137
    %v499 = vunpack.c.l.b16 %v138
    %v500 = vunpack.c.h.b16 %v138
    %v501 = vunpack.c.l.b16 %v139
    %v502 = vunpack.c.h.b16 %v139
    %v503 = vunpack.c.l.b16 %v140
    %v504 = vunpack.c.h.b16 %v140
    %v505 = vunpack.c.l.b16 %v141
    %v506 = vunpack.c.h.b16 %v141
    %v507 = vunpack.c.l.b16 %v142
    %v508 = vunpack.c.h.b16 %v142
    %v509 = vunpack.c.l.b16 %v143
    %v510 = vunpack.c.h.b16 %v143
    %v511 = vunpack.c.l.b16 %v144
    %v512 = vunpack.c.h.b16 %v144
    %v513 = vunpack.c.l.b16 %v145
    %v514 = vunpack.c.h.b16 %v145
    %v515 = vunpack.c.l.b16 %v146
    %v516 = vunpack.c.h.b16 %v146
    %v517 = vunpack.c.l.b16 %v147
    %v518 = vunpack.c.h.b16 %v147
    %v519 = vunpack.c.l.b16 %v148
    %v520 = vunpack.c.h.b16 %v148
    %v521 = vunpack.c.l.b16 %v149
    %v522 = vunpack.c.h.b16 %v149
    %v523 = vunpack.c.l.b16 %v150
    %v524 = vunpack.c.h.b16 %v150
    %v525 = vunpack.c.l.b16 %v151
    %v526 = vunpack.c.h.b16 %v151
    %v527 = vunpack.c.l.b16 %v152
    %v528 = vunpack.c.h.b16 %v152
    %v529 = vunpack.c.l.b16 %v153
    %v530 = vunpack.c.h.b16 %v153
    %v531 = vunpack.c.l.b16 %v154
    %v532 = vunpack.c.h.b16 %v154
    %v533 = vunpack.c.l.b16 %v155
    %v534 = vunpack.c.h.b16 %v155
    %v535 = vunpack.c.l.b16 %v156
    %v536 = vunpack.c.h.b16 %v156
    %v537 = vunpack.c.l.b16 %v157
    %v538 = vunpack.c.h.b16 %v157
    %v539 = vunpack.c.l.b16 %v158
    %v540 = vunpack.c.h.b16 %v158
    %v541 = vunpack.c.l.b16 %v159
    %v542 = vunpack.c.h.b16 %v159
    %v543 = vunpack.c.l.b16 %v160
    %v544 = vunpack.c.h.b16 %v160
    %v545 = vunpack.c.l.b16 %v161
    %v546 = vunpack.c.h.b16 %v161
    %v547 = vunpack.c.l.b16 %v162
    %v548 = vunpack.c.h.b16 %v162
    %v549 = vunpack.c.l.b16 %v163
    %v550 = vunpack.c.h.b16 %v163
    %v551 = vunpack.c.l.b16 %v164
    %v552 = vunpack.c.h.b16 %v164
    %v553 = vunpack.c.l.b16 %v165
    %v554 = vunpack.c.h.b16 %v165
    %v555 = vunpack.c.l.b16 %v166
    %v556 = vunpack.c.h.b16 %v166
    %v557 = vunpack.c.l.b16 %v167
    %v558 = vunpack.c.h.b16 %v167
    %v559 = vunpack.c.l.b16 %v168
    %v560 = vunpack.c.h.b16 %v168
    %v561 = vunpack.c.l.b16 %v169
    %v562 = vunpack.c.h.b16 %v169
    %v563 = vunpack.c.l.b16 %v170
    %v564 = vunpack.c.h.b16 %v170
    %v565 = vunpack.c.l.b16 %v171
    %v566 = vunpack.c.h.b16 %v171
    %v567 = vunpack.c.l.b16 %v172
    %v568 = vunpack.c.h.b16 %v172
    %v569 = vunpack.c.l.b16 %v173
    %v570 = vunpack.c.h.b16 %v173
    %v571 = vunpack.c.l.b16 %v174
    %v572 = vunpack.c.h.b16 %v174
    %v573 = vunpack.c.l.b16 %v175
    %v574 = vunpack.c.h.b16 %v175
    %v575 = vunpack.c.l.b16 %v176
    %v576 = vunpack.c.h.b16 %v176
    %v577 = vunpack.c.l.b16 %v177
    %v578 = vunpack.c.h.b16 %v177
    %v579 = vunpack.c.l.b16 %v178
    %v580 = vunpack.c.h.b16 %v178
    %v581 = vunpack.c.l.b16 %v179
    %v582 = vunpack.c.h.b16 %v179
    %v583 = vunpack.c.l.b16 %v180
    %v584 = vunpack.c.h.b16 %v180
    %v585 = vunpack.c.l.b16 %v181
    %v586 = vunpack.c.h.b16 %v181
    %v587 = vunpack.c.l.b16 %v182
    %v588 = vunpack.c.h.b16 %v182
    %v589 = vunpack.c.l.b16 %v183
    %v590 = vunpack.c.h.b16 %v183
    %v591 = vunpack.c.l.b16 %v184
    %v592 = vunpack.c.h.b16 %v184
    %v593 = vunpack.c.l.b16 %v185
    %v594 = vunpack.c.h.b16 %v185
    %v595 = vunpack.c.l.b16 %v186
    %v596 = vunpack.c.h.b16 %v186
    %v597 = vunpack.c.l.b16 %v187
    %v598 = vunpack.c.h.b16 %v187
    %v599 = vunpack.c.l.b16 %v188
    %v600 = vunpack.c.h.b16 %v188
    %v601 = vunpack.c.l.b16 %v189
    %v602 = vunpack.c.h.b16 %v189
    %v603 = vunpack.c.l.b16 %v190
    %v604 = vunpack.c.h.b16 %v190
    %v605 = vunpack.c.l.b16 %v191
    %v606 = vunpack.c.h.b16 %v191
    %v607 = vunpack.c.l.b16 %v192
    %v608 = vunpack.c.h.b16 %v192
    %v609 = vunpack.c.l.b16 %v193
    %v610 = vunpack.c.h.b16 %v193
    %v611 = vunpack.c.l.b16 %v194
    %v612 = vunpack.c.h.b16 %v194
    %v613 = vunpack.c.l.b16 %v195
    %v614 = vunpack.c.h.b16 %v195
    %v615 = vunpack.c.l.b16 %v196
    %v616 = vunpack.c.h.b16 %v196
    %v617 = vunpack.c.l.b16 %v197
    %v618 = vunpack.c.h.b16 %v197
    %v619 = vunpack.c.l.b16 %v198
    %v620 = vunpack.c.h.b16 %v198
    %v621 = vunpack.c.l.b16 %v199
    %v622 = vunpack.c.h.b16 %v199
    %v623 = vunpack.c.l.b16 %v200
    %v624 = vunpack.c.h.b16 %v200
    %v625 = vunpack.c.l.b16 %v201
    %v626 = vunpack.c.h.b16 %v201
    %v627 = vunpack.c.l.b16 %v202
    %v628 = vunpack.c.h.b16 %v202
    %v629 = vpack.c.b16 %v381, %v373
    %v630 = vpack.c.b16 %v382, %v374
    %v631 = vpack.c.b16 %v383, %v375
    %v632 = vpack.c.b16 %v384, %v376
    %v633 = vpack.c.b16 %v385, %v377
    %v634 = vpack.c.b16 %v386, %v378
    %v635 = vpack.c.b16 %v387, %v379
    %v636 = vpack.c.b16 %v388, %v380
    %v637 = vpack.c.b16 %v397, %v389
    %v638 = vpack.c.b16 %v398, %v390
    %v639 = vpack.c.b16 %v399, %v391
    %v640 = vpack.c.b16 %v400, %v392
    %v641 = vpack.c.b16 %v401, %v393
    %v642 = vpack.c.b16 %v402, %v394
    %v643 = vpack.c.b16 %v403, %v395
    %v644 = vpack.c.b16 %v404, %v396
    %v645 = vpack.c.b16 %v413, %v405
    %v646 = vpack.c.b16 %v414, %v406
    %v647 = vpack.c.b16 %v415, %v407
    %v648 = vpack.c.b16 %v416, %v408
    %v649 = vpack.c.b16 %v417, %v409
    %v650 = vpack.c.b16 %v418, %v410
    %v651 = vpack.c.b16 %v419, %v411
    %v652 = vpack.c.b16 %v420, %v412
    %v653 = vpack.c.b16 %v429, %v421
    %v654 = vpack.c.b16 %v430, %v422
    %v655 = vpack.c.b16 %v431, %v423
    %v656 = vpack.c.b16 %v432, %v424
    %v657 = vpack.c.b16 %v433, %v425
    %v658 = vpack.c.b16 %v434, %v426
    %v659 = vpack.c.b16 %v435, %v427
    %v660 = vpack.c.b16 %v436, %v428
    %v661 = vpack.c.b16 %v445, %v437
    %v662 = vpack.c.b16 %v446, %v438
    %v663 = vpack.c.b16 %v447, %v439
    %v664 = vpack.c.b16 %v448, %v440
    %v665 = vpack.c.b16 %v449, %v441
    %v666 = vpack.c.b16 %v450, %v442
    %v667 = vpack.c.b16 %v451, %v443
    %v668 = vpack.c.b16 %v452, %v444
    %v669 = vpack.c.b16 %v461, %v453
    %v670 = vpack.c.b16 %v462, %v454
    %v671 = vpack.c.b16 %v463, %v455
    %v672 = vpack.c.b16 %v464, %v456
    %v673 = vpack.c.b16 %v465, %v457
    %v674 = vpack.c.b16 %v466, %v458
    %v675 = vpack.c.b16 %v467, %v459
    %v676 = vpack.c.b16 %v468, %v460
    %v677 = vpack.c.b16 %v477, %v469
    %v678 = vpack.c.b16 %v478, %v470
    %v679 = vpack.c.b16 %v479, %v471
    %v680 = vpack.c.b16 %v480, %v472
    %v681 = vpack.c.b16 %v481, %v473
    %v682 = vpack.c.b16 %v482, %v474
    %v683 = vpack.c.b16 %v483, %v475
    %v684 = vpack.c.b16 %v484, %v476
    %v685 = vpack.c.b16 %v493, %v485
    %v686 = vpack.c.b16 %v494, %v486
    %v687 = vpack.c.b16 %v495, %v487
    %v688 = vpack.c.b16 %v496, %v488
    %v689 = vpack.c.b16 %v497, %v489
    %v690 = vpack.c.b16 %v498, %v490
    %v691 = vpack.c.b16 %v499, %v491
    %v692 = vpack.c.b16 %v500, %v492
    %v693 = vpack.c.b16 %v509, %v501
    %v694 = vpack.c.b16 %v510, %v502
    %v695 = vpack.c.b16 %v511, %v503
    %v696 = vpack.c.b16 %v512, %v504
    %v697 = vpack.c.b16 %v513, %v505
    %v698 = vpack.c.b16 %v514, %v506
    %v699 = vpack.c.b16 %v515, %v507
    %v700 = vpack.c.b16 %v516, %v508
    %v701 = vpack.c.b16 %v525, %v517
    %v702 = vpack.c.b16 %v526, %v518
    %v703 = vpack.c.b16 %v527, %v519
    %v704 = vpack.c.b16 %v528, %v520
    %v705 = vpack.c.b16 %v529, %v521
    %v706 = vpack.c.b16 %v530, %v522
    %v707 = vpack.c.b16 %v531, %v523
    %v708 = vpack.c.b16 %v532, %v524
    %v709 = vpack.c.b16 %v541, %v533
    %v710 = vpack.c.b16 %v542, %v534
    %v711 = vpack.c.b16 %v543, %v535
    %v712 = vpack.c.b16 %v544, %v536
    %v713 = vpack.c.b16 %v545, %v537
    %v714 = vpack.c.b16 %v546, %v538
    %v715 = vpack.c.b16 %v547, %v539
    %v716 = vpack.c.b16 %v548, %v540
    %v717 = vpack.c.b16 %v557, %v549
    %v718 = vpack.c.b16 %v558, %v550
    %v719 = vpack.c.b16 %v559, %v551
    %v720 = vpack.c.b16 %v560, %v552
    %v721 = vpack.c.b16 %v561, %v553
    %v722 = vpack.c.b16 %v562, %v554
    %v723 = vpack.c.b16 %v563, %v555
    %v724 = vpack.c.b16 %v564, %v556
    %v725 = vpack.c.b16 %v573, %v565
    %v726 = vpack.c.b16 %v574, %v566
    %v727 = vpack.c.b16 %v575, %v567
    %v728 = vpack.c.b16 %v576, %v568
    %v729 = vpack.c.b16 %v577, %v569
    %v730 = vpack.c.b16 %v578, %v570
    %v731 = vpack.c.b16 %v579, %v571
    %v732 = vpack.c.b16 %v580, %v572
    %v733 = vpack.c.b16 %v589, %v581
    %v734 = vpack.c.b16 %v590, %v582
    %v735 = vpack.c.b16 %v591, %v583
    %v736 = vpack.c.b16 %v592, %v584
    %v737 = vpack.c.b16 %v593, %v585
    %v738 = vpack.c.b16 %v594, %v586
    %v739 = vpack.c.b16 %v595, %v587
    %v740 = vpack.c.b16 %v596, %v588
    %v741 = vpack.c.b16 %v605, %v597
    %v742 = vpack.c.b16 %v606, %v598
    %v743 = vpack.c.b16 %v607, %v599
    %v744 = vpack.c.b16 %v608, %v600
    %v745 = vpack.c.b16 %v609, %v601
    %v746 = vpack.c.b16 %v610, %v602
    %v747 = vpack.c.b16 %v611, %v603
    %v748 = vpack.c.b16 %v612, %v604
    %v749 = vpack.c.b16 %v621, %v613
    %v750 = vpack.c.b16 %v622, %v614
    %v751 = vpack.c.b16 %v623, %v615
    %v752 = vpack.c.b16 %v624, %v616
    %v753 = vpack.c.b16 %v625, %v617
    %v754 = vpack.c.b16 %v626, %v618
    %v755 = vpack.c.b16 %v627, %v619
    %v756 = vpack.c.b16 %v628, %v620
    %885 = vmatprep.subr.bf16.mxu0 %v630
    %886 = vmatpush1.bf16.msra.mxu0 %v629
    %887 = vmatprep.subr.bf16.mxu0 %v638
    %888 = vmatpush1.bf16.msra.mxu0 %v637
    %889 = vmatprep.subr.bf16.mxu0 %v646
    %890 = vmatpush1.bf16.msra.mxu0 %v645
    %891 = vmatprep.subr.bf16.mxu0 %v654
    %892 = vmatpush1.bf16.msra.mxu0 %v653
    %893 = vmatprep.subr.bf16.mxu0 %v662
    %894 = vmatpush1.bf16.msra.mxu0 %v661
    %895 = vmatprep.subr.bf16.mxu0 %v670
    %896 = vmatpush1.bf16.msra.mxu0 %v669
    %897 = vmatprep.subr.bf16.mxu0 %v678
    %898 = vmatpush1.bf16.msra.mxu0 %v677
    %899 = vmatprep.subr.bf16.mxu0 %v686
    %900 = vmatpush1.bf16.msra.mxu0 %v685
    %901 = vmatprep.subr.bf16.mxu0 %v694
    %902 = vmatpush1.bf16.msra.mxu0 %v693
    %903 = vmatprep.subr.bf16.mxu0 %v702
    %904 = vmatpush1.bf16.msra.mxu0 %v701
    %905 = vmatprep.subr.bf16.mxu0 %v710
    %906 = vmatpush1.bf16.msra.mxu0 %v709
    %907 = vmatprep.subr.bf16.mxu0 %v718
    %908 = vmatpush1.bf16.msra.mxu0 %v717
    %909 = vmatprep.subr.bf16.mxu0 %v726
    %910 = vmatpush1.bf16.msra.mxu0 %v725
    %911 = vmatprep.subr.bf16.mxu0 %v734
    %912 = vmatpush1.bf16.msra.mxu0 %v733
    %913 = vmatprep.subr.bf16.mxu0 %v742
    %914 = vmatpush1.bf16.msra.mxu0 %v741
    %915 = vmatprep.subr.bf16.mxu0 %v750
    %916 = vmatpush1.bf16.msra.mxu0 %v749
    %917 = vmatprep.mubr.bf16.mxu0 %v74
    %918 = vmatmul.mubr.bf16.gmra.mrb[0].mxu0 %v73
    %v919 = vpop.f32.mrb[0].mxu0
    %v920 = vadd.f32 %v208, %v919
    %v921 = vpop.f32.mrb[0].mxu0
    %v922 = vadd.f32 %v212, %v921
    %v923 = vpop.f32.mrb[0].mxu0
    %v924 = vpop.f32.mrb[0].mxu0
    %925 = vdwg.mxu0
    %926 = vmatprep.subr.bf16.mxu0 %v632
    %927 = vmatpush1.bf16.msra.mxu0 %v631
    %928 = vmatprep.subr.bf16.mxu0 %v640
    %929 = vmatpush1.bf16.msra.mxu0 %v639
    %930 = vmatprep.subr.bf16.mxu0 %v648
    %931 = vmatpush1.bf16.msra.mxu0 %v647
    %932 = vmatprep.subr.bf16.mxu0 %v656
    %933 = vmatpush1.bf16.msra.mxu0 %v655
    %934 = vmatprep.subr.bf16.mxu0 %v664
    %935 = vmatpush1.bf16.msra.mxu0 %v663
    %936 = vmatprep.subr.bf16.mxu0 %v672
    %937 = vmatpush1.bf16.msra.mxu0 %v671
    %938 = vmatprep.subr.bf16.mxu0 %v680
    %939 = vmatpush1.bf16.msra.mxu0 %v679
    %940 = vmatprep.subr.bf16.mxu0 %v688
    %941 = vmatpush1.bf16.msra.mxu0 %v687
    %942 = vmatprep.subr.bf16.mxu0 %v696
    %943 = vmatpush1.bf16.msra.mxu0 %v695
    %944 = vmatprep.subr.bf16.mxu0 %v704
    %945 = vmatpush1.bf16.msra.mxu0 %v703
    %946 = vmatprep.subr.bf16.mxu0 %v712
    %947 = vmatpush1.bf16.msra.mxu0 %v711
    %948 = vmatprep.subr.bf16.mxu0 %v720
    %949 = vmatpush1.bf16.msra.mxu0 %v719
    %950 = vmatprep.subr.bf16.mxu0 %v728
    %951 = vmatpush1.bf16.msra.mxu0 %v727
    %952 = vmatprep.subr.bf16.mxu0 %v736
    %953 = vmatpush1.bf16.msra.mxu0 %v735
    %954 = vmatprep.subr.bf16.mxu0 %v744
    %955 = vmatpush1.bf16.msra.mxu0 %v743
    %956 = vmatprep.subr.bf16.mxu0 %v752
    %957 = vmatpush1.bf16.msra.mxu0 %v751
    %958 = vmatprep.mubr.bf16.mxu0 %v74
    %959 = vmatmul.mubr.bf16.gmra.mrb[0].mxu0 %v73
    %v960 = vpop.f32.mrb[0].mxu0
    %v961 = vadd.f32 %v216, %v960
    %v962 = vpop.f32.mrb[0].mxu0
    %v963 = vadd.f32 %v220, %v962
    %v964 = vpop.f32.mrb[0].mxu0
    %v965 = vpop.f32.mrb[0].mxu0
    %966 = vdwg.mxu0
    %967 = vmatprep.subr.bf16.mxu0 %v634
    %968 = vmatpush1.bf16.msra.mxu0 %v633
    %969 = vmatprep.subr.bf16.mxu0 %v642
    %970 = vmatpush1.bf16.msra.mxu0 %v641
    %971 = vmatprep.subr.bf16.mxu0 %v650
    %972 = vmatpush1.bf16.msra.mxu0 %v649
    %973 = vmatprep.subr.bf16.mxu0 %v658
    %974 = vmatpush1.bf16.msra.mxu0 %v657
    %975 = vmatprep.subr.bf16.mxu0 %v666
    %976 = vmatpush1.bf16.msra.mxu0 %v665
    %977 = vmatprep.subr.bf16.mxu0 %v674
    %978 = vmatpush1.bf16.msra.mxu0 %v673
    %979 = vmatprep.subr.bf16.mxu0 %v682
    %980 = vmatpush1.bf16.msra.mxu0 %v681
    %981 = vmatprep.subr.bf16.mxu0 %v690
    %982 = vmatpush1.bf16.msra.mxu0 %v689
    %983 = vmatprep.subr.bf16.mxu0 %v698
    %984 = vmatpush1.bf16.msra.mxu0 %v697
    %985 = vmatprep.subr.bf16.mxu0 %v706
    %986 = vmatpush1.bf16.msra.mxu0 %v705
    %987 = vmatprep.subr.bf16.mxu0 %v714
    %988 = vmatpush1.bf16.msra.mxu0 %v713
    %989 = vmatprep.subr.bf16.mxu0 %v722
    %990 = vmatpush1.bf16.msra.mxu0 %v721
    %991 = vmatprep.subr.bf16.mxu0 %v730
    %992 = vmatpush1.bf16.msra.mxu0 %v729
    %993 = vmatprep.subr.bf16.mxu0 %v738
    %994 = vmatpush1.bf16.msra.mxu0 %v737
    %995 = vmatprep.subr.bf16.mxu0 %v746
    %996 = vmatpush1.bf16.msra.mxu0 %v745
    %997 = vmatprep.subr.bf16.mxu0 %v754
    %998 = vmatpush1.bf16.msra.mxu0 %v753
    %999 = vmatprep.mubr.bf16.mxu0 %v74
    %1000 = vmatmul.mubr.bf16.gmra.mrb[0].mxu0 %v73
    %v1001 = vpop.f32.mrb[0].mxu0
    %v1002 = vadd.f32 %v224, %v1001
    %v1003 = vpop.f32.mrb[0].mxu0
    %v1004 = vadd.f32 %v228, %v1003
    %v1005 = vpop.f32.mrb[0].mxu0
    %v1006 = vpop.f32.mrb[0].mxu0
    %1007 = vdwg.mxu0
    %1008 = vmatprep.subr.bf16.mxu0 %v636
    %1009 = vmatpush1.bf16.msra.mxu0 %v635
    %1010 = vmatprep.subr.bf16.mxu0 %v644
    %1011 = vmatpush1.bf16.msra.mxu0 %v643
    %1012 = vmatprep.subr.bf16.mxu0 %v652
    %1013 = vmatpush1.bf16.msra.mxu0 %v651
    %1014 = vmatprep.subr.bf16.mxu0 %v660
    %1015 = vmatpush1.bf16.msra.mxu0 %v659
    %1016 = vmatprep.subr.bf16.mxu0 %v668
    %1017 = vmatpush1.bf16.msra.mxu0 %v667
    %1018 = vmatprep.subr.bf16.mxu0 %v676
    %1019 = vmatpush1.bf16.msra.mxu0 %v675
    %1020 = vmatprep.subr.bf16.mxu0 %v684
    %1021 = vmatpush1.bf16.msra.mxu0 %v683
    %1022 = vmatprep.subr.bf16.mxu0 %v692
    %1023 = vmatpush1.bf16.msra.mxu0 %v691
    %1024 = vmatprep.subr.bf16.mxu0 %v700
    %1025 = vmatpush1.bf16.msra.mxu0 %v699
    %1026 = vmatprep.subr.bf16.mxu0 %v708
    %1027 = vmatpush1.bf16.msra.mxu0 %v707
    %1028 = vmatprep.subr.bf16.mxu0 %v716
    %1029 = vmatpush1.bf16.msra.mxu0 %v715
    %1030 = vmatprep.subr.bf16.mxu0 %v724
    %1031 = vmatpush1.bf16.msra.mxu0 %v723
    %1032 = vmatprep.subr.bf16.mxu0 %v732
    %1033 = vmatpush1.bf16.msra.mxu0 %v731
    %1034 = vmatprep.subr.bf16.mxu0 %v740
    %1035 = vmatpush1.bf16.msra.mxu0 %v739
    %1036 = vmatprep.subr.bf16.mxu0 %v748
    %1037 = vmatpush1.bf16.msra.mxu0 %v747
    %1038 = vmatprep.subr.bf16.mxu0 %v756
    %1039 = vmatpush1.bf16.msra.mxu0 %v755
    %1040 = vmatprep.mubr.bf16.mxu0 %v74
    %1041 = vmatmul.mubr.bf16.gmra.mrb[0].mxu0 %v73
    %v1042 = vpop.f32.mrb[0].mxu0
    %v1043 = vadd.f32 %v232, %v1042
    %v1044 = vpop.f32.mrb[0].mxu0
    %v1045 = vadd.f32 %v236, %v1044
    %v1046 = vpop.f32.mrb[0].mxu0
    %v1047 = vpop.f32.mrb[0].mxu0
    %1048 = vdwg.mxu0
    %vm1049 = vcmp.gt.f32.partialorder %v920, 0.0
    %vm1050 = vcmp.gt.f32.partialorder %v922, 0.0
    %vm1051 = vcmp.gt.f32.partialorder %v961, 0.0
    %vm1052 = vcmp.gt.f32.partialorder %v963, 0.0
    %vm1053 = vcmp.gt.f32.partialorder %v1002, 0.0
    %vm1054 = vcmp.gt.f32.partialorder %v1004, 0.0
    %vm1055 = vcmp.gt.f32.partialorder %v1043, 0.0
    %vm1056 = vcmp.gt.f32.partialorder %v1045, 0.0
    %v1057 = vsel %vm1049, %v920, 1e-06
    %v1058 = vsel %vm1050, %v922, 1e-06
    %v1059 = vsel %vm1051, %v961, 1e-06
    %v1060 = vsel %vm1052, %v963, 1e-06
    %v1061 = vsel %vm1053, %v1002, 1e-06
    %v1062 = vsel %vm1054, %v1004, 1e-06
    %v1063 = vsel %vm1055, %v1043, 1e-06
    %v1064 = vsel %vm1056, %v1045, 1e-06
    %v1065 = vpack.c.bf16 %v1057, %v1057
    %v1066 = vpack.c.bf16 %v1058, %v1058
    %v1067 = vpack.c.bf16 %v1059, %v1059
    %v1068 = vpack.c.bf16 %v1060, %v1060
    %v1069 = vpack.c.bf16 %v1061, %v1061
    %v1070 = vpack.c.bf16 %v1062, %v1062
    %v1071 = vpack.c.bf16 %v1063, %v1063
    %v1072 = vpack.c.bf16 %v1064, %v1064
    %v1073 = vld [vmem:[#allocation6] sm:$0xff]
    %v1074 = vld [vmem:[#allocation6 + $0x8] sm:$0xff]
    %v1075 = vld [vmem:[#allocation6 + $0x10] sm:$0xff]
    %v1076 = vld [vmem:[#allocation6 + $0x18] sm:$0xff]
    %v1077 = vld [vmem:[#allocation6 + $0x20] sm:$0xff]
    %v1078 = vld [vmem:[#allocation6 + $0x28] sm:$0xff]
    %v1079 = vld [vmem:[#allocation6 + $0x30] sm:$0xff]
    %v1080 = vld [vmem:[#allocation6 + $0x38] sm:$0xff]
    %v1081 = vld [vmem:[#allocation6 + $0x40] sm:$0xff]
    %v1082 = vld [vmem:[#allocation6 + $0x48] sm:$0xff]
    %v1083 = vld [vmem:[#allocation6 + $0x50] sm:$0xff]
    %v1084 = vld [vmem:[#allocation6 + $0x58] sm:$0xff]
    %v1085 = vld [vmem:[#allocation6 + $0x60] sm:$0xff]
    %v1086 = vld [vmem:[#allocation6 + $0x68] sm:$0xff]
    %v1087 = vld [vmem:[#allocation6 + $0x70] sm:$0xff]
    %v1088 = vld [vmem:[#allocation6 + $0x78] sm:$0xff]
    %v1089 = vld [vmem:[#allocation6 + $0x80] sm:$0xff]
    %v1090 = vld [vmem:[#allocation6 + $0x88] sm:$0xff]
    %v1091 = vld [vmem:[#allocation6 + $0x90] sm:$0xff]
    %v1092 = vld [vmem:[#allocation6 + $0x98] sm:$0xff]
    %v1093 = vld [vmem:[#allocation6 + $0xa0] sm:$0xff]
    %v1094 = vld [vmem:[#allocation6 + $0xa8] sm:$0xff]
    %v1095 = vld [vmem:[#allocation6 + $0xb0] sm:$0xff]
    %v1096 = vld [vmem:[#allocation6 + $0xb8] sm:$0xff]
    %v1097 = vld [vmem:[#allocation6 + $0xc0] sm:$0xff]
    %v1098 = vld [vmem:[#allocation6 + $0xc8] sm:$0xff]
    %v1099 = vld [vmem:[#allocation6 + $0xd0] sm:$0xff]
    %v1100 = vld [vmem:[#allocation6 + $0xd8] sm:$0xff]
    %v1101 = vld [vmem:[#allocation6 + $0xe0] sm:$0xff]
    %v1102 = vld [vmem:[#allocation6 + $0xe8] sm:$0xff]
    %v1103 = vld [vmem:[#allocation6 + $0xf0] sm:$0xff]
    %v1104 = vld [vmem:[#allocation6 + $0xf8] sm:$0xff]
    %v1105 = vld [vmem:[#allocation6 + $0x100] sm:$0xff]
    %v1106 = vld [vmem:[#allocation6 + $0x108] sm:$0xff]
    %v1107 = vld [vmem:[#allocation6 + $0x110] sm:$0xff]
    %v1108 = vld [vmem:[#allocation6 + $0x118] sm:$0xff]
    %v1109 = vld [vmem:[#allocation6 + $0x120] sm:$0xff]
    %v1110 = vld [vmem:[#allocation6 + $0x128] sm:$0xff]
    %v1111 = vld [vmem:[#allocation6 + $0x130] sm:$0xff]
    %v1112 = vld [vmem:[#allocation6 + $0x138] sm:$0xff]
    %v1113 = vld [vmem:[#allocation6 + $0x140] sm:$0xff]
    %v1114 = vld [vmem:[#allocation6 + $0x148] sm:$0xff]
    %v1115 = vld [vmem:[#allocation6 + $0x150] sm:$0xff]
    %v1116 = vld [vmem:[#allocation6 + $0x158] sm:$0xff]
    %v1117 = vld [vmem:[#allocation6 + $0x160] sm:$0xff]
    %v1118 = vld [vmem:[#allocation6 + $0x168] sm:$0xff]
    %v1119 = vld [vmem:[#allocation6 + $0x170] sm:$0xff]
    %v1120 = vld [vmem:[#allocation6 + $0x178] sm:$0xff]
    %v1121 = vld [vmem:[#allocation6 + $0x180] sm:$0xff]
    %v1122 = vld [vmem:[#allocation6 + $0x188] sm:$0xff]
    %v1123 = vld [vmem:[#allocation6 + $0x190] sm:$0xff]
    %v1124 = vld [vmem:[#allocation6 + $0x198] sm:$0xff]
    %v1125 = vld [vmem:[#allocation6 + $0x1a0] sm:$0xff]
    %v1126 = vld [vmem:[#allocation6 + $0x1a8] sm:$0xff]
    %v1127 = vld [vmem:[#allocation6 + $0x1b0] sm:$0xff]
    %v1128 = vld [vmem:[#allocation6 + $0x1b8] sm:$0xff]
    %v1129 = vld [vmem:[#allocation6 + $0x1c0] sm:$0xff]
    %v1130 = vld [vmem:[#allocation6 + $0x1c8] sm:$0xff]
    %v1131 = vld [vmem:[#allocation6 + $0x1d0] sm:$0xff]
    %v1132 = vld [vmem:[#allocation6 + $0x1d8] sm:$0xff]
    %v1133 = vld [vmem:[#allocation6 + $0x1e0] sm:$0xff]
    %v1134 = vld [vmem:[#allocation6 + $0x1e8] sm:$0xff]
    %v1135 = vld [vmem:[#allocation6 + $0x1f0] sm:$0xff]
    %v1136 = vld [vmem:[#allocation6 + $0x1f8] sm:$0xff]
    %v1137 = vld [vmem:[#allocation6 + $0x200] sm:$0xff]
    %v1138 = vld [vmem:[#allocation6 + $0x208] sm:$0xff]
    %v1139 = vld [vmem:[#allocation6 + $0x210] sm:$0xff]
    %v1140 = vld [vmem:[#allocation6 + $0x218] sm:$0xff]
    %v1141 = vld [vmem:[#allocation6 + $0x220] sm:$0xff]
    %v1142 = vld [vmem:[#allocation6 + $0x228] sm:$0xff]
    %v1143 = vld [vmem:[#allocation6 + $0x230] sm:$0xff]
    %v1144 = vld [vmem:[#allocation6 + $0x238] sm:$0xff]
    %v1145 = vld [vmem:[#allocation6 + $0x240] sm:$0xff]
    %v1146 = vld [vmem:[#allocation6 + $0x248] sm:$0xff]
    %v1147 = vld [vmem:[#allocation6 + $0x250] sm:$0xff]
    %v1148 = vld [vmem:[#allocation6 + $0x258] sm:$0xff]
    %v1149 = vld [vmem:[#allocation6 + $0x260] sm:$0xff]
    %v1150 = vld [vmem:[#allocation6 + $0x268] sm:$0xff]
    %v1151 = vld [vmem:[#allocation6 + $0x270] sm:$0xff]
    %v1152 = vld [vmem:[#allocation6 + $0x278] sm:$0xff]
    %v1153 = vld [vmem:[#allocation6 + $0x280] sm:$0xff]
    %v1154 = vld [vmem:[#allocation6 + $0x288] sm:$0xff]
    %v1155 = vld [vmem:[#allocation6 + $0x290] sm:$0xff]
    %v1156 = vld [vmem:[#allocation6 + $0x298] sm:$0xff]
    %v1157 = vld [vmem:[#allocation6 + $0x2a0] sm:$0xff]
    %v1158 = vld [vmem:[#allocation6 + $0x2a8] sm:$0xff]
    %v1159 = vld [vmem:[#allocation6 + $0x2b0] sm:$0xff]
    %v1160 = vld [vmem:[#allocation6 + $0x2b8] sm:$0xff]
    %v1161 = vld [vmem:[#allocation6 + $0x2c0] sm:$0xff]
    %v1162 = vld [vmem:[#allocation6 + $0x2c8] sm:$0xff]
    %v1163 = vld [vmem:[#allocation6 + $0x2d0] sm:$0xff]
    %v1164 = vld [vmem:[#allocation6 + $0x2d8] sm:$0xff]
    %v1165 = vld [vmem:[#allocation6 + $0x2e0] sm:$0xff]
    %v1166 = vld [vmem:[#allocation6 + $0x2e8] sm:$0xff]
    %v1167 = vld [vmem:[#allocation6 + $0x2f0] sm:$0xff]
    %v1168 = vld [vmem:[#allocation6 + $0x2f8] sm:$0xff]
    %v1169 = vld [vmem:[#allocation6 + $0x300] sm:$0xff]
    %v1170 = vld [vmem:[#allocation6 + $0x308] sm:$0xff]
    %v1171 = vld [vmem:[#allocation6 + $0x310] sm:$0xff]
    %v1172 = vld [vmem:[#allocation6 + $0x318] sm:$0xff]
    %v1173 = vld [vmem:[#allocation6 + $0x320] sm:$0xff]
    %v1174 = vld [vmem:[#allocation6 + $0x328] sm:$0xff]
    %v1175 = vld [vmem:[#allocation6 + $0x330] sm:$0xff]
    %v1176 = vld [vmem:[#allocation6 + $0x338] sm:$0xff]
    %v1177 = vld [vmem:[#allocation6 + $0x340] sm:$0xff]
    %v1178 = vld [vmem:[#allocation6 + $0x348] sm:$0xff]
    %v1179 = vld [vmem:[#allocation6 + $0x350] sm:$0xff]
    %v1180 = vld [vmem:[#allocation6 + $0x358] sm:$0xff]
    %v1181 = vld [vmem:[#allocation6 + $0x360] sm:$0xff]
    %v1182 = vld [vmem:[#allocation6 + $0x368] sm:$0xff]
    %v1183 = vld [vmem:[#allocation6 + $0x370] sm:$0xff]
    %v1184 = vld [vmem:[#allocation6 + $0x378] sm:$0xff]
    %v1185 = vld [vmem:[#allocation6 + $0x380] sm:$0xff]
    %v1186 = vld [vmem:[#allocation6 + $0x388] sm:$0xff]
    %v1187 = vld [vmem:[#allocation6 + $0x390] sm:$0xff]
    %v1188 = vld [vmem:[#allocation6 + $0x398] sm:$0xff]
    %v1189 = vld [vmem:[#allocation6 + $0x3a0] sm:$0xff]
    %v1190 = vld [vmem:[#allocation6 + $0x3a8] sm:$0xff]
    %v1191 = vld [vmem:[#allocation6 + $0x3b0] sm:$0xff]
    %v1192 = vld [vmem:[#allocation6 + $0x3b8] sm:$0xff]
    %v1193 = vld [vmem:[#allocation6 + $0x3c0] sm:$0xff]
    %v1194 = vld [vmem:[#allocation6 + $0x3c8] sm:$0xff]
    %v1195 = vld [vmem:[#allocation6 + $0x3d0] sm:$0xff]
    %v1196 = vld [vmem:[#allocation6 + $0x3d8] sm:$0xff]
    %v1197 = vld [vmem:[#allocation6 + $0x3e0] sm:$0xff]
    %v1198 = vld [vmem:[#allocation6 + $0x3e8] sm:$0xff]
    %v1199 = vld [vmem:[#allocation6 + $0x3f0] sm:$0xff]
    %v1200 = vld [vmem:[#allocation6 + $0x3f8] sm:$0xff]
    %v1201 = vld [vmem:[#allocation6 + $0x400] sm:$0xff]
    %v1202 = vld [vmem:[#allocation6 + $0x408] sm:$0xff]
    %v1203 = vld [vmem:[#allocation6 + $0x410] sm:$0xff]
    %v1204 = vld [vmem:[#allocation6 + $0x418] sm:$0xff]
    %v1205 = vld [vmem:[#allocation6 + $0x420] sm:$0xff]
    %v1206 = vld [vmem:[#allocation6 + $0x428] sm:$0xff]
    %v1207 = vld [vmem:[#allocation6 + $0x430] sm:$0xff]
    %v1208 = vld [vmem:[#allocation6 + $0x438] sm:$0xff]
    %v1209 = vld [vmem:[#allocation6 + $0x440] sm:$0xff]
    %v1210 = vld [vmem:[#allocation6 + $0x448] sm:$0xff]
    %v1211 = vld [vmem:[#allocation6 + $0x450] sm:$0xff]
    %v1212 = vld [vmem:[#allocation6 + $0x458] sm:$0xff]
    %v1213 = vld [vmem:[#allocation6 + $0x460] sm:$0xff]
    %v1214 = vld [vmem:[#allocation6 + $0x468] sm:$0xff]
    %v1215 = vld [vmem:[#allocation6 + $0x470] sm:$0xff]
    %v1216 = vld [vmem:[#allocation6 + $0x478] sm:$0xff]
    %v1217 = vld [vmem:[#allocation6 + $0x480] sm:$0xff]
    %v1218 = vld [vmem:[#allocation6 + $0x488] sm:$0xff]
    %v1219 = vld [vmem:[#allocation6 + $0x490] sm:$0xff]
    %v1220 = vld [vmem:[#allocation6 + $0x498] sm:$0xff]
    %v1221 = vld [vmem:[#allocation6 + $0x4a0] sm:$0xff]
    %v1222 = vld [vmem:[#allocation6 + $0x4a8] sm:$0xff]
    %v1223 = vld [vmem:[#allocation6 + $0x4b0] sm:$0xff]
    %v1224 = vld [vmem:[#allocation6 + $0x4b8] sm:$0xff]
    %v1225 = vld [vmem:[#allocation6 + $0x4c0] sm:$0xff]
    %v1226 = vld [vmem:[#allocation6 + $0x4c8] sm:$0xff]
    %v1227 = vld [vmem:[#allocation6 + $0x4d0] sm:$0xff]
    %v1228 = vld [vmem:[#allocation6 + $0x4d8] sm:$0xff]
    %v1229 = vld [vmem:[#allocation6 + $0x4e0] sm:$0xff]
    %v1230 = vld [vmem:[#allocation6 + $0x4e8] sm:$0xff]
    %v1231 = vld [vmem:[#allocation6 + $0x4f0] sm:$0xff]
    %v1232 = vld [vmem:[#allocation6 + $0x4f8] sm:$0xff]
    %v1233 = vld [vmem:[#allocation6 + $0x500] sm:$0xff]
    %v1234 = vld [vmem:[#allocation6 + $0x508] sm:$0xff]
    %v1235 = vld [vmem:[#allocation6 + $0x510] sm:$0xff]
    %v1236 = vld [vmem:[#allocation6 + $0x518] sm:$0xff]
    %v1237 = vld [vmem:[#allocation6 + $0x520] sm:$0xff]
    %v1238 = vld [vmem:[#allocation6 + $0x528] sm:$0xff]
    %v1239 = vld [vmem:[#allocation6 + $0x530] sm:$0xff]
    %v1240 = vld [vmem:[#allocation6 + $0x538] sm:$0xff]
    %v1241 = vld [vmem:[#allocation6 + $0x540] sm:$0xff]
    %v1242 = vld [vmem:[#allocation6 + $0x548] sm:$0xff]
    %v1243 = vld [vmem:[#allocation6 + $0x550] sm:$0xff]
    %v1244 = vld [vmem:[#allocation6 + $0x558] sm:$0xff]
    %v1245 = vld [vmem:[#allocation6 + $0x560] sm:$0xff]
    %v1246 = vld [vmem:[#allocation6 + $0x568] sm:$0xff]
    %v1247 = vld [vmem:[#allocation6 + $0x570] sm:$0xff]
    %v1248 = vld [vmem:[#allocation6 + $0x578] sm:$0xff]
    %v1249 = vld [vmem:[#allocation6 + $0x580] sm:$0xff]
    %v1250 = vld [vmem:[#allocation6 + $0x588] sm:$0xff]
    %v1251 = vld [vmem:[#allocation6 + $0x590] sm:$0xff]
    %v1252 = vld [vmem:[#allocation6 + $0x598] sm:$0xff]
    %v1253 = vld [vmem:[#allocation6 + $0x5a0] sm:$0xff]
    %v1254 = vld [vmem:[#allocation6 + $0x5a8] sm:$0xff]
    %v1255 = vld [vmem:[#allocation6 + $0x5b0] sm:$0xff]
    %v1256 = vld [vmem:[#allocation6 + $0x5b8] sm:$0xff]
    %v1257 = vld [vmem:[#allocation6 + $0x5c0] sm:$0xff]
    %v1258 = vld [vmem:[#allocation6 + $0x5c8] sm:$0xff]
    %v1259 = vld [vmem:[#allocation6 + $0x5d0] sm:$0xff]
    %v1260 = vld [vmem:[#allocation6 + $0x5d8] sm:$0xff]
    %v1261 = vld [vmem:[#allocation6 + $0x5e0] sm:$0xff]
    %v1262 = vld [vmem:[#allocation6 + $0x5e8] sm:$0xff]
    %v1263 = vld [vmem:[#allocation6 + $0x5f0] sm:$0xff]
    %v1264 = vld [vmem:[#allocation6 + $0x5f8] sm:$0xff]
    %v1265 = vld [vmem:[#allocation6 + $0x600] sm:$0xff]
    %v1266 = vld [vmem:[#allocation6 + $0x608] sm:$0xff]
    %v1267 = vld [vmem:[#allocation6 + $0x610] sm:$0xff]
    %v1268 = vld [vmem:[#allocation6 + $0x618] sm:$0xff]
    %v1269 = vld [vmem:[#allocation6 + $0x620] sm:$0xff]
    %v1270 = vld [vmem:[#allocation6 + $0x628] sm:$0xff]
    %v1271 = vld [vmem:[#allocation6 + $0x630] sm:$0xff]
    %v1272 = vld [vmem:[#allocation6 + $0x638] sm:$0xff]
    %v1273 = vld [vmem:[#allocation6 + $0x640] sm:$0xff]
    %v1274 = vld [vmem:[#allocation6 + $0x648] sm:$0xff]
    %v1275 = vld [vmem:[#allocation6 + $0x650] sm:$0xff]
    %v1276 = vld [vmem:[#allocation6 + $0x658] sm:$0xff]
    %v1277 = vld [vmem:[#allocation6 + $0x660] sm:$0xff]
    %v1278 = vld [vmem:[#allocation6 + $0x668] sm:$0xff]
    %v1279 = vld [vmem:[#allocation6 + $0x670] sm:$0xff]
    %v1280 = vld [vmem:[#allocation6 + $0x678] sm:$0xff]
    %v1281 = vld [vmem:[#allocation6 + $0x680] sm:$0xff]
    %v1282 = vld [vmem:[#allocation6 + $0x688] sm:$0xff]
    %v1283 = vld [vmem:[#allocation6 + $0x690] sm:$0xff]
    %v1284 = vld [vmem:[#allocation6 + $0x698] sm:$0xff]
    %v1285 = vld [vmem:[#allocation6 + $0x6a0] sm:$0xff]
    %v1286 = vld [vmem:[#allocation6 + $0x6a8] sm:$0xff]
    %v1287 = vld [vmem:[#allocation6 + $0x6b0] sm:$0xff]
    %v1288 = vld [vmem:[#allocation6 + $0x6b8] sm:$0xff]
    %v1289 = vld [vmem:[#allocation6 + $0x6c0] sm:$0xff]
    %v1290 = vld [vmem:[#allocation6 + $0x6c8] sm:$0xff]
    %v1291 = vld [vmem:[#allocation6 + $0x6d0] sm:$0xff]
    %v1292 = vld [vmem:[#allocation6 + $0x6d8] sm:$0xff]
    %v1293 = vld [vmem:[#allocation6 + $0x6e0] sm:$0xff]
    %v1294 = vld [vmem:[#allocation6 + $0x6e8] sm:$0xff]
    %v1295 = vld [vmem:[#allocation6 + $0x6f0] sm:$0xff]
    %v1296 = vld [vmem:[#allocation6 + $0x6f8] sm:$0xff]
    %v1297 = vld [vmem:[#allocation6 + $0x700] sm:$0xff]
    %v1298 = vld [vmem:[#allocation6 + $0x708] sm:$0xff]
    %v1299 = vld [vmem:[#allocation6 + $0x710] sm:$0xff]
    %v1300 = vld [vmem:[#allocation6 + $0x718] sm:$0xff]
    %v1301 = vld [vmem:[#allocation6 + $0x720] sm:$0xff]
    %v1302 = vld [vmem:[#allocation6 + $0x728] sm:$0xff]
    %v1303 = vld [vmem:[#allocation6 + $0x730] sm:$0xff]
    %v1304 = vld [vmem:[#allocation6 + $0x738] sm:$0xff]
    %v1305 = vld [vmem:[#allocation6 + $0x740] sm:$0xff]
    %v1306 = vld [vmem:[#allocation6 + $0x748] sm:$0xff]
    %v1307 = vld [vmem:[#allocation6 + $0x750] sm:$0xff]
    %v1308 = vld [vmem:[#allocation6 + $0x758] sm:$0xff]
    %v1309 = vld [vmem:[#allocation6 + $0x760] sm:$0xff]
    %v1310 = vld [vmem:[#allocation6 + $0x768] sm:$0xff]
    %v1311 = vld [vmem:[#allocation6 + $0x770] sm:$0xff]
    %v1312 = vld [vmem:[#allocation6 + $0x778] sm:$0xff]
    %v1313 = vld [vmem:[#allocation6 + $0x780] sm:$0xff]
    %v1314 = vld [vmem:[#allocation6 + $0x788] sm:$0xff]
    %v1315 = vld [vmem:[#allocation6 + $0x790] sm:$0xff]
    %v1316 = vld [vmem:[#allocation6 + $0x798] sm:$0xff]
    %v1317 = vld [vmem:[#allocation6 + $0x7a0] sm:$0xff]
    %v1318 = vld [vmem:[#allocation6 + $0x7a8] sm:$0xff]
    %v1319 = vld [vmem:[#allocation6 + $0x7b0] sm:$0xff]
    %v1320 = vld [vmem:[#allocation6 + $0x7b8] sm:$0xff]
    %v1321 = vld [vmem:[#allocation6 + $0x7c0] sm:$0xff]
    %v1322 = vld [vmem:[#allocation6 + $0x7c8] sm:$0xff]
    %v1323 = vld [vmem:[#allocation6 + $0x7d0] sm:$0xff]
    %v1324 = vld [vmem:[#allocation6 + $0x7d8] sm:$0xff]
    %v1325 = vld [vmem:[#allocation6 + $0x7e0] sm:$0xff]
    %v1326 = vld [vmem:[#allocation6 + $0x7e8] sm:$0xff]
    %v1327 = vld [vmem:[#allocation6 + $0x7f0] sm:$0xff]
    %v1328 = vld [vmem:[#allocation6 + $0x7f8] sm:$0xff]
    %v1329 = vld [vmem:[#allocation6 + $0x800] sm:$0xff]
    %v1330 = vld [vmem:[#allocation6 + $0x808] sm:$0xff]
    %v1331 = vld [vmem:[#allocation6 + $0x810] sm:$0xff]
    %v1332 = vld [vmem:[#allocation6 + $0x818] sm:$0xff]
    %v1333 = vld [vmem:[#allocation6 + $0x820] sm:$0xff]
    %v1334 = vld [vmem:[#allocation6 + $0x828] sm:$0xff]
    %v1335 = vld [vmem:[#allocation6 + $0x830] sm:$0xff]
    %v1336 = vld [vmem:[#allocation6 + $0x838] sm:$0xff]
    %v1337 = vld [vmem:[#allocation6 + $0x840] sm:$0xff]
    %v1338 = vld [vmem:[#allocation6 + $0x848] sm:$0xff]
    %v1339 = vld [vmem:[#allocation6 + $0x850] sm:$0xff]
    %v1340 = vld [vmem:[#allocation6 + $0x858] sm:$0xff]
    %v1341 = vld [vmem:[#allocation6 + $0x860] sm:$0xff]
    %v1342 = vld [vmem:[#allocation6 + $0x868] sm:$0xff]
    %v1343 = vld [vmem:[#allocation6 + $0x870] sm:$0xff]
    %v1344 = vld [vmem:[#allocation6 + $0x878] sm:$0xff]
    %v1345 = vld [vmem:[#allocation6 + $0x880] sm:$0xff]
    %v1346 = vld [vmem:[#allocation6 + $0x888] sm:$0xff]
    %v1347 = vld [vmem:[#allocation6 + $0x890] sm:$0xff]
    %v1348 = vld [vmem:[#allocation6 + $0x898] sm:$0xff]
    %v1349 = vld [vmem:[#allocation6 + $0x8a0] sm:$0xff]
    %v1350 = vld [vmem:[#allocation6 + $0x8a8] sm:$0xff]
    %v1351 = vld [vmem:[#allocation6 + $0x8b0] sm:$0xff]
    %v1352 = vld [vmem:[#allocation6 + $0x8b8] sm:$0xff]
    %v1353 = vld [vmem:[#allocation6 + $0x8c0] sm:$0xff]
    %v1354 = vld [vmem:[#allocation6 + $0x8c8] sm:$0xff]
    %v1355 = vld [vmem:[#allocation6 + $0x8d0] sm:$0xff]
    %v1356 = vld [vmem:[#allocation6 + $0x8d8] sm:$0xff]
    %v1357 = vld [vmem:[#allocation6 + $0x8e0] sm:$0xff]
    %v1358 = vld [vmem:[#allocation6 + $0x8e8] sm:$0xff]
    %v1359 = vld [vmem:[#allocation6 + $0x8f0] sm:$0xff]
    %v1360 = vld [vmem:[#allocation6 + $0x8f8] sm:$0xff]
    %v1361 = vld [vmem:[#allocation6 + $0x900] sm:$0xff]
    %v1362 = vld [vmem:[#allocation6 + $0x908] sm:$0xff]
    %v1363 = vld [vmem:[#allocation6 + $0x910] sm:$0xff]
    %v1364 = vld [vmem:[#allocation6 + $0x918] sm:$0xff]
    %v1365 = vld [vmem:[#allocation6 + $0x920] sm:$0xff]
    %v1366 = vld [vmem:[#allocation6 + $0x928] sm:$0xff]
    %v1367 = vld [vmem:[#allocation6 + $0x930] sm:$0xff]
    %v1368 = vld [vmem:[#allocation6 + $0x938] sm:$0xff]
    %v1369 = vld [vmem:[#allocation6 + $0x940] sm:$0xff]
    %v1370 = vld [vmem:[#allocation6 + $0x948] sm:$0xff]
    %v1371 = vld [vmem:[#allocation6 + $0x950] sm:$0xff]
    %v1372 = vld [vmem:[#allocation6 + $0x958] sm:$0xff]
    %v1373 = vld [vmem:[#allocation6 + $0x960] sm:$0xff]
    %v1374 = vld [vmem:[#allocation6 + $0x968] sm:$0xff]
    %v1375 = vld [vmem:[#allocation6 + $0x970] sm:$0xff]
    %v1376 = vld [vmem:[#allocation6 + $0x978] sm:$0xff]
    %v1377 = vld [vmem:[#allocation6 + $0x980] sm:$0xff]
    %v1378 = vld [vmem:[#allocation6 + $0x988] sm:$0xff]
    %v1379 = vld [vmem:[#allocation6 + $0x990] sm:$0xff]
    %v1380 = vld [vmem:[#allocation6 + $0x998] sm:$0xff]
    %v1381 = vld [vmem:[#allocation6 + $0x9a0] sm:$0xff]
    %v1382 = vld [vmem:[#allocation6 + $0x9a8] sm:$0xff]
    %v1383 = vld [vmem:[#allocation6 + $0x9b0] sm:$0xff]
    %v1384 = vld [vmem:[#allocation6 + $0x9b8] sm:$0xff]
    %v1385 = vld [vmem:[#allocation6 + $0x9c0] sm:$0xff]
    %v1386 = vld [vmem:[#allocation6 + $0x9c8] sm:$0xff]
    %v1387 = vld [vmem:[#allocation6 + $0x9d0] sm:$0xff]
    %v1388 = vld [vmem:[#allocation6 + $0x9d8] sm:$0xff]
    %v1389 = vld [vmem:[#allocation6 + $0x9e0] sm:$0xff]
    %v1390 = vld [vmem:[#allocation6 + $0x9e8] sm:$0xff]
    %v1391 = vld [vmem:[#allocation6 + $0x9f0] sm:$0xff]
    %v1392 = vld [vmem:[#allocation6 + $0x9f8] sm:$0xff]
    %v1393 = vld [vmem:[#allocation6 + $0xa00] sm:$0xff]
    %v1394 = vld [vmem:[#allocation6 + $0xa08] sm:$0xff]
    %v1395 = vld [vmem:[#allocation6 + $0xa10] sm:$0xff]
    %v1396 = vld [vmem:[#allocation6 + $0xa18] sm:$0xff]
    %v1397 = vld [vmem:[#allocation6 + $0xa20] sm:$0xff]
    %v1398 = vld [vmem:[#allocation6 + $0xa28] sm:$0xff]
    %v1399 = vld [vmem:[#allocation6 + $0xa30] sm:$0xff]
    %v1400 = vld [vmem:[#allocation6 + $0xa38] sm:$0xff]
    %v1401 = vld [vmem:[#allocation6 + $0xa40] sm:$0xff]
    %v1402 = vld [vmem:[#allocation6 + $0xa48] sm:$0xff]
    %v1403 = vld [vmem:[#allocation6 + $0xa50] sm:$0xff]
    %v1404 = vld [vmem:[#allocation6 + $0xa58] sm:$0xff]
    %v1405 = vld [vmem:[#allocation6 + $0xa60] sm:$0xff]
    %v1406 = vld [vmem:[#allocation6 + $0xa68] sm:$0xff]
    %v1407 = vld [vmem:[#allocation6 + $0xa70] sm:$0xff]
    %v1408 = vld [vmem:[#allocation6 + $0xa78] sm:$0xff]
    %v1409 = vld [vmem:[#allocation6 + $0xa80] sm:$0xff]
    %v1410 = vld [vmem:[#allocation6 + $0xa88] sm:$0xff]
    %v1411 = vld [vmem:[#allocation6 + $0xa90] sm:$0xff]
    %v1412 = vld [vmem:[#allocation6 + $0xa98] sm:$0xff]
    %v1413 = vld [vmem:[#allocation6 + $0xaa0] sm:$0xff]
    %v1414 = vld [vmem:[#allocation6 + $0xaa8] sm:$0xff]
    %v1415 = vld [vmem:[#allocation6 + $0xab0] sm:$0xff]
    %v1416 = vld [vmem:[#allocation6 + $0xab8] sm:$0xff]
    %v1417 = vld [vmem:[#allocation6 + $0xac0] sm:$0xff]
    %v1418 = vld [vmem:[#allocation6 + $0xac8] sm:$0xff]
    %v1419 = vld [vmem:[#allocation6 + $0xad0] sm:$0xff]
    %v1420 = vld [vmem:[#allocation6 + $0xad8] sm:$0xff]
    %v1421 = vld [vmem:[#allocation6 + $0xae0] sm:$0xff]
    %v1422 = vld [vmem:[#allocation6 + $0xae8] sm:$0xff]
    %v1423 = vld [vmem:[#allocation6 + $0xaf0] sm:$0xff]
    %v1424 = vld [vmem:[#allocation6 + $0xaf8] sm:$0xff]
    %v1425 = vld [vmem:[#allocation6 + $0xb00] sm:$0xff]
    %v1426 = vld [vmem:[#allocation6 + $0xb08] sm:$0xff]
    %v1427 = vld [vmem:[#allocation6 + $0xb10] sm:$0xff]
    %v1428 = vld [vmem:[#allocation6 + $0xb18] sm:$0xff]
    %v1429 = vld [vmem:[#allocation6 + $0xb20] sm:$0xff]
    %v1430 = vld [vmem:[#allocation6 + $0xb28] sm:$0xff]
    %v1431 = vld [vmem:[#allocation6 + $0xb30] sm:$0xff]
    %v1432 = vld [vmem:[#allocation6 + $0xb38] sm:$0xff]
    %v1433 = vld [vmem:[#allocation6 + $0xb40] sm:$0xff]
    %v1434 = vld [vmem:[#allocation6 + $0xb48] sm:$0xff]
    %v1435 = vld [vmem:[#allocation6 + $0xb50] sm:$0xff]
    %v1436 = vld [vmem:[#allocation6 + $0xb58] sm:$0xff]
    %v1437 = vld [vmem:[#allocation6 + $0xb60] sm:$0xff]
    %v1438 = vld [vmem:[#allocation6 + $0xb68] sm:$0xff]
    %v1439 = vld [vmem:[#allocation6 + $0xb70] sm:$0xff]
    %v1440 = vld [vmem:[#allocation6 + $0xb78] sm:$0xff]
    %v1441 = vld [vmem:[#allocation6 + $0xb80] sm:$0xff]
    %v1442 = vld [vmem:[#allocation6 + $0xb88] sm:$0xff]
    %v1443 = vld [vmem:[#allocation6 + $0xb90] sm:$0xff]
    %v1444 = vld [vmem:[#allocation6 + $0xb98] sm:$0xff]
    %v1445 = vld [vmem:[#allocation6 + $0xba0] sm:$0xff]
    %v1446 = vld [vmem:[#allocation6 + $0xba8] sm:$0xff]
    %v1447 = vld [vmem:[#allocation6 + $0xbb0] sm:$0xff]
    %v1448 = vld [vmem:[#allocation6 + $0xbb8] sm:$0xff]
    %v1449 = vld [vmem:[#allocation6 + $0xbc0] sm:$0xff]
    %v1450 = vld [vmem:[#allocation6 + $0xbc8] sm:$0xff]
    %v1451 = vld [vmem:[#allocation6 + $0xbd0] sm:$0xff]
    %v1452 = vld [vmem:[#allocation6 + $0xbd8] sm:$0xff]
    %v1453 = vld [vmem:[#allocation6 + $0xbe0] sm:$0xff]
    %v1454 = vld [vmem:[#allocation6 + $0xbe8] sm:$0xff]
    %v1455 = vld [vmem:[#allocation6 + $0xbf0] sm:$0xff]
    %v1456 = vld [vmem:[#allocation6 + $0xbf8] sm:$0xff]
    %v1457 = vld [vmem:[#allocation6 + $0xc00] sm:$0xff]
    %v1458 = vld [vmem:[#allocation6 + $0xc08] sm:$0xff]
    %v1459 = vld [vmem:[#allocation6 + $0xc10] sm:$0xff]
    %v1460 = vld [vmem:[#allocation6 + $0xc18] sm:$0xff]
    %v1461 = vld [vmem:[#allocation6 + $0xc20] sm:$0xff]
    %v1462 = vld [vmem:[#allocation6 + $0xc28] sm:$0xff]
    %v1463 = vld [vmem:[#allocation6 + $0xc30] sm:$0xff]
    %v1464 = vld [vmem:[#allocation6 + $0xc38] sm:$0xff]
    %v1465 = vld [vmem:[#allocation6 + $0xc40] sm:$0xff]
    %v1466 = vld [vmem:[#allocation6 + $0xc48] sm:$0xff]
    %v1467 = vld [vmem:[#allocation6 + $0xc50] sm:$0xff]
    %v1468 = vld [vmem:[#allocation6 + $0xc58] sm:$0xff]
    %v1469 = vld [vmem:[#allocation6 + $0xc60] sm:$0xff]
    %v1470 = vld [vmem:[#allocation6 + $0xc68] sm:$0xff]
    %v1471 = vld [vmem:[#allocation6 + $0xc70] sm:$0xff]
    %v1472 = vld [vmem:[#allocation6 + $0xc78] sm:$0xff]
    %v1473 = vld [vmem:[#allocation6 + $0xc80] sm:$0xff]
    %v1474 = vld [vmem:[#allocation6 + $0xc88] sm:$0xff]
    %v1475 = vld [vmem:[#allocation6 + $0xc90] sm:$0xff]
    %v1476 = vld [vmem:[#allocation6 + $0xc98] sm:$0xff]
    %v1477 = vld [vmem:[#allocation6 + $0xca0] sm:$0xff]
    %v1478 = vld [vmem:[#allocation6 + $0xca8] sm:$0xff]
    %v1479 = vld [vmem:[#allocation6 + $0xcb0] sm:$0xff]
    %v1480 = vld [vmem:[#allocation6 + $0xcb8] sm:$0xff]
    %v1481 = vld [vmem:[#allocation6 + $0xcc0] sm:$0xff]
    %v1482 = vld [vmem:[#allocation6 + $0xcc8] sm:$0xff]
    %v1483 = vld [vmem:[#allocation6 + $0xcd0] sm:$0xff]
    %v1484 = vld [vmem:[#allocation6 + $0xcd8] sm:$0xff]
    %v1485 = vld [vmem:[#allocation6 + $0xce0] sm:$0xff]
    %v1486 = vld [vmem:[#allocation6 + $0xce8] sm:$0xff]
    %v1487 = vld [vmem:[#allocation6 + $0xcf0] sm:$0xff]
    %v1488 = vld [vmem:[#allocation6 + $0xcf8] sm:$0xff]
    %v1489 = vld [vmem:[#allocation6 + $0xd00] sm:$0xff]
    %v1490 = vld [vmem:[#allocation6 + $0xd08] sm:$0xff]
    %v1491 = vld [vmem:[#allocation6 + $0xd10] sm:$0xff]
    %v1492 = vld [vmem:[#allocation6 + $0xd18] sm:$0xff]
    %v1493 = vld [vmem:[#allocation6 + $0xd20] sm:$0xff]
    %v1494 = vld [vmem:[#allocation6 + $0xd28] sm:$0xff]
    %v1495 = vld [vmem:[#allocation6 + $0xd30] sm:$0xff]
    %v1496 = vld [vmem:[#allocation6 + $0xd38] sm:$0xff]
    %v1497 = vld [vmem:[#allocation6 + $0xd40] sm:$0xff]
    %v1498 = vld [vmem:[#allocation6 + $0xd48] sm:$0xff]
    %v1499 = vld [vmem:[#allocation6 + $0xd50] sm:$0xff]
    %v1500 = vld [vmem:[#allocation6 + $0xd58] sm:$0xff]
    %v1501 = vld [vmem:[#allocation6 + $0xd60] sm:$0xff]
    %v1502 = vld [vmem:[#allocation6 + $0xd68] sm:$0xff]
    %v1503 = vld [vmem:[#allocation6 + $0xd70] sm:$0xff]
    %v1504 = vld [vmem:[#allocation6 + $0xd78] sm:$0xff]
    %v1505 = vld [vmem:[#allocation6 + $0xd80] sm:$0xff]
    %v1506 = vld [vmem:[#allocation6 + $0xd88] sm:$0xff]
    %v1507 = vld [vmem:[#allocation6 + $0xd90] sm:$0xff]
    %v1508 = vld [vmem:[#allocation6 + $0xd98] sm:$0xff]
    %v1509 = vld [vmem:[#allocation6 + $0xda0] sm:$0xff]
    %v1510 = vld [vmem:[#allocation6 + $0xda8] sm:$0xff]
    %v1511 = vld [vmem:[#allocation6 + $0xdb0] sm:$0xff]
    %v1512 = vld [vmem:[#allocation6 + $0xdb8] sm:$0xff]
    %v1513 = vld [vmem:[#allocation6 + $0xdc0] sm:$0xff]
    %v1514 = vld [vmem:[#allocation6 + $0xdc8] sm:$0xff]
    %v1515 = vld [vmem:[#allocation6 + $0xdd0] sm:$0xff]
    %v1516 = vld [vmem:[#allocation6 + $0xdd8] sm:$0xff]
    %v1517 = vld [vmem:[#allocation6 + $0xde0] sm:$0xff]
    %v1518 = vld [vmem:[#allocation6 + $0xde8] sm:$0xff]
    %v1519 = vld [vmem:[#allocation6 + $0xdf0] sm:$0xff]
    %v1520 = vld [vmem:[#allocation6 + $0xdf8] sm:$0xff]
    %v1521 = vld [vmem:[#allocation6 + $0xe00] sm:$0xff]
    %v1522 = vld [vmem:[#allocation6 + $0xe08] sm:$0xff]
    %v1523 = vld [vmem:[#allocation6 + $0xe10] sm:$0xff]
    %v1524 = vld [vmem:[#allocation6 + $0xe18] sm:$0xff]
    %v1525 = vld [vmem:[#allocation6 + $0xe20] sm:$0xff]
    %v1526 = vld [vmem:[#allocation6 + $0xe28] sm:$0xff]
    %v1527 = vld [vmem:[#allocation6 + $0xe30] sm:$0xff]
    %v1528 = vld [vmem:[#allocation6 + $0xe38] sm:$0xff]
    %v1529 = vld [vmem:[#allocation6 + $0xe40] sm:$0xff]
    %v1530 = vld [vmem:[#allocation6 + $0xe48] sm:$0xff]
    %v1531 = vld [vmem:[#allocation6 + $0xe50] sm:$0xff]
    %v1532 = vld [vmem:[#allocation6 + $0xe58] sm:$0xff]
    %v1533 = vld [vmem:[#allocation6 + $0xe60] sm:$0xff]
    %v1534 = vld [vmem:[#allocation6 + $0xe68] sm:$0xff]
    %v1535 = vld [vmem:[#allocation6 + $0xe70] sm:$0xff]
    %v1536 = vld [vmem:[#allocation6 + $0xe78] sm:$0xff]
    %v1537 = vld [vmem:[#allocation6 + $0xe80] sm:$0xff]
    %v1538 = vld [vmem:[#allocation6 + $0xe88] sm:$0xff]
    %v1539 = vld [vmem:[#allocation6 + $0xe90] sm:$0xff]
    %v1540 = vld [vmem:[#allocation6 + $0xe98] sm:$0xff]
    %v1541 = vld [vmem:[#allocation6 + $0xea0] sm:$0xff]
    %v1542 = vld [vmem:[#allocation6 + $0xea8] sm:$0xff]
    %v1543 = vld [vmem:[#allocation6 + $0xeb0] sm:$0xff]
    %v1544 = vld [vmem:[#allocation6 + $0xeb8] sm:$0xff]
    %v1545 = vld [vmem:[#allocation6 + $0xec0] sm:$0xff]
    %v1546 = vld [vmem:[#allocation6 + $0xec8] sm:$0xff]
    %v1547 = vld [vmem:[#allocation6 + $0xed0] sm:$0xff]
    %v1548 = vld [vmem:[#allocation6 + $0xed8] sm:$0xff]
    %v1549 = vld [vmem:[#allocation6 + $0xee0] sm:$0xff]
    %v1550 = vld [vmem:[#allocation6 + $0xee8] sm:$0xff]
    %v1551 = vld [vmem:[#allocation6 + $0xef0] sm:$0xff]
    %v1552 = vld [vmem:[#allocation6 + $0xef8] sm:$0xff]
    %v1553 = vld [vmem:[#allocation6 + $0xf00] sm:$0xff]
    %v1554 = vld [vmem:[#allocation6 + $0xf08] sm:$0xff]
    %v1555 = vld [vmem:[#allocation6 + $0xf10] sm:$0xff]
    %v1556 = vld [vmem:[#allocation6 + $0xf18] sm:$0xff]
    %v1557 = vld [vmem:[#allocation6 + $0xf20] sm:$0xff]
    %v1558 = vld [vmem:[#allocation6 + $0xf28] sm:$0xff]
    %v1559 = vld [vmem:[#allocation6 + $0xf30] sm:$0xff]
    %v1560 = vld [vmem:[#allocation6 + $0xf38] sm:$0xff]
    %v1561 = vld [vmem:[#allocation6 + $0xf40] sm:$0xff]
    %v1562 = vld [vmem:[#allocation6 + $0xf48] sm:$0xff]
    %v1563 = vld [vmem:[#allocation6 + $0xf50] sm:$0xff]
    %v1564 = vld [vmem:[#allocation6 + $0xf58] sm:$0xff]
    %v1565 = vld [vmem:[#allocation6 + $0xf60] sm:$0xff]
    %v1566 = vld [vmem:[#allocation6 + $0xf68] sm:$0xff]
    %v1567 = vld [vmem:[#allocation6 + $0xf70] sm:$0xff]
    %v1568 = vld [vmem:[#allocation6 + $0xf78] sm:$0xff]
    %v1569 = vld [vmem:[#allocation6 + $0xf80] sm:$0xff]
    %v1570 = vld [vmem:[#allocation6 + $0xf88] sm:$0xff]
    %v1571 = vld [vmem:[#allocation6 + $0xf90] sm:$0xff]
    %v1572 = vld [vmem:[#allocation6 + $0xf98] sm:$0xff]
    %v1573 = vld [vmem:[#allocation6 + $0xfa0] sm:$0xff]
    %v1574 = vld [vmem:[#allocation6 + $0xfa8] sm:$0xff]
    %v1575 = vld [vmem:[#allocation6 + $0xfb0] sm:$0xff]
    %v1576 = vld [vmem:[#allocation6 + $0xfb8] sm:$0xff]
    %v1577 = vld [vmem:[#allocation6 + $0xfc0] sm:$0xff]
    %v1578 = vld [vmem:[#allocation6 + $0xfc8] sm:$0xff]
    %v1579 = vld [vmem:[#allocation6 + $0xfd0] sm:$0xff]
    %v1580 = vld [vmem:[#allocation6 + $0xfd8] sm:$0xff]
    %v1581 = vld [vmem:[#allocation6 + $0xfe0] sm:$0xff]
    %v1582 = vld [vmem:[#allocation6 + $0xfe8] sm:$0xff]
    %v1583 = vld [vmem:[#allocation6 + $0xff0] sm:$0xff]
    %v1584 = vld [vmem:[#allocation6 + $0xff8] sm:$0xff]
    %v1585 = vld [vmem:[#allocation7] sm:$0xff]
    %v1587 = vlaneseq
    %v1588 = vshrl.u32 %v1587, 7
    %v1589 = vsub.s32 0, %v1588
    %v1590 = vrot.slane %v1585, %v1589
    %v1591 = vlaneseq
    %v1592 = vshrl.u32 %v1591, 7
    %v1593 = vsub.s32 1, %v1592
    %v1594 = vrot.slane %v1585, %v1593
    %v1595 = vlaneseq
    %v1596 = vshrl.u32 %v1595, 7
    %v1597 = vsub.s32 2, %v1596
    %v1598 = vrot.slane %v1585, %v1597
    %v1599 = vlaneseq
    %v1600 = vshrl.u32 %v1599, 7
    %v1601 = vsub.s32 3, %v1600
    %v1602 = vrot.slane %v1585, %v1601
    %v1603 = vlaneseq
    %v1604 = vshrl.u32 %v1603, 7
    %v1605 = vsub.s32 4, %v1604
    %v1606 = vrot.slane %v1585, %v1605
    %v1607 = vlaneseq
    %v1608 = vshrl.u32 %v1607, 7
    %v1609 = vsub.s32 5, %v1608
    %v1610 = vrot.slane %v1585, %v1609
    %v1611 = vlaneseq
    %v1612 = vshrl.u32 %v1611, 7
    %v1613 = vsub.s32 6, %v1612
    %v1614 = vrot.slane %v1585, %v1613
    %v1615 = vlaneseq
    %v1616 = vshrl.u32 %v1615, 7
    %v1617 = vsub.s32 7, %v1616
    %v1618 = vrot.slane %v1585, %v1617
    %v2139 = vunpack.c.l.b16 %v1073
    %v2140 = vunpack.c.h.b16 %v1073
    %v2141 = vunpack.c.l.b16 %v1074
    %v2142 = vunpack.c.h.b16 %v1074
    %v2143 = vunpack.c.l.b16 %v1075
    %v2144 = vunpack.c.h.b16 %v1075
    %v2145 = vunpack.c.l.b16 %v1076
    %v2146 = vunpack.c.h.b16 %v1076
    %v2147 = vunpack.c.l.b16 %v1077
    %v2148 = vunpack.c.h.b16 %v1077
    %v2149 = vunpack.c.l.b16 %v1078
    %v2150 = vunpack.c.h.b16 %v1078
    %v2151 = vunpack.c.l.b16 %v1079
    %v2152 = vunpack.c.h.b16 %v1079
    %v2153 = vunpack.c.l.b16 %v1080
    %v2154 = vunpack.c.h.b16 %v1080
    %v2155 = vunpack.c.l.b16 %v1081
    %v2156 = vunpack.c.h.b16 %v1081
    %v2157 = vunpack.c.l.b16 %v1082
    %v2158 = vunpack.c.h.b16 %v1082
    %v2159 = vunpack.c.l.b16 %v1083
    %v2160 = vunpack.c.h.b16 %v1083
    %v2161 = vunpack.c.l.b16 %v1084
    %v2162 = vunpack.c.h.b16 %v1084
    %v2163 = vunpack.c.l.b16 %v1085
    %v2164 = vunpack.c.h.b16 %v1085
    %v2165 = vunpack.c.l.b16 %v1086
    %v2166 = vunpack.c.h.b16 %v1086
    %v2167 = vunpack.c.l.b16 %v1087
    %v2168 = vunpack.c.h.b16 %v1087
    %v2169 = vunpack.c.l.b16 %v1088
    %v2170 = vunpack.c.h.b16 %v1088
    %v2171 = vunpack.c.l.b16 %v1089
    %v2172 = vunpack.c.h.b16 %v1089
    %v2173 = vunpack.c.l.b16 %v1090
    %v2174 = vunpack.c.h.b16 %v1090
    %v2175 = vunpack.c.l.b16 %v1091
    %v2176 = vunpack.c.h.b16 %v1091
    %v2177 = vunpack.c.l.b16 %v1092
    %v2178 = vunpack.c.h.b16 %v1092
    %v2179 = vunpack.c.l.b16 %v1093
    %v2180 = vunpack.c.h.b16 %v1093
    %v2181 = vunpack.c.l.b16 %v1094
    %v2182 = vunpack.c.h.b16 %v1094
    %v2183 = vunpack.c.l.b16 %v1095
    %v2184 = vunpack.c.h.b16 %v1095
    %v2185 = vunpack.c.l.b16 %v1096
    %v2186 = vunpack.c.h.b16 %v1096
    %v2187 = vunpack.c.l.b16 %v1097
    %v2188 = vunpack.c.h.b16 %v1097
    %v2189 = vunpack.c.l.b16 %v1098
    %v2190 = vunpack.c.h.b16 %v1098
    %v2191 = vunpack.c.l.b16 %v1099
    %v2192 = vunpack.c.h.b16 %v1099
    %v2193 = vunpack.c.l.b16 %v1100
    %v2194 = vunpack.c.h.b16 %v1100
    %v2195 = vunpack.c.l.b16 %v1101
    %v2196 = vunpack.c.h.b16 %v1101
    %v2197 = vunpack.c.l.b16 %v1102
    %v2198 = vunpack.c.h.b16 %v1102
    %v2199 = vunpack.c.l.b16 %v1103
    %v2200 = vunpack.c.h.b16 %v1103
    %v2201 = vunpack.c.l.b16 %v1104
    %v2202 = vunpack.c.h.b16 %v1104
    %v2203 = vunpack.c.l.b16 %v1105
    %v2204 = vunpack.c.h.b16 %v1105
    %v2205 = vunpack.c.l.b16 %v1106
    %v2206 = vunpack.c.h.b16 %v1106
    %v2207 = vunpack.c.l.b16 %v1107
    %v2208 = vunpack.c.h.b16 %v1107
    %v2209 = vunpack.c.l.b16 %v1108
    %v2210 = vunpack.c.h.b16 %v1108
    %v2211 = vunpack.c.l.b16 %v1109
    %v2212 = vunpack.c.h.b16 %v1109
    %v2213 = vunpack.c.l.b16 %v1110
    %v2214 = vunpack.c.h.b16 %v1110
    %v2215 = vunpack.c.l.b16 %v1111
    %v2216 = vunpack.c.h.b16 %v1111
    %v2217 = vunpack.c.l.b16 %v1112
    %v2218 = vunpack.c.h.b16 %v1112
    %v2219 = vunpack.c.l.b16 %v1113
    %v2220 = vunpack.c.h.b16 %v1113
    %v2221 = vunpack.c.l.b16 %v1114
    %v2222 = vunpack.c.h.b16 %v1114
    %v2223 = vunpack.c.l.b16 %v1115
    %v2224 = vunpack.c.h.b16 %v1115
    %v2225 = vunpack.c.l.b16 %v1116
    %v2226 = vunpack.c.h.b16 %v1116
    %v2227 = vunpack.c.l.b16 %v1117
    %v2228 = vunpack.c.h.b16 %v1117
    %v2229 = vunpack.c.l.b16 %v1118
    %v2230 = vunpack.c.h.b16 %v1118
    %v2231 = vunpack.c.l.b16 %v1119
    %v2232 = vunpack.c.h.b16 %v1119
    %v2233 = vunpack.c.l.b16 %v1120
    %v2234 = vunpack.c.h.b16 %v1120
    %v2235 = vunpack.c.l.b16 %v1121
    %v2236 = vunpack.c.h.b16 %v1121
    %v2237 = vunpack.c.l.b16 %v1122
    %v2238 = vunpack.c.h.b16 %v1122
    %v2239 = vunpack.c.l.b16 %v1123
    %v2240 = vunpack.c.h.b16 %v1123
    %v2241 = vunpack.c.l.b16 %v1124
    %v2242 = vunpack.c.h.b16 %v1124
    %v2243 = vunpack.c.l.b16 %v1125
    %v2244 = vunpack.c.h.b16 %v1125
    %v2245 = vunpack.c.l.b16 %v1126
    %v2246 = vunpack.c.h.b16 %v1126
    %v2247 = vunpack.c.l.b16 %v1127
    %v2248 = vunpack.c.h.b16 %v1127
    %v2249 = vunpack.c.l.b16 %v1128
    %v2250 = vunpack.c.h.b16 %v1128
    %v2251 = vunpack.c.l.b16 %v1129
    %v2252 = vunpack.c.h.b16 %v1129
    %v2253 = vunpack.c.l.b16 %v1130
    %v2254 = vunpack.c.h.b16 %v1130
    %v2255 = vunpack.c.l.b16 %v1131
    %v2256 = vunpack.c.h.b16 %v1131
    %v2257 = vunpack.c.l.b16 %v1132
    %v2258 = vunpack.c.h.b16 %v1132
    %v2259 = vunpack.c.l.b16 %v1133
    %v2260 = vunpack.c.h.b16 %v1133
    %v2261 = vunpack.c.l.b16 %v1134
    %v2262 = vunpack.c.h.b16 %v1134
    %v2263 = vunpack.c.l.b16 %v1135
    %v2264 = vunpack.c.h.b16 %v1135
    %v2265 = vunpack.c.l.b16 %v1136
    %v2266 = vunpack.c.h.b16 %v1136
    %v2267 = vunpack.c.l.b16 %v1137
    %v2268 = vunpack.c.h.b16 %v1137
    %v2269 = vunpack.c.l.b16 %v1138
    %v2270 = vunpack.c.h.b16 %v1138
    %v2271 = vunpack.c.l.b16 %v1139
    %v2272 = vunpack.c.h.b16 %v1139
    %v2273 = vunpack.c.l.b16 %v1140
    %v2274 = vunpack.c.h.b16 %v1140
    %v2275 = vunpack.c.l.b16 %v1141
    %v2276 = vunpack.c.h.b16 %v1141
    %v2277 = vunpack.c.l.b16 %v1142
    %v2278 = vunpack.c.h.b16 %v1142
    %v2279 = vunpack.c.l.b16 %v1143
    %v2280 = vunpack.c.h.b16 %v1143
    %v2281 = vunpack.c.l.b16 %v1144
    %v2282 = vunpack.c.h.b16 %v1144
    %v2283 = vunpack.c.l.b16 %v1145
    %v2284 = vunpack.c.h.b16 %v1145
    %v2285 = vunpack.c.l.b16 %v1146
    %v2286 = vunpack.c.h.b16 %v1146
    %v2287 = vunpack.c.l.b16 %v1147
    %v2288 = vunpack.c.h.b16 %v1147
    %v2289 = vunpack.c.l.b16 %v1148
    %v2290 = vunpack.c.h.b16 %v1148
    %v2291 = vunpack.c.l.b16 %v1149
    %v2292 = vunpack.c.h.b16 %v1149
    %v2293 = vunpack.c.l.b16 %v1150
    %v2294 = vunpack.c.h.b16 %v1150
    %v2295 = vunpack.c.l.b16 %v1151
    %v2296 = vunpack.c.h.b16 %v1151
    %v2297 = vunpack.c.l.b16 %v1152
    %v2298 = vunpack.c.h.b16 %v1152
    %v2299 = vunpack.c.l.b16 %v1153
    %v2300 = vunpack.c.h.b16 %v1153
    %v2301 = vunpack.c.l.b16 %v1154
    %v2302 = vunpack.c.h.b16 %v1154
    %v2303 = vunpack.c.l.b16 %v1155
    %v2304 = vunpack.c.h.b16 %v1155
    %v2305 = vunpack.c.l.b16 %v1156
    %v2306 = vunpack.c.h.b16 %v1156
    %v2307 = vunpack.c.l.b16 %v1157
    %v2308 = vunpack.c.h.b16 %v1157
    %v2309 = vunpack.c.l.b16 %v1158
    %v2310 = vunpack.c.h.b16 %v1158
    %v2311 = vunpack.c.l.b16 %v1159
    %v2312 = vunpack.c.h.b16 %v1159
    %v2313 = vunpack.c.l.b16 %v1160
    %v2314 = vunpack.c.h.b16 %v1160
    %v2315 = vunpack.c.l.b16 %v1161
    %v2316 = vunpack.c.h.b16 %v1161
    %v2317 = vunpack.c.l.b16 %v1162
    %v2318 = vunpack.c.h.b16 %v1162
    %v2319 = vunpack.c.l.b16 %v1163
    %v2320 = vunpack.c.h.b16 %v1163
    %v2321 = vunpack.c.l.b16 %v1164
    %v2322 = vunpack.c.h.b16 %v1164
    %v2323 = vunpack.c.l.b16 %v1165
    %v2324 = vunpack.c.h.b16 %v1165
    %v2325 = vunpack.c.l.b16 %v1166
    %v2326 = vunpack.c.h.b16 %v1166
    %v2327 = vunpack.c.l.b16 %v1167
    %v2328 = vunpack.c.h.b16 %v1167
    %v2329 = vunpack.c.l.b16 %v1168
    %v2330 = vunpack.c.h.b16 %v1168
    %v2331 = vunpack.c.l.b16 %v1169
    %v2332 = vunpack.c.h.b16 %v1169
    %v2333 = vunpack.c.l.b16 %v1170
    %v2334 = vunpack.c.h.b16 %v1170
    %v2335 = vunpack.c.l.b16 %v1171
    %v2336 = vunpack.c.h.b16 %v1171
    %v2337 = vunpack.c.l.b16 %v1172
    %v2338 = vunpack.c.h.b16 %v1172
    %v2339 = vunpack.c.l.b16 %v1173
    %v2340 = vunpack.c.h.b16 %v1173
    %v2341 = vunpack.c.l.b16 %v1174
    %v2342 = vunpack.c.h.b16 %v1174
    %v2343 = vunpack.c.l.b16 %v1175
    %v2344 = vunpack.c.h.b16 %v1175
    %v2345 = vunpack.c.l.b16 %v1176
    %v2346 = vunpack.c.h.b16 %v1176
    %v2347 = vunpack.c.l.b16 %v1177
    %v2348 = vunpack.c.h.b16 %v1177
    %v2349 = vunpack.c.l.b16 %v1178
    %v2350 = vunpack.c.h.b16 %v1178
    %v2351 = vunpack.c.l.b16 %v1179
    %v2352 = vunpack.c.h.b16 %v1179
    %v2353 = vunpack.c.l.b16 %v1180
    %v2354 = vunpack.c.h.b16 %v1180
    %v2355 = vunpack.c.l.b16 %v1181
    %v2356 = vunpack.c.h.b16 %v1181
    %v2357 = vunpack.c.l.b16 %v1182
    %v2358 = vunpack.c.h.b16 %v1182
    %v2359 = vunpack.c.l.b16 %v1183
    %v2360 = vunpack.c.h.b16 %v1183
    %v2361 = vunpack.c.l.b16 %v1184
    %v2362 = vunpack.c.h.b16 %v1184
    %v2363 = vunpack.c.l.b16 %v1185
    %v2364 = vunpack.c.h.b16 %v1185
    %v2365 = vunpack.c.l.b16 %v1186
    %v2366 = vunpack.c.h.b16 %v1186
    %v2367 = vunpack.c.l.b16 %v1187
    %v2368 = vunpack.c.h.b16 %v1187
    %v2369 = vunpack.c.l.b16 %v1188
    %v2370 = vunpack.c.h.b16 %v1188
    %v2371 = vunpack.c.l.b16 %v1189
    %v2372 = vunpack.c.h.b16 %v1189
    %v2373 = vunpack.c.l.b16 %v1190
    %v2374 = vunpack.c.h.b16 %v1190
    %v2375 = vunpack.c.l.b16 %v1191
    %v2376 = vunpack.c.h.b16 %v1191
    %v2377 = vunpack.c.l.b16 %v1192
    %v2378 = vunpack.c.h.b16 %v1192
    %v2379 = vunpack.c.l.b16 %v1193
    %v2380 = vunpack.c.h.b16 %v1193
    %v2381 = vunpack.c.l.b16 %v1194
    %v2382 = vunpack.c.h.b16 %v1194
    %v2383 = vunpack.c.l.b16 %v1195
    %v2384 = vunpack.c.h.b16 %v1195
    %v2385 = vunpack.c.l.b16 %v1196
    %v2386 = vunpack.c.h.b16 %v1196
    %v2387 = vunpack.c.l.b16 %v1197
    %v2388 = vunpack.c.h.b16 %v1197
    %v2389 = vunpack.c.l.b16 %v1198
    %v2390 = vunpack.c.h.b16 %v1198
    %v2391 = vunpack.c.l.b16 %v1199
    %v2392 = vunpack.c.h.b16 %v1199
    %v2393 = vunpack.c.l.b16 %v1200
    %v2394 = vunpack.c.h.b16 %v1200
    %v2395 = vunpack.c.l.b16 %v1201
    %v2396 = vunpack.c.h.b16 %v1201
    %v2397 = vunpack.c.l.b16 %v1202
    %v2398 = vunpack.c.h.b16 %v1202
    %v2399 = vunpack.c.l.b16 %v1203
    %v2400 = vunpack.c.h.b16 %v1203
    %v2401 = vunpack.c.l.b16 %v1204
    %v2402 = vunpack.c.h.b16 %v1204
    %v2403 = vunpack.c.l.b16 %v1205
    %v2404 = vunpack.c.h.b16 %v1205
    %v2405 = vunpack.c.l.b16 %v1206
    %v2406 = vunpack.c.h.b16 %v1206
    %v2407 = vunpack.c.l.b16 %v1207
    %v2408 = vunpack.c.h.b16 %v1207
    %v2409 = vunpack.c.l.b16 %v1208
    %v2410 = vunpack.c.h.b16 %v1208
    %v2411 = vunpack.c.l.b16 %v1209
    %v2412 = vunpack.c.h.b16 %v1209
    %v2413 = vunpack.c.l.b16 %v1210
    %v2414 = vunpack.c.h.b16 %v1210
    %v2415 = vunpack.c.l.b16 %v1211
    %v2416 = vunpack.c.h.b16 %v1211
    %v2417 = vunpack.c.l.b16 %v1212
    %v2418 = vunpack.c.h.b16 %v1212
    %v2419 = vunpack.c.l.b16 %v1213
    %v2420 = vunpack.c.h.b16 %v1213
    %v2421 = vunpack.c.l.b16 %v1214
    %v2422 = vunpack.c.h.b16 %v1214
    %v2423 = vunpack.c.l.b16 %v1215
    %v2424 = vunpack.c.h.b16 %v1215
    %v2425 = vunpack.c.l.b16 %v1216
    %v2426 = vunpack.c.h.b16 %v1216
    %v2427 = vunpack.c.l.b16 %v1217
    %v2428 = vunpack.c.h.b16 %v1217
    %v2429 = vunpack.c.l.b16 %v1218
    %v2430 = vunpack.c.h.b16 %v1218
    %v2431 = vunpack.c.l.b16 %v1219
    %v2432 = vunpack.c.h.b16 %v1219
    %v2433 = vunpack.c.l.b16 %v1220
    %v2434 = vunpack.c.h.b16 %v1220
    %v2435 = vunpack.c.l.b16 %v1221
    %v2436 = vunpack.c.h.b16 %v1221
    %v2437 = vunpack.c.l.b16 %v1222
    %v2438 = vunpack.c.h.b16 %v1222
    %v2439 = vunpack.c.l.b16 %v1223
    %v2440 = vunpack.c.h.b16 %v1223
    %v2441 = vunpack.c.l.b16 %v1224
    %v2442 = vunpack.c.h.b16 %v1224
    %v2443 = vunpack.c.l.b16 %v1225
    %v2444 = vunpack.c.h.b16 %v1225
    %v2445 = vunpack.c.l.b16 %v1226
    %v2446 = vunpack.c.h.b16 %v1226
    %v2447 = vunpack.c.l.b16 %v1227
    %v2448 = vunpack.c.h.b16 %v1227
    %v2449 = vunpack.c.l.b16 %v1228
    %v2450 = vunpack.c.h.b16 %v1228
    %v2451 = vunpack.c.l.b16 %v1229
    %v2452 = vunpack.c.h.b16 %v1229
    %v2453 = vunpack.c.l.b16 %v1230
    %v2454 = vunpack.c.h.b16 %v1230
    %v2455 = vunpack.c.l.b16 %v1231
    %v2456 = vunpack.c.h.b16 %v1231
    %v2457 = vunpack.c.l.b16 %v1232
    %v2458 = vunpack.c.h.b16 %v1232
    %v2459 = vunpack.c.l.b16 %v1233
    %v2460 = vunpack.c.h.b16 %v1233
    %v2461 = vunpack.c.l.b16 %v1234
    %v2462 = vunpack.c.h.b16 %v1234
    %v2463 = vunpack.c.l.b16 %v1235
    %v2464 = vunpack.c.h.b16 %v1235
    %v2465 = vunpack.c.l.b16 %v1236
    %v2466 = vunpack.c.h.b16 %v1236
    %v2467 = vunpack.c.l.b16 %v1237
    %v2468 = vunpack.c.h.b16 %v1237
    %v2469 = vunpack.c.l.b16 %v1238
    %v2470 = vunpack.c.h.b16 %v1238
    %v2471 = vunpack.c.l.b16 %v1239
    %v2472 = vunpack.c.h.b16 %v1239
    %v2473 = vunpack.c.l.b16 %v1240
    %v2474 = vunpack.c.h.b16 %v1240
    %v2475 = vunpack.c.l.b16 %v1241
    %v2476 = vunpack.c.h.b16 %v1241
    %v2477 = vunpack.c.l.b16 %v1242
    %v2478 = vunpack.c.h.b16 %v1242
    %v2479 = vunpack.c.l.b16 %v1243
    %v2480 = vunpack.c.h.b16 %v1243
    %v2481 = vunpack.c.l.b16 %v1244
    %v2482 = vunpack.c.h.b16 %v1244
    %v2483 = vunpack.c.l.b16 %v1245
    %v2484 = vunpack.c.h.b16 %v1245
    %v2485 = vunpack.c.l.b16 %v1246
    %v2486 = vunpack.c.h.b16 %v1246
    %v2487 = vunpack.c.l.b16 %v1247
    %v2488 = vunpack.c.h.b16 %v1247
    %v2489 = vunpack.c.l.b16 %v1248
    %v2490 = vunpack.c.h.b16 %v1248
    %v2491 = vunpack.c.l.b16 %v1249
    %v2492 = vunpack.c.h.b16 %v1249
    %v2493 = vunpack.c.l.b16 %v1250
    %v2494 = vunpack.c.h.b16 %v1250
    %v2495 = vunpack.c.l.b16 %v1251
    %v2496 = vunpack.c.h.b16 %v1251
    %v2497 = vunpack.c.l.b16 %v1252
    %v2498 = vunpack.c.h.b16 %v1252
    %v2499 = vunpack.c.l.b16 %v1253
    %v2500 = vunpack.c.h.b16 %v1253
    %v2501 = vunpack.c.l.b16 %v1254
    %v2502 = vunpack.c.h.b16 %v1254
    %v2503 = vunpack.c.l.b16 %v1255
    %v2504 = vunpack.c.h.b16 %v1255
    %v2505 = vunpack.c.l.b16 %v1256
    %v2506 = vunpack.c.h.b16 %v1256
    %v2507 = vunpack.c.l.b16 %v1257
    %v2508 = vunpack.c.h.b16 %v1257
    %v2509 = vunpack.c.l.b16 %v1258
    %v2510 = vunpack.c.h.b16 %v1258
    %v2511 = vunpack.c.l.b16 %v1259
    %v2512 = vunpack.c.h.b16 %v1259
    %v2513 = vunpack.c.l.b16 %v1260
    %v2514 = vunpack.c.h.b16 %v1260
    %v2515 = vunpack.c.l.b16 %v1261
    %v2516 = vunpack.c.h.b16 %v1261
    %v2517 = vunpack.c.l.b16 %v1262
    %v2518 = vunpack.c.h.b16 %v1262
    %v2519 = vunpack.c.l.b16 %v1263
    %v2520 = vunpack.c.h.b16 %v1263
    %v2521 = vunpack.c.l.b16 %v1264
    %v2522 = vunpack.c.h.b16 %v1264
    %v2523 = vunpack.c.l.b16 %v1265
    %v2524 = vunpack.c.h.b16 %v1265
    %v2525 = vunpack.c.l.b16 %v1266
    %v2526 = vunpack.c.h.b16 %v1266
    %v2527 = vunpack.c.l.b16 %v1267
    %v2528 = vunpack.c.h.b16 %v1267
    %v2529 = vunpack.c.l.b16 %v1268
    %v2530 = vunpack.c.h.b16 %v1268
    %v2531 = vunpack.c.l.b16 %v1269
    %v2532 = vunpack.c.h.b16 %v1269
    %v2533 = vunpack.c.l.b16 %v1270
    %v2534 = vunpack.c.h.b16 %v1270
    %v2535 = vunpack.c.l.b16 %v1271
    %v2536 = vunpack.c.h.b16 %v1271
    %v2537 = vunpack.c.l.b16 %v1272
    %v2538 = vunpack.c.h.b16 %v1272
    %v2539 = vunpack.c.l.b16 %v1273
    %v2540 = vunpack.c.h.b16 %v1273
    %v2541 = vunpack.c.l.b16 %v1274
    %v2542 = vunpack.c.h.b16 %v1274
    %v2543 = vunpack.c.l.b16 %v1275
    %v2544 = vunpack.c.h.b16 %v1275
    %v2545 = vunpack.c.l.b16 %v1276
    %v2546 = vunpack.c.h.b16 %v1276
    %v2547 = vunpack.c.l.b16 %v1277
    %v2548 = vunpack.c.h.b16 %v1277
    %v2549 = vunpack.c.l.b16 %v1278
    %v2550 = vunpack.c.h.b16 %v1278
    %v2551 = vunpack.c.l.b16 %v1279
    %v2552 = vunpack.c.h.b16 %v1279
    %v2553 = vunpack.c.l.b16 %v1280
    %v2554 = vunpack.c.h.b16 %v1280
    %v2555 = vunpack.c.l.b16 %v1281
    %v2556 = vunpack.c.h.b16 %v1281
    %v2557 = vunpack.c.l.b16 %v1282
    %v2558 = vunpack.c.h.b16 %v1282
    %v2559 = vunpack.c.l.b16 %v1283
    %v2560 = vunpack.c.h.b16 %v1283
    %v2561 = vunpack.c.l.b16 %v1284
    %v2562 = vunpack.c.h.b16 %v1284
    %v2563 = vunpack.c.l.b16 %v1285
    %v2564 = vunpack.c.h.b16 %v1285
    %v2565 = vunpack.c.l.b16 %v1286
    %v2566 = vunpack.c.h.b16 %v1286
    %v2567 = vunpack.c.l.b16 %v1287
    %v2568 = vunpack.c.h.b16 %v1287
    %v2569 = vunpack.c.l.b16 %v1288
    %v2570 = vunpack.c.h.b16 %v1288
    %v2571 = vunpack.c.l.b16 %v1289
    %v2572 = vunpack.c.h.b16 %v1289
    %v2573 = vunpack.c.l.b16 %v1290
    %v2574 = vunpack.c.h.b16 %v1290
    %v2575 = vunpack.c.l.b16 %v1291
    %v2576 = vunpack.c.h.b16 %v1291
    %v2577 = vunpack.c.l.b16 %v1292
    %v2578 = vunpack.c.h.b16 %v1292
    %v2579 = vunpack.c.l.b16 %v1293
    %v2580 = vunpack.c.h.b16 %v1293
    %v2581 = vunpack.c.l.b16 %v1294
    %v2582 = vunpack.c.h.b16 %v1294
    %v2583 = vunpack.c.l.b16 %v1295
    %v2584 = vunpack.c.h.b16 %v1295
    %v2585 = vunpack.c.l.b16 %v1296
    %v2586 = vunpack.c.h.b16 %v1296
    %v2587 = vunpack.c.l.b16 %v1297
    %v2588 = vunpack.c.h.b16 %v1297
    %v2589 = vunpack.c.l.b16 %v1298
    %v2590 = vunpack.c.h.b16 %v1298
    %v2591 = vunpack.c.l.b16 %v1299
    %v2592 = vunpack.c.h.b16 %v1299
    %v2593 = vunpack.c.l.b16 %v1300
    %v2594 = vunpack.c.h.b16 %v1300
    %v2595 = vunpack.c.l.b16 %v1301
    %v2596 = vunpack.c.h.b16 %v1301
    %v2597 = vunpack.c.l.b16 %v1302
    %v2598 = vunpack.c.h.b16 %v1302
    %v2599 = vunpack.c.l.b16 %v1303
    %v2600 = vunpack.c.h.b16 %v1303
    %v2601 = vunpack.c.l.b16 %v1304
    %v2602 = vunpack.c.h.b16 %v1304
    %v2603 = vunpack.c.l.b16 %v1305
    %v2604 = vunpack.c.h.b16 %v1305
    %v2605 = vunpack.c.l.b16 %v1306
    %v2606 = vunpack.c.h.b16 %v1306
    %v2607 = vunpack.c.l.b16 %v1307
    %v2608 = vunpack.c.h.b16 %v1307
    %v2609 = vunpack.c.l.b16 %v1308
    %v2610 = vunpack.c.h.b16 %v1308
    %v2611 = vunpack.c.l.b16 %v1309
    %v2612 = vunpack.c.h.b16 %v1309
    %v2613 = vunpack.c.l.b16 %v1310
    %v2614 = vunpack.c.h.b16 %v1310
    %v2615 = vunpack.c.l.b16 %v1311
    %v2616 = vunpack.c.h.b16 %v1311
    %v2617 = vunpack.c.l.b16 %v1312
    %v2618 = vunpack.c.h.b16 %v1312
    %v2619 = vunpack.c.l.b16 %v1313
    %v2620 = vunpack.c.h.b16 %v1313
    %v2621 = vunpack.c.l.b16 %v1314
    %v2622 = vunpack.c.h.b16 %v1314
    %v2623 = vunpack.c.l.b16 %v1315
    %v2624 = vunpack.c.h.b16 %v1315
    %v2625 = vunpack.c.l.b16 %v1316
    %v2626 = vunpack.c.h.b16 %v1316
    %v2627 = vunpack.c.l.b16 %v1317
    %v2628 = vunpack.c.h.b16 %v1317
    %v2629 = vunpack.c.l.b16 %v1318
    %v2630 = vunpack.c.h.b16 %v1318
    %v2631 = vunpack.c.l.b16 %v1319
    %v2632 = vunpack.c.h.b16 %v1319
    %v2633 = vunpack.c.l.b16 %v1320
    %v2634 = vunpack.c.h.b16 %v1320
    %v2635 = vunpack.c.l.b16 %v1321
    %v2636 = vunpack.c.h.b16 %v1321
    %v2637 = vunpack.c.l.b16 %v1322
    %v2638 = vunpack.c.h.b16 %v1322
    %v2639 = vunpack.c.l.b16 %v1323
    %v2640 = vunpack.c.h.b16 %v1323
    %v2641 = vunpack.c.l.b16 %v1324
    %v2642 = vunpack.c.h.b16 %v1324
    %v2643 = vunpack.c.l.b16 %v1325
    %v2644 = vunpack.c.h.b16 %v1325
    %v2645 = vunpack.c.l.b16 %v1326
    %v2646 = vunpack.c.h.b16 %v1326
    %v2647 = vunpack.c.l.b16 %v1327
    %v2648 = vunpack.c.h.b16 %v1327
    %v2649 = vunpack.c.l.b16 %v1328
    %v2650 = vunpack.c.h.b16 %v1328
    %v2651 = vunpack.c.l.b16 %v1329
    %v2652 = vunpack.c.h.b16 %v1329
    %v2653 = vunpack.c.l.b16 %v1330
    %v2654 = vunpack.c.h.b16 %v1330
    %v2655 = vunpack.c.l.b16 %v1331
    %v2656 = vunpack.c.h.b16 %v1331
    %v2657 = vunpack.c.l.b16 %v1332
    %v2658 = vunpack.c.h.b16 %v1332
    %v2659 = vunpack.c.l.b16 %v1333
    %v2660 = vunpack.c.h.b16 %v1333
    %v2661 = vunpack.c.l.b16 %v1334
    %v2662 = vunpack.c.h.b16 %v1334
    %v2663 = vunpack.c.l.b16 %v1335
    %v2664 = vunpack.c.h.b16 %v1335
    %v2665 = vunpack.c.l.b16 %v1336
    %v2666 = vunpack.c.h.b16 %v1336
    %v2667 = vunpack.c.l.b16 %v1337
    %v2668 = vunpack.c.h.b16 %v1337
    %v2669 = vunpack.c.l.b16 %v1338
    %v2670 = vunpack.c.h.b16 %v1338
    %v2671 = vunpack.c.l.b16 %v1339
    %v2672 = vunpack.c.h.b16 %v1339
    %v2673 = vunpack.c.l.b16 %v1340
    %v2674 = vunpack.c.h.b16 %v1340
    %v2675 = vunpack.c.l.b16 %v1341
    %v2676 = vunpack.c.h.b16 %v1341
    %v2677 = vunpack.c.l.b16 %v1342
    %v2678 = vunpack.c.h.b16 %v1342
    %v2679 = vunpack.c.l.b16 %v1343
    %v2680 = vunpack.c.h.b16 %v1343
    %v2681 = vunpack.c.l.b16 %v1344
    %v2682 = vunpack.c.h.b16 %v1344
    %v2683 = vunpack.c.l.b16 %v1345
    %v2684 = vunpack.c.h.b16 %v1345
    %v2685 = vunpack.c.l.b16 %v1346
    %v2686 = vunpack.c.h.b16 %v1346
    %v2687 = vunpack.c.l.b16 %v1347
    %v2688 = vunpack.c.h.b16 %v1347
    %v2689 = vunpack.c.l.b16 %v1348
    %v2690 = vunpack.c.h.b16 %v1348
    %v2691 = vunpack.c.l.b16 %v1349
    %v2692 = vunpack.c.h.b16 %v1349
    %v2693 = vunpack.c.l.b16 %v1350
    %v2694 = vunpack.c.h.b16 %v1350
    %v2695 = vunpack.c.l.b16 %v1351
    %v2696 = vunpack.c.h.b16 %v1351
    %v2697 = vunpack.c.l.b16 %v1352
    %v2698 = vunpack.c.h.b16 %v1352
    %v2699 = vunpack.c.l.b16 %v1353
    %v2700 = vunpack.c.h.b16 %v1353
    %v2701 = vunpack.c.l.b16 %v1354
    %v2702 = vunpack.c.h.b16 %v1354
    %v2703 = vunpack.c.l.b16 %v1355
    %v2704 = vunpack.c.h.b16 %v1355
    %v2705 = vunpack.c.l.b16 %v1356
    %v2706 = vunpack.c.h.b16 %v1356
    %v2707 = vunpack.c.l.b16 %v1357
    %v2708 = vunpack.c.h.b16 %v1357
    %v2709 = vunpack.c.l.b16 %v1358
    %v2710 = vunpack.c.h.b16 %v1358
    %v2711 = vunpack.c.l.b16 %v1359
    %v2712 = vunpack.c.h.b16 %v1359
    %v2713 = vunpack.c.l.b16 %v1360
    %v2714 = vunpack.c.h.b16 %v1360
    %v2715 = vunpack.c.l.b16 %v1361
    %v2716 = vunpack.c.h.b16 %v1361
    %v2717 = vunpack.c.l.b16 %v1362
    %v2718 = vunpack.c.h.b16 %v1362
    %v2719 = vunpack.c.l.b16 %v1363
    %v2720 = vunpack.c.h.b16 %v1363
    %v2721 = vunpack.c.l.b16 %v1364
    %v2722 = vunpack.c.h.b16 %v1364
    %v2723 = vunpack.c.l.b16 %v1365
    %v2724 = vunpack.c.h.b16 %v1365
    %v2725 = vunpack.c.l.b16 %v1366
    %v2726 = vunpack.c.h.b16 %v1366
    %v2727 = vunpack.c.l.b16 %v1367
    %v2728 = vunpack.c.h.b16 %v1367
    %v2729 = vunpack.c.l.b16 %v1368
    %v2730 = vunpack.c.h.b16 %v1368
    %v2731 = vunpack.c.l.b16 %v1369
    %v2732 = vunpack.c.h.b16 %v1369
    %v2733 = vunpack.c.l.b16 %v1370
    %v2734 = vunpack.c.h.b16 %v1370
    %v2735 = vunpack.c.l.b16 %v1371
    %v2736 = vunpack.c.h.b16 %v1371
    %v2737 = vunpack.c.l.b16 %v1372
    %v2738 = vunpack.c.h.b16 %v1372
    %v2739 = vunpack.c.l.b16 %v1373
    %v2740 = vunpack.c.h.b16 %v1373
    %v2741 = vunpack.c.l.b16 %v1374
    %v2742 = vunpack.c.h.b16 %v1374
    %v2743 = vunpack.c.l.b16 %v1375
    %v2744 = vunpack.c.h.b16 %v1375
    %v2745 = vunpack.c.l.b16 %v1376
    %v2746 = vunpack.c.h.b16 %v1376
    %v2747 = vunpack.c.l.b16 %v1377
    %v2748 = vunpack.c.h.b16 %v1377
    %v2749 = vunpack.c.l.b16 %v1378
    %v2750 = vunpack.c.h.b16 %v1378
    %v2751 = vunpack.c.l.b16 %v1379
    %v2752 = vunpack.c.h.b16 %v1379
    %v2753 = vunpack.c.l.b16 %v1380
    %v2754 = vunpack.c.h.b16 %v1380
    %v2755 = vunpack.c.l.b16 %v1381
    %v2756 = vunpack.c.h.b16 %v1381
    %v2757 = vunpack.c.l.b16 %v1382
    %v2758 = vunpack.c.h.b16 %v1382
    %v2759 = vunpack.c.l.b16 %v1383
    %v2760 = vunpack.c.h.b16 %v1383
    %v2761 = vunpack.c.l.b16 %v1384
    %v2762 = vunpack.c.h.b16 %v1384
    %v2763 = vunpack.c.l.b16 %v1385
    %v2764 = vunpack.c.h.b16 %v1385
    %v2765 = vunpack.c.l.b16 %v1386
    %v2766 = vunpack.c.h.b16 %v1386
    %v2767 = vunpack.c.l.b16 %v1387
    %v2768 = vunpack.c.h.b16 %v1387
    %v2769 = vunpack.c.l.b16 %v1388
    %v2770 = vunpack.c.h.b16 %v1388
    %v2771 = vunpack.c.l.b16 %v1389
    %v2772 = vunpack.c.h.b16 %v1389
    %v2773 = vunpack.c.l.b16 %v1390
    %v2774 = vunpack.c.h.b16 %v1390
    %v2775 = vunpack.c.l.b16 %v1391
    %v2776 = vunpack.c.h.b16 %v1391
    %v2777 = vunpack.c.l.b16 %v1392
    %v2778 = vunpack.c.h.b16 %v1392
    %v2779 = vunpack.c.l.b16 %v1393
    %v2780 = vunpack.c.h.b16 %v1393
    %v2781 = vunpack.c.l.b16 %v1394
    %v2782 = vunpack.c.h.b16 %v1394
    %v2783 = vunpack.c.l.b16 %v1395
    %v2784 = vunpack.c.h.b16 %v1395
    %v2785 = vunpack.c.l.b16 %v1396
    %v2786 = vunpack.c.h.b16 %v1396
    %v2787 = vunpack.c.l.b16 %v1397
    %v2788 = vunpack.c.h.b16 %v1397
    %v2789 = vunpack.c.l.b16 %v1398
    %v2790 = vunpack.c.h.b16 %v1398
    %v2791 = vunpack.c.l.b16 %v1399
    %v2792 = vunpack.c.h.b16 %v1399
    %v2793 = vunpack.c.l.b16 %v1400
    %v2794 = vunpack.c.h.b16 %v1400
    %v2795 = vunpack.c.l.b16 %v1401
    %v2796 = vunpack.c.h.b16 %v1401
    %v2797 = vunpack.c.l.b16 %v1402
    %v2798 = vunpack.c.h.b16 %v1402
    %v2799 = vunpack.c.l.b16 %v1403
    %v2800 = vunpack.c.h.b16 %v1403
    %v2801 = vunpack.c.l.b16 %v1404
    %v2802 = vunpack.c.h.b16 %v1404
    %v2803 = vunpack.c.l.b16 %v1405
    %v2804 = vunpack.c.h.b16 %v1405
    %v2805 = vunpack.c.l.b16 %v1406
    %v2806 = vunpack.c.h.b16 %v1406
    %v2807 = vunpack.c.l.b16 %v1407
    %v2808 = vunpack.c.h.b16 %v1407
    %v2809 = vunpack.c.l.b16 %v1408
    %v2810 = vunpack.c.h.b16 %v1408
    %v2811 = vunpack.c.l.b16 %v1409
    %v2812 = vunpack.c.h.b16 %v1409
    %v2813 = vunpack.c.l.b16 %v1410
    %v2814 = vunpack.c.h.b16 %v1410
    %v2815 = vunpack.c.l.b16 %v1411
    %v2816 = vunpack.c.h.b16 %v1411
    %v2817 = vunpack.c.l.b16 %v1412
    %v2818 = vunpack.c.h.b16 %v1412
    %v2819 = vunpack.c.l.b16 %v1413
    %v2820 = vunpack.c.h.b16 %v1413
    %v2821 = vunpack.c.l.b16 %v1414
    %v2822 = vunpack.c.h.b16 %v1414
    %v2823 = vunpack.c.l.b16 %v1415
    %v2824 = vunpack.c.h.b16 %v1415
    %v2825 = vunpack.c.l.b16 %v1416
    %v2826 = vunpack.c.h.b16 %v1416
    %v2827 = vunpack.c.l.b16 %v1417
    %v2828 = vunpack.c.h.b16 %v1417
    %v2829 = vunpack.c.l.b16 %v1418
    %v2830 = vunpack.c.h.b16 %v1418
    %v2831 = vunpack.c.l.b16 %v1419
    %v2832 = vunpack.c.h.b16 %v1419
    %v2833 = vunpack.c.l.b16 %v1420
    %v2834 = vunpack.c.h.b16 %v1420
    %v2835 = vunpack.c.l.b16 %v1421
    %v2836 = vunpack.c.h.b16 %v1421
    %v2837 = vunpack.c.l.b16 %v1422
    %v2838 = vunpack.c.h.b16 %v1422
    %v2839 = vunpack.c.l.b16 %v1423
    %v2840 = vunpack.c.h.b16 %v1423
    %v2841 = vunpack.c.l.b16 %v1424
    %v2842 = vunpack.c.h.b16 %v1424
    %v2843 = vunpack.c.l.b16 %v1425
    %v2844 = vunpack.c.h.b16 %v1425
    %v2845 = vunpack.c.l.b16 %v1426
    %v2846 = vunpack.c.h.b16 %v1426
    %v2847 = vunpack.c.l.b16 %v1427
    %v2848 = vunpack.c.h.b16 %v1427
    %v2849 = vunpack.c.l.b16 %v1428
    %v2850 = vunpack.c.h.b16 %v1428
    %v2851 = vunpack.c.l.b16 %v1429
    %v2852 = vunpack.c.h.b16 %v1429
    %v2853 = vunpack.c.l.b16 %v1430
    %v2854 = vunpack.c.h.b16 %v1430
    %v2855 = vunpack.c.l.b16 %v1431
    %v2856 = vunpack.c.h.b16 %v1431
    %v2857 = vunpack.c.l.b16 %v1432
    %v2858 = vunpack.c.h.b16 %v1432
    %v2859 = vunpack.c.l.b16 %v1433
    %v2860 = vunpack.c.h.b16 %v1433
    %v2861 = vunpack.c.l.b16 %v1434
    %v2862 = vunpack.c.h.b16 %v1434
    %v2863 = vunpack.c.l.b16 %v1435
    %v2864 = vunpack.c.h.b16 %v1435
    %v2865 = vunpack.c.l.b16 %v1436
    %v2866 = vunpack.c.h.b16 %v1436
    %v2867 = vunpack.c.l.b16 %v1437
    %v2868 = vunpack.c.h.b16 %v1437
    %v2869 = vunpack.c.l.b16 %v1438
    %v2870 = vunpack.c.h.b16 %v1438
    %v2871 = vunpack.c.l.b16 %v1439
    %v2872 = vunpack.c.h.b16 %v1439
    %v2873 = vunpack.c.l.b16 %v1440
    %v2874 = vunpack.c.h.b16 %v1440
    %v2875 = vunpack.c.l.b16 %v1441
    %v2876 = vunpack.c.h.b16 %v1441
    %v2877 = vunpack.c.l.b16 %v1442
    %v2878 = vunpack.c.h.b16 %v1442
    %v2879 = vunpack.c.l.b16 %v1443
    %v2880 = vunpack.c.h.b16 %v1443
    %v2881 = vunpack.c.l.b16 %v1444
    %v2882 = vunpack.c.h.b16 %v1444
    %v2883 = vunpack.c.l.b16 %v1445
    %v2884 = vunpack.c.h.b16 %v1445
    %v2885 = vunpack.c.l.b16 %v1446
    %v2886 = vunpack.c.h.b16 %v1446
    %v2887 = vunpack.c.l.b16 %v1447
    %v2888 = vunpack.c.h.b16 %v1447
    %v2889 = vunpack.c.l.b16 %v1448
    %v2890 = vunpack.c.h.b16 %v1448
    %v2891 = vunpack.c.l.b16 %v1449
    %v2892 = vunpack.c.h.b16 %v1449
    %v2893 = vunpack.c.l.b16 %v1450
    %v2894 = vunpack.c.h.b16 %v1450
    %v2895 = vunpack.c.l.b16 %v1451
    %v2896 = vunpack.c.h.b16 %v1451
    %v2897 = vunpack.c.l.b16 %v1452
    %v2898 = vunpack.c.h.b16 %v1452
    %v2899 = vunpack.c.l.b16 %v1453
    %v2900 = vunpack.c.h.b16 %v1453
    %v2901 = vunpack.c.l.b16 %v1454
    %v2902 = vunpack.c.h.b16 %v1454
    %v2903 = vunpack.c.l.b16 %v1455
    %v2904 = vunpack.c.h.b16 %v1455
    %v2905 = vunpack.c.l.b16 %v1456
    %v2906 = vunpack.c.h.b16 %v1456
    %v2907 = vunpack.c.l.b16 %v1457
    %v2908 = vunpack.c.h.b16 %v1457
    %v2909 = vunpack.c.l.b16 %v1458
    %v2910 = vunpack.c.h.b16 %v1458
    %v2911 = vunpack.c.l.b16 %v1459
    %v2912 = vunpack.c.h.b16 %v1459
    %v2913 = vunpack.c.l.b16 %v1460
    %v2914 = vunpack.c.h.b16 %v1460
    %v2915 = vunpack.c.l.b16 %v1461
    %v2916 = vunpack.c.h.b16 %v1461
    %v2917 = vunpack.c.l.b16 %v1462
    %v2918 = vunpack.c.h.b16 %v1462
    %v2919 = vunpack.c.l.b16 %v1463
    %v2920 = vunpack.c.h.b16 %v1463
    %v2921 = vunpack.c.l.b16 %v1464
    %v2922 = vunpack.c.h.b16 %v1464
    %v2923 = vunpack.c.l.b16 %v1465
    %v2924 = vunpack.c.h.b16 %v1465
    %v2925 = vunpack.c.l.b16 %v1466
    %v2926 = vunpack.c.h.b16 %v1466
    %v2927 = vunpack.c.l.b16 %v1467
    %v2928 = vunpack.c.h.b16 %v1467
    %v2929 = vunpack.c.l.b16 %v1468
    %v2930 = vunpack.c.h.b16 %v1468
    %v2931 = vunpack.c.l.b16 %v1469
    %v2932 = vunpack.c.h.b16 %v1469
    %v2933 = vunpack.c.l.b16 %v1470
    %v2934 = vunpack.c.h.b16 %v1470
    %v2935 = vunpack.c.l.b16 %v1471
    %v2936 = vunpack.c.h.b16 %v1471
    %v2937 = vunpack.c.l.b16 %v1472
    %v2938 = vunpack.c.h.b16 %v1472
    %v2939 = vunpack.c.l.b16 %v1473
    %v2940 = vunpack.c.h.b16 %v1473
    %v2941 = vunpack.c.l.b16 %v1474
    %v2942 = vunpack.c.h.b16 %v1474
    %v2943 = vunpack.c.l.b16 %v1475
    %v2944 = vunpack.c.h.b16 %v1475
    %v2945 = vunpack.c.l.b16 %v1476
    %v2946 = vunpack.c.h.b16 %v1476
    %v2947 = vunpack.c.l.b16 %v1477
    %v2948 = vunpack.c.h.b16 %v1477
    %v2949 = vunpack.c.l.b16 %v1478
    %v2950 = vunpack.c.h.b16 %v1478
    %v2951 = vunpack.c.l.b16 %v1479
    %v2952 = vunpack.c.h.b16 %v1479
    %v2953 = vunpack.c.l.b16 %v1480
    %v2954 = vunpack.c.h.b16 %v1480
    %v2955 = vunpack.c.l.b16 %v1481
    %v2956 = vunpack.c.h.b16 %v1481
    %v2957 = vunpack.c.l.b16 %v1482
    %v2958 = vunpack.c.h.b16 %v1482
    %v2959 = vunpack.c.l.b16 %v1483
    %v2960 = vunpack.c.h.b16 %v1483
    %v2961 = vunpack.c.l.b16 %v1484
    %v2962 = vunpack.c.h.b16 %v1484
    %v2963 = vunpack.c.l.b16 %v1485
    %v2964 = vunpack.c.h.b16 %v1485
    %v2965 = vunpack.c.l.b16 %v1486
    %v2966 = vunpack.c.h.b16 %v1486
    %v2967 = vunpack.c.l.b16 %v1487
    %v2968 = vunpack.c.h.b16 %v1487
    %v2969 = vunpack.c.l.b16 %v1488
    %v2970 = vunpack.c.h.b16 %v1488
    %v2971 = vunpack.c.l.b16 %v1489
    %v2972 = vunpack.c.h.b16 %v1489
    %v2973 = vunpack.c.l.b16 %v1490
    %v2974 = vunpack.c.h.b16 %v1490
    %v2975 = vunpack.c.l.b16 %v1491
    %v2976 = vunpack.c.h.b16 %v1491
    %v2977 = vunpack.c.l.b16 %v1492
    %v2978 = vunpack.c.h.b16 %v1492
    %v2979 = vunpack.c.l.b16 %v1493
    %v2980 = vunpack.c.h.b16 %v1493
    %v2981 = vunpack.c.l.b16 %v1494
    %v2982 = vunpack.c.h.b16 %v1494
    %v2983 = vunpack.c.l.b16 %v1495
    %v2984 = vunpack.c.h.b16 %v1495
    %v2985 = vunpack.c.l.b16 %v1496
    %v2986 = vunpack.c.h.b16 %v1496
    %v2987 = vunpack.c.l.b16 %v1497
    %v2988 = vunpack.c.h.b16 %v1497
    %v2989 = vunpack.c.l.b16 %v1498
    %v2990 = vunpack.c.h.b16 %v1498
    %v2991 = vunpack.c.l.b16 %v1499
    %v2992 = vunpack.c.h.b16 %v1499
    %v2993 = vunpack.c.l.b16 %v1500
    %v2994 = vunpack.c.h.b16 %v1500
    %v2995 = vunpack.c.l.b16 %v1501
    %v2996 = vunpack.c.h.b16 %v1501
    %v2997 = vunpack.c.l.b16 %v1502
    %v2998 = vunpack.c.h.b16 %v1502
    %v2999 = vunpack.c.l.b16 %v1503
    %v3000 = vunpack.c.h.b16 %v1503
    %v3001 = vunpack.c.l.b16 %v1504
    %v3002 = vunpack.c.h.b16 %v1504
    %v3003 = vunpack.c.l.b16 %v1505
    %v3004 = vunpack.c.h.b16 %v1505
    %v3005 = vunpack.c.l.b16 %v1506
    %v3006 = vunpack.c.h.b16 %v1506
    %v3007 = vunpack.c.l.b16 %v1507
    %v3008 = vunpack.c.h.b16 %v1507
    %v3009 = vunpack.c.l.b16 %v1508
    %v3010 = vunpack.c.h.b16 %v1508
    %v3011 = vunpack.c.l.b16 %v1509
    %v3012 = vunpack.c.h.b16 %v1509
    %v3013 = vunpack.c.l.b16 %v1510
    %v3014 = vunpack.c.h.b16 %v1510
    %v3015 = vunpack.c.l.b16 %v1511
    %v3016 = vunpack.c.h.b16 %v1511
    %v3017 = vunpack.c.l.b16 %v1512
    %v3018 = vunpack.c.h.b16 %v1512
    %v3019 = vunpack.c.l.b16 %v1513
    %v3020 = vunpack.c.h.b16 %v1513
    %v3021 = vunpack.c.l.b16 %v1514
    %v3022 = vunpack.c.h.b16 %v1514
    %v3023 = vunpack.c.l.b16 %v1515
    %v3024 = vunpack.c.h.b16 %v1515
    %v3025 = vunpack.c.l.b16 %v1516
    %v3026 = vunpack.c.h.b16 %v1516
    %v3027 = vunpack.c.l.b16 %v1517
    %v3028 = vunpack.c.h.b16 %v1517
    %v3029 = vunpack.c.l.b16 %v1518
    %v3030 = vunpack.c.h.b16 %v1518
    %v3031 = vunpack.c.l.b16 %v1519
    %v3032 = vunpack.c.h.b16 %v1519
    %v3033 = vunpack.c.l.b16 %v1520
    %v3034 = vunpack.c.h.b16 %v1520
    %v3035 = vunpack.c.l.b16 %v1521
    %v3036 = vunpack.c.h.b16 %v1521
    %v3037 = vunpack.c.l.b16 %v1522
    %v3038 = vunpack.c.h.b16 %v1522
    %v3039 = vunpack.c.l.b16 %v1523
    %v3040 = vunpack.c.h.b16 %v1523
    %v3041 = vunpack.c.l.b16 %v1524
    %v3042 = vunpack.c.h.b16 %v1524
    %v3043 = vunpack.c.l.b16 %v1525
    %v3044 = vunpack.c.h.b16 %v1525
    %v3045 = vunpack.c.l.b16 %v1526
    %v3046 = vunpack.c.h.b16 %v1526
    %v3047 = vunpack.c.l.b16 %v1527
    %v3048 = vunpack.c.h.b16 %v1527
    %v3049 = vunpack.c.l.b16 %v1528
    %v3050 = vunpack.c.h.b16 %v1528
    %v3051 = vunpack.c.l.b16 %v1529
    %v3052 = vunpack.c.h.b16 %v1529
    %v3053 = vunpack.c.l.b16 %v1530
    %v3054 = vunpack.c.h.b16 %v1530
    %v3055 = vunpack.c.l.b16 %v1531
    %v3056 = vunpack.c.h.b16 %v1531
    %v3057 = vunpack.c.l.b16 %v1532
    %v3058 = vunpack.c.h.b16 %v1532
    %v3059 = vunpack.c.l.b16 %v1533
    %v3060 = vunpack.c.h.b16 %v1533
    %v3061 = vunpack.c.l.b16 %v1534
    %v3062 = vunpack.c.h.b16 %v1534
    %v3063 = vunpack.c.l.b16 %v1535
    %v3064 = vunpack.c.h.b16 %v1535
    %v3065 = vunpack.c.l.b16 %v1536
    %v3066 = vunpack.c.h.b16 %v1536
    %v3067 = vunpack.c.l.b16 %v1537
    %v3068 = vunpack.c.h.b16 %v1537
    %v3069 = vunpack.c.l.b16 %v1538
    %v3070 = vunpack.c.h.b16 %v1538
    %v3071 = vunpack.c.l.b16 %v1539
    %v3072 = vunpack.c.h.b16 %v1539
    %v3073 = vunpack.c.l.b16 %v1540
    %v3074 = vunpack.c.h.b16 %v1540
    %v3075 = vunpack.c.l.b16 %v1541
    %v3076 = vunpack.c.h.b16 %v1541
    %v3077 = vunpack.c.l.b16 %v1542
    %v3078 = vunpack.c.h.b16 %v1542
    %v3079 = vunpack.c.l.b16 %v1543
    %v3080 = vunpack.c.h.b16 %v1543
    %v3081 = vunpack.c.l.b16 %v1544
    %v3082 = vunpack.c.h.b16 %v1544
    %v3083 = vunpack.c.l.b16 %v1545
    %v3084 = vunpack.c.h.b16 %v1545
    %v3085 = vunpack.c.l.b16 %v1546
    %v3086 = vunpack.c.h.b16 %v1546
    %v3087 = vunpack.c.l.b16 %v1547
    %v3088 = vunpack.c.h.b16 %v1547
    %v3089 = vunpack.c.l.b16 %v1548
    %v3090 = vunpack.c.h.b16 %v1548
    %v3091 = vunpack.c.l.b16 %v1549
    %v3092 = vunpack.c.h.b16 %v1549
    %v3093 = vunpack.c.l.b16 %v1550
    %v3094 = vunpack.c.h.b16 %v1550
    %v3095 = vunpack.c.l.b16 %v1551
    %v3096 = vunpack.c.h.b16 %v1551
    %v3097 = vunpack.c.l.b16 %v1552
    %v3098 = vunpack.c.h.b16 %v1552
    %v3099 = vunpack.c.l.b16 %v1553
    %v3100 = vunpack.c.h.b16 %v1553
    %v3101 = vunpack.c.l.b16 %v1554
    %v3102 = vunpack.c.h.b16 %v1554
    %v3103 = vunpack.c.l.b16 %v1555
    %v3104 = vunpack.c.h.b16 %v1555
    %v3105 = vunpack.c.l.b16 %v1556
    %v3106 = vunpack.c.h.b16 %v1556
    %v3107 = vunpack.c.l.b16 %v1557
    %v3108 = vunpack.c.h.b16 %v1557
    %v3109 = vunpack.c.l.b16 %v1558
    %v3110 = vunpack.c.h.b16 %v1558
    %v3111 = vunpack.c.l.b16 %v1559
    %v3112 = vunpack.c.h.b16 %v1559
    %v3113 = vunpack.c.l.b16 %v1560
    %v3114 = vunpack.c.h.b16 %v1560
    %v3115 = vunpack.c.l.b16 %v1561
    %v3116 = vunpack.c.h.b16 %v1561
    %v3117 = vunpack.c.l.b16 %v1562
    %v3118 = vunpack.c.h.b16 %v1562
    %v3119 = vunpack.c.l.b16 %v1563
    %v3120 = vunpack.c.h.b16 %v1563
    %v3121 = vunpack.c.l.b16 %v1564
    %v3122 = vunpack.c.h.b16 %v1564
    %v3123 = vunpack.c.l.b16 %v1565
    %v3124 = vunpack.c.h.b16 %v1565
    %v3125 = vunpack.c.l.b16 %v1566
    %v3126 = vunpack.c.h.b16 %v1566
    %v3127 = vunpack.c.l.b16 %v1567
    %v3128 = vunpack.c.h.b16 %v1567
    %v3129 = vunpack.c.l.b16 %v1568
    %v3130 = vunpack.c.h.b16 %v1568
    %v3131 = vunpack.c.l.b16 %v1569
    %v3132 = vunpack.c.h.b16 %v1569
    %v3133 = vunpack.c.l.b16 %v1570
    %v3134 = vunpack.c.h.b16 %v1570
    %v3135 = vunpack.c.l.b16 %v1571
    %v3136 = vunpack.c.h.b16 %v1571
    %v3137 = vunpack.c.l.b16 %v1572
    %v3138 = vunpack.c.h.b16 %v1572
    %v3139 = vunpack.c.l.b16 %v1573
    %v3140 = vunpack.c.h.b16 %v1573
    %v3141 = vunpack.c.l.b16 %v1574
    %v3142 = vunpack.c.h.b16 %v1574
    %v3143 = vunpack.c.l.b16 %v1575
    %v3144 = vunpack.c.h.b16 %v1575
    %v3145 = vunpack.c.l.b16 %v1576
    %v3146 = vunpack.c.h.b16 %v1576
    %v3147 = vunpack.c.l.b16 %v1577
    %v3148 = vunpack.c.h.b16 %v1577
    %v3149 = vunpack.c.l.b16 %v1578
    %v3150 = vunpack.c.h.b16 %v1578
    %v3151 = vunpack.c.l.b16 %v1579
    %v3152 = vunpack.c.h.b16 %v1579
    %v3153 = vunpack.c.l.b16 %v1580
    %v3154 = vunpack.c.h.b16 %v1580
    %v3155 = vunpack.c.l.b16 %v1581
    %v3156 = vunpack.c.h.b16 %v1581
    %v3157 = vunpack.c.l.b16 %v1582
    %v3158 = vunpack.c.h.b16 %v1582
    %v3159 = vunpack.c.l.b16 %v1583
    %v3160 = vunpack.c.h.b16 %v1583
    %v3161 = vunpack.c.l.b16 %v1584
    %v3162 = vunpack.c.h.b16 %v1584
    %v3163 = vpack.c.b16 %v2147, %v2139
    %v3164 = vpack.c.b16 %v2148, %v2140
    %v3165 = vpack.c.b16 %v2149, %v2141
    %v3166 = vpack.c.b16 %v2150, %v2142
    %v3167 = vpack.c.b16 %v2151, %v2143
    %v3168 = vpack.c.b16 %v2152, %v2144
    %v3169 = vpack.c.b16 %v2153, %v2145
    %v3170 = vpack.c.b16 %v2154, %v2146
    %v3171 = vpack.c.b16 %v2163, %v2155
    %v3172 = vpack.c.b16 %v2164, %v2156
    %v3173 = vpack.c.b16 %v2165, %v2157
    %v3174 = vpack.c.b16 %v2166, %v2158
    %v3175 = vpack.c.b16 %v2167, %v2159
    %v3176 = vpack.c.b16 %v2168, %v2160
    %v3177 = vpack.c.b16 %v2169, %v2161
    %v3178 = vpack.c.b16 %v2170, %v2162
    %v3179 = vpack.c.b16 %v2179, %v2171
    %v3180 = vpack.c.b16 %v2180, %v2172
    %v3181 = vpack.c.b16 %v2181, %v2173
    %v3182 = vpack.c.b16 %v2182, %v2174
    %v3183 = vpack.c.b16 %v2183, %v2175
    %v3184 = vpack.c.b16 %v2184, %v2176
    %v3185 = vpack.c.b16 %v2185, %v2177
    %v3186 = vpack.c.b16 %v2186, %v2178
    %v3187 = vpack.c.b16 %v2195, %v2187
    %v3188 = vpack.c.b16 %v2196, %v2188
    %v3189 = vpack.c.b16 %v2197, %v2189
    %v3190 = vpack.c.b16 %v2198, %v2190
    %v3191 = vpack.c.b16 %v2199, %v2191
    %v3192 = vpack.c.b16 %v2200, %v2192
    %v3193 = vpack.c.b16 %v2201, %v2193
    %v3194 = vpack.c.b16 %v2202, %v2194
    %v3195 = vpack.c.b16 %v2211, %v2203
    %v3196 = vpack.c.b16 %v2212, %v2204
    %v3197 = vpack.c.b16 %v2213, %v2205
    %v3198 = vpack.c.b16 %v2214, %v2206
    %v3199 = vpack.c.b16 %v2215, %v2207
    %v3200 = vpack.c.b16 %v2216, %v2208
    %v3201 = vpack.c.b16 %v2217, %v2209
    %v3202 = vpack.c.b16 %v2218, %v2210
    %v3203 = vpack.c.b16 %v2227, %v2219
    %v3204 = vpack.c.b16 %v2228, %v2220
    %v3205 = vpack.c.b16 %v2229, %v2221
    %v3206 = vpack.c.b16 %v2230, %v2222
    %v3207 = vpack.c.b16 %v2231, %v2223
    %v3208 = vpack.c.b16 %v2232, %v2224
    %v3209 = vpack.c.b16 %v2233, %v2225
    %v3210 = vpack.c.b16 %v2234, %v2226
    %v3211 = vpack.c.b16 %v2243, %v2235
    %v3212 = vpack.c.b16 %v2244, %v2236
    %v3213 = vpack.c.b16 %v2245, %v2237
    %v3214 = vpack.c.b16 %v2246, %v2238
    %v3215 = vpack.c.b16 %v2247, %v2239
    %v3216 = vpack.c.b16 %v2248, %v2240
    %v3217 = vpack.c.b16 %v2249, %v2241
    %v3218 = vpack.c.b16 %v2250, %v2242
    %v3219 = vpack.c.b16 %v2259, %v2251
    %v3220 = vpack.c.b16 %v2260, %v2252
    %v3221 = vpack.c.b16 %v2261, %v2253
    %v3222 = vpack.c.b16 %v2262, %v2254
    %v3223 = vpack.c.b16 %v2263, %v2255
    %v3224 = vpack.c.b16 %v2264, %v2256
    %v3225 = vpack.c.b16 %v2265, %v2257
    %v3226 = vpack.c.b16 %v2266, %v2258
    %v3227 = vpack.c.b16 %v2275, %v2267
    %v3228 = vpack.c.b16 %v2276, %v2268
    %v3229 = vpack.c.b16 %v2277, %v2269
    %v3230 = vpack.c.b16 %v2278, %v2270
    %v3231 = vpack.c.b16 %v2279, %v2271
    %v3232 = vpack.c.b16 %v2280, %v2272
    %v3233 = vpack.c.b16 %v2281, %v2273
    %v3234 = vpack.c.b16 %v2282, %v2274
    %v3235 = vpack.c.b16 %v2291, %v2283
    %v3236 = vpack.c.b16 %v2292, %v2284
    %v3237 = vpack.c.b16 %v2293, %v2285
    %v3238 = vpack.c.b16 %v2294, %v2286
    %v3239 = vpack.c.b16 %v2295, %v2287
    %v3240 = vpack.c.b16 %v2296, %v2288
    %v3241 = vpack.c.b16 %v2297, %v2289
    %v3242 = vpack.c.b16 %v2298, %v2290
    %v3243 = vpack.c.b16 %v2307, %v2299
    %v3244 = vpack.c.b16 %v2308, %v2300
    %v3245 = vpack.c.b16 %v2309, %v2301
    %v3246 = vpack.c.b16 %v2310, %v2302
    %v3247 = vpack.c.b16 %v2311, %v2303
    %v3248 = vpack.c.b16 %v2312, %v2304
    %v3249 = vpack.c.b16 %v2313, %v2305
    %v3250 = vpack.c.b16 %v2314, %v2306
    %v3251 = vpack.c.b16 %v2323, %v2315
    %v3252 = vpack.c.b16 %v2324, %v2316
    %v3253 = vpack.c.b16 %v2325, %v2317
    %v3254 = vpack.c.b16 %v2326, %v2318
    %v3255 = vpack.c.b16 %v2327, %v2319
    %v3256 = vpack.c.b16 %v2328, %v2320
    %v3257 = vpack.c.b16 %v2329, %v2321
    %v3258 = vpack.c.b16 %v2330, %v2322
    %v3259 = vpack.c.b16 %v2339, %v2331
    %v3260 = vpack.c.b16 %v2340, %v2332
    %v3261 = vpack.c.b16 %v2341, %v2333
    %v3262 = vpack.c.b16 %v2342, %v2334
    %v3263 = vpack.c.b16 %v2343, %v2335
    %v3264 = vpack.c.b16 %v2344, %v2336
    %v3265 = vpack.c.b16 %v2345, %v2337
    %v3266 = vpack.c.b16 %v2346, %v2338
    %v3267 = vpack.c.b16 %v2355, %v2347
    %v3268 = vpack.c.b16 %v2356, %v2348
    %v3269 = vpack.c.b16 %v2357, %v2349
    %v3270 = vpack.c.b16 %v2358, %v2350
    %v3271 = vpack.c.b16 %v2359, %v2351
    %v3272 = vpack.c.b16 %v2360, %v2352
    %v3273 = vpack.c.b16 %v2361, %v2353
    %v3274 = vpack.c.b16 %v2362, %v2354
    %v3275 = vpack.c.b16 %v2371, %v2363
    %v3276 = vpack.c.b16 %v2372, %v2364
    %v3277 = vpack.c.b16 %v2373, %v2365
    %v3278 = vpack.c.b16 %v2374, %v2366
    %v3279 = vpack.c.b16 %v2375, %v2367
    %v3280 = vpack.c.b16 %v2376, %v2368
    %v3281 = vpack.c.b16 %v2377, %v2369
    %v3282 = vpack.c.b16 %v2378, %v2370
    %v3283 = vpack.c.b16 %v2387, %v2379
    %v3284 = vpack.c.b16 %v2388, %v2380
    %v3285 = vpack.c.b16 %v2389, %v2381
    %v3286 = vpack.c.b16 %v2390, %v2382
    %v3287 = vpack.c.b16 %v2391, %v2383
    %v3288 = vpack.c.b16 %v2392, %v2384
    %v3289 = vpack.c.b16 %v2393, %v2385
    %v3290 = vpack.c.b16 %v2394, %v2386
    %v3291 = vpack.c.b16 %v2403, %v2395
    %v3292 = vpack.c.b16 %v2404, %v2396
    %v3293 = vpack.c.b16 %v2405, %v2397
    %v3294 = vpack.c.b16 %v2406, %v2398
    %v3295 = vpack.c.b16 %v2407, %v2399
    %v3296 = vpack.c.b16 %v2408, %v2400
    %v3297 = vpack.c.b16 %v2409, %v2401
    %v3298 = vpack.c.b16 %v2410, %v2402
    %v3299 = vpack.c.b16 %v2419, %v2411
    %v3300 = vpack.c.b16 %v2420, %v2412
    %v3301 = vpack.c.b16 %v2421, %v2413
    %v3302 = vpack.c.b16 %v2422, %v2414
    %v3303 = vpack.c.b16 %v2423, %v2415
    %v3304 = vpack.c.b16 %v2424, %v2416
    %v3305 = vpack.c.b16 %v2425, %v2417
    %v3306 = vpack.c.b16 %v2426, %v2418
    %v3307 = vpack.c.b16 %v2435, %v2427
    %v3308 = vpack.c.b16 %v2436, %v2428
    %v3309 = vpack.c.b16 %v2437, %v2429
    %v3310 = vpack.c.b16 %v2438, %v2430
    %v3311 = vpack.c.b16 %v2439, %v2431
    %v3312 = vpack.c.b16 %v2440, %v2432
    %v3313 = vpack.c.b16 %v2441, %v2433
    %v3314 = vpack.c.b16 %v2442, %v2434
    %v3315 = vpack.c.b16 %v2451, %v2443
    %v3316 = vpack.c.b16 %v2452, %v2444
    %v3317 = vpack.c.b16 %v2453, %v2445
    %v3318 = vpack.c.b16 %v2454, %v2446
    %v3319 = vpack.c.b16 %v2455, %v2447
    %v3320 = vpack.c.b16 %v2456, %v2448
    %v3321 = vpack.c.b16 %v2457, %v2449
    %v3322 = vpack.c.b16 %v2458, %v2450
    %v3323 = vpack.c.b16 %v2467, %v2459
    %v3324 = vpack.c.b16 %v2468, %v2460
    %v3325 = vpack.c.b16 %v2469, %v2461
    %v3326 = vpack.c.b16 %v2470, %v2462
    %v3327 = vpack.c.b16 %v2471, %v2463
    %v3328 = vpack.c.b16 %v2472, %v2464
    %v3329 = vpack.c.b16 %v2473, %v2465
    %v3330 = vpack.c.b16 %v2474, %v2466
    %v3331 = vpack.c.b16 %v2483, %v2475
    %v3332 = vpack.c.b16 %v2484, %v2476
    %v3333 = vpack.c.b16 %v2485, %v2477
    %v3334 = vpack.c.b16 %v2486, %v2478
    %v3335 = vpack.c.b16 %v2487, %v2479
    %v3336 = vpack.c.b16 %v2488, %v2480
    %v3337 = vpack.c.b16 %v2489, %v2481
    %v3338 = vpack.c.b16 %v2490, %v2482
    %v3339 = vpack.c.b16 %v2499, %v2491
    %v3340 = vpack.c.b16 %v2500, %v2492
    %v3341 = vpack.c.b16 %v2501, %v2493
    %v3342 = vpack.c.b16 %v2502, %v2494
    %v3343 = vpack.c.b16 %v2503, %v2495
    %v3344 = vpack.c.b16 %v2504, %v2496
    %v3345 = vpack.c.b16 %v2505, %v2497
    %v3346 = vpack.c.b16 %v2506, %v2498
    %v3347 = vpack.c.b16 %v2515, %v2507
    %v3348 = vpack.c.b16 %v2516, %v2508
    %v3349 = vpack.c.b16 %v2517, %v2509
    %v3350 = vpack.c.b16 %v2518, %v2510
    %v3351 = vpack.c.b16 %v2519, %v2511
    %v3352 = vpack.c.b16 %v2520, %v2512
    %v3353 = vpack.c.b16 %v2521, %v2513
    %v3354 = vpack.c.b16 %v2522, %v2514
    %v3355 = vpack.c.b16 %v2531, %v2523
    %v3356 = vpack.c.b16 %v2532, %v2524
    %v3357 = vpack.c.b16 %v2533, %v2525
    %v3358 = vpack.c.b16 %v2534, %v2526
    %v3359 = vpack.c.b16 %v2535, %v2527
    %v3360 = vpack.c.b16 %v2536, %v2528
    %v3361 = vpack.c.b16 %v2537, %v2529
    %v3362 = vpack.c.b16 %v2538, %v2530
    %v3363 = vpack.c.b16 %v2547, %v2539
    %v3364 = vpack.c.b16 %v2548, %v2540
    %v3365 = vpack.c.b16 %v2549, %v2541
    %v3366 = vpack.c.b16 %v2550, %v2542
    %v3367 = vpack.c.b16 %v2551, %v2543
    %v3368 = vpack.c.b16 %v2552, %v2544
    %v3369 = vpack.c.b16 %v2553, %v2545
    %v3370 = vpack.c.b16 %v2554, %v2546
    %v3371 = vpack.c.b16 %v2563, %v2555
    %v3372 = vpack.c.b16 %v2564, %v2556
    %v3373 = vpack.c.b16 %v2565, %v2557
    %v3374 = vpack.c.b16 %v2566, %v2558
    %v3375 = vpack.c.b16 %v2567, %v2559
    %v3376 = vpack.c.b16 %v2568, %v2560
    %v3377 = vpack.c.b16 %v2569, %v2561
    %v3378 = vpack.c.b16 %v2570, %v2562
    %v3379 = vpack.c.b16 %v2579, %v2571
    %v3380 = vpack.c.b16 %v2580, %v2572
    %v3381 = vpack.c.b16 %v2581, %v2573
    %v3382 = vpack.c.b16 %v2582, %v2574
    %v3383 = vpack.c.b16 %v2583, %v2575
    %v3384 = vpack.c.b16 %v2584, %v2576
    %v3385 = vpack.c.b16 %v2585, %v2577
    %v3386 = vpack.c.b16 %v2586, %v2578
    %v3387 = vpack.c.b16 %v2595, %v2587
    %v3388 = vpack.c.b16 %v2596, %v2588
    %v3389 = vpack.c.b16 %v2597, %v2589
    %v3390 = vpack.c.b16 %v2598, %v2590
    %v3391 = vpack.c.b16 %v2599, %v2591
    %v3392 = vpack.c.b16 %v2600, %v2592
    %v3393 = vpack.c.b16 %v2601, %v2593
    %v3394 = vpack.c.b16 %v2602, %v2594
    %v3395 = vpack.c.b16 %v2611, %v2603
    %v3396 = vpack.c.b16 %v2612, %v2604
    %v3397 = vpack.c.b16 %v2613, %v2605
    %v3398 = vpack.c.b16 %v2614, %v2606
    %v3399 = vpack.c.b16 %v2615, %v2607
    %v3400 = vpack.c.b16 %v2616, %v2608
    %v3401 = vpack.c.b16 %v2617, %v2609
    %v3402 = vpack.c.b16 %v2618, %v2610
    %v3403 = vpack.c.b16 %v2627, %v2619
    %v3404 = vpack.c.b16 %v2628, %v2620
    %v3405 = vpack.c.b16 %v2629, %v2621
    %v3406 = vpack.c.b16 %v2630, %v2622
    %v3407 = vpack.c.b16 %v2631, %v2623
    %v3408 = vpack.c.b16 %v2632, %v2624
    %v3409 = vpack.c.b16 %v2633, %v2625
    %v3410 = vpack.c.b16 %v2634, %v2626
    %v3411 = vpack.c.b16 %v2643, %v2635
    %v3412 = vpack.c.b16 %v2644, %v2636
    %v3413 = vpack.c.b16 %v2645, %v2637
    %v3414 = vpack.c.b16 %v2646, %v2638
    %v3415 = vpack.c.b16 %v2647, %v2639
    %v3416 = vpack.c.b16 %v2648, %v2640
    %v3417 = vpack.c.b16 %v2649, %v2641
    %v3418 = vpack.c.b16 %v2650, %v2642
    %v3419 = vpack.c.b16 %v2659, %v2651
    %v3420 = vpack.c.b16 %v2660, %v2652
    %v3421 = vpack.c.b16 %v2661, %v2653
    %v3422 = vpack.c.b16 %v2662, %v2654
    %v3423 = vpack.c.b16 %v2663, %v2655
    %v3424 = vpack.c.b16 %v2664, %v2656
    %v3425 = vpack.c.b16 %v2665, %v2657
    %v3426 = vpack.c.b16 %v2666, %v2658
    %v3427 = vpack.c.b16 %v2675, %v2667
    %v3428 = vpack.c.b16 %v2676, %v2668
    %v3429 = vpack.c.b16 %v2677, %v2669
    %v3430 = vpack.c.b16 %v2678, %v2670
    %v3431 = vpack.c.b16 %v2679, %v2671
    %v3432 = vpack.c.b16 %v2680, %v2672
    %v3433 = vpack.c.b16 %v2681, %v2673
    %v3434 = vpack.c.b16 %v2682, %v2674
    %v3435 = vpack.c.b16 %v2691, %v2683
    %v3436 = vpack.c.b16 %v2692, %v2684
    %v3437 = vpack.c.b16 %v2693, %v2685
    %v3438 = vpack.c.b16 %v2694, %v2686
    %v3439 = vpack.c.b16 %v2695, %v2687
    %v3440 = vpack.c.b16 %v2696, %v2688
    %v3441 = vpack.c.b16 %v2697, %v2689
    %v3442 = vpack.c.b16 %v2698, %v2690
    %v3443 = vpack.c.b16 %v2707, %v2699
    %v3444 = vpack.c.b16 %v2708, %v2700
    %v3445 = vpack.c.b16 %v2709, %v2701
    %v3446 = vpack.c.b16 %v2710, %v2702
    %v3447 = vpack.c.b16 %v2711, %v2703
    %v3448 = vpack.c.b16 %v2712, %v2704
    %v3449 = vpack.c.b16 %v2713, %v2705
    %v3450 = vpack.c.b16 %v2714, %v2706
    %v3451 = vpack.c.b16 %v2723, %v2715
    %v3452 = vpack.c.b16 %v2724, %v2716
    %v3453 = vpack.c.b16 %v2725, %v2717
    %v3454 = vpack.c.b16 %v2726, %v2718
    %v3455 = vpack.c.b16 %v2727, %v2719
    %v3456 = vpack.c.b16 %v2728, %v2720
    %v3457 = vpack.c.b16 %v2729, %v2721
    %v3458 = vpack.c.b16 %v2730, %v2722
    %v3459 = vpack.c.b16 %v2739, %v2731
    %v3460 = vpack.c.b16 %v2740, %v2732
    %v3461 = vpack.c.b16 %v2741, %v2733
    %v3462 = vpack.c.b16 %v2742, %v2734
    %v3463 = vpack.c.b16 %v2743, %v2735
    %v3464 = vpack.c.b16 %v2744, %v2736
    %v3465 = vpack.c.b16 %v2745, %v2737
    %v3466 = vpack.c.b16 %v2746, %v2738
    %v3467 = vpack.c.b16 %v2755, %v2747
    %v3468 = vpack.c.b16 %v2756, %v2748
    %v3469 = vpack.c.b16 %v2757, %v2749
    %v3470 = vpack.c.b16 %v2758, %v2750
    %v3471 = vpack.c.b16 %v2759, %v2751
    %v3472 = vpack.c.b16 %v2760, %v2752
    %v3473 = vpack.c.b16 %v2761, %v2753
    %v3474 = vpack.c.b16 %v2762, %v2754
    %v3475 = vpack.c.b16 %v2771, %v2763
    %v3476 = vpack.c.b16 %v2772, %v2764
    %v3477 = vpack.c.b16 %v2773, %v2765
    %v3478 = vpack.c.b16 %v2774, %v2766
    %v3479 = vpack.c.b16 %v2775, %v2767
    %v3480 = vpack.c.b16 %v2776, %v2768
    %v3481 = vpack.c.b16 %v2777, %v2769
    %v3482 = vpack.c.b16 %v2778, %v2770
    %v3483 = vpack.c.b16 %v2787, %v2779
    %v3484 = vpack.c.b16 %v2788, %v2780
    %v3485 = vpack.c.b16 %v2789, %v2781
    %v3486 = vpack.c.b16 %v2790, %v2782
    %v3487 = vpack.c.b16 %v2791, %v2783
    %v3488 = vpack.c.b16 %v2792, %v2784
    %v3489 = vpack.c.b16 %v2793, %v2785
    %v3490 = vpack.c.b16 %v2794, %v2786
    %v3491 = vpack.c.b16 %v2803, %v2795
    %v3492 = vpack.c.b16 %v2804, %v2796
    %v3493 = vpack.c.b16 %v2805, %v2797
    %v3494 = vpack.c.b16 %v2806, %v2798
    %v3495 = vpack.c.b16 %v2807, %v2799
    %v3496 = vpack.c.b16 %v2808, %v2800
    %v3497 = vpack.c.b16 %v2809, %v2801
    %v3498 = vpack.c.b16 %v2810, %v2802
    %v3499 = vpack.c.b16 %v2819, %v2811
    %v3500 = vpack.c.b16 %v2820, %v2812
    %v3501 = vpack.c.b16 %v2821, %v2813
    %v3502 = vpack.c.b16 %v2822, %v2814
    %v3503 = vpack.c.b16 %v2823, %v2815
    %v3504 = vpack.c.b16 %v2824, %v2816
    %v3505 = vpack.c.b16 %v2825, %v2817
    %v3506 = vpack.c.b16 %v2826, %v2818
    %v3507 = vpack.c.b16 %v2835, %v2827
    %v3508 = vpack.c.b16 %v2836, %v2828
    %v3509 = vpack.c.b16 %v2837, %v2829
    %v3510 = vpack.c.b16 %v2838, %v2830
    %v3511 = vpack.c.b16 %v2839, %v2831
    %v3512 = vpack.c.b16 %v2840, %v2832
    %v3513 = vpack.c.b16 %v2841, %v2833
    %v3514 = vpack.c.b16 %v2842, %v2834
    %v3515 = vpack.c.b16 %v2851, %v2843
    %v3516 = vpack.c.b16 %v2852, %v2844
    %v3517 = vpack.c.b16 %v2853, %v2845
    %v3518 = vpack.c.b16 %v2854, %v2846
    %v3519 = vpack.c.b16 %v2855, %v2847
    %v3520 = vpack.c.b16 %v2856, %v2848
    %v3521 = vpack.c.b16 %v2857, %v2849
    %v3522 = vpack.c.b16 %v2858, %v2850
    %v3523 = vpack.c.b16 %v2867, %v2859
    %v3524 = vpack.c.b16 %v2868, %v2860
    %v3525 = vpack.c.b16 %v2869, %v2861
    %v3526 = vpack.c.b16 %v2870, %v2862
    %v3527 = vpack.c.b16 %v2871, %v2863
    %v3528 = vpack.c.b16 %v2872, %v2864
    %v3529 = vpack.c.b16 %v2873, %v2865
    %v3530 = vpack.c.b16 %v2874, %v2866
    %v3531 = vpack.c.b16 %v2883, %v2875
    %v3532 = vpack.c.b16 %v2884, %v2876
    %v3533 = vpack.c.b16 %v2885, %v2877
    %v3534 = vpack.c.b16 %v2886, %v2878
    %v3535 = vpack.c.b16 %v2887, %v2879
    %v3536 = vpack.c.b16 %v2888, %v2880
    %v3537 = vpack.c.b16 %v2889, %v2881
    %v3538 = vpack.c.b16 %v2890, %v2882
    %v3539 = vpack.c.b16 %v2899, %v2891
    %v3540 = vpack.c.b16 %v2900, %v2892
    %v3541 = vpack.c.b16 %v2901, %v2893
    %v3542 = vpack.c.b16 %v2902, %v2894
    %v3543 = vpack.c.b16 %v2903, %v2895
    %v3544 = vpack.c.b16 %v2904, %v2896
    %v3545 = vpack.c.b16 %v2905, %v2897
    %v3546 = vpack.c.b16 %v2906, %v2898
    %v3547 = vpack.c.b16 %v2915, %v2907
    %v3548 = vpack.c.b16 %v2916, %v2908
    %v3549 = vpack.c.b16 %v2917, %v2909
    %v3550 = vpack.c.b16 %v2918, %v2910
    %v3551 = vpack.c.b16 %v2919, %v2911
    %v3552 = vpack.c.b16 %v2920, %v2912
    %v3553 = vpack.c.b16 %v2921, %v2913
    %v3554 = vpack.c.b16 %v2922, %v2914
    %v3555 = vpack.c.b16 %v2931, %v2923
    %v3556 = vpack.c.b16 %v2932, %v2924
    %v3557 = vpack.c.b16 %v2933, %v2925
    %v3558 = vpack.c.b16 %v2934, %v2926
    %v3559 = vpack.c.b16 %v2935, %v2927
    %v3560 = vpack.c.b16 %v2936, %v2928
    %v3561 = vpack.c.b16 %v2937, %v2929
    %v3562 = vpack.c.b16 %v2938, %v2930
    %v3563 = vpack.c.b16 %v2947, %v2939
    %v3564 = vpack.c.b16 %v2948, %v2940
    %v3565 = vpack.c.b16 %v2949, %v2941
    %v3566 = vpack.c.b16 %v2950, %v2942
    %v3567 = vpack.c.b16 %v2951, %v2943
    %v3568 = vpack.c.b16 %v2952, %v2944
    %v3569 = vpack.c.b16 %v2953, %v2945
    %v3570 = vpack.c.b16 %v2954, %v2946
    %v3571 = vpack.c.b16 %v2963, %v2955
    %v3572 = vpack.c.b16 %v2964, %v2956
    %v3573 = vpack.c.b16 %v2965, %v2957
    %v3574 = vpack.c.b16 %v2966, %v2958
    %v3575 = vpack.c.b16 %v2967, %v2959
    %v3576 = vpack.c.b16 %v2968, %v2960
    %v3577 = vpack.c.b16 %v2969, %v2961
    %v3578 = vpack.c.b16 %v2970, %v2962
    %v3579 = vpack.c.b16 %v2979, %v2971
    %v3580 = vpack.c.b16 %v2980, %v2972
    %v3581 = vpack.c.b16 %v2981, %v2973
    %v3582 = vpack.c.b16 %v2982, %v2974
    %v3583 = vpack.c.b16 %v2983, %v2975
    %v3584 = vpack.c.b16 %v2984, %v2976
    %v3585 = vpack.c.b16 %v2985, %v2977
    %v3586 = vpack.c.b16 %v2986, %v2978
    %v3587 = vpack.c.b16 %v2995, %v2987
    %v3588 = vpack.c.b16 %v2996, %v2988
    %v3589 = vpack.c.b16 %v2997, %v2989
    %v3590 = vpack.c.b16 %v2998, %v2990
    %v3591 = vpack.c.b16 %v2999, %v2991
    %v3592 = vpack.c.b16 %v3000, %v2992
    %v3593 = vpack.c.b16 %v3001, %v2993
    %v3594 = vpack.c.b16 %v3002, %v2994
    %v3595 = vpack.c.b16 %v3011, %v3003
    %v3596 = vpack.c.b16 %v3012, %v3004
    %v3597 = vpack.c.b16 %v3013, %v3005
    %v3598 = vpack.c.b16 %v3014, %v3006
    %v3599 = vpack.c.b16 %v3015, %v3007
    %v3600 = vpack.c.b16 %v3016, %v3008
    %v3601 = vpack.c.b16 %v3017, %v3009
    %v3602 = vpack.c.b16 %v3018, %v3010
    %v3603 = vpack.c.b16 %v3027, %v3019
    %v3604 = vpack.c.b16 %v3028, %v3020
    %v3605 = vpack.c.b16 %v3029, %v3021
    %v3606 = vpack.c.b16 %v3030, %v3022
    %v3607 = vpack.c.b16 %v3031, %v3023
    %v3608 = vpack.c.b16 %v3032, %v3024
    %v3609 = vpack.c.b16 %v3033, %v3025
    %v3610 = vpack.c.b16 %v3034, %v3026
    %v3611 = vpack.c.b16 %v3043, %v3035
    %v3612 = vpack.c.b16 %v3044, %v3036
    %v3613 = vpack.c.b16 %v3045, %v3037
    %v3614 = vpack.c.b16 %v3046, %v3038
    %v3615 = vpack.c.b16 %v3047, %v3039
    %v3616 = vpack.c.b16 %v3048, %v3040
    %v3617 = vpack.c.b16 %v3049, %v3041
    %v3618 = vpack.c.b16 %v3050, %v3042
    %v3619 = vpack.c.b16 %v3059, %v3051
    %v3620 = vpack.c.b16 %v3060, %v3052
    %v3621 = vpack.c.b16 %v3061, %v3053
    %v3622 = vpack.c.b16 %v3062, %v3054
    %v3623 = vpack.c.b16 %v3063, %v3055
    %v3624 = vpack.c.b16 %v3064, %v3056
    %v3625 = vpack.c.b16 %v3065, %v3057
    %v3626 = vpack.c.b16 %v3066, %v3058
    %v3627 = vpack.c.b16 %v3075, %v3067
    %v3628 = vpack.c.b16 %v3076, %v3068
    %v3629 = vpack.c.b16 %v3077, %v3069
    %v3630 = vpack.c.b16 %v3078, %v3070
    %v3631 = vpack.c.b16 %v3079, %v3071
    %v3632 = vpack.c.b16 %v3080, %v3072
    %v3633 = vpack.c.b16 %v3081, %v3073
    %v3634 = vpack.c.b16 %v3082, %v3074
    %v3635 = vpack.c.b16 %v3091, %v3083
    %v3636 = vpack.c.b16 %v3092, %v3084
    %v3637 = vpack.c.b16 %v3093, %v3085
    %v3638 = vpack.c.b16 %v3094, %v3086
    %v3639 = vpack.c.b16 %v3095, %v3087
    %v3640 = vpack.c.b16 %v3096, %v3088
    %v3641 = vpack.c.b16 %v3097, %v3089
    %v3642 = vpack.c.b16 %v3098, %v3090
    %v3643 = vpack.c.b16 %v3107, %v3099
    %v3644 = vpack.c.b16 %v3108, %v3100
    %v3645 = vpack.c.b16 %v3109, %v3101
    %v3646 = vpack.c.b16 %v3110, %v3102
    %v3647 = vpack.c.b16 %v3111, %v3103
    %v3648 = vpack.c.b16 %v3112, %v3104
    %v3649 = vpack.c.b16 %v3113, %v3105
    %v3650 = vpack.c.b16 %v3114, %v3106
    %v3651 = vpack.c.b16 %v3123, %v3115
    %v3652 = vpack.c.b16 %v3124, %v3116
    %v3653 = vpack.c.b16 %v3125, %v3117
    %v3654 = vpack.c.b16 %v3126, %v3118
    %v3655 = vpack.c.b16 %v3127, %v3119
    %v3656 = vpack.c.b16 %v3128, %v3120
    %v3657 = vpack.c.b16 %v3129, %v3121
    %v3658 = vpack.c.b16 %v3130, %v3122
    %v3659 = vpack.c.b16 %v3139, %v3131
    %v3660 = vpack.c.b16 %v3140, %v3132
    %v3661 = vpack.c.b16 %v3141, %v3133
    %v3662 = vpack.c.b16 %v3142, %v3134
    %v3663 = vpack.c.b16 %v3143, %v3135
    %v3664 = vpack.c.b16 %v3144, %v3136
    %v3665 = vpack.c.b16 %v3145, %v3137
    %v3666 = vpack.c.b16 %v3146, %v3138
    %v3667 = vpack.c.b16 %v3155, %v3147
    %v3668 = vpack.c.b16 %v3156, %v3148
    %v3669 = vpack.c.b16 %v3157, %v3149
    %v3670 = vpack.c.b16 %v3158, %v3150
    %v3671 = vpack.c.b16 %v3159, %v3151
    %v3672 = vpack.c.b16 %v3160, %v3152
    %v3673 = vpack.c.b16 %v3161, %v3153
    %v3674 = vpack.c.b16 %v3162, %v3154
    %4187 = vmatprep.subr.bf16.mxu0 %v3164
    %4188 = vmatpush1.bf16.msra.mxu0 %v3163
    %4189 = vmatprep.subr.bf16.mxu0 %v3172
    %4190 = vmatpush1.bf16.msra.mxu0 %v3171
    %4191 = vmatprep.subr.bf16.mxu0 %v3180
    %4192 = vmatpush1.bf16.msra.mxu0 %v3179
    %4193 = vmatprep.subr.bf16.mxu0 %v3188
    %4194 = vmatpush1.bf16.msra.mxu0 %v3187
    %4195 = vmatprep.subr.bf16.mxu0 %v3196
    %4196 = vmatpush1.bf16.msra.mxu0 %v3195
    %4197 = vmatprep.subr.bf16.mxu0 %v3204
    %4198 = vmatpush1.bf16.msra.mxu0 %v3203
    %4199 = vmatprep.subr.bf16.mxu0 %v3212
    %4200 = vmatpush1.bf16.msra.mxu0 %v3211
    %4201 = vmatprep.subr.bf16.mxu0 %v3220
    %4202 = vmatpush1.bf16.msra.mxu0 %v3219
    %4203 = vmatprep.subr.bf16.mxu0 %v3228
    %4204 = vmatpush1.bf16.msra.mxu0 %v3227
    %4205 = vmatprep.subr.bf16.mxu0 %v3236
    %4206 = vmatpush1.bf16.msra.mxu0 %v3235
    %4207 = vmatprep.subr.bf16.mxu0 %v3244
    %4208 = vmatpush1.bf16.msra.mxu0 %v3243
    %4209 = vmatprep.subr.bf16.mxu0 %v3252
    %4210 = vmatpush1.bf16.msra.mxu0 %v3251
    %4211 = vmatprep.subr.bf16.mxu0 %v3260
    %4212 = vmatpush1.bf16.msra.mxu0 %v3259
    %4213 = vmatprep.subr.bf16.mxu0 %v3268
    %4214 = vmatpush1.bf16.msra.mxu0 %v3267
    %4215 = vmatprep.subr.bf16.mxu0 %v3276
    %4216 = vmatpush1.bf16.msra.mxu0 %v3275
    %4217 = vmatprep.subr.bf16.mxu0 %v3284
    %4218 = vmatpush1.bf16.msra.mxu0 %v3283
    %4219 = vmatprep.mubr.bf16.mxu0 %v1066
    %4220 = vmatmul.mubr.bf16.gmra.mrb[0].mxu0 %v1065
    %v4221 = vpop.f32.mrb[0].mxu0
    %v4222 = vadd.f32 %v1590, %v4221
    %v4223 = vpop.f32.mrb[0].mxu0
    %v4224 = vadd.f32 %v1594, %v4223
    %v4225 = vpop.f32.mrb[0].mxu0
    %v4226 = vpop.f32.mrb[0].mxu0
    %4227 = vdwg.mxu0
    %4228 = vmatprep.subr.bf16.mxu0 %v3292
    %4229 = vmatpush1.bf16.msra.mxu0 %v3291
    %4230 = vmatprep.subr.bf16.mxu0 %v3300
    %4231 = vmatpush1.bf16.msra.mxu0 %v3299
    %4232 = vmatprep.subr.bf16.mxu0 %v3308
    %4233 = vmatpush1.bf16.msra.mxu0 %v3307
    %4234 = vmatprep.subr.bf16.mxu0 %v3316
    %4235 = vmatpush1.bf16.msra.mxu0 %v3315
    %4236 = vmatprep.subr.bf16.mxu0 %v3324
    %4237 = vmatpush1.bf16.msra.mxu0 %v3323
    %4238 = vmatprep.subr.bf16.mxu0 %v3332
    %4239 = vmatpush1.bf16.msra.mxu0 %v3331
    %4240 = vmatprep.subr.bf16.mxu0 %v3340
    %4241 = vmatpush1.bf16.msra.mxu0 %v3339
    %4242 = vmatprep.subr.bf16.mxu0 %v3348
    %4243 = vmatpush1.bf16.msra.mxu0 %v3347
    %4244 = vmatprep.subr.bf16.mxu0 %v3356
    %4245 = vmatpush1.bf16.msra.mxu0 %v3355
    %4246 = vmatprep.subr.bf16.mxu0 %v3364
    %4247 = vmatpush1.bf16.msra.mxu0 %v3363
    %4248 = vmatprep.subr.bf16.mxu0 %v3372
    %4249 = vmatpush1.bf16.msra.mxu0 %v3371
    %4250 = vmatprep.subr.bf16.mxu0 %v3380
    %4251 = vmatpush1.bf16.msra.mxu0 %v3379
    %4252 = vmatprep.subr.bf16.mxu0 %v3388
    %4253 = vmatpush1.bf16.msra.mxu0 %v3387
    %4254 = vmatprep.subr.bf16.mxu0 %v3396
    %4255 = vmatpush1.bf16.msra.mxu0 %v3395
    %4256 = vmatprep.subr.bf16.mxu0 %v3404
    %4257 = vmatpush1.bf16.msra.mxu0 %v3403
    %4258 = vmatprep.subr.bf16.mxu0 %v3412
    %4259 = vmatpush1.bf16.msra.mxu0 %v3411
    %4260 = vmatprep.mubr.bf16.mxu0 %v1068
    %4261 = vmatmul.mubr.bf16.gmra.mrb[0].mxu0 %v1067
    %v4262 = vpop.f32.mrb[0].mxu0
    %v4263 = vadd.f32 %v4222, %v4262
    %v4264 = vpop.f32.mrb[0].mxu0
    %v4265 = vadd.f32 %v4224, %v4264
    %v4266 = vpop.f32.mrb[0].mxu0
    %v4267 = vpop.f32.mrb[0].mxu0
    %4268 = vdwg.mxu0
    %4269 = vmatprep.subr.bf16.mxu0 %v3420
    %4270 = vmatpush1.bf16.msra.mxu0 %v3419
    %4271 = vmatprep.subr.bf16.mxu0 %v3428
    %4272 = vmatpush1.bf16.msra.mxu0 %v3427
    %4273 = vmatprep.subr.bf16.mxu0 %v3436
    %4274 = vmatpush1.bf16.msra.mxu0 %v3435
    %4275 = vmatprep.subr.bf16.mxu0 %v3444
    %4276 = vmatpush1.bf16.msra.mxu0 %v3443
    %4277 = vmatprep.subr.bf16.mxu0 %v3452
    %4278 = vmatpush1.bf16.msra.mxu0 %v3451
    %4279 = vmatprep.subr.bf16.mxu0 %v3460
    %4280 = vmatpush1.bf16.msra.mxu0 %v3459
    %4281 = vmatprep.subr.bf16.mxu0 %v3468
    %4282 = vmatpush1.bf16.msra.mxu0 %v3467
    %4283 = vmatprep.subr.bf16.mxu0 %v3476
    %4284 = vmatpush1.bf16.msra.mxu0 %v3475
    %4285 = vmatprep.subr.bf16.mxu0 %v3484
    %4286 = vmatpush1.bf16.msra.mxu0 %v3483
    %4287 = vmatprep.subr.bf16.mxu0 %v3492
    %4288 = vmatpush1.bf16.msra.mxu0 %v3491
    %4289 = vmatprep.subr.bf16.mxu0 %v3500
    %4290 = vmatpush1.bf16.msra.mxu0 %v3499
    %4291 = vmatprep.subr.bf16.mxu0 %v3508
    %4292 = vmatpush1.bf16.msra.mxu0 %v3507
    %4293 = vmatprep.subr.bf16.mxu0 %v3516
    %4294 = vmatpush1.bf16.msra.mxu0 %v3515
    %4295 = vmatprep.subr.bf16.mxu0 %v3524
    %4296 = vmatpush1.bf16.msra.mxu0 %v3523
    %4297 = vmatprep.subr.bf16.mxu0 %v3532
    %4298 = vmatpush1.bf16.msra.mxu0 %v3531
    %4299 = vmatprep.subr.bf16.mxu0 %v3540
    %4300 = vmatpush1.bf16.msra.mxu0 %v3539
    %4301 = vmatprep.mubr.bf16.mxu0 %v1070
    %4302 = vmatmul.mubr.bf16.gmra.mrb[0].mxu0 %v1069
    %v4303 = vpop.f32.mrb[0].mxu0
    %v4304 = vadd.f32 %v4263, %v4303
    %v4305 = vpop.f32.mrb[0].mxu0
    %v4306 = vadd.f32 %v4265, %v4305
    %v4307 = vpop.f32.mrb[0].mxu0
    %v4308 = vpop.f32.mrb[0].mxu0
    %4309 = vdwg.mxu0
    %4310 = vmatprep.subr.bf16.mxu0 %v3548
    %4311 = vmatpush1.bf16.msra.mxu0 %v3547
    %4312 = vmatprep.subr.bf16.mxu0 %v3556
    %4313 = vmatpush1.bf16.msra.mxu0 %v3555
    %4314 = vmatprep.subr.bf16.mxu0 %v3564
    %4315 = vmatpush1.bf16.msra.mxu0 %v3563
    %4316 = vmatprep.subr.bf16.mxu0 %v3572
    %4317 = vmatpush1.bf16.msra.mxu0 %v3571
    %4318 = vmatprep.subr.bf16.mxu0 %v3580
    %4319 = vmatpush1.bf16.msra.mxu0 %v3579
    %4320 = vmatprep.subr.bf16.mxu0 %v3588
    %4321 = vmatpush1.bf16.msra.mxu0 %v3587
    %4322 = vmatprep.subr.bf16.mxu0 %v3596
    %4323 = vmatpush1.bf16.msra.mxu0 %v3595
    %4324 = vmatprep.subr.bf16.mxu0 %v3604
    %4325 = vmatpush1.bf16.msra.mxu0 %v3603
    %4326 = vmatprep.subr.bf16.mxu0 %v3612
    %4327 = vmatpush1.bf16.msra.mxu0 %v3611
    %4328 = vmatprep.subr.bf16.mxu0 %v3620
    %4329 = vmatpush1.bf16.msra.mxu0 %v3619
    %4330 = vmatprep.subr.bf16.mxu0 %v3628
    %4331 = vmatpush1.bf16.msra.mxu0 %v3627
    %4332 = vmatprep.subr.bf16.mxu0 %v3636
    %4333 = vmatpush1.bf16.msra.mxu0 %v3635
    %4334 = vmatprep.subr.bf16.mxu0 %v3644
    %4335 = vmatpush1.bf16.msra.mxu0 %v3643
    %4336 = vmatprep.subr.bf16.mxu0 %v3652
    %4337 = vmatpush1.bf16.msra.mxu0 %v3651
    %4338 = vmatprep.subr.bf16.mxu0 %v3660
    %4339 = vmatpush1.bf16.msra.mxu0 %v3659
    %4340 = vmatprep.subr.bf16.mxu0 %v3668
    %4341 = vmatpush1.bf16.msra.mxu0 %v3667
    %4342 = vmatprep.mubr.bf16.mxu0 %v1072
    %4343 = vmatmul.mubr.bf16.gmra.mrb[0].mxu0 %v1071
    %v4344 = vpop.f32.mrb[0].mxu0
    %v4345 = vadd.f32 %v4304, %v4344
    %v4346 = vpop.f32.mrb[0].mxu0
    %v4347 = vadd.f32 %v4306, %v4346
    %v4348 = vpop.f32.mrb[0].mxu0
    %v4349 = vpop.f32.mrb[0].mxu0
    %4350 = vdwg.mxu0
    %4351 = vmatprep.subr.bf16.mxu0 %v3166
    %4352 = vmatpush1.bf16.msra.mxu0 %v3165
    %4353 = vmatprep.subr.bf16.mxu0 %v3174
    %4354 = vmatpush1.bf16.msra.mxu0 %v3173
    %4355 = vmatprep.subr.bf16.mxu0 %v3182
    %4356 = vmatpush1.bf16.msra.mxu0 %v3181
    %4357 = vmatprep.subr.bf16.mxu0 %v3190
    %4358 = vmatpush1.bf16.msra.mxu0 %v3189
    %4359 = vmatprep.subr.bf16.mxu0 %v3198
    %4360 = vmatpush1.bf16.msra.mxu0 %v3197
    %4361 = vmatprep.subr.bf16.mxu0 %v3206
    %4362 = vmatpush1.bf16.msra.mxu0 %v3205
    %4363 = vmatprep.subr.bf16.mxu0 %v3214
    %4364 = vmatpush1.bf16.msra.mxu0 %v3213
    %4365 = vmatprep.subr.bf16.mxu0 %v3222
    %4366 = vmatpush1.bf16.msra.mxu0 %v3221
    %4367 = vmatprep.subr.bf16.mxu0 %v3230
    %4368 = vmatpush1.bf16.msra.mxu0 %v3229
    %4369 = vmatprep.subr.bf16.mxu0 %v3238
    %4370 = vmatpush1.bf16.msra.mxu0 %v3237
    %4371 = vmatprep.subr.bf16.mxu0 %v3246
    %4372 = vmatpush1.bf16.msra.mxu0 %v3245
    %4373 = vmatprep.subr.bf16.mxu0 %v3254
    %4374 = vmatpush1.bf16.msra.mxu0 %v3253
    %4375 = vmatprep.subr.bf16.mxu0 %v3262
    %4376 = vmatpush1.bf16.msra.mxu0 %v3261
    %4377 = vmatprep.subr.bf16.mxu0 %v3270
    %4378 = vmatpush1.bf16.msra.mxu0 %v3269
    %4379 = vmatprep.subr.bf16.mxu0 %v3278
    %4380 = vmatpush1.bf16.msra.mxu0 %v3277
    %4381 = vmatprep.subr.bf16.mxu0 %v3286
    %4382 = vmatpush1.bf16.msra.mxu0 %v3285
    %4383 = vmatprep.mubr.bf16.mxu0 %v1066
    %4384 = vmatmul.mubr.bf16.gmra.mrb[0].mxu0 %v1065
    %v4385 = vpop.f32.mrb[0].mxu0
    %v4386 = vadd.f32 %v1598, %v4385
    %v4387 = vpop.f32.mrb[0].mxu0
    %v4388 = vadd.f32 %v1602, %v4387
    %v4389 = vpop.f32.mrb[0].mxu0
    %v4390 = vpop.f32.mrb[0].mxu0
    %4391 = vdwg.mxu0
    %4392 = vmatprep.subr.bf16.mxu0 %v3294
    %4393 = vmatpush1.bf16.msra.mxu0 %v3293
    %4394 = vmatprep.subr.bf16.mxu0 %v3302
    %4395 = vmatpush1.bf16.msra.mxu0 %v3301
    %4396 = vmatprep.subr.bf16.mxu0 %v3310
    %4397 = vmatpush1.bf16.msra.mxu0 %v3309
    %4398 = vmatprep.subr.bf16.mxu0 %v3318
    %4399 = vmatpush1.bf16.msra.mxu0 %v3317
    %4400 = vmatprep.subr.bf16.mxu0 %v3326
    %4401 = vmatpush1.bf16.msra.mxu0 %v3325
    %4402 = vmatprep.subr.bf16.mxu0 %v3334
    %4403 = vmatpush1.bf16.msra.mxu0 %v3333
    %4404 = vmatprep.subr.bf16.mxu0 %v3342
    %4405 = vmatpush1.bf16.msra.mxu0 %v3341
    %4406 = vmatprep.subr.bf16.mxu0 %v3350
    %4407 = vmatpush1.bf16.msra.mxu0 %v3349
    %4408 = vmatprep.subr.bf16.mxu0 %v3358
    %4409 = vmatpush1.bf16.msra.mxu0 %v3357
    %4410 = vmatprep.subr.bf16.mxu0 %v3366
    %4411 = vmatpush1.bf16.msra.mxu0 %v3365
    %4412 = vmatprep.subr.bf16.mxu0 %v3374
    %4413 = vmatpush1.bf16.msra.mxu0 %v3373
    %4414 = vmatprep.subr.bf16.mxu0 %v3382
    %4415 = vmatpush1.bf16.msra.mxu0 %v3381
    %4416 = vmatprep.subr.bf16.mxu0 %v3390
    %4417 = vmatpush1.bf16.msra.mxu0 %v3389
    %4418 = vmatprep.subr.bf16.mxu0 %v3398
    %4419 = vmatpush1.bf16.msra.mxu0 %v3397
    %4420 = vmatprep.subr.bf16.mxu0 %v3406
    %4421 = vmatpush1.bf16.msra.mxu0 %v3405
    %4422 = vmatprep.subr.bf16.mxu0 %v3414
    %4423 = vmatpush1.bf16.msra.mxu0 %v3413
    %4424 = vmatprep.mubr.bf16.mxu0 %v1068
    %4425 = vmatmul.mubr.bf16.gmra.mrb[0].mxu0 %v1067
    %v4426 = vpop.f32.mrb[0].mxu0
    %v4427 = vadd.f32 %v4386, %v4426
    %v4428 = vpop.f32.mrb[0].mxu0
    %v4429 = vadd.f32 %v4388, %v4428
    %v4430 = vpop.f32.mrb[0].mxu0
    %v4431 = vpop.f32.mrb[0].mxu0
    %4432 = vdwg.mxu0
    %4433 = vmatprep.subr.bf16.mxu0 %v3422
    %4434 = vmatpush1.bf16.msra.mxu0 %v3421
    %4435 = vmatprep.subr.bf16.mxu0 %v3430
    %4436 = vmatpush1.bf16.msra.mxu0 %v3429
    %4437 = vmatprep.subr.bf16.mxu0 %v3438
    %4438 = vmatpush1.bf16.msra.mxu0 %v3437
    %4439 = vmatprep.subr.bf16.mxu0 %v3446
    %4440 = vmatpush1.bf16.msra.mxu0 %v3445
    %4441 = vmatprep.subr.bf16.mxu0 %v3454
    %4442 = vmatpush1.bf16.msra.mxu0 %v3453
    %4443 = vmatprep.subr.bf16.mxu0 %v3462
    %4444 = vmatpush1.bf16.msra.mxu0 %v3461
    %4445 = vmatprep.subr.bf16.mxu0 %v3470
    %4446 = vmatpush1.bf16.msra.mxu0 %v3469
    %4447 = vmatprep.subr.bf16.mxu0 %v3478
    %4448 = vmatpush1.bf16.msra.mxu0 %v3477
    %4449 = vmatprep.subr.bf16.mxu0 %v3486
    %4450 = vmatpush1.bf16.msra.mxu0 %v3485
    %4451 = vmatprep.subr.bf16.mxu0 %v3494
    %4452 = vmatpush1.bf16.msra.mxu0 %v3493
    %4453 = vmatprep.subr.bf16.mxu0 %v3502
    %4454 = vmatpush1.bf16.msra.mxu0 %v3501
    %4455 = vmatprep.subr.bf16.mxu0 %v3510
    %4456 = vmatpush1.bf16.msra.mxu0 %v3509
    %4457 = vmatprep.subr.bf16.mxu0 %v3518
    %4458 = vmatpush1.bf16.msra.mxu0 %v3517
    %4459 = vmatprep.subr.bf16.mxu0 %v3526
    %4460 = vmatpush1.bf16.msra.mxu0 %v3525
    %4461 = vmatprep.subr.bf16.mxu0 %v3534
    %4462 = vmatpush1.bf16.msra.mxu0 %v3533
    %4463 = vmatprep.subr.bf16.mxu0 %v3542
    %4464 = vmatpush1.bf16.msra.mxu0 %v3541
    %4465 = vmatprep.mubr.bf16.mxu0 %v1070
    %4466 = vmatmul.mubr.bf16.gmra.mrb[0].mxu0 %v1069
    %v4467 = vpop.f32.mrb[0].mxu0
    %v4468 = vadd.f32 %v4427, %v4467
    %v4469 = vpop.f32.mrb[0].mxu0
    %v4470 = vadd.f32 %v4429, %v4469
    %v4471 = vpop.f32.mrb[0].mxu0
    %v4472 = vpop.f32.mrb[0].mxu0
    %4473 = vdwg.mxu0
    %4474 = vmatprep.subr.bf16.mxu0 %v3550
    %4475 = vmatpush1.bf16.msra.mxu0 %v3549
    %4476 = vmatprep.subr.bf16.mxu0 %v3558
    %4477 = vmatpush1.bf16.msra.mxu0 %v3557
    %4478 = vmatprep.subr.bf16.mxu0 %v3566
    %4479 = vmatpush1.bf16.msra.mxu0 %v3565
    %4480 = vmatprep.subr.bf16.mxu0 %v3574
    %4481 = vmatpush1.bf16.msra.mxu0 %v3573
    %4482 = vmatprep.subr.bf16.mxu0 %v3582
    %4483 = vmatpush1.bf16.msra.mxu0 %v3581
    %4484 = vmatprep.subr.bf16.mxu0 %v3590
    %4485 = vmatpush1.bf16.msra.mxu0 %v3589
    %4486 = vmatprep.subr.bf16.mxu0 %v3598
    %4487 = vmatpush1.bf16.msra.mxu0 %v3597
    %4488 = vmatprep.subr.bf16.mxu0 %v3606
    %4489 = vmatpush1.bf16.msra.mxu0 %v3605
    %4490 = vmatprep.subr.bf16.mxu0 %v3614
    %4491 = vmatpush1.bf16.msra.mxu0 %v3613
    %4492 = vmatprep.subr.bf16.mxu0 %v3622
    %4493 = vmatpush1.bf16.msra.mxu0 %v3621
    %4494 = vmatprep.subr.bf16.mxu0 %v3630
    %4495 = vmatpush1.bf16.msra.mxu0 %v3629
    %4496 = vmatprep.subr.bf16.mxu0 %v3638
    %4497 = vmatpush1.bf16.msra.mxu0 %v3637
    %4498 = vmatprep.subr.bf16.mxu0 %v3646
    %4499 = vmatpush1.bf16.msra.mxu0 %v3645
    %4500 = vmatprep.subr.bf16.mxu0 %v3654
    %4501 = vmatpush1.bf16.msra.mxu0 %v3653
    %4502 = vmatprep.subr.bf16.mxu0 %v3662
    %4503 = vmatpush1.bf16.msra.mxu0 %v3661
    %4504 = vmatprep.subr.bf16.mxu0 %v3670
    %4505 = vmatpush1.bf16.msra.mxu0 %v3669
    %4506 = vmatprep.mubr.bf16.mxu0 %v1072
    %4507 = vmatmul.mubr.bf16.gmra.mrb[0].mxu0 %v1071
    %v4508 = vpop.f32.mrb[0].mxu0
    %v4509 = vadd.f32 %v4468, %v4508
    %v4510 = vpop.f32.mrb[0].mxu0
    %v4511 = vadd.f32 %v4470, %v4510
    %v4512 = vpop.f32.mrb[0].mxu0
    %v4513 = vpop.f32.mrb[0].mxu0
    %4514 = vdwg.mxu0
    %4515 = vmatprep.subr.bf16.mxu0 %v3168
    %4516 = vmatpush1.bf16.msra.mxu0 %v3167
    %4517 = vmatprep.subr.bf16.mxu0 %v3176
    %4518 = vmatpush1.bf16.msra.mxu0 %v3175
    %4519 = vmatprep.subr.bf16.mxu0 %v3184
    %4520 = vmatpush1.bf16.msra.mxu0 %v3183
    %4521 = vmatprep.subr.bf16.mxu0 %v3192
    %4522 = vmatpush1.bf16.msra.mxu0 %v3191
    %4523 = vmatprep.subr.bf16.mxu0 %v3200
    %4524 = vmatpush1.bf16.msra.mxu0 %v3199
    %4525 = vmatprep.subr.bf16.mxu0 %v3208
    %4526 = vmatpush1.bf16.msra.mxu0 %v3207
    %4527 = vmatprep.subr.bf16.mxu0 %v3216
    %4528 = vmatpush1.bf16.msra.mxu0 %v3215
    %4529 = vmatprep.subr.bf16.mxu0 %v3224
    %4530 = vmatpush1.bf16.msra.mxu0 %v3223
    %4531 = vmatprep.subr.bf16.mxu0 %v3232
    %4532 = vmatpush1.bf16.msra.mxu0 %v3231
    %4533 = vmatprep.subr.bf16.mxu0 %v3240
    %4534 = vmatpush1.bf16.msra.mxu0 %v3239
    %4535 = vmatprep.subr.bf16.mxu0 %v3248
    %4536 = vmatpush1.bf16.msra.mxu0 %v3247
    %4537 = vmatprep.subr.bf16.mxu0 %v3256
    %4538 = vmatpush1.bf16.msra.mxu0 %v3255
    %4539 = vmatprep.subr.bf16.mxu0 %v3264
    %4540 = vmatpush1.bf16.msra.mxu0 %v3263
    %4541 = vmatprep.subr.bf16.mxu0 %v3272
    %4542 = vmatpush1.bf16.msra.mxu0 %v3271
    %4543 = vmatprep.subr.bf16.mxu0 %v3280
    %4544 = vmatpush1.bf16.msra.mxu0 %v3279
    %4545 = vmatprep.subr.bf16.mxu0 %v3288
    %4546 = vmatpush1.bf16.msra.mxu0 %v3287
    %4547 = vmatprep.mubr.bf16.mxu0 %v1066
    %4548 = vmatmul.mubr.bf16.gmra.mrb[0].mxu0 %v1065
    %v4549 = vpop.f32.mrb[0].mxu0
    %v4550 = vadd.f32 %v1606, %v4549
    %v4551 = vpop.f32.mrb[0].mxu0
    %v4552 = vadd.f32 %v1610, %v4551
    %v4553 = vpop.f32.mrb[0].mxu0
    %v4554 = vpop.f32.mrb[0].mxu0
    %4555 = vdwg.mxu0
    %4556 = vmatprep.subr.bf16.mxu0 %v3296
    %4557 = vmatpush1.bf16.msra.mxu0 %v3295
    %4558 = vmatprep.subr.bf16.mxu0 %v3304
    %4559 = vmatpush1.bf16.msra.mxu0 %v3303
    %4560 = vmatprep.subr.bf16.mxu0 %v3312
    %4561 = vmatpush1.bf16.msra.mxu0 %v3311
    %4562 = vmatprep.subr.bf16.mxu0 %v3320
    %4563 = vmatpush1.bf16.msra.mxu0 %v3319
    %4564 = vmatprep.subr.bf16.mxu0 %v3328
    %4565 = vmatpush1.bf16.msra.mxu0 %v3327
    %4566 = vmatprep.subr.bf16.mxu0 %v3336
    %4567 = vmatpush1.bf16.msra.mxu0 %v3335
    %4568 = vmatprep.subr.bf16.mxu0 %v3344
    %4569 = vmatpush1.bf16.msra.mxu0 %v3343
    %4570 = vmatprep.subr.bf16.mxu0 %v3352
    %4571 = vmatpush1.bf16.msra.mxu0 %v3351
    %4572 = vmatprep.subr.bf16.mxu0 %v3360
    %4573 = vmatpush1.bf16.msra.mxu0 %v3359
    %4574 = vmatprep.subr.bf16.mxu0 %v3368
    %4575 = vmatpush1.bf16.msra.mxu0 %v3367
    %4576 = vmatprep.subr.bf16.mxu0 %v3376
    %4577 = vmatpush1.bf16.msra.mxu0 %v3375
    %4578 = vmatprep.subr.bf16.mxu0 %v3384
    %4579 = vmatpush1.bf16.msra.mxu0 %v3383
    %4580 = vmatprep.subr.bf16.mxu0 %v3392
    %4581 = vmatpush1.bf16.msra.mxu0 %v3391
    %4582 = vmatprep.subr.bf16.mxu0 %v3400
    %4583 = vmatpush1.bf16.msra.mxu0 %v3399
    %4584 = vmatprep.subr.bf16.mxu0 %v3408
    %4585 = vmatpush1.bf16.msra.mxu0 %v3407
    %4586 = vmatprep.subr.bf16.mxu0 %v3416
    %4587 = vmatpush1.bf16.msra.mxu0 %v3415
    %4588 = vmatprep.mubr.bf16.mxu0 %v1068
    %4589 = vmatmul.mubr.bf16.gmra.mrb[0].mxu0 %v1067
    %v4590 = vpop.f32.mrb[0].mxu0
    %v4591 = vadd.f32 %v4550, %v4590
    %v4592 = vpop.f32.mrb[0].mxu0
    %v4593 = vadd.f32 %v4552, %v4592
    %v4594 = vpop.f32.mrb[0].mxu0
    %v4595 = vpop.f32.mrb[0].mxu0
    %4596 = vdwg.mxu0
    %4597 = vmatprep.subr.bf16.mxu0 %v3424
    %4598 = vmatpush1.bf16.msra.mxu0 %v3423
    %4599 = vmatprep.subr.bf16.mxu0 %v3432
    %4600 = vmatpush1.bf16.msra.mxu0 %v3431
    %4601 = vmatprep.subr.bf16.mxu0 %v3440
    %4602 = vmatpush1.bf16.msra.mxu0 %v3439
    %4603 = vmatprep.subr.bf16.mxu0 %v3448
    %4604 = vmatpush1.bf16.msra.mxu0 %v3447
    %4605 = vmatprep.subr.bf16.mxu0 %v3456
    %4606 = vmatpush1.bf16.msra.mxu0 %v3455
    %4607 = vmatprep.subr.bf16.mxu0 %v3464
    %4608 = vmatpush1.bf16.msra.mxu0 %v3463
    %4609 = vmatprep.subr.bf16.mxu0 %v3472
    %4610 = vmatpush1.bf16.msra.mxu0 %v3471
    %4611 = vmatprep.subr.bf16.mxu0 %v3480
    %4612 = vmatpush1.bf16.msra.mxu0 %v3479
    %4613 = vmatprep.subr.bf16.mxu0 %v3488
    %4614 = vmatpush1.bf16.msra.mxu0 %v3487
    %4615 = vmatprep.subr.bf16.mxu0 %v3496
    %4616 = vmatpush1.bf16.msra.mxu0 %v3495
    %4617 = vmatprep.subr.bf16.mxu0 %v3504
    %4618 = vmatpush1.bf16.msra.mxu0 %v3503
    %4619 = vmatprep.subr.bf16.mxu0 %v3512
    %4620 = vmatpush1.bf16.msra.mxu0 %v3511
    %4621 = vmatprep.subr.bf16.mxu0 %v3520
    %4622 = vmatpush1.bf16.msra.mxu0 %v3519
    %4623 = vmatprep.subr.bf16.mxu0 %v3528
    %4624 = vmatpush1.bf16.msra.mxu0 %v3527
    %4625 = vmatprep.subr.bf16.mxu0 %v3536
    %4626 = vmatpush1.bf16.msra.mxu0 %v3535
    %4627 = vmatprep.subr.bf16.mxu0 %v3544
    %4628 = vmatpush1.bf16.msra.mxu0 %v3543
    %4629 = vmatprep.mubr.bf16.mxu0 %v1070
    %4630 = vmatmul.mubr.bf16.gmra.mrb[0].mxu0 %v1069
    %v4631 = vpop.f32.mrb[0].mxu0
    %v4632 = vadd.f32 %v4591, %v4631
    %v4633 = vpop.f32.mrb[0].mxu0
    %v4634 = vadd.f32 %v4593, %v4633
    %v4635 = vpop.f32.mrb[0].mxu0
    %v4636 = vpop.f32.mrb[0].mxu0
    %4637 = vdwg.mxu0
    %4638 = vmatprep.subr.bf16.mxu0 %v3552
    %4639 = vmatpush1.bf16.msra.mxu0 %v3551
    %4640 = vmatprep.subr.bf16.mxu0 %v3560
    %4641 = vmatpush1.bf16.msra.mxu0 %v3559
    %4642 = vmatprep.subr.bf16.mxu0 %v3568
    %4643 = vmatpush1.bf16.msra.mxu0 %v3567
    %4644 = vmatprep.subr.bf16.mxu0 %v3576
    %4645 = vmatpush1.bf16.msra.mxu0 %v3575
    %4646 = vmatprep.subr.bf16.mxu0 %v3584
    %4647 = vmatpush1.bf16.msra.mxu0 %v3583
    %4648 = vmatprep.subr.bf16.mxu0 %v3592
    %4649 = vmatpush1.bf16.msra.mxu0 %v3591
    %4650 = vmatprep.subr.bf16.mxu0 %v3600
    %4651 = vmatpush1.bf16.msra.mxu0 %v3599
    %4652 = vmatprep.subr.bf16.mxu0 %v3608
    %4653 = vmatpush1.bf16.msra.mxu0 %v3607
    %4654 = vmatprep.subr.bf16.mxu0 %v3616
    %4655 = vmatpush1.bf16.msra.mxu0 %v3615
    %4656 = vmatprep.subr.bf16.mxu0 %v3624
    %4657 = vmatpush1.bf16.msra.mxu0 %v3623
    %4658 = vmatprep.subr.bf16.mxu0 %v3632
    %4659 = vmatpush1.bf16.msra.mxu0 %v3631
    %4660 = vmatprep.subr.bf16.mxu0 %v3640
    %4661 = vmatpush1.bf16.msra.mxu0 %v3639
    %4662 = vmatprep.subr.bf16.mxu0 %v3648
    %4663 = vmatpush1.bf16.msra.mxu0 %v3647
    %4664 = vmatprep.subr.bf16.mxu0 %v3656
    %4665 = vmatpush1.bf16.msra.mxu0 %v3655
    %4666 = vmatprep.subr.bf16.mxu0 %v3664
    %4667 = vmatpush1.bf16.msra.mxu0 %v3663
    %4668 = vmatprep.subr.bf16.mxu0 %v3672
    %4669 = vmatpush1.bf16.msra.mxu0 %v3671
    %4670 = vmatprep.mubr.bf16.mxu0 %v1072
    %4671 = vmatmul.mubr.bf16.gmra.mrb[0].mxu0 %v1071
    %v4672 = vpop.f32.mrb[0].mxu0
    %v4673 = vadd.f32 %v4632, %v4672
    %v4674 = vpop.f32.mrb[0].mxu0
    %v4675 = vadd.f32 %v4634, %v4674
    %v4676 = vpop.f32.mrb[0].mxu0
    %v4677 = vpop.f32.mrb[0].mxu0
    %4678 = vdwg.mxu0
    %4679 = vmatprep.subr.bf16.mxu0 %v3170
    %4680 = vmatpush1.bf16.msra.mxu0 %v3169
    %4681 = vmatprep.subr.bf16.mxu0 %v3178
    %4682 = vmatpush1.bf16.msra.mxu0 %v3177
    %4683 = vmatprep.subr.bf16.mxu0 %v3186
    %4684 = vmatpush1.bf16.msra.mxu0 %v3185
    %4685 = vmatprep.subr.bf16.mxu0 %v3194
    %4686 = vmatpush1.bf16.msra.mxu0 %v3193
    %4687 = vmatprep.subr.bf16.mxu0 %v3202
    %4688 = vmatpush1.bf16.msra.mxu0 %v3201
    %4689 = vmatprep.subr.bf16.mxu0 %v3210
    %4690 = vmatpush1.bf16.msra.mxu0 %v3209
    %4691 = vmatprep.subr.bf16.mxu0 %v3218
    %4692 = vmatpush1.bf16.msra.mxu0 %v3217
    %4693 = vmatprep.subr.bf16.mxu0 %v3226
    %4694 = vmatpush1.bf16.msra.mxu0 %v3225
    %4695 = vmatprep.subr.bf16.mxu0 %v3234
    %4696 = vmatpush1.bf16.msra.mxu0 %v3233
    %4697 = vmatprep.subr.bf16.mxu0 %v3242
    %4698 = vmatpush1.bf16.msra.mxu0 %v3241
    %4699 = vmatprep.subr.bf16.mxu0 %v3250
    %4700 = vmatpush1.bf16.msra.mxu0 %v3249
    %4701 = vmatprep.subr.bf16.mxu0 %v3258
    %4702 = vmatpush1.bf16.msra.mxu0 %v3257
    %4703 = vmatprep.subr.bf16.mxu0 %v3266
    %4704 = vmatpush1.bf16.msra.mxu0 %v3265
    %4705 = vmatprep.subr.bf16.mxu0 %v3274
    %4706 = vmatpush1.bf16.msra.mxu0 %v3273
    %4707 = vmatprep.subr.bf16.mxu0 %v3282
    %4708 = vmatpush1.bf16.msra.mxu0 %v3281
    %4709 = vmatprep.subr.bf16.mxu0 %v3290
    %4710 = vmatpush1.bf16.msra.mxu0 %v3289
    %4711 = vmatprep.mubr.bf16.mxu0 %v1066
    %4712 = vmatmul.mubr.bf16.gmra.mrb[0].mxu0 %v1065
    %v4713 = vpop.f32.mrb[0].mxu0
    %v4714 = vadd.f32 %v1614, %v4713
    %v4715 = vpop.f32.mrb[0].mxu0
    %v4716 = vadd.f32 %v1618, %v4715
    %v4717 = vpop.f32.mrb[0].mxu0
    %v4718 = vpop.f32.mrb[0].mxu0
    %4719 = vdwg.mxu0
    %4720 = vmatprep.subr.bf16.mxu0 %v3298
    %4721 = vmatpush1.bf16.msra.mxu0 %v3297
    %4722 = vmatprep.subr.bf16.mxu0 %v3306
    %4723 = vmatpush1.bf16.msra.mxu0 %v3305
    %4724 = vmatprep.subr.bf16.mxu0 %v3314
    %4725 = vmatpush1.bf16.msra.mxu0 %v3313
    %4726 = vmatprep.subr.bf16.mxu0 %v3322
    %4727 = vmatpush1.bf16.msra.mxu0 %v3321
    %4728 = vmatprep.subr.bf16.mxu0 %v3330
    %4729 = vmatpush1.bf16.msra.mxu0 %v3329
    %4730 = vmatprep.subr.bf16.mxu0 %v3338
    %4731 = vmatpush1.bf16.msra.mxu0 %v3337
    %4732 = vmatprep.subr.bf16.mxu0 %v3346
    %4733 = vmatpush1.bf16.msra.mxu0 %v3345
    %4734 = vmatprep.subr.bf16.mxu0 %v3354
    %4735 = vmatpush1.bf16.msra.mxu0 %v3353
    %4736 = vmatprep.subr.bf16.mxu0 %v3362
    %4737 = vmatpush1.bf16.msra.mxu0 %v3361
    %4738 = vmatprep.subr.bf16.mxu0 %v3370
    %4739 = vmatpush1.bf16.msra.mxu0 %v3369
    %4740 = vmatprep.subr.bf16.mxu0 %v3378
    %4741 = vmatpush1.bf16.msra.mxu0 %v3377
    %4742 = vmatprep.subr.bf16.mxu0 %v3386
    %4743 = vmatpush1.bf16.msra.mxu0 %v3385
    %4744 = vmatprep.subr.bf16.mxu0 %v3394
    %4745 = vmatpush1.bf16.msra.mxu0 %v3393
    %4746 = vmatprep.subr.bf16.mxu0 %v3402
    %4747 = vmatpush1.bf16.msra.mxu0 %v3401
    %4748 = vmatprep.subr.bf16.mxu0 %v3410
    %4749 = vmatpush1.bf16.msra.mxu0 %v3409
    %4750 = vmatprep.subr.bf16.mxu0 %v3418
    %4751 = vmatpush1.bf16.msra.mxu0 %v3417
    %4752 = vmatprep.mubr.bf16.mxu0 %v1068
    %4753 = vmatmul.mubr.bf16.gmra.mrb[0].mxu0 %v1067
    %v4754 = vpop.f32.mrb[0].mxu0
    %v4755 = vadd.f32 %v4714, %v4754
    %v4756 = vpop.f32.mrb[0].mxu0
    %v4757 = vadd.f32 %v4716, %v4756
    %v4758 = vpop.f32.mrb[0].mxu0
    %v4759 = vpop.f32.mrb[0].mxu0
    %4760 = vdwg.mxu0
    %4761 = vmatprep.subr.bf16.mxu0 %v3426
    %4762 = vmatpush1.bf16.msra.mxu0 %v3425
    %4763 = vmatprep.subr.bf16.mxu0 %v3434
    %4764 = vmatpush1.bf16.msra.mxu0 %v3433
    %4765 = vmatprep.subr.bf16.mxu0 %v3442
    %4766 = vmatpush1.bf16.msra.mxu0 %v3441
    %4767 = vmatprep.subr.bf16.mxu0 %v3450
    %4768 = vmatpush1.bf16.msra.mxu0 %v3449
    %4769 = vmatprep.subr.bf16.mxu0 %v3458
    %4770 = vmatpush1.bf16.msra.mxu0 %v3457
    %4771 = vmatprep.subr.bf16.mxu0 %v3466
    %4772 = vmatpush1.bf16.msra.mxu0 %v3465
    %4773 = vmatprep.subr.bf16.mxu0 %v3474
    %4774 = vmatpush1.bf16.msra.mxu0 %v3473
    %4775 = vmatprep.subr.bf16.mxu0 %v3482
    %4776 = vmatpush1.bf16.msra.mxu0 %v3481
    %4777 = vmatprep.subr.bf16.mxu0 %v3490
    %4778 = vmatpush1.bf16.msra.mxu0 %v3489
    %4779 = vmatprep.subr.bf16.mxu0 %v3498
    %4780 = vmatpush1.bf16.msra.mxu0 %v3497
    %4781 = vmatprep.subr.bf16.mxu0 %v3506
    %4782 = vmatpush1.bf16.msra.mxu0 %v3505
    %4783 = vmatprep.subr.bf16.mxu0 %v3514
    %4784 = vmatpush1.bf16.msra.mxu0 %v3513
    %4785 = vmatprep.subr.bf16.mxu0 %v3522
    %4786 = vmatpush1.bf16.msra.mxu0 %v3521
    %4787 = vmatprep.subr.bf16.mxu0 %v3530
    %4788 = vmatpush1.bf16.msra.mxu0 %v3529
    %4789 = vmatprep.subr.bf16.mxu0 %v3538
    %4790 = vmatpush1.bf16.msra.mxu0 %v3537
    %4791 = vmatprep.subr.bf16.mxu0 %v3546
    %4792 = vmatpush1.bf16.msra.mxu0 %v3545
    %4793 = vmatprep.mubr.bf16.mxu0 %v1070
    %4794 = vmatmul.mubr.bf16.gmra.mrb[0].mxu0 %v1069
    %v4795 = vpop.f32.mrb[0].mxu0
    %v4796 = vadd.f32 %v4755, %v4795
    %v4797 = vpop.f32.mrb[0].mxu0
    %v4798 = vadd.f32 %v4757, %v4797
    %v4799 = vpop.f32.mrb[0].mxu0
    %v4800 = vpop.f32.mrb[0].mxu0
    %4801 = vdwg.mxu0
    %4802 = vmatprep.subr.bf16.mxu0 %v3554
    %4803 = vmatpush1.bf16.msra.mxu0 %v3553
    %4804 = vmatprep.subr.bf16.mxu0 %v3562
    %4805 = vmatpush1.bf16.msra.mxu0 %v3561
    %4806 = vmatprep.subr.bf16.mxu0 %v3570
    %4807 = vmatpush1.bf16.msra.mxu0 %v3569
    %4808 = vmatprep.subr.bf16.mxu0 %v3578
    %4809 = vmatpush1.bf16.msra.mxu0 %v3577
    %4810 = vmatprep.subr.bf16.mxu0 %v3586
    %4811 = vmatpush1.bf16.msra.mxu0 %v3585
    %4812 = vmatprep.subr.bf16.mxu0 %v3594
    %4813 = vmatpush1.bf16.msra.mxu0 %v3593
    %4814 = vmatprep.subr.bf16.mxu0 %v3602
    %4815 = vmatpush1.bf16.msra.mxu0 %v3601
    %4816 = vmatprep.subr.bf16.mxu0 %v3610
    %4817 = vmatpush1.bf16.msra.mxu0 %v3609
    %4818 = vmatprep.subr.bf16.mxu0 %v3618
    %4819 = vmatpush1.bf16.msra.mxu0 %v3617
    %4820 = vmatprep.subr.bf16.mxu0 %v3626
    %4821 = vmatpush1.bf16.msra.mxu0 %v3625
    %4822 = vmatprep.subr.bf16.mxu0 %v3634
    %4823 = vmatpush1.bf16.msra.mxu0 %v3633
    %4824 = vmatprep.subr.bf16.mxu0 %v3642
    %4825 = vmatpush1.bf16.msra.mxu0 %v3641
    %4826 = vmatprep.subr.bf16.mxu0 %v3650
    %4827 = vmatpush1.bf16.msra.mxu0 %v3649
    %4828 = vmatprep.subr.bf16.mxu0 %v3658
    %4829 = vmatpush1.bf16.msra.mxu0 %v3657
    %4830 = vmatprep.subr.bf16.mxu0 %v3666
    %4831 = vmatpush1.bf16.msra.mxu0 %v3665
    %4832 = vmatprep.subr.bf16.mxu0 %v3674
    %4833 = vmatpush1.bf16.msra.mxu0 %v3673
    %4834 = vmatprep.mubr.bf16.mxu0 %v1072
    %4835 = vmatmul.mubr.bf16.gmra.mrb[0].mxu0 %v1071
    %v4836 = vpop.f32.mrb[0].mxu0
    %v4837 = vadd.f32 %v4796, %v4836
    %v4838 = vpop.f32.mrb[0].mxu0
    %v4839 = vadd.f32 %v4798, %v4838
    %v4840 = vpop.f32.mrb[0].mxu0
    %v4841 = vpop.f32.mrb[0].mxu0
    %4842 = vdwg.mxu0
    %v4843 = vsub.f32 0.0, %v4345
    %v4844 = vsub.f32 0.0, %v4347
    %v4845 = vsub.f32 0.0, %v4509
    %v4846 = vsub.f32 0.0, %v4511
    %v4847 = vsub.f32 0.0, %v4673
    %v4848 = vsub.f32 0.0, %v4675
    %v4849 = vsub.f32 0.0, %v4837
    %v4850 = vsub.f32 0.0, %v4839
    %v4851 = vmul.f32 %v4843, 1.442695
    %v4852 = vpow.pop %v4851
    %v4853 = vmul.f32 %v4844, 1.442695
    %v4854 = vpow.pop %v4853
    %v4855 = vmul.f32 %v4845, 1.442695
    %v4856 = vpow.pop %v4855
    %v4857 = vmul.f32 %v4846, 1.442695
    %v4858 = vpow.pop %v4857
    %v4859 = vmul.f32 %v4847, 1.442695
    %v4860 = vpow.pop %v4859
    %v4861 = vmul.f32 %v4848, 1.442695
    %v4862 = vpow.pop %v4861
    %v4863 = vmul.f32 %v4849, 1.442695
    %v4864 = vpow.pop %v4863
    %v4865 = vmul.f32 %v4850, 1.442695
    %v4866 = vpow.pop %v4865
    %v4867 = vadd.f32 %v4852, 1.0
    %v4868 = vadd.f32 %v4854, 1.0
    %v4869 = vadd.f32 %v4856, 1.0
    %v4870 = vadd.f32 %v4858, 1.0
    %v4871 = vadd.f32 %v4860, 1.0
    %v4872 = vadd.f32 %v4862, 1.0
    %v4873 = vadd.f32 %v4864, 1.0
    %v4874 = vadd.f32 %v4866, 1.0
    %v4875 = vrcp.pop %v4867
    %v4876 = vrcp.pop %v4868
    %v4877 = vrcp.pop %v4869
    %v4878 = vrcp.pop %v4870
    %v4879 = vrcp.pop %v4871
    %v4880 = vrcp.pop %v4872
    %v4881 = vrcp.pop %v4873
    %v4882 = vrcp.pop %v4874
    %v4883 = vmin.f32 %v4875, 1.0
    %v4884 = vmin.f32 %v4876, 1.0
    %v4885 = vmin.f32 %v4877, 1.0
    %v4886 = vmin.f32 %v4878, 1.0
    %v4887 = vmin.f32 %v4879, 1.0
    %v4888 = vmin.f32 %v4880, 1.0
    %v4889 = vmin.f32 %v4881, 1.0
    %v4890 = vmin.f32 %v4882, 1.0
    %4891 = vst [vmem:[%s5] sm:$0xff] %v4883
    %4892 = vst [vmem:[%s5 + $0x8] sm:$0xff] %v4884
    %4893 = vst [vmem:[%s5 + $0x10] sm:$0xff] %v4885
    %4894 = vst [vmem:[%s5 + $0x18] sm:$0xff] %v4886
    %4895 = vst [vmem:[%s5 + $0x20] sm:$0xff] %v4887
    %4896 = vst [vmem:[%s5 + $0x28] sm:$0xff] %v4888
    %4897 = vst [vmem:[%s5 + $0x30] sm:$0xff] %v4889
    %4898 = vst [vmem:[%s5 + $0x38] sm:$0xff] %v4890
    // Predicated region
    $region38: #{transformer_classifier.3} parent=1 // pred_check
      _
    $region39: #{transformer_classifier.3} parent=1 // pred_check_branch
      %4900 = sbr.rel (0) target = $region41
    $region40: #{transformer_classifier.3} parent=1 // pred_region
      _
    $region41: #{transformer_classifier.3} parent=1 // pred_fallthru
      _
    // Predicated region
    $region42: #{transformer_classifier.3} parent=1 // pred_check
      _
    $region43: #{transformer_classifier.3} parent=1 // pred_check_branch
      %4902 = sbr.rel (0) target = $region45
    $region44: #{transformer_classifier.3} parent=1 // pred_region
      _
    $region45: #{transformer_classifier.3} parent=1 // pred_fallthru
      _
    %4903 = vsyncpa [#allocation3], 1
    %4904 = vsyncpa [#allocation5], 1
    %4905 = vsyncpa [#allocation8], 1

</llo_original>
